<compile_context>
chip_gen: v5e
topology: v5e:2x2
jax: 0.10.0
libtpu: 0.0.40
codegen_flags: <defaults>
</compile_context>

<pallas_src>
import functools

import jax
import jax.numpy as jnp
from jax.experimental import pallas as pl
from jax.experimental.pallas import tpu as pltpu


def _resblock_kernel(x_ref, w1_ref, b1_ref, w2_ref, b2_ref, o_ref,
                     pad_scr, acc_scr, *, ksize, res_scale, mm_dtype):
    """Processes `nb` batch elements per grid step.

    x_ref   : (nb, H, W, C)        un-padded input block (also the residual)
    w*_ref  : (K*K, Cin, Cout)     conv weights, tap-major
    b*_ref  : (1, C)               conv biases
    o_ref   : (nb, H, W, C)        output block
    pad_scr : (nb, H+2p, W+2p, C)  VMEM zero-haloed staging buffer (mm_dtype),
                                   reused for both convs
    acc_scr : (nb*H*W, C) f32      VMEM accumulator shared by both convs
    """
    nb, H, W, C = x_ref.shape
    pad = ksize // 2
    Hp, Wp = H + 2 * pad, W + 2 * pad
    f32 = jnp.float32
    taps = [(kh, kw) for kh in range(ksize) for kw in range(ksize)]

    def conv_taps(w_ref):
        # shift-and-matmul over the K*K taps, accumulating in VMEM scratch
        for t, (kh, kw) in enumerate(taps):
            tap = pad_scr[:, kh:kh + H, kw:kw + W, :]
            contrib = jnp.dot(tap.reshape(nb * H * W, C),
                              w_ref[t].astype(mm_dtype),
                              preferred_element_type=f32)
            if t == 0:
                acc_scr[...] = contrib      # first tap overwrites: no zero-init
            else:
                acc_scr[...] += contrib

    # ---- clear only the thin zero halo (interior is always fully written);
    #      done every step so megacore batch-sharding stays correct ----------
    dt = pad_scr.dtype
    zcol = jnp.zeros((nb, Hp, pad, C), dt)
    zrow = jnp.zeros((nb, pad, Wp, C), dt)
    pad_scr[:, :, 0:pad, :] = zcol
    pad_scr[:, :, Wp - pad:Wp, :] = zcol
    pad_scr[:, 0:pad, :, :] = zrow
    pad_scr[:, Hp - pad:Hp, :, :] = zrow

    # ---- conv1: stage x inside the zero halo, then tap-accumulate ----------
    pad_scr[:, pad:pad + H, pad:pad + W, :] = x_ref[...].astype(dt)
    conv_taps(w1_ref)
    h1 = acc_scr[...].reshape(nb, H, W, C) + b1_ref[...].astype(f32)
    h1 = jnp.maximum(h1, 0.0)                       # ReLU, f32 epilogue

    # ---- conv2: reuse the same zero-haloed buffer ---------------------------
    pad_scr[:, pad:pad + H, pad:pad + W, :] = h1.astype(dt)
    conv_taps(w2_ref)
    res = acc_scr[...].reshape(nb, H, W, C) + b2_ref[...].astype(f32)

    # ---- residual scale + add (residual in full input precision) -----------
    o_ref[...] = (res * res_scale + x_ref[...].astype(f32)).astype(o_ref.dtype)


def _pick_batch_block(N, H, W, C, K, in_dtype, out_dtype, w_dtype, mm_dtype,
                      budget_bytes=32 * 1024 * 1024):
    """Largest batch block that divides N, fits the VMEM budget, and (when the
    batch allows) keeps >=2 grid steps so the batch axis can still be
    megacore-sharded."""
    pad = K // 2
    Hp, Wp = H + 2 * pad, W + 2 * pad
    isz = jnp.dtype(in_dtype).itemsize
    osz = jnp.dtype(out_dtype).itemsize
    wsz = jnp.dtype(w_dtype).itemsize
    msz = jnp.dtype(mm_dtype).itemsize
    fixed = 2 * (2 * K * K * C * C * wsz + 2 * C * wsz)   # weights+biases, dbl-buffered

    def vmem(nb):
        return (fixed
                + 2 * nb * H * W * C * isz      # x block, double-buffered
                + 2 * nb * H * W * C * osz      # out block, double-buffered
                + nb * Hp * Wp * C * msz        # zero-haloed staging scratch
                + nb * H * W * C * 4)           # f32 accumulator

    best = 1
    for nb in range(1, N + 1):
        if N % nb:
            continue
        if vmem(nb) > budget_bytes:
            continue
        if N >= 2 and N // nb < 2:
            continue
        best = nb
    return best


def resblock_nhwc(x_nhwc, w1, b1, w2, b2, *, ksize, res_scale,
                  matmul_dtype=jnp.float32, batch_block=None):
    """x_nhwc: (N,H,W,C); w*: (K*K,Cin,Cout); b*: (1,C)."""
    N, H, W, C = x_nhwc.shape
    pad = ksize // 2
    Hp, Wp = H + 2 * pad, W + 2 * pad

    if batch_block is None:
        batch_block = _pick_batch_block(N, H, W, C, ksize, x_nhwc.dtype,
                                        x_nhwc.dtype, w1.dtype, matmul_dtype)
    nb = batch_block
    assert N % nb == 0, "batch_block must divide the batch size"

    kernel = functools.partial(_resblock_kernel, ksize=ksize,
                               res_scale=float(res_scale),
                               mm_dtype=matmul_dtype)

    itemsize = jnp.dtype(x_nhwc.dtype).itemsize
    w_itemsize = jnp.dtype(w1.dtype).itemsize
    flops = 2 * 2 * N * H * W * ksize * ksize * C * C           # two convs
    bytes_accessed = (2 * N * H * W * C * itemsize               # x in + out
                      + (w1.size + w2.size + b1.size + b2.size) * w_itemsize)

    return pl.pallas_call(
        kernel,
        out_shape=jax.ShapeDtypeStruct((N, H, W, C), x_nhwc.dtype),
        grid_spec=pltpu.PrefetchScalarGridSpec(
            num_scalar_prefetch=0,
            grid=(N // nb,),
            in_specs=[
                pl.BlockSpec((nb, H, W, C), lambda n: (n, 0, 0, 0)),
                pl.BlockSpec((ksize * ksize, C, C), lambda n: (0, 0, 0)),
                pl.BlockSpec((1, C), lambda n: (0, 0)),
                pl.BlockSpec((ksize * ksize, C, C), lambda n: (0, 0, 0)),
                pl.BlockSpec((1, C), lambda n: (0, 0)),
            ],
            out_specs=pl.BlockSpec((nb, H, W, C), lambda n: (n, 0, 0, 0)),
            scratch_shapes=[
                pltpu.VMEM((nb, Hp, Wp, C), matmul_dtype),   # zero-haloed staging
                pltpu.VMEM((nb * H * W, C), jnp.float32),    # shared accumulator
            ],
        ),
        compiler_params=pltpu.CompilerParams(
            dimension_semantics=("parallel",),
            vmem_limit_bytes=64 * 1024 * 1024,
        ),
        cost_estimate=pl.CostEstimate(flops=flops, transcendentals=0,
                                      bytes_accessed=bytes_accessed),
    )(x_nhwc, w1, b1, w2, b2)


def resblock(x_nchw, w1_oihw, b1, w2_oihw, b2, *, res_scale=1.0,
             matmul_dtype=jnp.float32, batch_block=None):
    """PyTorch-layout wrapper: x (N,C,H,W), weights (O,I,KH,KW), bias (O,)."""
    K = w1_oihw.shape[2]
    cin, cout = w1_oihw.shape[1], w1_oihw.shape[0]
    x = jnp.transpose(x_nchw, (0, 2, 3, 1))                        # NCHW->NHWC
    w1 = jnp.transpose(w1_oihw, (2, 3, 1, 0)).reshape(K * K, cin, cout)
    w2 = jnp.transpose(w2_oihw, (2, 3, 1, 0)).reshape(K * K, cin, cout)
    out = resblock_nhwc(x, w1, b1.reshape(1, -1), w2, b2.reshape(1, -1),
                        ksize=K, res_scale=res_scale,
                        matmul_dtype=matmul_dtype, batch_block=batch_block)
    return jnp.transpose(out, (0, 3, 1, 2))                        # NHWC->NCHW


def resblock_reference(x_nchw, w1, b1, w2, b2, res_scale):
    dn = ('NCHW', 'OIHW', 'NCHW')
    h = jax.lax.conv_general_dilated(x_nchw, w1, (1, 1), 'SAME',
                                     dimension_numbers=dn)
    h = h + b1[None, :, None, None]
    h = jnp.maximum(h, 0.0)
    h = jax.lax.conv_general_dilated(h, w2, (1, 1), 'SAME',
                                     dimension_numbers=dn)
    h = h + b2[None, :, None, None]
    return h * res_scale + x_nchw


if __name__ == "__main__":
    N, n_feats, H, W, K = 2, 4, 16, 16, 3
    res_scale = 1.0  # module default

    key = jax.random.PRNGKey(0)
    kx, kw1, kb1, kw2, kb2 = jax.random.split(key, 5)
    fan_in = n_feats * K * K
    bound = 1.0 / (fan_in ** 0.5)  # ~ PyTorch Conv2d default init scale

    x = jax.random.normal(kx, (N, n_feats, H, W), jnp.float32)
    w1 = jax.random.uniform(kw1, (n_feats, n_feats, K, K), jnp.float32,
                            -bound, bound)
    b1 = jax.random.uniform(kb1, (n_feats,), jnp.float32, -bound, bound)
    w2 = jax.random.uniform(kw2, (n_feats, n_feats, K, K), jnp.float32,
                            -bound, bound)
    b2 = jax.random.uniform(kb2, (n_feats,), jnp.float32, -bound, bound)

    out = jax.block_until_ready(
        resblock(x, w1, b1, w2, b2, res_scale=res_scale))

    ref = jax.block_until_ready(
        resblock_reference(x, w1, b1, w2, b2, res_scale))

    assert out.shape == x.shape and out.dtype == x.dtype
    assert bool(jnp.allclose(out, ref, atol=1e-4, rtol=1e-4)), "mismatch vs reference"
    print("KERNEL_OK")
</pallas_src>

<mosaic_0001>
module attributes {stable_mosaic.version = 11 : i64} {
  func.func @_resblock_kernel(%arg0: i32, %arg1: memref<1x16x16x4xf32, #tpu.memory_space<vmem>>, %arg2: memref<9x4x4xf32, #tpu.memory_space<vmem>>, %arg3: memref<1x4xf32, #tpu.memory_space<vmem>>, %arg4: memref<9x4x4xf32, #tpu.memory_space<vmem>>, %arg5: memref<1x4xf32, #tpu.memory_space<vmem>>, %arg6: memref<1x16x16x4xf32, #tpu.memory_space<vmem>>, %arg7: memref<1x18x18x4xf32, #tpu.memory_space<vmem>>, %arg8: memref<256x4xf32, #tpu.memory_space<vmem>>) attributes {dimension_semantics = [#tpu.dimension_semantics<parallel>], iteration_bounds = array<i64: 2>, scalar_prefetch = 0 : i64, scratch_operands = 2 : i64, tpu.core_type = #tpu.core_type<tc>, window_params = [{transform_indices = @transform_0, window_bounds = array<i64: 1, 16, 16, 4>}, {pipeline_mode = #tpu.pipeline_mode<synchronous>, transform_indices = @transform_1, window_bounds = array<i64: 9, 4, 4>}, {pipeline_mode = #tpu.pipeline_mode<synchronous>, transform_indices = @transform_2, window_bounds = array<i64: 1, 4>}, {pipeline_mode = #tpu.pipeline_mode<synchronous>, transform_indices = @transform_3, window_bounds = array<i64: 9, 4, 4>}, {pipeline_mode = #tpu.pipeline_mode<synchronous>, transform_indices = @transform_4, window_bounds = array<i64: 1, 4>}, {transform_indices = @transform_5, window_bounds = array<i64: 1, 16, 16, 4>}]} {
    %cst = arith.constant 0.000000e+00 : f32
    %0 = vector.broadcast %cst : f32 to vector<1x18x1x4xf32>
    %cst_0 = arith.constant 0.000000e+00 : f32
    %1 = vector.broadcast %cst_0 : f32 to vector<1x1x18x4xf32>
    %c0 = arith.constant 0 : index
    %c0_1 = arith.constant 0 : index
    %c0_2 = arith.constant 0 : index
    %c0_3 = arith.constant 0 : index
    %2 = vector.load %arg7[%c0, %c0_1, %c0_2, %c0_3] : memref<1x18x18x4xf32, #tpu.memory_space<vmem>>, vector<1x18x1x4xf32>
    tpu.vector_store %arg7[%c0, %c0_1, %c0_2, %c0_3], %0 {strides = array<i32>} : memref<1x18x18x4xf32, #tpu.memory_space<vmem>>, vector<1x18x1x4xf32>,
    %c0_4 = arith.constant 0 : index
    %c0_5 = arith.constant 0 : index
    %c17 = arith.constant 17 : index
    %c0_6 = arith.constant 0 : index
    %3 = vector.load %arg7[%c0_4, %c0_5, %c17, %c0_6] : memref<1x18x18x4xf32, #tpu.memory_space<vmem>>, vector<1x18x1x4xf32>
    tpu.vector_store %arg7[%c0_4, %c0_5, %c17, %c0_6], %0 {strides = array<i32>} : memref<1x18x18x4xf32, #tpu.memory_space<vmem>>, vector<1x18x1x4xf32>,
    %c0_7 = arith.constant 0 : index
    %c0_8 = arith.constant 0 : index
    %c0_9 = arith.constant 0 : index
    %c0_10 = arith.constant 0 : index
    %4 = vector.load %arg7[%c0_7, %c0_8, %c0_9, %c0_10] : memref<1x18x18x4xf32, #tpu.memory_space<vmem>>, vector<1x1x18x4xf32>
    tpu.vector_store %arg7[%c0_7, %c0_8, %c0_9, %c0_10], %1 {strides = array<i32>} : memref<1x18x18x4xf32, #tpu.memory_space<vmem>>, vector<1x1x18x4xf32>,
    %c0_11 = arith.constant 0 : index
    %c17_12 = arith.constant 17 : index
    %c0_13 = arith.constant 0 : index
    %c0_14 = arith.constant 0 : index
    %5 = vector.load %arg7[%c0_11, %c17_12, %c0_13, %c0_14] : memref<1x18x18x4xf32, #tpu.memory_space<vmem>>, vector<1x1x18x4xf32>
    tpu.vector_store %arg7[%c0_11, %c17_12, %c0_13, %c0_14], %1 {strides = array<i32>} : memref<1x18x18x4xf32, #tpu.memory_space<vmem>>, vector<1x1x18x4xf32>,
    %c0_15 = arith.constant 0 : index
    %c0_16 = arith.constant 0 : index
    %c0_17 = arith.constant 0 : index
    %c0_18 = arith.constant 0 : index
    %6 = vector.load %arg1[%c0_15, %c0_16, %c0_17, %c0_18] : memref<1x16x16x4xf32, #tpu.memory_space<vmem>>, vector<1x16x16x4xf32>
    %c0_19 = arith.constant 0 : index
    %c1 = arith.constant 1 : index
    %c1_20 = arith.constant 1 : index
    %c0_21 = arith.constant 0 : index
    %7 = vector.load %arg7[%c0_19, %c1, %c1_20, %c0_21] : memref<1x18x18x4xf32, #tpu.memory_space<vmem>>, vector<1x16x16x4xf32>
    tpu.vector_store %arg7[%c0_19, %c1, %c1_20, %c0_21], %6 {strides = array<i32>} : memref<1x18x18x4xf32, #tpu.memory_space<vmem>>, vector<1x16x16x4xf32>,
    %c0_22 = arith.constant 0 : index
    %c0_23 = arith.constant 0 : index
    %c0_24 = arith.constant 0 : index
    %c0_25 = arith.constant 0 : index
    %8 = vector.load %arg7[%c0_22, %c0_23, %c0_24, %c0_25] : memref<1x18x18x4xf32, #tpu.memory_space<vmem>>, vector<1x16x16x4xf32>
    %9 = vector.shape_cast %8 : vector<1x16x16x4xf32> to vector<256x4xf32>
    %c0_26 = arith.constant 0 : index
    %c0_27 = arith.constant 0 : index
    %c0_28 = arith.constant 0 : index
    %10 = vector.load %arg2[%c0_26, %c0_27, %c0_28] : memref<9x4x4xf32, #tpu.memory_space<vmem>>, vector<1x4x4xf32>
    %11 = vector.shape_cast %10 : vector<1x4x4xf32> to vector<4x4xf32>
    %cst_29 = arith.constant dense<0.000000e+00> : vector<256x4xf32>
    %12 = tpu.matmul %9, %11, %cst_29 {dimension_numbers = #tpu.dot_dimension_numbers<[1], [0], [0], [1], [0, 0, 1, 1], [], []>} : vector<256x4xf32>, vector<4x4xf32>, vector<256x4xf32> -> vector<256x4xf32>
    %c0_30 = arith.constant 0 : index
    %c0_31 = arith.constant 0 : index
    %13 = vector.load %arg8[%c0_30, %c0_31] : memref<256x4xf32, #tpu.memory_space<vmem>>, vector<256x4xf32>
    tpu.vector_store %arg8[%c0_30, %c0_31], %12 {strides = array<i32>} : memref<256x4xf32, #tpu.memory_space<vmem>>, vector<256x4xf32>,
    %c0_32 = arith.constant 0 : index
    %c0_33 = arith.constant 0 : index
    %c1_34 = arith.constant 1 : index
    %c0_35 = arith.constant 0 : index
    %14 = vector.load %arg7[%c0_32, %c0_33, %c1_34, %c0_35] : memref<1x18x18x4xf32, #tpu.memory_space<vmem>>, vector<1x16x16x4xf32>
    %15 = vector.shape_cast %14 : vector<1x16x16x4xf32> to vector<256x4xf32>
    %c1_36 = arith.constant 1 : index
    %c0_37 = arith.constant 0 : index
    %c0_38 = arith.constant 0 : index
    %16 = vector.load %arg2[%c1_36, %c0_37, %c0_38] : memref<9x4x4xf32, #tpu.memory_space<vmem>>, vector<1x4x4xf32>
    %17 = vector.shape_cast %16 : vector<1x4x4xf32> to vector<4x4xf32>
    %cst_39 = arith.constant dense<0.000000e+00> : vector<256x4xf32>
    %18 = tpu.matmul %15, %17, %cst_39 {dimension_numbers = #tpu.dot_dimension_numbers<[1], [0], [0], [1], [0, 0, 1, 1], [], []>} : vector<256x4xf32>, vector<4x4xf32>, vector<256x4xf32> -> vector<256x4xf32>
    %c0_40 = arith.constant 0 : index
    %c0_41 = arith.constant 0 : index
    %19 = vector.load %arg8[%c0_40, %c0_41] : memref<256x4xf32, #tpu.memory_space<vmem>>, vector<256x4xf32>
    %20 = arith.addf %19, %18 : vector<256x4xf32>
    %c0_42 = arith.constant 0 : index
    %c0_43 = arith.constant 0 : index
    %21 = vector.load %arg8[%c0_42, %c0_43] : memref<256x4xf32, #tpu.memory_space<vmem>>, vector<256x4xf32>
    tpu.vector_store %arg8[%c0_42, %c0_43], %20 {strides = array<i32>} : memref<256x4xf32, #tpu.memory_space<vmem>>, vector<256x4xf32>,
    %c0_44 = arith.constant 0 : index
    %c0_45 = arith.constant 0 : index
    %c2 = arith.constant 2 : index
    %c0_46 = arith.constant 0 : index
    %22 = vector.load %arg7[%c0_44, %c0_45, %c2, %c0_46] : memref<1x18x18x4xf32, #tpu.memory_space<vmem>>, vector<1x16x16x4xf32>
    %23 = vector.shape_cast %22 : vector<1x16x16x4xf32> to vector<256x4xf32>
    %c2_47 = arith.constant 2 : index
    %c0_48 = arith.constant 0 : index
    %c0_49 = arith.constant 0 : index
    %24 = vector.load %arg2[%c2_47, %c0_48, %c0_49] : memref<9x4x4xf32, #tpu.memory_space<vmem>>, vector<1x4x4xf32>
    %25 = vector.shape_cast %24 : vector<1x4x4xf32> to vector<4x4xf32>
    %cst_50 = arith.constant dense<0.000000e+00> : vector<256x4xf32>
    %26 = tpu.matmul %23, %25, %cst_50 {dimension_numbers = #tpu.dot_dimension_numbers<[1], [0], [0], [1], [0, 0, 1, 1], [], []>} : vector<256x4xf32>, vector<4x4xf32>, vector<256x4xf32> -> vector<256x4xf32>
    %c0_51 = arith.constant 0 : index
    %c0_52 = arith.constant 0 : index
    %27 = vector.load %arg8[%c0_51, %c0_52] : memref<256x4xf32, #tpu.memory_space<vmem>>, vector<256x4xf32>
    %28 = arith.addf %27, %26 : vector<256x4xf32>
    %c0_53 = arith.constant 0 : index
    %c0_54 = arith.constant 0 : index
    %29 = vector.load %arg8[%c0_53, %c0_54] : memref<256x4xf32, #tpu.memory_space<vmem>>, vector<256x4xf32>
    tpu.vector_store %arg8[%c0_53, %c0_54], %28 {strides = array<i32>} : memref<256x4xf32, #tpu.memory_space<vmem>>, vector<256x4xf32>,
    %c0_55 = arith.constant 0 : index
    %c1_56 = arith.constant 1 : index
    %c0_57 = arith.constant 0 : index
    %c0_58 = arith.constant 0 : index
    %30 = vector.load %arg7[%c0_55, %c1_56, %c0_57, %c0_58] : memref<1x18x18x4xf32, #tpu.memory_space<vmem>>, vector<1x16x16x4xf32>
    %31 = vector.shape_cast %30 : vector<1x16x16x4xf32> to vector<256x4xf32>
    %c3 = arith.constant 3 : index
    %c0_59 = arith.constant 0 : index
    %c0_60 = arith.constant 0 : index
    %32 = vector.load %arg2[%c3, %c0_59, %c0_60] : memref<9x4x4xf32, #tpu.memory_space<vmem>>, vector<1x4x4xf32>
    %33 = vector.shape_cast %32 : vector<1x4x4xf32> to vector<4x4xf32>
    %cst_61 = arith.constant dense<0.000000e+00> : vector<256x4xf32>
    %34 = tpu.matmul %31, %33, %cst_61 {dimension_numbers = #tpu.dot_dimension_numbers<[1], [0], [0], [1], [0, 0, 1, 1], [], []>} : vector<256x4xf32>, vector<4x4xf32>, vector<256x4xf32> -> vector<256x4xf32>
    %c0_62 = arith.constant 0 : index
    %c0_63 = arith.constant 0 : index
    %35 = vector.load %arg8[%c0_62, %c0_63] : memref<256x4xf32, #tpu.memory_space<vmem>>, vector<256x4xf32>
    %36 = arith.addf %35, %34 : vector<256x4xf32>
    %c0_64 = arith.constant 0 : index
    %c0_65 = arith.constant 0 : index
    %37 = vector.load %arg8[%c0_64, %c0_65] : memref<256x4xf32, #tpu.memory_space<vmem>>, vector<256x4xf32>
    tpu.vector_store %arg8[%c0_64, %c0_65], %36 {strides = array<i32>} : memref<256x4xf32, #tpu.memory_space<vmem>>, vector<256x4xf32>,
    %c0_66 = arith.constant 0 : index
    %c1_67 = arith.constant 1 : index
    %c1_68 = arith.constant 1 : index
    %c0_69 = arith.constant 0 : index
    %38 = vector.load %arg7[%c0_66, %c1_67, %c1_68, %c0_69] : memref<1x18x18x4xf32, #tpu.memory_space<vmem>>, vector<1x16x16x4xf32>
    %39 = vector.shape_cast %38 : vector<1x16x16x4xf32> to vector<256x4xf32>
    %c4 = arith.constant 4 : index
    %c0_70 = arith.constant 0 : index
    %c0_71 = arith.constant 0 : index
    %40 = vector.load %arg2[%c4, %c0_70, %c0_71] : memref<9x4x4xf32, #tpu.memory_space<vmem>>, vector<1x4x4xf32>
    %41 = vector.shape_cast %40 : vector<1x4x4xf32> to vector<4x4xf32>
    %cst_72 = arith.constant dense<0.000000e+00> : vector<256x4xf32>
    %42 = tpu.matmul %39, %41, %cst_72 {dimension_numbers = #tpu.dot_dimension_numbers<[1], [0], [0], [1], [0, 0, 1, 1], [], []>} : vector<256x4xf32>, vector<4x4xf32>, vector<256x4xf32> -> vector<256x4xf32>
    %c0_73 = arith.constant 0 : index
    %c0_74 = arith.constant 0 : index
    %43 = vector.load %arg8[%c0_73, %c0_74] : memref<256x4xf32, #tpu.memory_space<vmem>>, vector<256x4xf32>
    %44 = arith.addf %43, %42 : vector<256x4xf32>
    %c0_75 = arith.constant 0 : index
    %c0_76 = arith.constant 0 : index
    %45 = vector.load %arg8[%c0_75, %c0_76] : memref<256x4xf32, #tpu.memory_space<vmem>>, vector<256x4xf32>
    tpu.vector_store %arg8[%c0_75, %c0_76], %44 {strides = array<i32>} : memref<256x4xf32, #tpu.memory_space<vmem>>, vector<256x4xf32>,
    %c0_77 = arith.constant 0 : index
    %c1_78 = arith.constant 1 : index
    %c2_79 = arith.constant 2 : index
    %c0_80 = arith.constant 0 : index
    %46 = vector.load %arg7[%c0_77, %c1_78, %c2_79, %c0_80] : memref<1x18x18x4xf32, #tpu.memory_space<vmem>>, vector<1x16x16x4xf32>
    %47 = vector.shape_cast %46 : vector<1x16x16x4xf32> to vector<256x4xf32>
    %c5 = arith.constant 5 : index
    %c0_81 = arith.constant 0 : index
    %c0_82 = arith.constant 0 : index
    %48 = vector.load %arg2[%c5, %c0_81, %c0_82] : memref<9x4x4xf32, #tpu.memory_space<vmem>>, vector<1x4x4xf32>
    %49 = vector.shape_cast %48 : vector<1x4x4xf32> to vector<4x4xf32>
    %cst_83 = arith.constant dense<0.000000e+00> : vector<256x4xf32>
    %50 = tpu.matmul %47, %49, %cst_83 {dimension_numbers = #tpu.dot_dimension_numbers<[1], [0], [0], [1], [0, 0, 1, 1], [], []>} : vector<256x4xf32>, vector<4x4xf32>, vector<256x4xf32> -> vector<256x4xf32>
    %c0_84 = arith.constant 0 : index
    %c0_85 = arith.constant 0 : index
    %51 = vector.load %arg8[%c0_84, %c0_85] : memref<256x4xf32, #tpu.memory_space<vmem>>, vector<256x4xf32>
    %52 = arith.addf %51, %50 : vector<256x4xf32>
    %c0_86 = arith.constant 0 : index
    %c0_87 = arith.constant 0 : index
    %53 = vector.load %arg8[%c0_86, %c0_87] : memref<256x4xf32, #tpu.memory_space<vmem>>, vector<256x4xf32>
    tpu.vector_store %arg8[%c0_86, %c0_87], %52 {strides = array<i32>} : memref<256x4xf32, #tpu.memory_space<vmem>>, vector<256x4xf32>,
    %c0_88 = arith.constant 0 : index
    %c2_89 = arith.constant 2 : index
    %c0_90 = arith.constant 0 : index
    %c0_91 = arith.constant 0 : index
    %54 = vector.load %arg7[%c0_88, %c2_89, %c0_90, %c0_91] : memref<1x18x18x4xf32, #tpu.memory_space<vmem>>, vector<1x16x16x4xf32>
    %55 = vector.shape_cast %54 : vector<1x16x16x4xf32> to vector<256x4xf32>
    %c6 = arith.constant 6 : index
    %c0_92 = arith.constant 0 : index
    %c0_93 = arith.constant 0 : index
    %56 = vector.load %arg2[%c6, %c0_92, %c0_93] : memref<9x4x4xf32, #tpu.memory_space<vmem>>, vector<1x4x4xf32>
    %57 = vector.shape_cast %56 : vector<1x4x4xf32> to vector<4x4xf32>
    %cst_94 = arith.constant dense<0.000000e+00> : vector<256x4xf32>
    %58 = tpu.matmul %55, %57, %cst_94 {dimension_numbers = #tpu.dot_dimension_numbers<[1], [0], [0], [1], [0, 0, 1, 1], [], []>} : vector<256x4xf32>, vector<4x4xf32>, vector<256x4xf32> -> vector<256x4xf32>
    %c0_95 = arith.constant 0 : index
    %c0_96 = arith.constant 0 : index
    %59 = vector.load %arg8[%c0_95, %c0_96] : memref<256x4xf32, #tpu.memory_space<vmem>>, vector<256x4xf32>
    %60 = arith.addf %59, %58 : vector<256x4xf32>
    %c0_97 = arith.constant 0 : index
    %c0_98 = arith.constant 0 : index
    %61 = vector.load %arg8[%c0_97, %c0_98] : memref<256x4xf32, #tpu.memory_space<vmem>>, vector<256x4xf32>
    tpu.vector_store %arg8[%c0_97, %c0_98], %60 {strides = array<i32>} : memref<256x4xf32, #tpu.memory_space<vmem>>, vector<256x4xf32>,
    %c0_99 = arith.constant 0 : index
    %c2_100 = arith.constant 2 : index
    %c1_101 = arith.constant 1 : index
    %c0_102 = arith.constant 0 : index
    %62 = vector.load %arg7[%c0_99, %c2_100, %c1_101, %c0_102] : memref<1x18x18x4xf32, #tpu.memory_space<vmem>>, vector<1x16x16x4xf32>
    %63 = vector.shape_cast %62 : vector<1x16x16x4xf32> to vector<256x4xf32>
    %c7 = arith.constant 7 : index
    %c0_103 = arith.constant 0 : index
    %c0_104 = arith.constant 0 : index
    %64 = vector.load %arg2[%c7, %c0_103, %c0_104] : memref<9x4x4xf32, #tpu.memory_space<vmem>>, vector<1x4x4xf32>
    %65 = vector.shape_cast %64 : vector<1x4x4xf32> to vector<4x4xf32>
    %cst_105 = arith.constant dense<0.000000e+00> : vector<256x4xf32>
    %66 = tpu.matmul %63, %65, %cst_105 {dimension_numbers = #tpu.dot_dimension_numbers<[1], [0], [0], [1], [0, 0, 1, 1], [], []>} : vector<256x4xf32>, vector<4x4xf32>, vector<256x4xf32> -> vector<256x4xf32>
    %c0_106 = arith.constant 0 : index
    %c0_107 = arith.constant 0 : index
    %67 = vector.load %arg8[%c0_106, %c0_107] : memref<256x4xf32, #tpu.memory_space<vmem>>, vector<256x4xf32>
    %68 = arith.addf %67, %66 : vector<256x4xf32>
    %c0_108 = arith.constant 0 : index
    %c0_109 = arith.constant 0 : index
    %69 = vector.load %arg8[%c0_108, %c0_109] : memref<256x4xf32, #tpu.memory_space<vmem>>, vector<256x4xf32>
    tpu.vector_store %arg8[%c0_108, %c0_109], %68 {strides = array<i32>} : memref<256x4xf32, #tpu.memory_space<vmem>>, vector<256x4xf32>,
    %c0_110 = arith.constant 0 : index
    %c2_111 = arith.constant 2 : index
    %c2_112 = arith.constant 2 : index
    %c0_113 = arith.constant 0 : index
    %70 = vector.load %arg7[%c0_110, %c2_111, %c2_112, %c0_113] : memref<1x18x18x4xf32, #tpu.memory_space<vmem>>, vector<1x16x16x4xf32>
    %71 = vector.shape_cast %70 : vector<1x16x16x4xf32> to vector<256x4xf32>
    %c8 = arith.constant 8 : index
    %c0_114 = arith.constant 0 : index
    %c0_115 = arith.constant 0 : index
    %72 = vector.load %arg2[%c8, %c0_114, %c0_115] : memref<9x4x4xf32, #tpu.memory_space<vmem>>, vector<1x4x4xf32>
    %73 = vector.shape_cast %72 : vector<1x4x4xf32> to vector<4x4xf32>
    %cst_116 = arith.constant dense<0.000000e+00> : vector<256x4xf32>
    %74 = tpu.matmul %71, %73, %cst_116 {dimension_numbers = #tpu.dot_dimension_numbers<[1], [0], [0], [1], [0, 0, 1, 1], [], []>} : vector<256x4xf32>, vector<4x4xf32>, vector<256x4xf32> -> vector<256x4xf32>
    %c0_117 = arith.constant 0 : index
    %c0_118 = arith.constant 0 : index
    %75 = vector.load %arg8[%c0_117, %c0_118] : memref<256x4xf32, #tpu.memory_space<vmem>>, vector<256x4xf32>
    %76 = arith.addf %75, %74 : vector<256x4xf32>
    %c0_119 = arith.constant 0 : index
    %c0_120 = arith.constant 0 : index
    %77 = vector.load %arg8[%c0_119, %c0_120] : memref<256x4xf32, #tpu.memory_space<vmem>>, vector<256x4xf32>
    tpu.vector_store %arg8[%c0_119, %c0_120], %76 {strides = array<i32>} : memref<256x4xf32, #tpu.memory_space<vmem>>, vector<256x4xf32>,
    %c0_121 = arith.constant 0 : index
    %c0_122 = arith.constant 0 : index
    %78 = vector.load %arg8[%c0_121, %c0_122] : memref<256x4xf32, #tpu.memory_space<vmem>>, vector<256x4xf32>
    %79 = vector.shape_cast %78 : vector<256x4xf32> to vector<1x16x16x4xf32>
    %c0_123 = arith.constant 0 : index
    %c0_124 = arith.constant 0 : index
    %80 = vector.load %arg3[%c0_123, %c0_124] : memref<1x4xf32, #tpu.memory_space<vmem>>, vector<1x4xf32>
    %81 = vector.shape_cast %80 : vector<1x4xf32> to vector<1x1x1x4xf32>
    %82 = vector.broadcast %81 : vector<1x1x1x4xf32> to vector<1x16x16x4xf32>
    %83 = arith.addf %79, %82 : vector<1x16x16x4xf32>
    %cst_125 = arith.constant 0.000000e+00 : f32
    %84 = vector.broadcast %cst_125 : f32 to vector<1x16x16x4xf32>
    %85 = arith.maximumf %83, %84 : vector<1x16x16x4xf32>
    %c0_126 = arith.constant 0 : index
    %c1_127 = arith.constant 1 : index
    %c1_128 = arith.constant 1 : index
    %c0_129 = arith.constant 0 : index
    %86 = vector.load %arg7[%c0_126, %c1_127, %c1_128, %c0_129] : memref<1x18x18x4xf32, #tpu.memory_space<vmem>>, vector<1x16x16x4xf32>
    tpu.vector_store %arg7[%c0_126, %c1_127, %c1_128, %c0_129], %85 {strides = array<i32>} : memref<1x18x18x4xf32, #tpu.memory_space<vmem>>, vector<1x16x16x4xf32>,
    %c0_130 = arith.constant 0 : index
    %c0_131 = arith.constant 0 : index
    %c0_132 = arith.constant 0 : index
    %c0_133 = arith.constant 0 : index
    %87 = vector.load %arg7[%c0_130, %c0_131, %c0_132, %c0_133] : memref<1x18x18x4xf32, #tpu.memory_space<vmem>>, vector<1x16x16x4xf32>
    %88 = vector.shape_cast %87 : vector<1x16x16x4xf32> to vector<256x4xf32>
    %c0_134 = arith.constant 0 : index
    %c0_135 = arith.constant 0 : index
    %c0_136 = arith.constant 0 : index
    %89 = vector.load %arg4[%c0_134, %c0_135, %c0_136] : memref<9x4x4xf32, #tpu.memory_space<vmem>>, vector<1x4x4xf32>
    %90 = vector.shape_cast %89 : vector<1x4x4xf32> to vector<4x4xf32>
    %cst_137 = arith.constant dense<0.000000e+00> : vector<256x4xf32>
    %91 = tpu.matmul %88, %90, %cst_137 {dimension_numbers = #tpu.dot_dimension_numbers<[1], [0], [0], [1], [0, 0, 1, 1], [], []>} : vector<256x4xf32>, vector<4x4xf32>, vector<256x4xf32> -> vector<256x4xf32>
    %c0_138 = arith.constant 0 : index
    %c0_139 = arith.constant 0 : index
    %92 = vector.load %arg8[%c0_138, %c0_139] : memref<256x4xf32, #tpu.memory_space<vmem>>, vector<256x4xf32>
    tpu.vector_store %arg8[%c0_138, %c0_139], %91 {strides = array<i32>} : memref<256x4xf32, #tpu.memory_space<vmem>>, vector<256x4xf32>,
    %c0_140 = arith.constant 0 : index
    %c0_141 = arith.constant 0 : index
    %c1_142 = arith.constant 1 : index
    %c0_143 = arith.constant 0 : index
    %93 = vector.load %arg7[%c0_140, %c0_141, %c1_142, %c0_143] : memref<1x18x18x4xf32, #tpu.memory_space<vmem>>, vector<1x16x16x4xf32>
    %94 = vector.shape_cast %93 : vector<1x16x16x4xf32> to vector<256x4xf32>
    %c1_144 = arith.constant 1 : index
    %c0_145 = arith.constant 0 : index
    %c0_146 = arith.constant 0 : index
    %95 = vector.load %arg4[%c1_144, %c0_145, %c0_146] : memref<9x4x4xf32, #tpu.memory_space<vmem>>, vector<1x4x4xf32>
    %96 = vector.shape_cast %95 : vector<1x4x4xf32> to vector<4x4xf32>
    %cst_147 = arith.constant dense<0.000000e+00> : vector<256x4xf32>
    %97 = tpu.matmul %94, %96, %cst_147 {dimension_numbers = #tpu.dot_dimension_numbers<[1], [0], [0], [1], [0, 0, 1, 1], [], []>} : vector<256x4xf32>, vector<4x4xf32>, vector<256x4xf32> -> vector<256x4xf32>
    %c0_148 = arith.constant 0 : index
    %c0_149 = arith.constant 0 : index
    %98 = vector.load %arg8[%c0_148, %c0_149] : memref<256x4xf32, #tpu.memory_space<vmem>>, vector<256x4xf32>
    %99 = arith.addf %98, %97 : vector<256x4xf32>
    %c0_150 = arith.constant 0 : index
    %c0_151 = arith.constant 0 : index
    %100 = vector.load %arg8[%c0_150, %c0_151] : memref<256x4xf32, #tpu.memory_space<vmem>>, vector<256x4xf32>
    tpu.vector_store %arg8[%c0_150, %c0_151], %99 {strides = array<i32>} : memref<256x4xf32, #tpu.memory_space<vmem>>, vector<256x4xf32>,
    %c0_152 = arith.constant 0 : index
    %c0_153 = arith.constant 0 : index
    %c2_154 = arith.constant 2 : index
    %c0_155 = arith.constant 0 : index
    %101 = vector.load %arg7[%c0_152, %c0_153, %c2_154, %c0_155] : memref<1x18x18x4xf32, #tpu.memory_space<vmem>>, vector<1x16x16x4xf32>
    %102 = vector.shape_cast %101 : vector<1x16x16x4xf32> to vector<256x4xf32>
    %c2_156 = arith.constant 2 : index
    %c0_157 = arith.constant 0 : index
    %c0_158 = arith.constant 0 : index
    %103 = vector.load %arg4[%c2_156, %c0_157, %c0_158] : memref<9x4x4xf32, #tpu.memory_space<vmem>>, vector<1x4x4xf32>
    %104 = vector.shape_cast %103 : vector<1x4x4xf32> to vector<4x4xf32>
    %cst_159 = arith.constant dense<0.000000e+00> : vector<256x4xf32>
    %105 = tpu.matmul %102, %104, %cst_159 {dimension_numbers = #tpu.dot_dimension_numbers<[1], [0], [0], [1], [0, 0, 1, 1], [], []>} : vector<256x4xf32>, vector<4x4xf32>, vector<256x4xf32> -> vector<256x4xf32>
    %c0_160 = arith.constant 0 : index
    %c0_161 = arith.constant 0 : index
    %106 = vector.load %arg8[%c0_160, %c0_161] : memref<256x4xf32, #tpu.memory_space<vmem>>, vector<256x4xf32>
    %107 = arith.addf %106, %105 : vector<256x4xf32>
    %c0_162 = arith.constant 0 : index
    %c0_163 = arith.constant 0 : index
    %108 = vector.load %arg8[%c0_162, %c0_163] : memref<256x4xf32, #tpu.memory_space<vmem>>, vector<256x4xf32>
    tpu.vector_store %arg8[%c0_162, %c0_163], %107 {strides = array<i32>} : memref<256x4xf32, #tpu.memory_space<vmem>>, vector<256x4xf32>,
    %c0_164 = arith.constant 0 : index
    %c1_165 = arith.constant 1 : index
    %c0_166 = arith.constant 0 : index
    %c0_167 = arith.constant 0 : index
    %109 = vector.load %arg7[%c0_164, %c1_165, %c0_166, %c0_167] : memref<1x18x18x4xf32, #tpu.memory_space<vmem>>, vector<1x16x16x4xf32>
    %110 = vector.shape_cast %109 : vector<1x16x16x4xf32> to vector<256x4xf32>
    %c3_168 = arith.constant 3 : index
    %c0_169 = arith.constant 0 : index
    %c0_170 = arith.constant 0 : index
    %111 = vector.load %arg4[%c3_168, %c0_169, %c0_170] : memref<9x4x4xf32, #tpu.memory_space<vmem>>, vector<1x4x4xf32>
    %112 = vector.shape_cast %111 : vector<1x4x4xf32> to vector<4x4xf32>
    %cst_171 = arith.constant dense<0.000000e+00> : vector<256x4xf32>
    %113 = tpu.matmul %110, %112, %cst_171 {dimension_numbers = #tpu.dot_dimension_numbers<[1], [0], [0], [1], [0, 0, 1, 1], [], []>} : vector<256x4xf32>, vector<4x4xf32>, vector<256x4xf32> -> vector<256x4xf32>
    %c0_172 = arith.constant 0 : index
    %c0_173 = arith.constant 0 : index
    %114 = vector.load %arg8[%c0_172, %c0_173] : memref<256x4xf32, #tpu.memory_space<vmem>>, vector<256x4xf32>
    %115 = arith.addf %114, %113 : vector<256x4xf32>
    %c0_174 = arith.constant 0 : index
    %c0_175 = arith.constant 0 : index
    %116 = vector.load %arg8[%c0_174, %c0_175] : memref<256x4xf32, #tpu.memory_space<vmem>>, vector<256x4xf32>
    tpu.vector_store %arg8[%c0_174, %c0_175], %115 {strides = array<i32>} : memref<256x4xf32, #tpu.memory_space<vmem>>, vector<256x4xf32>,
    %c0_176 = arith.constant 0 : index
    %c1_177 = arith.constant 1 : index
    %c1_178 = arith.constant 1 : index
    %c0_179 = arith.constant 0 : index
    %117 = vector.load %arg7[%c0_176, %c1_177, %c1_178, %c0_179] : memref<1x18x18x4xf32, #tpu.memory_space<vmem>>, vector<1x16x16x4xf32>
    %118 = vector.shape_cast %117 : vector<1x16x16x4xf32> to vector<256x4xf32>
    %c4_180 = arith.constant 4 : index
    %c0_181 = arith.constant 0 : index
    %c0_182 = arith.constant 0 : index
    %119 = vector.load %arg4[%c4_180, %c0_181, %c0_182] : memref<9x4x4xf32, #tpu.memory_space<vmem>>, vector<1x4x4xf32>
    %120 = vector.shape_cast %119 : vector<1x4x4xf32> to vector<4x4xf32>
    %cst_183 = arith.constant dense<0.000000e+00> : vector<256x4xf32>
    %121 = tpu.matmul %118, %120, %cst_183 {dimension_numbers = #tpu.dot_dimension_numbers<[1], [0], [0], [1], [0, 0, 1, 1], [], []>} : vector<256x4xf32>, vector<4x4xf32>, vector<256x4xf32> -> vector<256x4xf32>
    %c0_184 = arith.constant 0 : index
    %c0_185 = arith.constant 0 : index
    %122 = vector.load %arg8[%c0_184, %c0_185] : memref<256x4xf32, #tpu.memory_space<vmem>>, vector<256x4xf32>
    %123 = arith.addf %122, %121 : vector<256x4xf32>
    %c0_186 = arith.constant 0 : index
    %c0_187 = arith.constant 0 : index
    %124 = vector.load %arg8[%c0_186, %c0_187] : memref<256x4xf32, #tpu.memory_space<vmem>>, vector<256x4xf32>
    tpu.vector_store %arg8[%c0_186, %c0_187], %123 {strides = array<i32>} : memref<256x4xf32, #tpu.memory_space<vmem>>, vector<256x4xf32>,
    %c0_188 = arith.constant 0 : index
    %c1_189 = arith.constant 1 : index
    %c2_190 = arith.constant 2 : index
    %c0_191 = arith.constant 0 : index
    %125 = vector.load %arg7[%c0_188, %c1_189, %c2_190, %c0_191] : memref<1x18x18x4xf32, #tpu.memory_space<vmem>>, vector<1x16x16x4xf32>
    %126 = vector.shape_cast %125 : vector<1x16x16x4xf32> to vector<256x4xf32>
    %c5_192 = arith.constant 5 : index
    %c0_193 = arith.constant 0 : index
    %c0_194 = arith.constant 0 : index
    %127 = vector.load %arg4[%c5_192, %c0_193, %c0_194] : memref<9x4x4xf32, #tpu.memory_space<vmem>>, vector<1x4x4xf32>
    %128 = vector.shape_cast %127 : vector<1x4x4xf32> to vector<4x4xf32>
    %cst_195 = arith.constant dense<0.000000e+00> : vector<256x4xf32>
    %129 = tpu.matmul %126, %128, %cst_195 {dimension_numbers = #tpu.dot_dimension_numbers<[1], [0], [0], [1], [0, 0, 1, 1], [], []>} : vector<256x4xf32>, vector<4x4xf32>, vector<256x4xf32> -> vector<256x4xf32>
    %c0_196 = arith.constant 0 : index
    %c0_197 = arith.constant 0 : index
    %130 = vector.load %arg8[%c0_196, %c0_197] : memref<256x4xf32, #tpu.memory_space<vmem>>, vector<256x4xf32>
    %131 = arith.addf %130, %129 : vector<256x4xf32>
    %c0_198 = arith.constant 0 : index
    %c0_199 = arith.constant 0 : index
    %132 = vector.load %arg8[%c0_198, %c0_199] : memref<256x4xf32, #tpu.memory_space<vmem>>, vector<256x4xf32>
    tpu.vector_store %arg8[%c0_198, %c0_199], %131 {strides = array<i32>} : memref<256x4xf32, #tpu.memory_space<vmem>>, vector<256x4xf32>,
    %c0_200 = arith.constant 0 : index
    %c2_201 = arith.constant 2 : index
    %c0_202 = arith.constant 0 : index
    %c0_203 = arith.constant 0 : index
    %133 = vector.load %arg7[%c0_200, %c2_201, %c0_202, %c0_203] : memref<1x18x18x4xf32, #tpu.memory_space<vmem>>, vector<1x16x16x4xf32>
    %134 = vector.shape_cast %133 : vector<1x16x16x4xf32> to vector<256x4xf32>
    %c6_204 = arith.constant 6 : index
    %c0_205 = arith.constant 0 : index
    %c0_206 = arith.constant 0 : index
    %135 = vector.load %arg4[%c6_204, %c0_205, %c0_206] : memref<9x4x4xf32, #tpu.memory_space<vmem>>, vector<1x4x4xf32>
    %136 = vector.shape_cast %135 : vector<1x4x4xf32> to vector<4x4xf32>
    %cst_207 = arith.constant dense<0.000000e+00> : vector<256x4xf32>
    %137 = tpu.matmul %134, %136, %cst_207 {dimension_numbers = #tpu.dot_dimension_numbers<[1], [0], [0], [1], [0, 0, 1, 1], [], []>} : vector<256x4xf32>, vector<4x4xf32>, vector<256x4xf32> -> vector<256x4xf32>
    %c0_208 = arith.constant 0 : index
    %c0_209 = arith.constant 0 : index
    %138 = vector.load %arg8[%c0_208, %c0_209] : memref<256x4xf32, #tpu.memory_space<vmem>>, vector<256x4xf32>
    %139 = arith.addf %138, %137 : vector<256x4xf32>
    %c0_210 = arith.constant 0 : index
    %c0_211 = arith.constant 0 : index
    %140 = vector.load %arg8[%c0_210, %c0_211] : memref<256x4xf32, #tpu.memory_space<vmem>>, vector<256x4xf32>
    tpu.vector_store %arg8[%c0_210, %c0_211], %139 {strides = array<i32>} : memref<256x4xf32, #tpu.memory_space<vmem>>, vector<256x4xf32>,
    %c0_212 = arith.constant 0 : index
    %c2_213 = arith.constant 2 : index
    %c1_214 = arith.constant 1 : index
    %c0_215 = arith.constant 0 : index
    %141 = vector.load %arg7[%c0_212, %c2_213, %c1_214, %c0_215] : memref<1x18x18x4xf32, #tpu.memory_space<vmem>>, vector<1x16x16x4xf32>
    %142 = vector.shape_cast %141 : vector<1x16x16x4xf32> to vector<256x4xf32>
    %c7_216 = arith.constant 7 : index
    %c0_217 = arith.constant 0 : index
    %c0_218 = arith.constant 0 : index
    %143 = vector.load %arg4[%c7_216, %c0_217, %c0_218] : memref<9x4x4xf32, #tpu.memory_space<vmem>>, vector<1x4x4xf32>
    %144 = vector.shape_cast %143 : vector<1x4x4xf32> to vector<4x4xf32>
    %cst_219 = arith.constant dense<0.000000e+00> : vector<256x4xf32>
    %145 = tpu.matmul %142, %144, %cst_219 {dimension_numbers = #tpu.dot_dimension_numbers<[1], [0], [0], [1], [0, 0, 1, 1], [], []>} : vector<256x4xf32>, vector<4x4xf32>, vector<256x4xf32> -> vector<256x4xf32>
    %c0_220 = arith.constant 0 : index
    %c0_221 = arith.constant 0 : index
    %146 = vector.load %arg8[%c0_220, %c0_221] : memref<256x4xf32, #tpu.memory_space<vmem>>, vector<256x4xf32>
    %147 = arith.addf %146, %145 : vector<256x4xf32>
    %c0_222 = arith.constant 0 : index
    %c0_223 = arith.constant 0 : index
    %148 = vector.load %arg8[%c0_222, %c0_223] : memref<256x4xf32, #tpu.memory_space<vmem>>, vector<256x4xf32>
    tpu.vector_store %arg8[%c0_222, %c0_223], %147 {strides = array<i32>} : memref<256x4xf32, #tpu.memory_space<vmem>>, vector<256x4xf32>,
    %c0_224 = arith.constant 0 : index
    %c2_225 = arith.constant 2 : index
    %c2_226 = arith.constant 2 : index
    %c0_227 = arith.constant 0 : index
    %149 = vector.load %arg7[%c0_224, %c2_225, %c2_226, %c0_227] : memref<1x18x18x4xf32, #tpu.memory_space<vmem>>, vector<1x16x16x4xf32>
    %150 = vector.shape_cast %149 : vector<1x16x16x4xf32> to vector<256x4xf32>
    %c8_228 = arith.constant 8 : index
    %c0_229 = arith.constant 0 : index
    %c0_230 = arith.constant 0 : index
    %151 = vector.load %arg4[%c8_228, %c0_229, %c0_230] : memref<9x4x4xf32, #tpu.memory_space<vmem>>, vector<1x4x4xf32>
    %152 = vector.shape_cast %151 : vector<1x4x4xf32> to vector<4x4xf32>
    %cst_231 = arith.constant dense<0.000000e+00> : vector<256x4xf32>
    %153 = tpu.matmul %150, %152, %cst_231 {dimension_numbers = #tpu.dot_dimension_numbers<[1], [0], [0], [1], [0, 0, 1, 1], [], []>} : vector<256x4xf32>, vector<4x4xf32>, vector<256x4xf32> -> vector<256x4xf32>
    %c0_232 = arith.constant 0 : index
    %c0_233 = arith.constant 0 : index
    %154 = vector.load %arg8[%c0_232, %c0_233] : memref<256x4xf32, #tpu.memory_space<vmem>>, vector<256x4xf32>
    %155 = arith.addf %154, %153 : vector<256x4xf32>
    %c0_234 = arith.constant 0 : index
    %c0_235 = arith.constant 0 : index
    %156 = vector.load %arg8[%c0_234, %c0_235] : memref<256x4xf32, #tpu.memory_space<vmem>>, vector<256x4xf32>
    tpu.vector_store %arg8[%c0_234, %c0_235], %155 {strides = array<i32>} : memref<256x4xf32, #tpu.memory_space<vmem>>, vector<256x4xf32>,
    %c0_236 = arith.constant 0 : index
    %c0_237 = arith.constant 0 : index
    %157 = vector.load %arg8[%c0_236, %c0_237] : memref<256x4xf32, #tpu.memory_space<vmem>>, vector<256x4xf32>
    %158 = vector.shape_cast %157 : vector<256x4xf32> to vector<1x16x16x4xf32>
    %c0_238 = arith.constant 0 : index
    %c0_239 = arith.constant 0 : index
    %159 = vector.load %arg5[%c0_238, %c0_239] : memref<1x4xf32, #tpu.memory_space<vmem>>, vector<1x4xf32>
    %160 = vector.shape_cast %159 : vector<1x4xf32> to vector<1x1x1x4xf32>
    %161 = vector.broadcast %160 : vector<1x1x1x4xf32> to vector<1x16x16x4xf32>
    %162 = arith.addf %158, %161 : vector<1x16x16x4xf32>
    %cst_240 = arith.constant 1.000000e+00 : f32
    %163 = vector.broadcast %cst_240 : f32 to vector<1x16x16x4xf32>
    %164 = arith.mulf %162, %163 : vector<1x16x16x4xf32>
    %c0_241 = arith.constant 0 : index
    %c0_242 = arith.constant 0 : index
    %c0_243 = arith.constant 0 : index
    %c0_244 = arith.constant 0 : index
    %165 = vector.load %arg1[%c0_241, %c0_242, %c0_243, %c0_244] : memref<1x16x16x4xf32, #tpu.memory_space<vmem>>, vector<1x16x16x4xf32>
    %166 = arith.addf %164, %165 : vector<1x16x16x4xf32>
    %c0_245 = arith.constant 0 : index
    %c0_246 = arith.constant 0 : index
    %c0_247 = arith.constant 0 : index
    %c0_248 = arith.constant 0 : index
    %167 = vector.load %arg6[%c0_245, %c0_246, %c0_247, %c0_248] : memref<1x16x16x4xf32, #tpu.memory_space<vmem>>, vector<1x16x16x4xf32>
    tpu.vector_store %arg6[%c0_245, %c0_246, %c0_247, %c0_248], %166 {strides = array<i32>} : memref<1x16x16x4xf32, #tpu.memory_space<vmem>>, vector<1x16x16x4xf32>,
    return
  }
  func.func @transform_0(%arg0: i32) -> (i32, i32, i32, i32) {
    %c0_i32 = arith.constant 0 : i32
    %c0_i32_0 = arith.constant 0 : i32
    %c0_i32_1 = arith.constant 0 : i32
    %c0_i32_2 = arith.constant 0 : i32
    return %arg0, %c0_i32, %c0_i32_0, %c0_i32_1 : i32, i32, i32, i32
  }
  func.func @transform_1(%arg0: i32) -> (i32, i32, i32) {
    %c0_i32 = arith.constant 0 : i32
    %c0_i32_0 = arith.constant 0 : i32
    %c0_i32_1 = arith.constant 0 : i32
    %c0_i32_2 = arith.constant 0 : i32
    return %c0_i32, %c0_i32_0, %c0_i32_1 : i32, i32, i32
  }
  func.func @transform_2(%arg0: i32) -> (i32, i32) {
    %c0_i32 = arith.constant 0 : i32
    %c0_i32_0 = arith.constant 0 : i32
    %c0_i32_1 = arith.constant 0 : i32
    return %c0_i32, %c0_i32_0 : i32, i32
  }
  func.func @transform_3(%arg0: i32) -> (i32, i32, i32) {
    %c0_i32 = arith.constant 0 : i32
    %c0_i32_0 = arith.constant 0 : i32
    %c0_i32_1 = arith.constant 0 : i32
    %c0_i32_2 = arith.constant 0 : i32
    return %c0_i32, %c0_i32_0, %c0_i32_1 : i32, i32, i32
  }
  func.func @transform_4(%arg0: i32) -> (i32, i32) {
    %c0_i32 = arith.constant 0 : i32
    %c0_i32_0 = arith.constant 0 : i32
    %c0_i32_1 = arith.constant 0 : i32
    return %c0_i32, %c0_i32_0 : i32, i32
  }
  func.func @transform_5(%arg0: i32) -> (i32, i32, i32, i32) {
    %c0_i32 = arith.constant 0 : i32
    %c0_i32_0 = arith.constant 0 : i32
    %c0_i32_1 = arith.constant 0 : i32
    %c0_i32_2 = arith.constant 0 : i32
    return %arg0, %c0_i32, %c0_i32_0, %c0_i32_1 : i32, i32, i32, i32
  }
}

</mosaic_0001>

<llo_original>
// kernel: tpu_custom_call.1
$region0: #{tpu_custom_call.1}
  #allocation0 [shape = 'u32[]', space=smem, size = 0x4, offset = 0x4, fixed_abs, tag = 'smem constant byte address 0x4 - core index']
  #allocation1 [shape = 'u32[72,128]{1,0:T(1,128)}', space=vmem, size = 0x9000, scoped, tag = 'internal scratch']
  #allocation2 [shape = 'f32[1,18,18,4]{3,2,1,0:T(8,128)}', space=vmem, size = 0x36000, scoped, tag = 'scratch operand']
  #allocation3 [shape = 'f32[256,4]{1,0:T(8,128)}', space=vmem, size = 0x20000, scoped, tag = 'scratch operand']
  %s0 = inlined_call_operand.vmem [shape: f32[2,16,16,4], index: 0, kind: input, shape index: {}]
  %s1 = inlined_call_operand.vmem [shape: f32[9,4,4], index: 1, kind: input, shape index: {}]
  %s2 = inlined_call_operand.vmem [shape: f32[1,4], index: 2, kind: input, shape index: {}]
  %s3 = inlined_call_operand.vmem [shape: f32[9,4,4], index: 3, kind: input, shape index: {}]
  %s4 = inlined_call_operand.vmem [shape: f32[1,4], index: 4, kind: input, shape index: {}]
  %s5 = inlined_call_operand.vmem [shape: f32[2,16,16,4], index: 5, kind: output, shape index: {}]
  %s6 = sld [smem:[#allocation0]]
  $region53: #{tpu_custom_call.1} parent=0
    _
  %s8 = ssub.s32 1, %s6
  %s9 = scalar_select 0, %s8, %s6
  loop: start=0, step=1, limit=4
  $region2: #{tpu_custom_call.1} parent=0 // loop_pre_header
    _
  $region3: #{tpu_custom_call.1} parent=0 // loop_header
    %s11 = sphi 0, %s15
    %p12 = scmp.ge.s32.totalorder %s11, 4
    %s21 = sphi 0, %s23
    %s24 = sphi 0, %s21
    %s25 = sphi 0, %s24
    %s41 = sphi 0, %s25
    %s45 = sphi 0, %s45
    %s47 = sphi 0, %s45
    %s48 = sphi 0, %s47
    %s62 = sphi 0, %s48
    %s66 = sphi 0, %s66
    %s68 = sphi 0, %s66
    %s69 = sphi 0, %s68
    %s83 = sphi 0, %s69
    %s87 = sphi 0, %s87
    %s89 = sphi 0, %s87
    %s90 = sphi 0, %s89
    %s104 = sphi 0, %s90
    %s108 = sphi 0, %s108
    %s110 = sphi 0, %s108
    %s111 = sphi 0, %s110
    %s125 = sphi 0, %s111
    %s131 = sphi 0, %s133
    %s134 = sphi 0, %s131
    %s135 = sphi 0, %s134
    %s151 = sphi 0, %s135
  $region4: #{tpu_custom_call.1} parent=0 // loop_header_branch
    %14 = sbr.rel (%p12) target = $region8
  $region5: #{tpu_custom_call.1} parent=0 // loop_body
    %s16 = ssub.s32 %s11, 1
    %s17 = ssub.s32 %s11, 2
    %s18 = sadd.s32 %s11, 1
    %s19 = ssub.s32 %s11, %s18
    %p20 = scmp.eq.s32.totalorder %s19, 0
    %s22 = sadd.s32 %s21, 1
    %s23 = scalar_select %p20, %s21, %s22
    %p26 = pneg %p20
    %p27 = scmp.eq.s32.totalorder %s11, 1
    %p28 = por %p26, %p27
    %p29 = scmp.ne.s32.totalorder %s21, %s24
    %p30 = scmp.eq.s32.totalorder %s11, 0
    %p31 = por %p29, %p30
    %p32 = scmp.ne.s32.totalorder %s21, %s24
    %p33 = scmp.eq.s32.totalorder %s16, 1
    %p34 = por %p32, %p33
    %p35 = scmp.ne.s32.totalorder %s24, %s25
    %p36 = scmp.eq.s32.totalorder %s16, 0
    %p37 = por %p35, %p36
    %p38 = scmp.ne.s32.totalorder %s24, %s25
    %p39 = scmp.eq.s32.totalorder %s17, 1
    %p40 = por %p38, %p39
    %p42 = scmp.ne.s32.totalorder %s25, %s41
    %p43 = scmp.eq.s32.totalorder %s17, 0
    %p44 = por %p42, %p43
    %s46 = sadd.s32 %s45, 1
    %p49 = scmp.eq.s32.totalorder %s11, 1
    %p50 = scmp.ne.s32.totalorder %s45, %s47
    %p51 = scmp.eq.s32.totalorder %s11, 0
    %p52 = por %p50, %p51
    %p53 = scmp.ne.s32.totalorder %s45, %s47
    %p54 = scmp.eq.s32.totalorder %s16, 1
    %p55 = por %p53, %p54
    %p56 = scmp.ne.s32.totalorder %s47, %s48
    %p57 = scmp.eq.s32.totalorder %s16, 0
    %p58 = por %p56, %p57
    %p59 = scmp.ne.s32.totalorder %s47, %s48
    %p60 = scmp.eq.s32.totalorder %s17, 1
    %p61 = por %p59, %p60
    %p63 = scmp.ne.s32.totalorder %s48, %s62
    %p64 = scmp.eq.s32.totalorder %s17, 0
    %p65 = por %p63, %p64
    %s67 = sadd.s32 %s66, 1
    %p70 = scmp.eq.s32.totalorder %s11, 1
    %p71 = scmp.ne.s32.totalorder %s66, %s68
    %p72 = scmp.eq.s32.totalorder %s11, 0
    %p73 = por %p71, %p72
    %p74 = scmp.ne.s32.totalorder %s66, %s68
    %p75 = scmp.eq.s32.totalorder %s16, 1
    %p76 = por %p74, %p75
    %p77 = scmp.ne.s32.totalorder %s68, %s69
    %p78 = scmp.eq.s32.totalorder %s16, 0
    %p79 = por %p77, %p78
    %p80 = scmp.ne.s32.totalorder %s68, %s69
    %p81 = scmp.eq.s32.totalorder %s17, 1
    %p82 = por %p80, %p81
    %p84 = scmp.ne.s32.totalorder %s69, %s83
    %p85 = scmp.eq.s32.totalorder %s17, 0
    %p86 = por %p84, %p85
    %s88 = sadd.s32 %s87, 1
    %p91 = scmp.eq.s32.totalorder %s11, 1
    %p92 = scmp.ne.s32.totalorder %s87, %s89
    %p93 = scmp.eq.s32.totalorder %s11, 0
    %p94 = por %p92, %p93
    %p95 = scmp.ne.s32.totalorder %s87, %s89
    %p96 = scmp.eq.s32.totalorder %s16, 1
    %p97 = por %p95, %p96
    %p98 = scmp.ne.s32.totalorder %s89, %s90
    %p99 = scmp.eq.s32.totalorder %s16, 0
    %p100 = por %p98, %p99
    %p101 = scmp.ne.s32.totalorder %s89, %s90
    %p102 = scmp.eq.s32.totalorder %s17, 1
    %p103 = por %p101, %p102
    %p105 = scmp.ne.s32.totalorder %s90, %s104
    %p106 = scmp.eq.s32.totalorder %s17, 0
    %p107 = por %p105, %p106
    %s109 = sadd.s32 %s108, 1
    %p112 = scmp.eq.s32.totalorder %s11, 1
    %p113 = scmp.ne.s32.totalorder %s108, %s110
    %p114 = scmp.eq.s32.totalorder %s11, 0
    %p115 = por %p113, %p114
    %p116 = scmp.ne.s32.totalorder %s108, %s110
    %p117 = scmp.eq.s32.totalorder %s16, 1
    %p118 = por %p116, %p117
    %p119 = scmp.ne.s32.totalorder %s110, %s111
    %p120 = scmp.eq.s32.totalorder %s16, 0
    %p121 = por %p119, %p120
    %p122 = scmp.ne.s32.totalorder %s110, %s111
    %p123 = scmp.eq.s32.totalorder %s17, 1
    %p124 = por %p122, %p123
    %p126 = scmp.ne.s32.totalorder %s111, %s125
    %p127 = scmp.eq.s32.totalorder %s17, 0
    %p128 = por %p126, %p127
    %s129 = ssub.s32 %s11, %s18
    %p130 = scmp.eq.s32.totalorder %s129, 0
    %s132 = sadd.s32 %s131, 1
    %s133 = scalar_select %p130, %s131, %s132
    %p136 = pneg %p130
    %p137 = scmp.eq.s32.totalorder %s11, 1
    %p138 = por %p136, %p137
    %p139 = scmp.ne.s32.totalorder %s131, %s134
    %p140 = scmp.eq.s32.totalorder %s11, 0
    %p141 = por %p139, %p140
    %p142 = scmp.ne.s32.totalorder %s131, %s134
    %p143 = scmp.eq.s32.totalorder %s16, 1
    %p144 = por %p142, %p143
    %p145 = scmp.ne.s32.totalorder %s134, %s135
    %p146 = scmp.eq.s32.totalorder %s16, 0
    %p147 = por %p145, %p146
    %p148 = scmp.ne.s32.totalorder %s134, %s135
    %p149 = scmp.eq.s32.totalorder %s17, 1
    %p150 = por %p148, %p149
    %p152 = scmp.ne.s32.totalorder %s135, %s151
    %p153 = scmp.eq.s32.totalorder %s17, 0
    %p154 = por %p152, %p153
    %p155 = scmp.le.s32.totalorder 1, %s11
    %p156 = scmp.lt.s32.totalorder %s11, 3
    %p157 = pnand %p155, %p156
    %p158 = pneg %p157
    // Predicated region
    $region9: #{tpu_custom_call.1} parent=5 // pred_check
      _
    $region10: #{tpu_custom_call.1} parent=5 // pred_check_branch
      %160 = sbr.rel (%p157) target = $region12
    $region11: #{tpu_custom_call.1} parent=5 // pred_region
      %s161 = ssub.s32 %s11, 1
      // Predicated region
      $region13: #{tpu_custom_call.1} parent=11 // pred_check
        %p162 = pneg %p58
      $region14: #{tpu_custom_call.1} parent=11 // pred_check_branch
        %164 = sbr.rel (%p162) target = $region16
      $region15: #{tpu_custom_call.1} parent=11 // pred_region
        _
      $region16: #{tpu_custom_call.1} parent=11 // pred_fallthru
        _
      // Predicated region
      $region17: #{tpu_custom_call.1} parent=11 // pred_check
        %p165 = pneg %p79
      $region18: #{tpu_custom_call.1} parent=11 // pred_check_branch
        %167 = sbr.rel (%p165) target = $region20
      $region19: #{tpu_custom_call.1} parent=11 // pred_region
        _
      $region20: #{tpu_custom_call.1} parent=11 // pred_fallthru
        _
      // Predicated region
      $region21: #{tpu_custom_call.1} parent=11 // pred_check
        %p168 = pneg %p100
      $region22: #{tpu_custom_call.1} parent=11 // pred_check_branch
        %170 = sbr.rel (%p168) target = $region24
      $region23: #{tpu_custom_call.1} parent=11 // pred_region
        _
      $region24: #{tpu_custom_call.1} parent=11 // pred_fallthru
        _
      // Predicated region
      $region25: #{tpu_custom_call.1} parent=11 // pred_check
        %p171 = pneg %p121
      $region26: #{tpu_custom_call.1} parent=11 // pred_check_branch
        %173 = sbr.rel (%p171) target = $region28
      $region27: #{tpu_custom_call.1} parent=11 // pred_region
        _
      $region28: #{tpu_custom_call.1} parent=11 // pred_fallthru
        _
    $region12: #{tpu_custom_call.1} parent=5 // pred_fallthru
      _
    %p174 = scmp.lt.s32.totalorder %s11, 2
    // Predicated region
    $region29: #{tpu_custom_call.1} parent=5 // pred_check
      %p175 = pneg %p174
    $region30: #{tpu_custom_call.1} parent=5 // pred_check_branch
      %177 = sbr.rel (%p175) target = $region32
    $region31: #{tpu_custom_call.1} parent=5 // pred_region
      // Predicated region
      $region33: #{tpu_custom_call.1} parent=31 // pred_check
        %p178 = pneg %p31
      $region34: #{tpu_custom_call.1} parent=31 // pred_check_branch
        %180 = sbr.rel (%p178) target = $region36
      $region35: #{tpu_custom_call.1} parent=31 // pred_region
        %p181 = scmp.lt.s32.totalorder %s11, 1
        %s182 = scalar_select %p181, %s11, 1
        %s183 = smul.addr %s182, 32
        %s184 = smul.addr %s183, 8
        %s185 = scalar_lea.vmem %s0, %s184
      $region36: #{tpu_custom_call.1} parent=31 // pred_fallthru
        _
    $region32: #{tpu_custom_call.1} parent=5 // pred_fallthru
      _
    %p186 = scmp.le.s32.totalorder 1, %s11
    %p187 = scmp.lt.s32.totalorder %s11, 3
    %p188 = pnand %p186, %p187
    %p189 = pneg %p188
    // Predicated region
    $region37: #{tpu_custom_call.1} parent=5 // pred_check
      _
    $region38: #{tpu_custom_call.1} parent=5 // pred_check_branch
      %191 = sbr.rel (%p188) target = $region40
    $region39: #{tpu_custom_call.1} parent=5 // pred_region
      %s192 = ssub.s32 %s11, 1
      %p193 = scmp.lt.s32.totalorder %s16, 1
      %s194 = scalar_select %p193, %s16, 1
      %s195 = smul.addr %s194, 32
      %s196 = smul.addr %s195, 8
      %s197 = scalar_lea.vmem %s0, %s196
      %p198 = pneg %p37
      %p199 = pneg %p34
      %p200 = pneg %p58
      %p201 = pneg %p55
      %p202 = pneg %p79
      %p203 = pneg %p76
      %p204 = pneg %p100
      %p205 = pneg %p97
      %p206 = pneg %p121
      %p207 = pneg %p118
      %p208 = pneg %p147
      %p209 = pneg %p144
      %p210 = scmp.lt.s32.totalorder %s16, 1
      %s211 = scalar_select %p210, %s16, 1
      %s212 = smul.addr %s211, 32
      %s213 = smul.addr %s212, 8
      %s214 = scalar_lea.vmem %s5, %s213
      %p215 = scmp.lt.s32.totalorder %s16, 1
      %s216 = scalar_select %p215, %s16, 1
      %s217 = smul.addr %s216, 32
      %s218 = smul.addr %s217, 8
      %s219 = scalar_lea.vmem %s0, %s218
      %p220 = scmp.lt.s32.totalorder %s16, 1
      %s221 = scalar_select %p220, %s16, 1
      %s222 = smul.addr %s221, 32
      %s223 = smul.addr %s222, 8
      %s224 = scalar_lea.vmem %s5, %s223
      %vm225 = vcmask 24576
      %226 = vst.msk [vmem:[#allocation2] sm:$0x1] %vm225, 0.0
      %227 = vst.msk [vmem:[#allocation2 + $0x18] sm:$0x1] %vm225, 0.0
      %228 = vst.msk [vmem:[#allocation2 + $0x30] sm:$0x1] %vm225, 0.0
      %229 = vst.msk [vmem:[#allocation2 + $0x48] sm:$0x1] %vm225, 0.0
      %230 = vst.msk [vmem:[#allocation2 + $0x60] sm:$0x1] %vm225, 0.0
      %231 = vst.msk [vmem:[#allocation2 + $0x78] sm:$0x1] %vm225, 0.0
      %232 = vst.msk [vmem:[#allocation2 + $0x90] sm:$0x1] %vm225, 0.0
      %233 = vst.msk [vmem:[#allocation2 + $0xa8] sm:$0x1] %vm225, 0.0
      %234 = vst.msk [vmem:[#allocation2 + $0xc0] sm:$0x1] %vm225, 0.0
      %235 = vst.msk [vmem:[#allocation2 + $0xd8] sm:$0x1] %vm225, 0.0
      %236 = vst.msk [vmem:[#allocation2 + $0xf0] sm:$0x1] %vm225, 0.0
      %237 = vst.msk [vmem:[#allocation2 + $0x108] sm:$0x1] %vm225, 0.0
      %238 = vst.msk [vmem:[#allocation2 + $0x120] sm:$0x1] %vm225, 0.0
      %239 = vst.msk [vmem:[#allocation2 + $0x138] sm:$0x1] %vm225, 0.0
      %240 = vst.msk [vmem:[#allocation2 + $0x150] sm:$0x1] %vm225, 0.0
      %241 = vst.msk [vmem:[#allocation2 + $0x168] sm:$0x1] %vm225, 0.0
      %242 = vst.msk [vmem:[#allocation2 + $0x180] sm:$0x1] %vm225, 0.0
      %243 = vst.msk [vmem:[#allocation2 + $0x198] sm:$0x1] %vm225, 0.0
      %244 = vst.msk [vmem:[#allocation2 + $0x11] sm:$0x1] %vm225, 0.0
      %245 = vst.msk [vmem:[#allocation2 + $0x29] sm:$0x1] %vm225, 0.0
      %246 = vst.msk [vmem:[#allocation2 + $0x41] sm:$0x1] %vm225, 0.0
      %247 = vst.msk [vmem:[#allocation2 + $0x59] sm:$0x1] %vm225, 0.0
      %248 = vst.msk [vmem:[#allocation2 + $0x71] sm:$0x1] %vm225, 0.0
      %249 = vst.msk [vmem:[#allocation2 + $0x89] sm:$0x1] %vm225, 0.0
      %250 = vst.msk [vmem:[#allocation2 + $0xa1] sm:$0x1] %vm225, 0.0
      %251 = vst.msk [vmem:[#allocation2 + $0xb9] sm:$0x1] %vm225, 0.0
      %252 = vst.msk [vmem:[#allocation2 + $0xd1] sm:$0x1] %vm225, 0.0
      %253 = vst.msk [vmem:[#allocation2 + $0xe9] sm:$0x1] %vm225, 0.0
      %254 = vst.msk [vmem:[#allocation2 + $0x101] sm:$0x1] %vm225, 0.0
      %255 = vst.msk [vmem:[#allocation2 + $0x119] sm:$0x1] %vm225, 0.0
      %256 = vst.msk [vmem:[#allocation2 + $0x131] sm:$0x1] %vm225, 0.0
      %257 = vst.msk [vmem:[#allocation2 + $0x149] sm:$0x1] %vm225, 0.0
      %258 = vst.msk [vmem:[#allocation2 + $0x161] sm:$0x1] %vm225, 0.0
      %259 = vst.msk [vmem:[#allocation2 + $0x179] sm:$0x1] %vm225, 0.0
      %260 = vst.msk [vmem:[#allocation2 + $0x191] sm:$0x1] %vm225, 0.0
      %261 = vst.msk [vmem:[#allocation2 + $0x1a9] sm:$0x1] %vm225, 0.0
      %vm262 = vcmask 31744
      %263 = vst.msk [vmem:[#allocation2] sm:$0xff] %vm262, 0.0
      %264 = vst.msk [vmem:[#allocation2 + $0x8] sm:$0xff] %vm262, 0.0
      %vm265 = vcmask 25600
      %266 = vst.msk [vmem:[#allocation2 + $0x10] sm:$0x3] %vm265, 0.0
      %s267 = scalar_lea.vmem [#allocation2], 408
      %268 = vst.msk [vmem:[%s267] sm:$0xff] %vm262, 0.0
      %269 = vst.msk [vmem:[%s267 + $0x8] sm:$0xff] %vm262, 0.0
      %270 = vst.msk [vmem:[%s267 + $0x10] sm:$0x3] %vm265, 0.0
      %v271 = vld [vmem:[%s219] sm:$0xff]
      %v272 = vld [vmem:[%s219 + $0x8] sm:$0xff]
      %v273 = vld [vmem:[%s219 + $0x10] sm:$0xff]
      %v274 = vld [vmem:[%s219 + $0x18] sm:$0xff]
      %v275 = vld [vmem:[%s219 + $0x20] sm:$0xff]
      %v276 = vld [vmem:[%s219 + $0x28] sm:$0xff]
      %v277 = vld [vmem:[%s219 + $0x30] sm:$0xff]
      %v278 = vld [vmem:[%s219 + $0x38] sm:$0xff]
      %v279 = vld [vmem:[%s219 + $0x40] sm:$0xff]
      %v280 = vld [vmem:[%s219 + $0x48] sm:$0xff]
      %v281 = vld [vmem:[%s219 + $0x50] sm:$0xff]
      %v282 = vld [vmem:[%s219 + $0x58] sm:$0xff]
      %v283 = vld [vmem:[%s219 + $0x60] sm:$0xff]
      %v284 = vld [vmem:[%s219 + $0x68] sm:$0xff]
      %v285 = vld [vmem:[%s219 + $0x70] sm:$0xff]
      %v286 = vld [vmem:[%s219 + $0x78] sm:$0xff]
      %v287 = vld [vmem:[%s219 + $0x80] sm:$0xff]
      %v288 = vld [vmem:[%s219 + $0x88] sm:$0xff]
      %v289 = vld [vmem:[%s219 + $0x90] sm:$0xff]
      %v290 = vld [vmem:[%s219 + $0x98] sm:$0xff]
      %v291 = vld [vmem:[%s219 + $0xa0] sm:$0xff]
      %v292 = vld [vmem:[%s219 + $0xa8] sm:$0xff]
      %v293 = vld [vmem:[%s219 + $0xb0] sm:$0xff]
      %v294 = vld [vmem:[%s219 + $0xb8] sm:$0xff]
      %v295 = vld [vmem:[%s219 + $0xc0] sm:$0xff]
      %v296 = vld [vmem:[%s219 + $0xc8] sm:$0xff]
      %v297 = vld [vmem:[%s219 + $0xd0] sm:$0xff]
      %v298 = vld [vmem:[%s219 + $0xd8] sm:$0xff]
      %v299 = vld [vmem:[%s219 + $0xe0] sm:$0xff]
      %v300 = vld [vmem:[%s219 + $0xe8] sm:$0xff]
      %v301 = vld [vmem:[%s219 + $0xf0] sm:$0xff]
      %v302 = vld [vmem:[%s219 + $0xf8] sm:$0xff]
      %s303 = scalar_lea.vmem [#allocation2], 24
      %304 = vst.msk [vmem:[%s303 + $0x1] sm:$0xff] %vm262, %v271
      %305 = vst.msk [vmem:[%s303 + $0x9] sm:$0xff] %vm262, %v272
      %306 = vst.msk [vmem:[%s303 + $0x19] sm:$0xff] %vm262, %v273
      %307 = vst.msk [vmem:[%s303 + $0x21] sm:$0xff] %vm262, %v274
      %308 = vst.msk [vmem:[%s303 + $0x31] sm:$0xff] %vm262, %v275
      %309 = vst.msk [vmem:[%s303 + $0x39] sm:$0xff] %vm262, %v276
      %310 = vst.msk [vmem:[%s303 + $0x49] sm:$0xff] %vm262, %v277
      %311 = vst.msk [vmem:[%s303 + $0x51] sm:$0xff] %vm262, %v278
      %312 = vst.msk [vmem:[%s303 + $0x61] sm:$0xff] %vm262, %v279
      %313 = vst.msk [vmem:[%s303 + $0x69] sm:$0xff] %vm262, %v280
      %314 = vst.msk [vmem:[%s303 + $0x79] sm:$0xff] %vm262, %v281
      %315 = vst.msk [vmem:[%s303 + $0x81] sm:$0xff] %vm262, %v282
      %316 = vst.msk [vmem:[%s303 + $0x91] sm:$0xff] %vm262, %v283
      %317 = vst.msk [vmem:[%s303 + $0x99] sm:$0xff] %vm262, %v284
      %318 = vst.msk [vmem:[%s303 + $0xa9] sm:$0xff] %vm262, %v285
      %319 = vst.msk [vmem:[%s303 + $0xb1] sm:$0xff] %vm262, %v286
      %320 = vst.msk [vmem:[%s303 + $0xc1] sm:$0xff] %vm262, %v287
      %321 = vst.msk [vmem:[%s303 + $0xc9] sm:$0xff] %vm262, %v288
      %322 = vst.msk [vmem:[%s303 + $0xd9] sm:$0xff] %vm262, %v289
      %323 = vst.msk [vmem:[%s303 + $0xe1] sm:$0xff] %vm262, %v290
      %324 = vst.msk [vmem:[%s303 + $0xf1] sm:$0xff] %vm262, %v291
      %325 = vst.msk [vmem:[%s303 + $0xf9] sm:$0xff] %vm262, %v292
      %326 = vst.msk [vmem:[%s303 + $0x109] sm:$0xff] %vm262, %v293
      %327 = vst.msk [vmem:[%s303 + $0x111] sm:$0xff] %vm262, %v294
      %328 = vst.msk [vmem:[%s303 + $0x121] sm:$0xff] %vm262, %v295
      %329 = vst.msk [vmem:[%s303 + $0x129] sm:$0xff] %vm262, %v296
      %330 = vst.msk [vmem:[%s303 + $0x139] sm:$0xff] %vm262, %v297
      %331 = vst.msk [vmem:[%s303 + $0x141] sm:$0xff] %vm262, %v298
      %332 = vst.msk [vmem:[%s303 + $0x151] sm:$0xff] %vm262, %v299
      %333 = vst.msk [vmem:[%s303 + $0x159] sm:$0xff] %vm262, %v300
      %334 = vst.msk [vmem:[%s303 + $0x169] sm:$0xff] %vm262, %v301
      %335 = vst.msk [vmem:[%s303 + $0x171] sm:$0xff] %vm262, %v302
      %v336 = vld [vmem:[#allocation2] sm:$0xff]
      %v337 = vld [vmem:[#allocation2 + $0x8] sm:$0xff]
      %v338 = vld [vmem:[#allocation2 + $0x18] sm:$0xff]
      %v339 = vld [vmem:[#allocation2 + $0x20] sm:$0xff]
      %v340 = vld [vmem:[#allocation2 + $0x30] sm:$0xff]
      %v341 = vld [vmem:[#allocation2 + $0x38] sm:$0xff]
      %v342 = vld [vmem:[#allocation2 + $0x48] sm:$0xff]
      %v343 = vld [vmem:[#allocation2 + $0x50] sm:$0xff]
      %v344 = vld [vmem:[#allocation2 + $0x60] sm:$0xff]
      %v345 = vld [vmem:[#allocation2 + $0x68] sm:$0xff]
      %v346 = vld [vmem:[#allocation2 + $0x78] sm:$0xff]
      %v347 = vld [vmem:[#allocation2 + $0x80] sm:$0xff]
      %v348 = vld [vmem:[#allocation2 + $0x90] sm:$0xff]
      %v349 = vld [vmem:[#allocation2 + $0x98] sm:$0xff]
      %v350 = vld [vmem:[#allocation2 + $0xa8] sm:$0xff]
      %v351 = vld [vmem:[#allocation2 + $0xb0] sm:$0xff]
      %v352 = vld [vmem:[#allocation2 + $0xc0] sm:$0xff]
      %v353 = vld [vmem:[#allocation2 + $0xc8] sm:$0xff]
      %v354 = vld [vmem:[#allocation2 + $0xd8] sm:$0xff]
      %v355 = vld [vmem:[#allocation2 + $0xe0] sm:$0xff]
      %v356 = vld [vmem:[#allocation2 + $0xf0] sm:$0xff]
      %v357 = vld [vmem:[#allocation2 + $0xf8] sm:$0xff]
      %v358 = vld [vmem:[#allocation2 + $0x108] sm:$0xff]
      %v359 = vld [vmem:[#allocation2 + $0x110] sm:$0xff]
      %v360 = vld [vmem:[#allocation2 + $0x120] sm:$0xff]
      %v361 = vld [vmem:[#allocation2 + $0x128] sm:$0xff]
      %v362 = vld [vmem:[#allocation2 + $0x138] sm:$0xff]
      %v363 = vld [vmem:[#allocation2 + $0x140] sm:$0xff]
      %v364 = vld [vmem:[#allocation2 + $0x150] sm:$0xff]
      %v365 = vld [vmem:[#allocation2 + $0x158] sm:$0xff]
      %v366 = vld [vmem:[#allocation2 + $0x168] sm:$0xff]
      %v367 = vld [vmem:[#allocation2 + $0x170] sm:$0xff]
      %v368 = vld [vmem:[%s1] sm:$0xf]
      %v370 = vsel %vm262, %v336, 0
      %v373 = vsel %vm262, %v337, 0
      %v376 = vsel %vm262, %v338, 0
      %v379 = vsel %vm262, %v339, 0
      %v382 = vsel %vm262, %v340, 0
      %v385 = vsel %vm262, %v341, 0
      %v388 = vsel %vm262, %v342, 0
      %v391 = vsel %vm262, %v343, 0
      %v394 = vsel %vm262, %v344, 0
      %v397 = vsel %vm262, %v345, 0
      %v400 = vsel %vm262, %v346, 0
      %v403 = vsel %vm262, %v347, 0
      %v406 = vsel %vm262, %v348, 0
      %v409 = vsel %vm262, %v349, 0
      %v412 = vsel %vm262, %v350, 0
      %v415 = vsel %vm262, %v351, 0
      %v418 = vsel %vm262, %v352, 0
      %v421 = vsel %vm262, %v353, 0
      %v424 = vsel %vm262, %v354, 0
      %v427 = vsel %vm262, %v355, 0
      %v430 = vsel %vm262, %v356, 0
      %v433 = vsel %vm262, %v357, 0
      %v436 = vsel %vm262, %v358, 0
      %v439 = vsel %vm262, %v359, 0
      %v442 = vsel %vm262, %v360, 0
      %v445 = vsel %vm262, %v361, 0
      %v448 = vsel %vm262, %v362, 0
      %v451 = vsel %vm262, %v363, 0
      %v454 = vsel %vm262, %v364, 0
      %v457 = vsel %vm262, %v365, 0
      %v460 = vsel %vm262, %v366, 0
      %v463 = vsel %vm262, %v367, 0
      %vm465 = vcmask 1043456
      %v467 = vsel %vm465, %v368, 0
      %469 = vmatpush.msra.mxu0 0.0
      %470 = vmatpush.msra.mxu0 0.0
      %471 = vmatpush.msra.mxu0 0.0
      %472 = vmatpush.msra.mxu0 0.0
      %473 = vmatpush.msra.mxu0 0.0
      %474 = vmatpush.msra.mxu0 0.0
      %475 = vmatpush.msra.mxu0 0.0
      %476 = vmatpush.msra.mxu0 0.0
      %477 = vmatpush.msra.mxu0 0.0
      %478 = vmatpush.msra.mxu0 0.0
      %479 = vmatpush.msra.mxu0 0.0
      %480 = vmatpush.msra.mxu0 0.0
      %481 = vmatpush.msra.mxu0 0.0
      %482 = vmatpush.msra.mxu0 0.0
      %483 = vmatpush.msra.mxu0 0.0
      %484 = vmatpush.msra.mxu0 %v467
      %485 = vmatmul.f32.gmra.mxu0 %v370
      %v486 = vpop.f32.mrf.mxu0
      %v487 = vadd.f32 0.0, %v486
      %488 = vmatmul.f32.gmra.mxu0 %v373
      %v489 = vpop.f32.mrf.mxu0
      %v490 = vadd.f32 0.0, %v489
      %491 = vmatmul.f32.gmra.mxu0 %v376
      %v492 = vpop.f32.mrf.mxu0
      %v493 = vadd.f32 0.0, %v492
      %494 = vmatmul.f32.gmra.mxu0 %v379
      %v495 = vpop.f32.mrf.mxu0
      %v496 = vadd.f32 0.0, %v495
      %497 = vmatmul.f32.gmra.mxu0 %v382
      %v498 = vpop.f32.mrf.mxu0
      %v499 = vadd.f32 0.0, %v498
      %500 = vmatmul.f32.gmra.mxu0 %v385
      %v501 = vpop.f32.mrf.mxu0
      %v502 = vadd.f32 0.0, %v501
      %503 = vmatmul.f32.gmra.mxu0 %v388
      %v504 = vpop.f32.mrf.mxu0
      %v505 = vadd.f32 0.0, %v504
      %506 = vmatmul.f32.gmra.mxu0 %v391
      %v507 = vpop.f32.mrf.mxu0
      %v508 = vadd.f32 0.0, %v507
      %509 = vmatmul.f32.gmra.mxu0 %v394
      %v510 = vpop.f32.mrf.mxu0
      %v511 = vadd.f32 0.0, %v510
      %512 = vmatmul.f32.gmra.mxu0 %v397
      %v513 = vpop.f32.mrf.mxu0
      %v514 = vadd.f32 0.0, %v513
      %515 = vmatmul.f32.gmra.mxu0 %v400
      %v516 = vpop.f32.mrf.mxu0
      %v517 = vadd.f32 0.0, %v516
      %518 = vmatmul.f32.gmra.mxu0 %v403
      %v519 = vpop.f32.mrf.mxu0
      %v520 = vadd.f32 0.0, %v519
      %521 = vmatmul.f32.gmra.mxu0 %v406
      %v522 = vpop.f32.mrf.mxu0
      %v523 = vadd.f32 0.0, %v522
      %524 = vmatmul.f32.gmra.mxu0 %v409
      %v525 = vpop.f32.mrf.mxu0
      %v526 = vadd.f32 0.0, %v525
      %527 = vmatmul.f32.gmra.mxu0 %v412
      %v528 = vpop.f32.mrf.mxu0
      %v529 = vadd.f32 0.0, %v528
      %530 = vmatmul.f32.gmra.mxu0 %v415
      %v531 = vpop.f32.mrf.mxu0
      %v532 = vadd.f32 0.0, %v531
      %533 = vmatmul.f32.gmra.mxu0 %v418
      %v534 = vpop.f32.mrf.mxu0
      %v535 = vadd.f32 0.0, %v534
      %536 = vmatmul.f32.gmra.mxu0 %v421
      %v537 = vpop.f32.mrf.mxu0
      %v538 = vadd.f32 0.0, %v537
      %539 = vmatmul.f32.gmra.mxu0 %v424
      %v540 = vpop.f32.mrf.mxu0
      %v541 = vadd.f32 0.0, %v540
      %542 = vmatmul.f32.gmra.mxu0 %v427
      %v543 = vpop.f32.mrf.mxu0
      %v544 = vadd.f32 0.0, %v543
      %545 = vmatmul.f32.gmra.mxu0 %v430
      %v546 = vpop.f32.mrf.mxu0
      %v547 = vadd.f32 0.0, %v546
      %548 = vmatmul.f32.gmra.mxu0 %v433
      %v549 = vpop.f32.mrf.mxu0
      %v550 = vadd.f32 0.0, %v549
      %551 = vmatmul.f32.gmra.mxu0 %v436
      %v552 = vpop.f32.mrf.mxu0
      %v553 = vadd.f32 0.0, %v552
      %554 = vmatmul.f32.gmra.mxu0 %v439
      %v555 = vpop.f32.mrf.mxu0
      %v556 = vadd.f32 0.0, %v555
      %557 = vmatmul.f32.gmra.mxu0 %v442
      %v558 = vpop.f32.mrf.mxu0
      %v559 = vadd.f32 0.0, %v558
      %560 = vmatmul.f32.gmra.mxu0 %v445
      %v561 = vpop.f32.mrf.mxu0
      %v562 = vadd.f32 0.0, %v561
      %563 = vmatmul.f32.gmra.mxu0 %v448
      %v564 = vpop.f32.mrf.mxu0
      %v565 = vadd.f32 0.0, %v564
      %566 = vmatmul.f32.gmra.mxu0 %v451
      %v567 = vpop.f32.mrf.mxu0
      %v568 = vadd.f32 0.0, %v567
      %569 = vmatmul.f32.gmra.mxu0 %v454
      %v570 = vpop.f32.mrf.mxu0
      %v571 = vadd.f32 0.0, %v570
      %572 = vmatmul.f32.gmra.mxu0 %v457
      %v573 = vpop.f32.mrf.mxu0
      %v574 = vadd.f32 0.0, %v573
      %575 = vmatmul.f32.gmra.mxu0 %v460
      %v576 = vpop.f32.mrf.mxu0
      %v577 = vadd.f32 0.0, %v576
      %578 = vmatmul.f32.gmra.mxu0 %v463
      %v579 = vpop.f32.mrf.mxu0
      %v580 = vadd.f32 0.0, %v579
      %581 = vdwg.mxu0
      %582 = vst.msk [vmem:[#allocation3] sm:$0xff] %vm262, %v487
      %583 = vst.msk [vmem:[#allocation3 + $0x8] sm:$0xff] %vm262, %v490
      %584 = vst.msk [vmem:[#allocation3 + $0x10] sm:$0xff] %vm262, %v493
      %585 = vst.msk [vmem:[#allocation3 + $0x18] sm:$0xff] %vm262, %v496
      %586 = vst.msk [vmem:[#allocation3 + $0x20] sm:$0xff] %vm262, %v499
      %587 = vst.msk [vmem:[#allocation3 + $0x28] sm:$0xff] %vm262, %v502
      %588 = vst.msk [vmem:[#allocation3 + $0x30] sm:$0xff] %vm262, %v505
      %589 = vst.msk [vmem:[#allocation3 + $0x38] sm:$0xff] %vm262, %v508
      %590 = vst.msk [vmem:[#allocation3 + $0x40] sm:$0xff] %vm262, %v511
      %591 = vst.msk [vmem:[#allocation3 + $0x48] sm:$0xff] %vm262, %v514
      %592 = vst.msk [vmem:[#allocation3 + $0x50] sm:$0xff] %vm262, %v517
      %593 = vst.msk [vmem:[#allocation3 + $0x58] sm:$0xff] %vm262, %v520
      %594 = vst.msk [vmem:[#allocation3 + $0x60] sm:$0xff] %vm262, %v523
      %595 = vst.msk [vmem:[#allocation3 + $0x68] sm:$0xff] %vm262, %v526
      %596 = vst.msk [vmem:[#allocation3 + $0x70] sm:$0xff] %vm262, %v529
      %597 = vst.msk [vmem:[#allocation3 + $0x78] sm:$0xff] %vm262, %v532
      %598 = vst.msk [vmem:[#allocation3 + $0x80] sm:$0xff] %vm262, %v535
      %599 = vst.msk [vmem:[#allocation3 + $0x88] sm:$0xff] %vm262, %v538
      %600 = vst.msk [vmem:[#allocation3 + $0x90] sm:$0xff] %vm262, %v541
      %601 = vst.msk [vmem:[#allocation3 + $0x98] sm:$0xff] %vm262, %v544
      %602 = vst.msk [vmem:[#allocation3 + $0xa0] sm:$0xff] %vm262, %v547
      %603 = vst.msk [vmem:[#allocation3 + $0xa8] sm:$0xff] %vm262, %v550
      %604 = vst.msk [vmem:[#allocation3 + $0xb0] sm:$0xff] %vm262, %v553
      %605 = vst.msk [vmem:[#allocation3 + $0xb8] sm:$0xff] %vm262, %v556
      %606 = vst.msk [vmem:[#allocation3 + $0xc0] sm:$0xff] %vm262, %v559
      %607 = vst.msk [vmem:[#allocation3 + $0xc8] sm:$0xff] %vm262, %v562
      %608 = vst.msk [vmem:[#allocation3 + $0xd0] sm:$0xff] %vm262, %v565
      %609 = vst.msk [vmem:[#allocation3 + $0xd8] sm:$0xff] %vm262, %v568
      %610 = vst.msk [vmem:[#allocation3 + $0xe0] sm:$0xff] %vm262, %v571
      %611 = vst.msk [vmem:[#allocation3 + $0xe8] sm:$0xff] %vm262, %v574
      %612 = vst.msk [vmem:[#allocation3 + $0xf0] sm:$0xff] %vm262, %v577
      %613 = vst.msk [vmem:[#allocation3 + $0xf8] sm:$0xff] %vm262, %v580
      %v614 = vld [vmem:[#allocation2 + $0x1] sm:$0xff]
      %v615 = vld [vmem:[#allocation2 + $0x9] sm:$0xff]
      %v616 = vld [vmem:[#allocation2 + $0x19] sm:$0xff]
      %v617 = vld [vmem:[#allocation2 + $0x21] sm:$0xff]
      %v618 = vld [vmem:[#allocation2 + $0x31] sm:$0xff]
      %v619 = vld [vmem:[#allocation2 + $0x39] sm:$0xff]
      %v620 = vld [vmem:[#allocation2 + $0x49] sm:$0xff]
      %v621 = vld [vmem:[#allocation2 + $0x51] sm:$0xff]
      %v622 = vld [vmem:[#allocation2 + $0x61] sm:$0xff]
      %v623 = vld [vmem:[#allocation2 + $0x69] sm:$0xff]
      %v624 = vld [vmem:[#allocation2 + $0x79] sm:$0xff]
      %v625 = vld [vmem:[#allocation2 + $0x81] sm:$0xff]
      %v626 = vld [vmem:[#allocation2 + $0x91] sm:$0xff]
      %v627 = vld [vmem:[#allocation2 + $0x99] sm:$0xff]
      %v628 = vld [vmem:[#allocation2 + $0xa9] sm:$0xff]
      %v629 = vld [vmem:[#allocation2 + $0xb1] sm:$0xff]
      %v630 = vld [vmem:[#allocation2 + $0xc1] sm:$0xff]
      %v631 = vld [vmem:[#allocation2 + $0xc9] sm:$0xff]
      %v632 = vld [vmem:[#allocation2 + $0xd9] sm:$0xff]
      %v633 = vld [vmem:[#allocation2 + $0xe1] sm:$0xff]
      %v634 = vld [vmem:[#allocation2 + $0xf1] sm:$0xff]
      %v635 = vld [vmem:[#allocation2 + $0xf9] sm:$0xff]
      %v636 = vld [vmem:[#allocation2 + $0x109] sm:$0xff]
      %v637 = vld [vmem:[#allocation2 + $0x111] sm:$0xff]
      %v638 = vld [vmem:[#allocation2 + $0x121] sm:$0xff]
      %v639 = vld [vmem:[#allocation2 + $0x129] sm:$0xff]
      %v640 = vld [vmem:[#allocation2 + $0x139] sm:$0xff]
      %v641 = vld [vmem:[#allocation2 + $0x141] sm:$0xff]
      %v642 = vld [vmem:[#allocation2 + $0x151] sm:$0xff]
      %v643 = vld [vmem:[#allocation2 + $0x159] sm:$0xff]
      %v644 = vld [vmem:[#allocation2 + $0x169] sm:$0xff]
      %v645 = vld [vmem:[#allocation2 + $0x171] sm:$0xff]
      %s646 = scalar_lea.vmem %s1, 4
      %v647 = vld [vmem:[%s646] sm:$0xf]
      %v649 = vsel %vm262, %v614, 0
      %v652 = vsel %vm262, %v615, 0
      %v655 = vsel %vm262, %v616, 0
      %v658 = vsel %vm262, %v617, 0
      %v661 = vsel %vm262, %v618, 0
      %v664 = vsel %vm262, %v619, 0
      %v667 = vsel %vm262, %v620, 0
      %v670 = vsel %vm262, %v621, 0
      %v673 = vsel %vm262, %v622, 0
      %v676 = vsel %vm262, %v623, 0
      %v679 = vsel %vm262, %v624, 0
      %v682 = vsel %vm262, %v625, 0
      %v685 = vsel %vm262, %v626, 0
      %v688 = vsel %vm262, %v627, 0
      %v691 = vsel %vm262, %v628, 0
      %v694 = vsel %vm262, %v629, 0
      %v697 = vsel %vm262, %v630, 0
      %v700 = vsel %vm262, %v631, 0
      %v703 = vsel %vm262, %v632, 0
      %v706 = vsel %vm262, %v633, 0
      %v709 = vsel %vm262, %v634, 0
      %v712 = vsel %vm262, %v635, 0
      %v715 = vsel %vm262, %v636, 0
      %v718 = vsel %vm262, %v637, 0
      %v721 = vsel %vm262, %v638, 0
      %v724 = vsel %vm262, %v639, 0
      %v727 = vsel %vm262, %v640, 0
      %v730 = vsel %vm262, %v641, 0
      %v733 = vsel %vm262, %v642, 0
      %v736 = vsel %vm262, %v643, 0
      %v739 = vsel %vm262, %v644, 0
      %v742 = vsel %vm262, %v645, 0
      %v745 = vsel %vm465, %v647, 0
      %747 = vmatpush.msra.mxu0 0.0
      %748 = vmatpush.msra.mxu0 0.0
      %749 = vmatpush.msra.mxu0 0.0
      %750 = vmatpush.msra.mxu0 0.0
      %751 = vmatpush.msra.mxu0 0.0
      %752 = vmatpush.msra.mxu0 0.0
      %753 = vmatpush.msra.mxu0 0.0
      %754 = vmatpush.msra.mxu0 0.0
      %755 = vmatpush.msra.mxu0 0.0
      %756 = vmatpush.msra.mxu0 0.0
      %757 = vmatpush.msra.mxu0 0.0
      %758 = vmatpush.msra.mxu0 0.0
      %759 = vmatpush.msra.mxu0 0.0
      %760 = vmatpush.msra.mxu0 0.0
      %761 = vmatpush.msra.mxu0 0.0
      %762 = vmatpush.msra.mxu0 %v745
      %763 = vmatmul.f32.gmra.mxu0 %v649
      %v764 = vpop.f32.mrf.mxu0
      %v765 = vadd.f32 0.0, %v764
      %766 = vmatmul.f32.gmra.mxu0 %v652
      %v767 = vpop.f32.mrf.mxu0
      %v768 = vadd.f32 0.0, %v767
      %769 = vmatmul.f32.gmra.mxu0 %v655
      %v770 = vpop.f32.mrf.mxu0
      %v771 = vadd.f32 0.0, %v770
      %772 = vmatmul.f32.gmra.mxu0 %v658
      %v773 = vpop.f32.mrf.mxu0
      %v774 = vadd.f32 0.0, %v773
      %775 = vmatmul.f32.gmra.mxu0 %v661
      %v776 = vpop.f32.mrf.mxu0
      %v777 = vadd.f32 0.0, %v776
      %778 = vmatmul.f32.gmra.mxu0 %v664
      %v779 = vpop.f32.mrf.mxu0
      %v780 = vadd.f32 0.0, %v779
      %781 = vmatmul.f32.gmra.mxu0 %v667
      %v782 = vpop.f32.mrf.mxu0
      %v783 = vadd.f32 0.0, %v782
      %784 = vmatmul.f32.gmra.mxu0 %v670
      %v785 = vpop.f32.mrf.mxu0
      %v786 = vadd.f32 0.0, %v785
      %787 = vmatmul.f32.gmra.mxu0 %v673
      %v788 = vpop.f32.mrf.mxu0
      %v789 = vadd.f32 0.0, %v788
      %790 = vmatmul.f32.gmra.mxu0 %v676
      %v791 = vpop.f32.mrf.mxu0
      %v792 = vadd.f32 0.0, %v791
      %793 = vmatmul.f32.gmra.mxu0 %v679
      %v794 = vpop.f32.mrf.mxu0
      %v795 = vadd.f32 0.0, %v794
      %796 = vmatmul.f32.gmra.mxu0 %v682
      %v797 = vpop.f32.mrf.mxu0
      %v798 = vadd.f32 0.0, %v797
      %799 = vmatmul.f32.gmra.mxu0 %v685
      %v800 = vpop.f32.mrf.mxu0
      %v801 = vadd.f32 0.0, %v800
      %802 = vmatmul.f32.gmra.mxu0 %v688
      %v803 = vpop.f32.mrf.mxu0
      %v804 = vadd.f32 0.0, %v803
      %805 = vmatmul.f32.gmra.mxu0 %v691
      %v806 = vpop.f32.mrf.mxu0
      %v807 = vadd.f32 0.0, %v806
      %808 = vmatmul.f32.gmra.mxu0 %v694
      %v809 = vpop.f32.mrf.mxu0
      %v810 = vadd.f32 0.0, %v809
      %811 = vmatmul.f32.gmra.mxu0 %v697
      %v812 = vpop.f32.mrf.mxu0
      %v813 = vadd.f32 0.0, %v812
      %814 = vmatmul.f32.gmra.mxu0 %v700
      %v815 = vpop.f32.mrf.mxu0
      %v816 = vadd.f32 0.0, %v815
      %817 = vmatmul.f32.gmra.mxu0 %v703
      %v818 = vpop.f32.mrf.mxu0
      %v819 = vadd.f32 0.0, %v818
      %820 = vmatmul.f32.gmra.mxu0 %v706
      %v821 = vpop.f32.mrf.mxu0
      %v822 = vadd.f32 0.0, %v821
      %823 = vmatmul.f32.gmra.mxu0 %v709
      %v824 = vpop.f32.mrf.mxu0
      %v825 = vadd.f32 0.0, %v824
      %826 = vmatmul.f32.gmra.mxu0 %v712
      %v827 = vpop.f32.mrf.mxu0
      %v828 = vadd.f32 0.0, %v827
      %829 = vmatmul.f32.gmra.mxu0 %v715
      %v830 = vpop.f32.mrf.mxu0
      %v831 = vadd.f32 0.0, %v830
      %832 = vmatmul.f32.gmra.mxu0 %v718
      %v833 = vpop.f32.mrf.mxu0
      %v834 = vadd.f32 0.0, %v833
      %835 = vmatmul.f32.gmra.mxu0 %v721
      %v836 = vpop.f32.mrf.mxu0
      %v837 = vadd.f32 0.0, %v836
      %838 = vmatmul.f32.gmra.mxu0 %v724
      %v839 = vpop.f32.mrf.mxu0
      %v840 = vadd.f32 0.0, %v839
      %841 = vmatmul.f32.gmra.mxu0 %v727
      %v842 = vpop.f32.mrf.mxu0
      %v843 = vadd.f32 0.0, %v842
      %844 = vmatmul.f32.gmra.mxu0 %v730
      %v845 = vpop.f32.mrf.mxu0
      %v846 = vadd.f32 0.0, %v845
      %847 = vmatmul.f32.gmra.mxu0 %v733
      %v848 = vpop.f32.mrf.mxu0
      %v849 = vadd.f32 0.0, %v848
      %850 = vmatmul.f32.gmra.mxu0 %v736
      %v851 = vpop.f32.mrf.mxu0
      %v852 = vadd.f32 0.0, %v851
      %853 = vmatmul.f32.gmra.mxu0 %v739
      %v854 = vpop.f32.mrf.mxu0
      %v855 = vadd.f32 0.0, %v854
      %856 = vmatmul.f32.gmra.mxu0 %v742
      %v857 = vpop.f32.mrf.mxu0
      %v858 = vadd.f32 0.0, %v857
      %859 = vdwg.mxu0
      %v860 = vld [vmem:[#allocation3] sm:$0xff]
      %v861 = vld [vmem:[#allocation3 + $0x8] sm:$0xff]
      %v862 = vld [vmem:[#allocation3 + $0x10] sm:$0xff]
      %v863 = vld [vmem:[#allocation3 + $0x18] sm:$0xff]
      %v864 = vld [vmem:[#allocation3 + $0x20] sm:$0xff]
      %v865 = vld [vmem:[#allocation3 + $0x28] sm:$0xff]
      %v866 = vld [vmem:[#allocation3 + $0x30] sm:$0xff]
      %v867 = vld [vmem:[#allocation3 + $0x38] sm:$0xff]
      %v868 = vld [vmem:[#allocation3 + $0x40] sm:$0xff]
      %v869 = vld [vmem:[#allocation3 + $0x48] sm:$0xff]
      %v870 = vld [vmem:[#allocation3 + $0x50] sm:$0xff]
      %v871 = vld [vmem:[#allocation3 + $0x58] sm:$0xff]
      %v872 = vld [vmem:[#allocation3 + $0x60] sm:$0xff]
      %v873 = vld [vmem:[#allocation3 + $0x68] sm:$0xff]
      %v874 = vld [vmem:[#allocation3 + $0x70] sm:$0xff]
      %v875 = vld [vmem:[#allocation3 + $0x78] sm:$0xff]
      %v876 = vld [vmem:[#allocation3 + $0x80] sm:$0xff]
      %v877 = vld [vmem:[#allocation3 + $0x88] sm:$0xff]
      %v878 = vld [vmem:[#allocation3 + $0x90] sm:$0xff]
      %v879 = vld [vmem:[#allocation3 + $0x98] sm:$0xff]
      %v880 = vld [vmem:[#allocation3 + $0xa0] sm:$0xff]
      %v881 = vld [vmem:[#allocation3 + $0xa8] sm:$0xff]
      %v882 = vld [vmem:[#allocation3 + $0xb0] sm:$0xff]
      %v883 = vld [vmem:[#allocation3 + $0xb8] sm:$0xff]
      %v884 = vld [vmem:[#allocation3 + $0xc0] sm:$0xff]
      %v885 = vld [vmem:[#allocation3 + $0xc8] sm:$0xff]
      %v886 = vld [vmem:[#allocation3 + $0xd0] sm:$0xff]
      %v887 = vld [vmem:[#allocation3 + $0xd8] sm:$0xff]
      %v888 = vld [vmem:[#allocation3 + $0xe0] sm:$0xff]
      %v889 = vld [vmem:[#allocation3 + $0xe8] sm:$0xff]
      %v890 = vld [vmem:[#allocation3 + $0xf0] sm:$0xff]
      %v891 = vld [vmem:[#allocation3 + $0xf8] sm:$0xff]
      %v892 = vadd.f32 %v860, %v765
      %v893 = vadd.f32 %v861, %v768
      %v894 = vadd.f32 %v862, %v771
      %v895 = vadd.f32 %v863, %v774
      %v896 = vadd.f32 %v864, %v777
      %v897 = vadd.f32 %v865, %v780
      %v898 = vadd.f32 %v866, %v783
      %v899 = vadd.f32 %v867, %v786
      %v900 = vadd.f32 %v868, %v789
      %v901 = vadd.f32 %v869, %v792
      %v902 = vadd.f32 %v870, %v795
      %v903 = vadd.f32 %v871, %v798
      %v904 = vadd.f32 %v872, %v801
      %v905 = vadd.f32 %v873, %v804
      %v906 = vadd.f32 %v874, %v807
      %v907 = vadd.f32 %v875, %v810
      %v908 = vadd.f32 %v876, %v813
      %v909 = vadd.f32 %v877, %v816
      %v910 = vadd.f32 %v878, %v819
      %v911 = vadd.f32 %v879, %v822
      %v912 = vadd.f32 %v880, %v825
      %v913 = vadd.f32 %v881, %v828
      %v914 = vadd.f32 %v882, %v831
      %v915 = vadd.f32 %v883, %v834
      %v916 = vadd.f32 %v884, %v837
      %v917 = vadd.f32 %v885, %v840
      %v918 = vadd.f32 %v886, %v843
      %v919 = vadd.f32 %v887, %v846
      %v920 = vadd.f32 %v888, %v849
      %v921 = vadd.f32 %v889, %v852
      %v922 = vadd.f32 %v890, %v855
      %v923 = vadd.f32 %v891, %v858
      %924 = vst.msk [vmem:[#allocation3] sm:$0xff] %vm262, %v892
      %925 = vst.msk [vmem:[#allocation3 + $0x8] sm:$0xff] %vm262, %v893
      %926 = vst.msk [vmem:[#allocation3 + $0x10] sm:$0xff] %vm262, %v894
      %927 = vst.msk [vmem:[#allocation3 + $0x18] sm:$0xff] %vm262, %v895
      %928 = vst.msk [vmem:[#allocation3 + $0x20] sm:$0xff] %vm262, %v896
      %929 = vst.msk [vmem:[#allocation3 + $0x28] sm:$0xff] %vm262, %v897
      %930 = vst.msk [vmem:[#allocation3 + $0x30] sm:$0xff] %vm262, %v898
      %931 = vst.msk [vmem:[#allocation3 + $0x38] sm:$0xff] %vm262, %v899
      %932 = vst.msk [vmem:[#allocation3 + $0x40] sm:$0xff] %vm262, %v900
      %933 = vst.msk [vmem:[#allocation3 + $0x48] sm:$0xff] %vm262, %v901
      %934 = vst.msk [vmem:[#allocation3 + $0x50] sm:$0xff] %vm262, %v902
      %935 = vst.msk [vmem:[#allocation3 + $0x58] sm:$0xff] %vm262, %v903
      %936 = vst.msk [vmem:[#allocation3 + $0x60] sm:$0xff] %vm262, %v904
      %937 = vst.msk [vmem:[#allocation3 + $0x68] sm:$0xff] %vm262, %v905
      %938 = vst.msk [vmem:[#allocation3 + $0x70] sm:$0xff] %vm262, %v906
      %939 = vst.msk [vmem:[#allocation3 + $0x78] sm:$0xff] %vm262, %v907
      %940 = vst.msk [vmem:[#allocation3 + $0x80] sm:$0xff] %vm262, %v908
      %941 = vst.msk [vmem:[#allocation3 + $0x88] sm:$0xff] %vm262, %v909
      %942 = vst.msk [vmem:[#allocation3 + $0x90] sm:$0xff] %vm262, %v910
      %943 = vst.msk [vmem:[#allocation3 + $0x98] sm:$0xff] %vm262, %v911
      %944 = vst.msk [vmem:[#allocation3 + $0xa0] sm:$0xff] %vm262, %v912
      %945 = vst.msk [vmem:[#allocation3 + $0xa8] sm:$0xff] %vm262, %v913
      %946 = vst.msk [vmem:[#allocation3 + $0xb0] sm:$0xff] %vm262, %v914
      %947 = vst.msk [vmem:[#allocation3 + $0xb8] sm:$0xff] %vm262, %v915
      %948 = vst.msk [vmem:[#allocation3 + $0xc0] sm:$0xff] %vm262, %v916
      %949 = vst.msk [vmem:[#allocation3 + $0xc8] sm:$0xff] %vm262, %v917
      %950 = vst.msk [vmem:[#allocation3 + $0xd0] sm:$0xff] %vm262, %v918
      %951 = vst.msk [vmem:[#allocation3 + $0xd8] sm:$0xff] %vm262, %v919
      %952 = vst.msk [vmem:[#allocation3 + $0xe0] sm:$0xff] %vm262, %v920
      %953 = vst.msk [vmem:[#allocation3 + $0xe8] sm:$0xff] %vm262, %v921
      %954 = vst.msk [vmem:[#allocation3 + $0xf0] sm:$0xff] %vm262, %v922
      %955 = vst.msk [vmem:[#allocation3 + $0xf8] sm:$0xff] %vm262, %v923
      %v956 = vld [vmem:[#allocation2 + $0x2] sm:$0xff]
      %v957 = vld [vmem:[#allocation2 + $0xa] sm:$0xff]
      %v958 = vld [vmem:[#allocation2 + $0x1a] sm:$0xff]
      %v959 = vld [vmem:[#allocation2 + $0x22] sm:$0xff]
      %v960 = vld [vmem:[#allocation2 + $0x32] sm:$0xff]
      %v961 = vld [vmem:[#allocation2 + $0x3a] sm:$0xff]
      %v962 = vld [vmem:[#allocation2 + $0x4a] sm:$0xff]
      %v963 = vld [vmem:[#allocation2 + $0x52] sm:$0xff]
      %v964 = vld [vmem:[#allocation2 + $0x62] sm:$0xff]
      %v965 = vld [vmem:[#allocation2 + $0x6a] sm:$0xff]
      %v966 = vld [vmem:[#allocation2 + $0x7a] sm:$0xff]
      %v967 = vld [vmem:[#allocation2 + $0x82] sm:$0xff]
      %v968 = vld [vmem:[#allocation2 + $0x92] sm:$0xff]
      %v969 = vld [vmem:[#allocation2 + $0x9a] sm:$0xff]
      %v970 = vld [vmem:[#allocation2 + $0xaa] sm:$0xff]
      %v971 = vld [vmem:[#allocation2 + $0xb2] sm:$0xff]
      %v972 = vld [vmem:[#allocation2 + $0xc2] sm:$0xff]
      %v973 = vld [vmem:[#allocation2 + $0xca] sm:$0xff]
      %v974 = vld [vmem:[#allocation2 + $0xda] sm:$0xff]
      %v975 = vld [vmem:[#allocation2 + $0xe2] sm:$0xff]
      %v976 = vld [vmem:[#allocation2 + $0xf2] sm:$0xff]
      %v977 = vld [vmem:[#allocation2 + $0xfa] sm:$0xff]
      %v978 = vld [vmem:[#allocation2 + $0x10a] sm:$0xff]
      %v979 = vld [vmem:[#allocation2 + $0x112] sm:$0xff]
      %v980 = vld [vmem:[#allocation2 + $0x122] sm:$0xff]
      %v981 = vld [vmem:[#allocation2 + $0x12a] sm:$0xff]
      %v982 = vld [vmem:[#allocation2 + $0x13a] sm:$0xff]
      %v983 = vld [vmem:[#allocation2 + $0x142] sm:$0xff]
      %v984 = vld [vmem:[#allocation2 + $0x152] sm:$0xff]
      %v985 = vld [vmem:[#allocation2 + $0x15a] sm:$0xff]
      %v986 = vld [vmem:[#allocation2 + $0x16a] sm:$0xff]
      %v987 = vld [vmem:[#allocation2 + $0x172] sm:$0xff]
      %s988 = scalar_lea.vmem %s1, 8
      %v989 = vld [vmem:[%s988] sm:$0xf]
      %v991 = vsel %vm262, %v956, 0
      %v994 = vsel %vm262, %v957, 0
      %v997 = vsel %vm262, %v958, 0
      %v1000 = vsel %vm262, %v959, 0
      %v1003 = vsel %vm262, %v960, 0
      %v1006 = vsel %vm262, %v961, 0
      %v1009 = vsel %vm262, %v962, 0
      %v1012 = vsel %vm262, %v963, 0
      %v1015 = vsel %vm262, %v964, 0
      %v1018 = vsel %vm262, %v965, 0
      %v1021 = vsel %vm262, %v966, 0
      %v1024 = vsel %vm262, %v967, 0
      %v1027 = vsel %vm262, %v968, 0
      %v1030 = vsel %vm262, %v969, 0
      %v1033 = vsel %vm262, %v970, 0
      %v1036 = vsel %vm262, %v971, 0
      %v1039 = vsel %vm262, %v972, 0
      %v1042 = vsel %vm262, %v973, 0
      %v1045 = vsel %vm262, %v974, 0
      %v1048 = vsel %vm262, %v975, 0
      %v1051 = vsel %vm262, %v976, 0
      %v1054 = vsel %vm262, %v977, 0
      %v1057 = vsel %vm262, %v978, 0
      %v1060 = vsel %vm262, %v979, 0
      %v1063 = vsel %vm262, %v980, 0
      %v1066 = vsel %vm262, %v981, 0
      %v1069 = vsel %vm262, %v982, 0
      %v1072 = vsel %vm262, %v983, 0
      %v1075 = vsel %vm262, %v984, 0
      %v1078 = vsel %vm262, %v985, 0
      %v1081 = vsel %vm262, %v986, 0
      %v1084 = vsel %vm262, %v987, 0
      %v1087 = vsel %vm465, %v989, 0
      %1089 = vmatpush.msra.mxu0 0.0
      %1090 = vmatpush.msra.mxu0 0.0
      %1091 = vmatpush.msra.mxu0 0.0
      %1092 = vmatpush.msra.mxu0 0.0
      %1093 = vmatpush.msra.mxu0 0.0
      %1094 = vmatpush.msra.mxu0 0.0
      %1095 = vmatpush.msra.mxu0 0.0
      %1096 = vmatpush.msra.mxu0 0.0
      %1097 = vmatpush.msra.mxu0 0.0
      %1098 = vmatpush.msra.mxu0 0.0
      %1099 = vmatpush.msra.mxu0 0.0
      %1100 = vmatpush.msra.mxu0 0.0
      %1101 = vmatpush.msra.mxu0 0.0
      %1102 = vmatpush.msra.mxu0 0.0
      %1103 = vmatpush.msra.mxu0 0.0
      %1104 = vmatpush.msra.mxu0 %v1087
      %1105 = vmatmul.f32.gmra.mxu0 %v991
      %v1106 = vpop.f32.mrf.mxu0
      %v1107 = vadd.f32 0.0, %v1106
      %1108 = vmatmul.f32.gmra.mxu0 %v994
      %v1109 = vpop.f32.mrf.mxu0
      %v1110 = vadd.f32 0.0, %v1109
      %1111 = vmatmul.f32.gmra.mxu0 %v997
      %v1112 = vpop.f32.mrf.mxu0
      %v1113 = vadd.f32 0.0, %v1112
      %1114 = vmatmul.f32.gmra.mxu0 %v1000
      %v1115 = vpop.f32.mrf.mxu0
      %v1116 = vadd.f32 0.0, %v1115
      %1117 = vmatmul.f32.gmra.mxu0 %v1003
      %v1118 = vpop.f32.mrf.mxu0
      %v1119 = vadd.f32 0.0, %v1118
      %1120 = vmatmul.f32.gmra.mxu0 %v1006
      %v1121 = vpop.f32.mrf.mxu0
      %v1122 = vadd.f32 0.0, %v1121
      %1123 = vmatmul.f32.gmra.mxu0 %v1009
      %v1124 = vpop.f32.mrf.mxu0
      %v1125 = vadd.f32 0.0, %v1124
      %1126 = vmatmul.f32.gmra.mxu0 %v1012
      %v1127 = vpop.f32.mrf.mxu0
      %v1128 = vadd.f32 0.0, %v1127
      %1129 = vmatmul.f32.gmra.mxu0 %v1015
      %v1130 = vpop.f32.mrf.mxu0
      %v1131 = vadd.f32 0.0, %v1130
      %1132 = vmatmul.f32.gmra.mxu0 %v1018
      %v1133 = vpop.f32.mrf.mxu0
      %v1134 = vadd.f32 0.0, %v1133
      %1135 = vmatmul.f32.gmra.mxu0 %v1021
      %v1136 = vpop.f32.mrf.mxu0
      %v1137 = vadd.f32 0.0, %v1136
      %1138 = vmatmul.f32.gmra.mxu0 %v1024
      %v1139 = vpop.f32.mrf.mxu0
      %v1140 = vadd.f32 0.0, %v1139
      %1141 = vmatmul.f32.gmra.mxu0 %v1027
      %v1142 = vpop.f32.mrf.mxu0
      %v1143 = vadd.f32 0.0, %v1142
      %1144 = vmatmul.f32.gmra.mxu0 %v1030
      %v1145 = vpop.f32.mrf.mxu0
      %v1146 = vadd.f32 0.0, %v1145
      %1147 = vmatmul.f32.gmra.mxu0 %v1033
      %v1148 = vpop.f32.mrf.mxu0
      %v1149 = vadd.f32 0.0, %v1148
      %1150 = vmatmul.f32.gmra.mxu0 %v1036
      %v1151 = vpop.f32.mrf.mxu0
      %v1152 = vadd.f32 0.0, %v1151
      %1153 = vmatmul.f32.gmra.mxu0 %v1039
      %v1154 = vpop.f32.mrf.mxu0
      %v1155 = vadd.f32 0.0, %v1154
      %1156 = vmatmul.f32.gmra.mxu0 %v1042
      %v1157 = vpop.f32.mrf.mxu0
      %v1158 = vadd.f32 0.0, %v1157
      %1159 = vmatmul.f32.gmra.mxu0 %v1045
      %v1160 = vpop.f32.mrf.mxu0
      %v1161 = vadd.f32 0.0, %v1160
      %1162 = vmatmul.f32.gmra.mxu0 %v1048
      %v1163 = vpop.f32.mrf.mxu0
      %v1164 = vadd.f32 0.0, %v1163
      %1165 = vmatmul.f32.gmra.mxu0 %v1051
      %v1166 = vpop.f32.mrf.mxu0
      %v1167 = vadd.f32 0.0, %v1166
      %1168 = vmatmul.f32.gmra.mxu0 %v1054
      %v1169 = vpop.f32.mrf.mxu0
      %v1170 = vadd.f32 0.0, %v1169
      %1171 = vmatmul.f32.gmra.mxu0 %v1057
      %v1172 = vpop.f32.mrf.mxu0
      %v1173 = vadd.f32 0.0, %v1172
      %1174 = vmatmul.f32.gmra.mxu0 %v1060
      %v1175 = vpop.f32.mrf.mxu0
      %v1176 = vadd.f32 0.0, %v1175
      %1177 = vmatmul.f32.gmra.mxu0 %v1063
      %v1178 = vpop.f32.mrf.mxu0
      %v1179 = vadd.f32 0.0, %v1178
      %1180 = vmatmul.f32.gmra.mxu0 %v1066
      %v1181 = vpop.f32.mrf.mxu0
      %v1182 = vadd.f32 0.0, %v1181
      %1183 = vmatmul.f32.gmra.mxu0 %v1069
      %v1184 = vpop.f32.mrf.mxu0
      %v1185 = vadd.f32 0.0, %v1184
      %1186 = vmatmul.f32.gmra.mxu0 %v1072
      %v1187 = vpop.f32.mrf.mxu0
      %v1188 = vadd.f32 0.0, %v1187
      %1189 = vmatmul.f32.gmra.mxu0 %v1075
      %v1190 = vpop.f32.mrf.mxu0
      %v1191 = vadd.f32 0.0, %v1190
      %1192 = vmatmul.f32.gmra.mxu0 %v1078
      %v1193 = vpop.f32.mrf.mxu0
      %v1194 = vadd.f32 0.0, %v1193
      %1195 = vmatmul.f32.gmra.mxu0 %v1081
      %v1196 = vpop.f32.mrf.mxu0
      %v1197 = vadd.f32 0.0, %v1196
      %1198 = vmatmul.f32.gmra.mxu0 %v1084
      %v1199 = vpop.f32.mrf.mxu0
      %v1200 = vadd.f32 0.0, %v1199
      %1201 = vdwg.mxu0
      %v1202 = vld [vmem:[#allocation3] sm:$0xff]
      %v1203 = vld [vmem:[#allocation3 + $0x8] sm:$0xff]
      %v1204 = vld [vmem:[#allocation3 + $0x10] sm:$0xff]
      %v1205 = vld [vmem:[#allocation3 + $0x18] sm:$0xff]
      %v1206 = vld [vmem:[#allocation3 + $0x20] sm:$0xff]
      %v1207 = vld [vmem:[#allocation3 + $0x28] sm:$0xff]
      %v1208 = vld [vmem:[#allocation3 + $0x30] sm:$0xff]
      %v1209 = vld [vmem:[#allocation3 + $0x38] sm:$0xff]
      %v1210 = vld [vmem:[#allocation3 + $0x40] sm:$0xff]
      %v1211 = vld [vmem:[#allocation3 + $0x48] sm:$0xff]
      %v1212 = vld [vmem:[#allocation3 + $0x50] sm:$0xff]
      %v1213 = vld [vmem:[#allocation3 + $0x58] sm:$0xff]
      %v1214 = vld [vmem:[#allocation3 + $0x60] sm:$0xff]
      %v1215 = vld [vmem:[#allocation3 + $0x68] sm:$0xff]
      %v1216 = vld [vmem:[#allocation3 + $0x70] sm:$0xff]
      %v1217 = vld [vmem:[#allocation3 + $0x78] sm:$0xff]
      %v1218 = vld [vmem:[#allocation3 + $0x80] sm:$0xff]
      %v1219 = vld [vmem:[#allocation3 + $0x88] sm:$0xff]
      %v1220 = vld [vmem:[#allocation3 + $0x90] sm:$0xff]
      %v1221 = vld [vmem:[#allocation3 + $0x98] sm:$0xff]
      %v1222 = vld [vmem:[#allocation3 + $0xa0] sm:$0xff]
      %v1223 = vld [vmem:[#allocation3 + $0xa8] sm:$0xff]
      %v1224 = vld [vmem:[#allocation3 + $0xb0] sm:$0xff]
      %v1225 = vld [vmem:[#allocation3 + $0xb8] sm:$0xff]
      %v1226 = vld [vmem:[#allocation3 + $0xc0] sm:$0xff]
      %v1227 = vld [vmem:[#allocation3 + $0xc8] sm:$0xff]
      %v1228 = vld [vmem:[#allocation3 + $0xd0] sm:$0xff]
      %v1229 = vld [vmem:[#allocation3 + $0xd8] sm:$0xff]
      %v1230 = vld [vmem:[#allocation3 + $0xe0] sm:$0xff]
      %v1231 = vld [vmem:[#allocation3 + $0xe8] sm:$0xff]
      %v1232 = vld [vmem:[#allocation3 + $0xf0] sm:$0xff]
      %v1233 = vld [vmem:[#allocation3 + $0xf8] sm:$0xff]
      %v1234 = vadd.f32 %v1202, %v1107
      %v1235 = vadd.f32 %v1203, %v1110
      %v1236 = vadd.f32 %v1204, %v1113
      %v1237 = vadd.f32 %v1205, %v1116
      %v1238 = vadd.f32 %v1206, %v1119
      %v1239 = vadd.f32 %v1207, %v1122
      %v1240 = vadd.f32 %v1208, %v1125
      %v1241 = vadd.f32 %v1209, %v1128
      %v1242 = vadd.f32 %v1210, %v1131
      %v1243 = vadd.f32 %v1211, %v1134
      %v1244 = vadd.f32 %v1212, %v1137
      %v1245 = vadd.f32 %v1213, %v1140
      %v1246 = vadd.f32 %v1214, %v1143
      %v1247 = vadd.f32 %v1215, %v1146
      %v1248 = vadd.f32 %v1216, %v1149
      %v1249 = vadd.f32 %v1217, %v1152
      %v1250 = vadd.f32 %v1218, %v1155
      %v1251 = vadd.f32 %v1219, %v1158
      %v1252 = vadd.f32 %v1220, %v1161
      %v1253 = vadd.f32 %v1221, %v1164
      %v1254 = vadd.f32 %v1222, %v1167
      %v1255 = vadd.f32 %v1223, %v1170
      %v1256 = vadd.f32 %v1224, %v1173
      %v1257 = vadd.f32 %v1225, %v1176
      %v1258 = vadd.f32 %v1226, %v1179
      %v1259 = vadd.f32 %v1227, %v1182
      %v1260 = vadd.f32 %v1228, %v1185
      %v1261 = vadd.f32 %v1229, %v1188
      %v1262 = vadd.f32 %v1230, %v1191
      %v1263 = vadd.f32 %v1231, %v1194
      %v1264 = vadd.f32 %v1232, %v1197
      %v1265 = vadd.f32 %v1233, %v1200
      %1266 = vst.msk [vmem:[#allocation3] sm:$0xff] %vm262, %v1234
      %1267 = vst.msk [vmem:[#allocation3 + $0x8] sm:$0xff] %vm262, %v1235
      %1268 = vst.msk [vmem:[#allocation3 + $0x10] sm:$0xff] %vm262, %v1236
      %1269 = vst.msk [vmem:[#allocation3 + $0x18] sm:$0xff] %vm262, %v1237
      %1270 = vst.msk [vmem:[#allocation3 + $0x20] sm:$0xff] %vm262, %v1238
      %1271 = vst.msk [vmem:[#allocation3 + $0x28] sm:$0xff] %vm262, %v1239
      %1272 = vst.msk [vmem:[#allocation3 + $0x30] sm:$0xff] %vm262, %v1240
      %1273 = vst.msk [vmem:[#allocation3 + $0x38] sm:$0xff] %vm262, %v1241
      %1274 = vst.msk [vmem:[#allocation3 + $0x40] sm:$0xff] %vm262, %v1242
      %1275 = vst.msk [vmem:[#allocation3 + $0x48] sm:$0xff] %vm262, %v1243
      %1276 = vst.msk [vmem:[#allocation3 + $0x50] sm:$0xff] %vm262, %v1244
      %1277 = vst.msk [vmem:[#allocation3 + $0x58] sm:$0xff] %vm262, %v1245
      %1278 = vst.msk [vmem:[#allocation3 + $0x60] sm:$0xff] %vm262, %v1246
      %1279 = vst.msk [vmem:[#allocation3 + $0x68] sm:$0xff] %vm262, %v1247
      %1280 = vst.msk [vmem:[#allocation3 + $0x70] sm:$0xff] %vm262, %v1248
      %1281 = vst.msk [vmem:[#allocation3 + $0x78] sm:$0xff] %vm262, %v1249
      %1282 = vst.msk [vmem:[#allocation3 + $0x80] sm:$0xff] %vm262, %v1250
      %1283 = vst.msk [vmem:[#allocation3 + $0x88] sm:$0xff] %vm262, %v1251
      %1284 = vst.msk [vmem:[#allocation3 + $0x90] sm:$0xff] %vm262, %v1252
      %1285 = vst.msk [vmem:[#allocation3 + $0x98] sm:$0xff] %vm262, %v1253
      %1286 = vst.msk [vmem:[#allocation3 + $0xa0] sm:$0xff] %vm262, %v1254
      %1287 = vst.msk [vmem:[#allocation3 + $0xa8] sm:$0xff] %vm262, %v1255
      %1288 = vst.msk [vmem:[#allocation3 + $0xb0] sm:$0xff] %vm262, %v1256
      %1289 = vst.msk [vmem:[#allocation3 + $0xb8] sm:$0xff] %vm262, %v1257
      %1290 = vst.msk [vmem:[#allocation3 + $0xc0] sm:$0xff] %vm262, %v1258
      %1291 = vst.msk [vmem:[#allocation3 + $0xc8] sm:$0xff] %vm262, %v1259
      %1292 = vst.msk [vmem:[#allocation3 + $0xd0] sm:$0xff] %vm262, %v1260
      %1293 = vst.msk [vmem:[#allocation3 + $0xd8] sm:$0xff] %vm262, %v1261
      %1294 = vst.msk [vmem:[#allocation3 + $0xe0] sm:$0xff] %vm262, %v1262
      %1295 = vst.msk [vmem:[#allocation3 + $0xe8] sm:$0xff] %vm262, %v1263
      %1296 = vst.msk [vmem:[#allocation3 + $0xf0] sm:$0xff] %vm262, %v1264
      %1297 = vst.msk [vmem:[#allocation3 + $0xf8] sm:$0xff] %vm262, %v1265
      %v1298 = vld [vmem:[%s303] sm:$0xff]
      %v1299 = vld [vmem:[%s303 + $0x8] sm:$0xff]
      %v1300 = vld [vmem:[%s303 + $0x18] sm:$0xff]
      %v1301 = vld [vmem:[%s303 + $0x20] sm:$0xff]
      %v1302 = vld [vmem:[%s303 + $0x30] sm:$0xff]
      %v1303 = vld [vmem:[%s303 + $0x38] sm:$0xff]
      %v1304 = vld [vmem:[%s303 + $0x48] sm:$0xff]
      %v1305 = vld [vmem:[%s303 + $0x50] sm:$0xff]
      %v1306 = vld [vmem:[%s303 + $0x60] sm:$0xff]
      %v1307 = vld [vmem:[%s303 + $0x68] sm:$0xff]
      %v1308 = vld [vmem:[%s303 + $0x78] sm:$0xff]
      %v1309 = vld [vmem:[%s303 + $0x80] sm:$0xff]
      %v1310 = vld [vmem:[%s303 + $0x90] sm:$0xff]
      %v1311 = vld [vmem:[%s303 + $0x98] sm:$0xff]
      %v1312 = vld [vmem:[%s303 + $0xa8] sm:$0xff]
      %v1313 = vld [vmem:[%s303 + $0xb0] sm:$0xff]
      %v1314 = vld [vmem:[%s303 + $0xc0] sm:$0xff]
      %v1315 = vld [vmem:[%s303 + $0xc8] sm:$0xff]
      %v1316 = vld [vmem:[%s303 + $0xd8] sm:$0xff]
      %v1317 = vld [vmem:[%s303 + $0xe0] sm:$0xff]
      %v1318 = vld [vmem:[%s303 + $0xf0] sm:$0xff]
      %v1319 = vld [vmem:[%s303 + $0xf8] sm:$0xff]
      %v1320 = vld [vmem:[%s303 + $0x108] sm:$0xff]
      %v1321 = vld [vmem:[%s303 + $0x110] sm:$0xff]
      %v1322 = vld [vmem:[%s303 + $0x120] sm:$0xff]
      %v1323 = vld [vmem:[%s303 + $0x128] sm:$0xff]
      %v1324 = vld [vmem:[%s303 + $0x138] sm:$0xff]
      %v1325 = vld [vmem:[%s303 + $0x140] sm:$0xff]
      %v1326 = vld [vmem:[%s303 + $0x150] sm:$0xff]
      %v1327 = vld [vmem:[%s303 + $0x158] sm:$0xff]
      %v1328 = vld [vmem:[%s303 + $0x168] sm:$0xff]
      %v1329 = vld [vmem:[%s303 + $0x170] sm:$0xff]
      %s1330 = scalar_lea.vmem %s1, 12
      %v1331 = vld [vmem:[%s1330] sm:$0xf]
      %v1333 = vsel %vm262, %v1298, 0
      %v1336 = vsel %vm262, %v1299, 0
      %v1339 = vsel %vm262, %v1300, 0
      %v1342 = vsel %vm262, %v1301, 0
      %v1345 = vsel %vm262, %v1302, 0
      %v1348 = vsel %vm262, %v1303, 0
      %v1351 = vsel %vm262, %v1304, 0
      %v1354 = vsel %vm262, %v1305, 0
      %v1357 = vsel %vm262, %v1306, 0
      %v1360 = vsel %vm262, %v1307, 0
      %v1363 = vsel %vm262, %v1308, 0
      %v1366 = vsel %vm262, %v1309, 0
      %v1369 = vsel %vm262, %v1310, 0
      %v1372 = vsel %vm262, %v1311, 0
      %v1375 = vsel %vm262, %v1312, 0
      %v1378 = vsel %vm262, %v1313, 0
      %v1381 = vsel %vm262, %v1314, 0
      %v1384 = vsel %vm262, %v1315, 0
      %v1387 = vsel %vm262, %v1316, 0
      %v1390 = vsel %vm262, %v1317, 0
      %v1393 = vsel %vm262, %v1318, 0
      %v1396 = vsel %vm262, %v1319, 0
      %v1399 = vsel %vm262, %v1320, 0
      %v1402 = vsel %vm262, %v1321, 0
      %v1405 = vsel %vm262, %v1322, 0
      %v1408 = vsel %vm262, %v1323, 0
      %v1411 = vsel %vm262, %v1324, 0
      %v1414 = vsel %vm262, %v1325, 0
      %v1417 = vsel %vm262, %v1326, 0
      %v1420 = vsel %vm262, %v1327, 0
      %v1423 = vsel %vm262, %v1328, 0
      %v1426 = vsel %vm262, %v1329, 0
      %v1429 = vsel %vm465, %v1331, 0
      %1431 = vmatpush.msra.mxu0 0.0
      %1432 = vmatpush.msra.mxu0 0.0
      %1433 = vmatpush.msra.mxu0 0.0
      %1434 = vmatpush.msra.mxu0 0.0
      %1435 = vmatpush.msra.mxu0 0.0
      %1436 = vmatpush.msra.mxu0 0.0
      %1437 = vmatpush.msra.mxu0 0.0
      %1438 = vmatpush.msra.mxu0 0.0
      %1439 = vmatpush.msra.mxu0 0.0
      %1440 = vmatpush.msra.mxu0 0.0
      %1441 = vmatpush.msra.mxu0 0.0
      %1442 = vmatpush.msra.mxu0 0.0
      %1443 = vmatpush.msra.mxu0 0.0
      %1444 = vmatpush.msra.mxu0 0.0
      %1445 = vmatpush.msra.mxu0 0.0
      %1446 = vmatpush.msra.mxu0 %v1429
      %1447 = vmatmul.f32.gmra.mxu0 %v1333
      %v1448 = vpop.f32.mrf.mxu0
      %v1449 = vadd.f32 0.0, %v1448
      %1450 = vmatmul.f32.gmra.mxu0 %v1336
      %v1451 = vpop.f32.mrf.mxu0
      %v1452 = vadd.f32 0.0, %v1451
      %1453 = vmatmul.f32.gmra.mxu0 %v1339
      %v1454 = vpop.f32.mrf.mxu0
      %v1455 = vadd.f32 0.0, %v1454
      %1456 = vmatmul.f32.gmra.mxu0 %v1342
      %v1457 = vpop.f32.mrf.mxu0
      %v1458 = vadd.f32 0.0, %v1457
      %1459 = vmatmul.f32.gmra.mxu0 %v1345
      %v1460 = vpop.f32.mrf.mxu0
      %v1461 = vadd.f32 0.0, %v1460
      %1462 = vmatmul.f32.gmra.mxu0 %v1348
      %v1463 = vpop.f32.mrf.mxu0
      %v1464 = vadd.f32 0.0, %v1463
      %1465 = vmatmul.f32.gmra.mxu0 %v1351
      %v1466 = vpop.f32.mrf.mxu0
      %v1467 = vadd.f32 0.0, %v1466
      %1468 = vmatmul.f32.gmra.mxu0 %v1354
      %v1469 = vpop.f32.mrf.mxu0
      %v1470 = vadd.f32 0.0, %v1469
      %1471 = vmatmul.f32.gmra.mxu0 %v1357
      %v1472 = vpop.f32.mrf.mxu0
      %v1473 = vadd.f32 0.0, %v1472
      %1474 = vmatmul.f32.gmra.mxu0 %v1360
      %v1475 = vpop.f32.mrf.mxu0
      %v1476 = vadd.f32 0.0, %v1475
      %1477 = vmatmul.f32.gmra.mxu0 %v1363
      %v1478 = vpop.f32.mrf.mxu0
      %v1479 = vadd.f32 0.0, %v1478
      %1480 = vmatmul.f32.gmra.mxu0 %v1366
      %v1481 = vpop.f32.mrf.mxu0
      %v1482 = vadd.f32 0.0, %v1481
      %1483 = vmatmul.f32.gmra.mxu0 %v1369
      %v1484 = vpop.f32.mrf.mxu0
      %v1485 = vadd.f32 0.0, %v1484
      %1486 = vmatmul.f32.gmra.mxu0 %v1372
      %v1487 = vpop.f32.mrf.mxu0
      %v1488 = vadd.f32 0.0, %v1487
      %1489 = vmatmul.f32.gmra.mxu0 %v1375
      %v1490 = vpop.f32.mrf.mxu0
      %v1491 = vadd.f32 0.0, %v1490
      %1492 = vmatmul.f32.gmra.mxu0 %v1378
      %v1493 = vpop.f32.mrf.mxu0
      %v1494 = vadd.f32 0.0, %v1493
      %1495 = vmatmul.f32.gmra.mxu0 %v1381
      %v1496 = vpop.f32.mrf.mxu0
      %v1497 = vadd.f32 0.0, %v1496
      %1498 = vmatmul.f32.gmra.mxu0 %v1384
      %v1499 = vpop.f32.mrf.mxu0
      %v1500 = vadd.f32 0.0, %v1499
      %1501 = vmatmul.f32.gmra.mxu0 %v1387
      %v1502 = vpop.f32.mrf.mxu0
      %v1503 = vadd.f32 0.0, %v1502
      %1504 = vmatmul.f32.gmra.mxu0 %v1390
      %v1505 = vpop.f32.mrf.mxu0
      %v1506 = vadd.f32 0.0, %v1505
      %1507 = vmatmul.f32.gmra.mxu0 %v1393
      %v1508 = vpop.f32.mrf.mxu0
      %v1509 = vadd.f32 0.0, %v1508
      %1510 = vmatmul.f32.gmra.mxu0 %v1396
      %v1511 = vpop.f32.mrf.mxu0
      %v1512 = vadd.f32 0.0, %v1511
      %1513 = vmatmul.f32.gmra.mxu0 %v1399
      %v1514 = vpop.f32.mrf.mxu0
      %v1515 = vadd.f32 0.0, %v1514
      %1516 = vmatmul.f32.gmra.mxu0 %v1402
      %v1517 = vpop.f32.mrf.mxu0
      %v1518 = vadd.f32 0.0, %v1517
      %1519 = vmatmul.f32.gmra.mxu0 %v1405
      %v1520 = vpop.f32.mrf.mxu0
      %v1521 = vadd.f32 0.0, %v1520
      %1522 = vmatmul.f32.gmra.mxu0 %v1408
      %v1523 = vpop.f32.mrf.mxu0
      %v1524 = vadd.f32 0.0, %v1523
      %1525 = vmatmul.f32.gmra.mxu0 %v1411
      %v1526 = vpop.f32.mrf.mxu0
      %v1527 = vadd.f32 0.0, %v1526
      %1528 = vmatmul.f32.gmra.mxu0 %v1414
      %v1529 = vpop.f32.mrf.mxu0
      %v1530 = vadd.f32 0.0, %v1529
      %1531 = vmatmul.f32.gmra.mxu0 %v1417
      %v1532 = vpop.f32.mrf.mxu0
      %v1533 = vadd.f32 0.0, %v1532
      %1534 = vmatmul.f32.gmra.mxu0 %v1420
      %v1535 = vpop.f32.mrf.mxu0
      %v1536 = vadd.f32 0.0, %v1535
      %1537 = vmatmul.f32.gmra.mxu0 %v1423
      %v1538 = vpop.f32.mrf.mxu0
      %v1539 = vadd.f32 0.0, %v1538
      %1540 = vmatmul.f32.gmra.mxu0 %v1426
      %v1541 = vpop.f32.mrf.mxu0
      %v1542 = vadd.f32 0.0, %v1541
      %1543 = vdwg.mxu0
      %v1544 = vld [vmem:[#allocation3] sm:$0xff]
      %v1545 = vld [vmem:[#allocation3 + $0x8] sm:$0xff]
      %v1546 = vld [vmem:[#allocation3 + $0x10] sm:$0xff]
      %v1547 = vld [vmem:[#allocation3 + $0x18] sm:$0xff]
      %v1548 = vld [vmem:[#allocation3 + $0x20] sm:$0xff]
      %v1549 = vld [vmem:[#allocation3 + $0x28] sm:$0xff]
      %v1550 = vld [vmem:[#allocation3 + $0x30] sm:$0xff]
      %v1551 = vld [vmem:[#allocation3 + $0x38] sm:$0xff]
      %v1552 = vld [vmem:[#allocation3 + $0x40] sm:$0xff]
      %v1553 = vld [vmem:[#allocation3 + $0x48] sm:$0xff]
      %v1554 = vld [vmem:[#allocation3 + $0x50] sm:$0xff]
      %v1555 = vld [vmem:[#allocation3 + $0x58] sm:$0xff]
      %v1556 = vld [vmem:[#allocation3 + $0x60] sm:$0xff]
      %v1557 = vld [vmem:[#allocation3 + $0x68] sm:$0xff]
      %v1558 = vld [vmem:[#allocation3 + $0x70] sm:$0xff]
      %v1559 = vld [vmem:[#allocation3 + $0x78] sm:$0xff]
      %v1560 = vld [vmem:[#allocation3 + $0x80] sm:$0xff]
      %v1561 = vld [vmem:[#allocation3 + $0x88] sm:$0xff]
      %v1562 = vld [vmem:[#allocation3 + $0x90] sm:$0xff]
      %v1563 = vld [vmem:[#allocation3 + $0x98] sm:$0xff]
      %v1564 = vld [vmem:[#allocation3 + $0xa0] sm:$0xff]
      %v1565 = vld [vmem:[#allocation3 + $0xa8] sm:$0xff]
      %v1566 = vld [vmem:[#allocation3 + $0xb0] sm:$0xff]
      %v1567 = vld [vmem:[#allocation3 + $0xb8] sm:$0xff]
      %v1568 = vld [vmem:[#allocation3 + $0xc0] sm:$0xff]
      %v1569 = vld [vmem:[#allocation3 + $0xc8] sm:$0xff]
      %v1570 = vld [vmem:[#allocation3 + $0xd0] sm:$0xff]
      %v1571 = vld [vmem:[#allocation3 + $0xd8] sm:$0xff]
      %v1572 = vld [vmem:[#allocation3 + $0xe0] sm:$0xff]
      %v1573 = vld [vmem:[#allocation3 + $0xe8] sm:$0xff]
      %v1574 = vld [vmem:[#allocation3 + $0xf0] sm:$0xff]
      %v1575 = vld [vmem:[#allocation3 + $0xf8] sm:$0xff]
      %v1576 = vadd.f32 %v1544, %v1449
      %v1577 = vadd.f32 %v1545, %v1452
      %v1578 = vadd.f32 %v1546, %v1455
      %v1579 = vadd.f32 %v1547, %v1458
      %v1580 = vadd.f32 %v1548, %v1461
      %v1581 = vadd.f32 %v1549, %v1464
      %v1582 = vadd.f32 %v1550, %v1467
      %v1583 = vadd.f32 %v1551, %v1470
      %v1584 = vadd.f32 %v1552, %v1473
      %v1585 = vadd.f32 %v1553, %v1476
      %v1586 = vadd.f32 %v1554, %v1479
      %v1587 = vadd.f32 %v1555, %v1482
      %v1588 = vadd.f32 %v1556, %v1485
      %v1589 = vadd.f32 %v1557, %v1488
      %v1590 = vadd.f32 %v1558, %v1491
      %v1591 = vadd.f32 %v1559, %v1494
      %v1592 = vadd.f32 %v1560, %v1497
      %v1593 = vadd.f32 %v1561, %v1500
      %v1594 = vadd.f32 %v1562, %v1503
      %v1595 = vadd.f32 %v1563, %v1506
      %v1596 = vadd.f32 %v1564, %v1509
      %v1597 = vadd.f32 %v1565, %v1512
      %v1598 = vadd.f32 %v1566, %v1515
      %v1599 = vadd.f32 %v1567, %v1518
      %v1600 = vadd.f32 %v1568, %v1521
      %v1601 = vadd.f32 %v1569, %v1524
      %v1602 = vadd.f32 %v1570, %v1527
      %v1603 = vadd.f32 %v1571, %v1530
      %v1604 = vadd.f32 %v1572, %v1533
      %v1605 = vadd.f32 %v1573, %v1536
      %v1606 = vadd.f32 %v1574, %v1539
      %v1607 = vadd.f32 %v1575, %v1542
      %1608 = vst.msk [vmem:[#allocation3] sm:$0xff] %vm262, %v1576
      %1609 = vst.msk [vmem:[#allocation3 + $0x8] sm:$0xff] %vm262, %v1577
      %1610 = vst.msk [vmem:[#allocation3 + $0x10] sm:$0xff] %vm262, %v1578
      %1611 = vst.msk [vmem:[#allocation3 + $0x18] sm:$0xff] %vm262, %v1579
      %1612 = vst.msk [vmem:[#allocation3 + $0x20] sm:$0xff] %vm262, %v1580
      %1613 = vst.msk [vmem:[#allocation3 + $0x28] sm:$0xff] %vm262, %v1581
      %1614 = vst.msk [vmem:[#allocation3 + $0x30] sm:$0xff] %vm262, %v1582
      %1615 = vst.msk [vmem:[#allocation3 + $0x38] sm:$0xff] %vm262, %v1583
      %1616 = vst.msk [vmem:[#allocation3 + $0x40] sm:$0xff] %vm262, %v1584
      %1617 = vst.msk [vmem:[#allocation3 + $0x48] sm:$0xff] %vm262, %v1585
      %1618 = vst.msk [vmem:[#allocation3 + $0x50] sm:$0xff] %vm262, %v1586
      %1619 = vst.msk [vmem:[#allocation3 + $0x58] sm:$0xff] %vm262, %v1587
      %1620 = vst.msk [vmem:[#allocation3 + $0x60] sm:$0xff] %vm262, %v1588
      %1621 = vst.msk [vmem:[#allocation3 + $0x68] sm:$0xff] %vm262, %v1589
      %1622 = vst.msk [vmem:[#allocation3 + $0x70] sm:$0xff] %vm262, %v1590
      %1623 = vst.msk [vmem:[#allocation3 + $0x78] sm:$0xff] %vm262, %v1591
      %1624 = vst.msk [vmem:[#allocation3 + $0x80] sm:$0xff] %vm262, %v1592
      %1625 = vst.msk [vmem:[#allocation3 + $0x88] sm:$0xff] %vm262, %v1593
      %1626 = vst.msk [vmem:[#allocation3 + $0x90] sm:$0xff] %vm262, %v1594
      %1627 = vst.msk [vmem:[#allocation3 + $0x98] sm:$0xff] %vm262, %v1595
      %1628 = vst.msk [vmem:[#allocation3 + $0xa0] sm:$0xff] %vm262, %v1596
      %1629 = vst.msk [vmem:[#allocation3 + $0xa8] sm:$0xff] %vm262, %v1597
      %1630 = vst.msk [vmem:[#allocation3 + $0xb0] sm:$0xff] %vm262, %v1598
      %1631 = vst.msk [vmem:[#allocation3 + $0xb8] sm:$0xff] %vm262, %v1599
      %1632 = vst.msk [vmem:[#allocation3 + $0xc0] sm:$0xff] %vm262, %v1600
      %1633 = vst.msk [vmem:[#allocation3 + $0xc8] sm:$0xff] %vm262, %v1601
      %1634 = vst.msk [vmem:[#allocation3 + $0xd0] sm:$0xff] %vm262, %v1602
      %1635 = vst.msk [vmem:[#allocation3 + $0xd8] sm:$0xff] %vm262, %v1603
      %1636 = vst.msk [vmem:[#allocation3 + $0xe0] sm:$0xff] %vm262, %v1604
      %1637 = vst.msk [vmem:[#allocation3 + $0xe8] sm:$0xff] %vm262, %v1605
      %1638 = vst.msk [vmem:[#allocation3 + $0xf0] sm:$0xff] %vm262, %v1606
      %1639 = vst.msk [vmem:[#allocation3 + $0xf8] sm:$0xff] %vm262, %v1607
      %v1640 = vld [vmem:[%s303 + $0x1] sm:$0xff]
      %v1641 = vld [vmem:[%s303 + $0x9] sm:$0xff]
      %v1642 = vld [vmem:[%s303 + $0x19] sm:$0xff]
      %v1643 = vld [vmem:[%s303 + $0x21] sm:$0xff]
      %v1644 = vld [vmem:[%s303 + $0x31] sm:$0xff]
      %v1645 = vld [vmem:[%s303 + $0x39] sm:$0xff]
      %v1646 = vld [vmem:[%s303 + $0x49] sm:$0xff]
      %v1647 = vld [vmem:[%s303 + $0x51] sm:$0xff]
      %v1648 = vld [vmem:[%s303 + $0x61] sm:$0xff]
      %v1649 = vld [vmem:[%s303 + $0x69] sm:$0xff]
      %v1650 = vld [vmem:[%s303 + $0x79] sm:$0xff]
      %v1651 = vld [vmem:[%s303 + $0x81] sm:$0xff]
      %v1652 = vld [vmem:[%s303 + $0x91] sm:$0xff]
      %v1653 = vld [vmem:[%s303 + $0x99] sm:$0xff]
      %v1654 = vld [vmem:[%s303 + $0xa9] sm:$0xff]
      %v1655 = vld [vmem:[%s303 + $0xb1] sm:$0xff]
      %v1656 = vld [vmem:[%s303 + $0xc1] sm:$0xff]
      %v1657 = vld [vmem:[%s303 + $0xc9] sm:$0xff]
      %v1658 = vld [vmem:[%s303 + $0xd9] sm:$0xff]
      %v1659 = vld [vmem:[%s303 + $0xe1] sm:$0xff]
      %v1660 = vld [vmem:[%s303 + $0xf1] sm:$0xff]
      %v1661 = vld [vmem:[%s303 + $0xf9] sm:$0xff]
      %v1662 = vld [vmem:[%s303 + $0x109] sm:$0xff]
      %v1663 = vld [vmem:[%s303 + $0x111] sm:$0xff]
      %v1664 = vld [vmem:[%s303 + $0x121] sm:$0xff]
      %v1665 = vld [vmem:[%s303 + $0x129] sm:$0xff]
      %v1666 = vld [vmem:[%s303 + $0x139] sm:$0xff]
      %v1667 = vld [vmem:[%s303 + $0x141] sm:$0xff]
      %v1668 = vld [vmem:[%s303 + $0x151] sm:$0xff]
      %v1669 = vld [vmem:[%s303 + $0x159] sm:$0xff]
      %v1670 = vld [vmem:[%s303 + $0x169] sm:$0xff]
      %v1671 = vld [vmem:[%s303 + $0x171] sm:$0xff]
      %s1672 = scalar_lea.vmem %s1, 16
      %v1673 = vld [vmem:[%s1672] sm:$0xf]
      %v1675 = vsel %vm262, %v1640, 0
      %v1678 = vsel %vm262, %v1641, 0
      %v1681 = vsel %vm262, %v1642, 0
      %v1684 = vsel %vm262, %v1643, 0
      %v1687 = vsel %vm262, %v1644, 0
      %v1690 = vsel %vm262, %v1645, 0
      %v1693 = vsel %vm262, %v1646, 0
      %v1696 = vsel %vm262, %v1647, 0
      %v1699 = vsel %vm262, %v1648, 0
      %v1702 = vsel %vm262, %v1649, 0
      %v1705 = vsel %vm262, %v1650, 0
      %v1708 = vsel %vm262, %v1651, 0
      %v1711 = vsel %vm262, %v1652, 0
      %v1714 = vsel %vm262, %v1653, 0
      %v1717 = vsel %vm262, %v1654, 0
      %v1720 = vsel %vm262, %v1655, 0
      %v1723 = vsel %vm262, %v1656, 0
      %v1726 = vsel %vm262, %v1657, 0
      %v1729 = vsel %vm262, %v1658, 0
      %v1732 = vsel %vm262, %v1659, 0
      %v1735 = vsel %vm262, %v1660, 0
      %v1738 = vsel %vm262, %v1661, 0
      %v1741 = vsel %vm262, %v1662, 0
      %v1744 = vsel %vm262, %v1663, 0
      %v1747 = vsel %vm262, %v1664, 0
      %v1750 = vsel %vm262, %v1665, 0
      %v1753 = vsel %vm262, %v1666, 0
      %v1756 = vsel %vm262, %v1667, 0
      %v1759 = vsel %vm262, %v1668, 0
      %v1762 = vsel %vm262, %v1669, 0
      %v1765 = vsel %vm262, %v1670, 0
      %v1768 = vsel %vm262, %v1671, 0
      %v1771 = vsel %vm465, %v1673, 0
      %1773 = vmatpush.msra.mxu0 0.0
      %1774 = vmatpush.msra.mxu0 0.0
      %1775 = vmatpush.msra.mxu0 0.0
      %1776 = vmatpush.msra.mxu0 0.0
      %1777 = vmatpush.msra.mxu0 0.0
      %1778 = vmatpush.msra.mxu0 0.0
      %1779 = vmatpush.msra.mxu0 0.0
      %1780 = vmatpush.msra.mxu0 0.0
      %1781 = vmatpush.msra.mxu0 0.0
      %1782 = vmatpush.msra.mxu0 0.0
      %1783 = vmatpush.msra.mxu0 0.0
      %1784 = vmatpush.msra.mxu0 0.0
      %1785 = vmatpush.msra.mxu0 0.0
      %1786 = vmatpush.msra.mxu0 0.0
      %1787 = vmatpush.msra.mxu0 0.0
      %1788 = vmatpush.msra.mxu0 %v1771
      %1789 = vmatmul.f32.gmra.mxu0 %v1675
      %v1790 = vpop.f32.mrf.mxu0
      %v1791 = vadd.f32 0.0, %v1790
      %1792 = vmatmul.f32.gmra.mxu0 %v1678
      %v1793 = vpop.f32.mrf.mxu0
      %v1794 = vadd.f32 0.0, %v1793
      %1795 = vmatmul.f32.gmra.mxu0 %v1681
      %v1796 = vpop.f32.mrf.mxu0
      %v1797 = vadd.f32 0.0, %v1796
      %1798 = vmatmul.f32.gmra.mxu0 %v1684
      %v1799 = vpop.f32.mrf.mxu0
      %v1800 = vadd.f32 0.0, %v1799
      %1801 = vmatmul.f32.gmra.mxu0 %v1687
      %v1802 = vpop.f32.mrf.mxu0
      %v1803 = vadd.f32 0.0, %v1802
      %1804 = vmatmul.f32.gmra.mxu0 %v1690
      %v1805 = vpop.f32.mrf.mxu0
      %v1806 = vadd.f32 0.0, %v1805
      %1807 = vmatmul.f32.gmra.mxu0 %v1693
      %v1808 = vpop.f32.mrf.mxu0
      %v1809 = vadd.f32 0.0, %v1808
      %1810 = vmatmul.f32.gmra.mxu0 %v1696
      %v1811 = vpop.f32.mrf.mxu0
      %v1812 = vadd.f32 0.0, %v1811
      %1813 = vmatmul.f32.gmra.mxu0 %v1699
      %v1814 = vpop.f32.mrf.mxu0
      %v1815 = vadd.f32 0.0, %v1814
      %1816 = vmatmul.f32.gmra.mxu0 %v1702
      %v1817 = vpop.f32.mrf.mxu0
      %v1818 = vadd.f32 0.0, %v1817
      %1819 = vmatmul.f32.gmra.mxu0 %v1705
      %v1820 = vpop.f32.mrf.mxu0
      %v1821 = vadd.f32 0.0, %v1820
      %1822 = vmatmul.f32.gmra.mxu0 %v1708
      %v1823 = vpop.f32.mrf.mxu0
      %v1824 = vadd.f32 0.0, %v1823
      %1825 = vmatmul.f32.gmra.mxu0 %v1711
      %v1826 = vpop.f32.mrf.mxu0
      %v1827 = vadd.f32 0.0, %v1826
      %1828 = vmatmul.f32.gmra.mxu0 %v1714
      %v1829 = vpop.f32.mrf.mxu0
      %v1830 = vadd.f32 0.0, %v1829
      %1831 = vmatmul.f32.gmra.mxu0 %v1717
      %v1832 = vpop.f32.mrf.mxu0
      %v1833 = vadd.f32 0.0, %v1832
      %1834 = vmatmul.f32.gmra.mxu0 %v1720
      %v1835 = vpop.f32.mrf.mxu0
      %v1836 = vadd.f32 0.0, %v1835
      %1837 = vmatmul.f32.gmra.mxu0 %v1723
      %v1838 = vpop.f32.mrf.mxu0
      %v1839 = vadd.f32 0.0, %v1838
      %1840 = vmatmul.f32.gmra.mxu0 %v1726
      %v1841 = vpop.f32.mrf.mxu0
      %v1842 = vadd.f32 0.0, %v1841
      %1843 = vmatmul.f32.gmra.mxu0 %v1729
      %v1844 = vpop.f32.mrf.mxu0
      %v1845 = vadd.f32 0.0, %v1844
      %1846 = vmatmul.f32.gmra.mxu0 %v1732
      %v1847 = vpop.f32.mrf.mxu0
      %v1848 = vadd.f32 0.0, %v1847
      %1849 = vmatmul.f32.gmra.mxu0 %v1735
      %v1850 = vpop.f32.mrf.mxu0
      %v1851 = vadd.f32 0.0, %v1850
      %1852 = vmatmul.f32.gmra.mxu0 %v1738
      %v1853 = vpop.f32.mrf.mxu0
      %v1854 = vadd.f32 0.0, %v1853
      %1855 = vmatmul.f32.gmra.mxu0 %v1741
      %v1856 = vpop.f32.mrf.mxu0
      %v1857 = vadd.f32 0.0, %v1856
      %1858 = vmatmul.f32.gmra.mxu0 %v1744
      %v1859 = vpop.f32.mrf.mxu0
      %v1860 = vadd.f32 0.0, %v1859
      %1861 = vmatmul.f32.gmra.mxu0 %v1747
      %v1862 = vpop.f32.mrf.mxu0
      %v1863 = vadd.f32 0.0, %v1862
      %1864 = vmatmul.f32.gmra.mxu0 %v1750
      %v1865 = vpop.f32.mrf.mxu0
      %v1866 = vadd.f32 0.0, %v1865
      %1867 = vmatmul.f32.gmra.mxu0 %v1753
      %v1868 = vpop.f32.mrf.mxu0
      %v1869 = vadd.f32 0.0, %v1868
      %1870 = vmatmul.f32.gmra.mxu0 %v1756
      %v1871 = vpop.f32.mrf.mxu0
      %v1872 = vadd.f32 0.0, %v1871
      %1873 = vmatmul.f32.gmra.mxu0 %v1759
      %v1874 = vpop.f32.mrf.mxu0
      %v1875 = vadd.f32 0.0, %v1874
      %1876 = vmatmul.f32.gmra.mxu0 %v1762
      %v1877 = vpop.f32.mrf.mxu0
      %v1878 = vadd.f32 0.0, %v1877
      %1879 = vmatmul.f32.gmra.mxu0 %v1765
      %v1880 = vpop.f32.mrf.mxu0
      %v1881 = vadd.f32 0.0, %v1880
      %1882 = vmatmul.f32.gmra.mxu0 %v1768
      %v1883 = vpop.f32.mrf.mxu0
      %v1884 = vadd.f32 0.0, %v1883
      %1885 = vdwg.mxu0
      %v1886 = vld [vmem:[#allocation3] sm:$0xff]
      %v1887 = vld [vmem:[#allocation3 + $0x8] sm:$0xff]
      %v1888 = vld [vmem:[#allocation3 + $0x10] sm:$0xff]
      %v1889 = vld [vmem:[#allocation3 + $0x18] sm:$0xff]
      %v1890 = vld [vmem:[#allocation3 + $0x20] sm:$0xff]
      %v1891 = vld [vmem:[#allocation3 + $0x28] sm:$0xff]
      %v1892 = vld [vmem:[#allocation3 + $0x30] sm:$0xff]
      %v1893 = vld [vmem:[#allocation3 + $0x38] sm:$0xff]
      %v1894 = vld [vmem:[#allocation3 + $0x40] sm:$0xff]
      %v1895 = vld [vmem:[#allocation3 + $0x48] sm:$0xff]
      %v1896 = vld [vmem:[#allocation3 + $0x50] sm:$0xff]
      %v1897 = vld [vmem:[#allocation3 + $0x58] sm:$0xff]
      %v1898 = vld [vmem:[#allocation3 + $0x60] sm:$0xff]
      %v1899 = vld [vmem:[#allocation3 + $0x68] sm:$0xff]
      %v1900 = vld [vmem:[#allocation3 + $0x70] sm:$0xff]
      %v1901 = vld [vmem:[#allocation3 + $0x78] sm:$0xff]
      %v1902 = vld [vmem:[#allocation3 + $0x80] sm:$0xff]
      %v1903 = vld [vmem:[#allocation3 + $0x88] sm:$0xff]
      %v1904 = vld [vmem:[#allocation3 + $0x90] sm:$0xff]
      %v1905 = vld [vmem:[#allocation3 + $0x98] sm:$0xff]
      %v1906 = vld [vmem:[#allocation3 + $0xa0] sm:$0xff]
      %v1907 = vld [vmem:[#allocation3 + $0xa8] sm:$0xff]
      %v1908 = vld [vmem:[#allocation3 + $0xb0] sm:$0xff]
      %v1909 = vld [vmem:[#allocation3 + $0xb8] sm:$0xff]
      %v1910 = vld [vmem:[#allocation3 + $0xc0] sm:$0xff]
      %v1911 = vld [vmem:[#allocation3 + $0xc8] sm:$0xff]
      %v1912 = vld [vmem:[#allocation3 + $0xd0] sm:$0xff]
      %v1913 = vld [vmem:[#allocation3 + $0xd8] sm:$0xff]
      %v1914 = vld [vmem:[#allocation3 + $0xe0] sm:$0xff]
      %v1915 = vld [vmem:[#allocation3 + $0xe8] sm:$0xff]
      %v1916 = vld [vmem:[#allocation3 + $0xf0] sm:$0xff]
      %v1917 = vld [vmem:[#allocation3 + $0xf8] sm:$0xff]
      %v1918 = vadd.f32 %v1886, %v1791
      %v1919 = vadd.f32 %v1887, %v1794
      %v1920 = vadd.f32 %v1888, %v1797
      %v1921 = vadd.f32 %v1889, %v1800
      %v1922 = vadd.f32 %v1890, %v1803
      %v1923 = vadd.f32 %v1891, %v1806
      %v1924 = vadd.f32 %v1892, %v1809
      %v1925 = vadd.f32 %v1893, %v1812
      %v1926 = vadd.f32 %v1894, %v1815
      %v1927 = vadd.f32 %v1895, %v1818
      %v1928 = vadd.f32 %v1896, %v1821
      %v1929 = vadd.f32 %v1897, %v1824
      %v1930 = vadd.f32 %v1898, %v1827
      %v1931 = vadd.f32 %v1899, %v1830
      %v1932 = vadd.f32 %v1900, %v1833
      %v1933 = vadd.f32 %v1901, %v1836
      %v1934 = vadd.f32 %v1902, %v1839
      %v1935 = vadd.f32 %v1903, %v1842
      %v1936 = vadd.f32 %v1904, %v1845
      %v1937 = vadd.f32 %v1905, %v1848
      %v1938 = vadd.f32 %v1906, %v1851
      %v1939 = vadd.f32 %v1907, %v1854
      %v1940 = vadd.f32 %v1908, %v1857
      %v1941 = vadd.f32 %v1909, %v1860
      %v1942 = vadd.f32 %v1910, %v1863
      %v1943 = vadd.f32 %v1911, %v1866
      %v1944 = vadd.f32 %v1912, %v1869
      %v1945 = vadd.f32 %v1913, %v1872
      %v1946 = vadd.f32 %v1914, %v1875
      %v1947 = vadd.f32 %v1915, %v1878
      %v1948 = vadd.f32 %v1916, %v1881
      %v1949 = vadd.f32 %v1917, %v1884
      %1950 = vst.msk [vmem:[#allocation3] sm:$0xff] %vm262, %v1918
      %1951 = vst.msk [vmem:[#allocation3 + $0x8] sm:$0xff] %vm262, %v1919
      %1952 = vst.msk [vmem:[#allocation3 + $0x10] sm:$0xff] %vm262, %v1920
      %1953 = vst.msk [vmem:[#allocation3 + $0x18] sm:$0xff] %vm262, %v1921
      %1954 = vst.msk [vmem:[#allocation3 + $0x20] sm:$0xff] %vm262, %v1922
      %1955 = vst.msk [vmem:[#allocation3 + $0x28] sm:$0xff] %vm262, %v1923
      %1956 = vst.msk [vmem:[#allocation3 + $0x30] sm:$0xff] %vm262, %v1924
      %1957 = vst.msk [vmem:[#allocation3 + $0x38] sm:$0xff] %vm262, %v1925
      %1958 = vst.msk [vmem:[#allocation3 + $0x40] sm:$0xff] %vm262, %v1926
      %1959 = vst.msk [vmem:[#allocation3 + $0x48] sm:$0xff] %vm262, %v1927
      %1960 = vst.msk [vmem:[#allocation3 + $0x50] sm:$0xff] %vm262, %v1928
      %1961 = vst.msk [vmem:[#allocation3 + $0x58] sm:$0xff] %vm262, %v1929
      %1962 = vst.msk [vmem:[#allocation3 + $0x60] sm:$0xff] %vm262, %v1930
      %1963 = vst.msk [vmem:[#allocation3 + $0x68] sm:$0xff] %vm262, %v1931
      %1964 = vst.msk [vmem:[#allocation3 + $0x70] sm:$0xff] %vm262, %v1932
      %1965 = vst.msk [vmem:[#allocation3 + $0x78] sm:$0xff] %vm262, %v1933
      %1966 = vst.msk [vmem:[#allocation3 + $0x80] sm:$0xff] %vm262, %v1934
      %1967 = vst.msk [vmem:[#allocation3 + $0x88] sm:$0xff] %vm262, %v1935
      %1968 = vst.msk [vmem:[#allocation3 + $0x90] sm:$0xff] %vm262, %v1936
      %1969 = vst.msk [vmem:[#allocation3 + $0x98] sm:$0xff] %vm262, %v1937
      %1970 = vst.msk [vmem:[#allocation3 + $0xa0] sm:$0xff] %vm262, %v1938
      %1971 = vst.msk [vmem:[#allocation3 + $0xa8] sm:$0xff] %vm262, %v1939
      %1972 = vst.msk [vmem:[#allocation3 + $0xb0] sm:$0xff] %vm262, %v1940
      %1973 = vst.msk [vmem:[#allocation3 + $0xb8] sm:$0xff] %vm262, %v1941
      %1974 = vst.msk [vmem:[#allocation3 + $0xc0] sm:$0xff] %vm262, %v1942
      %1975 = vst.msk [vmem:[#allocation3 + $0xc8] sm:$0xff] %vm262, %v1943
      %1976 = vst.msk [vmem:[#allocation3 + $0xd0] sm:$0xff] %vm262, %v1944
      %1977 = vst.msk [vmem:[#allocation3 + $0xd8] sm:$0xff] %vm262, %v1945
      %1978 = vst.msk [vmem:[#allocation3 + $0xe0] sm:$0xff] %vm262, %v1946
      %1979 = vst.msk [vmem:[#allocation3 + $0xe8] sm:$0xff] %vm262, %v1947
      %1980 = vst.msk [vmem:[#allocation3 + $0xf0] sm:$0xff] %vm262, %v1948
      %1981 = vst.msk [vmem:[#allocation3 + $0xf8] sm:$0xff] %vm262, %v1949
      %v1982 = vld [vmem:[%s303 + $0x2] sm:$0xff]
      %v1983 = vld [vmem:[%s303 + $0xa] sm:$0xff]
      %v1984 = vld [vmem:[%s303 + $0x1a] sm:$0xff]
      %v1985 = vld [vmem:[%s303 + $0x22] sm:$0xff]
      %v1986 = vld [vmem:[%s303 + $0x32] sm:$0xff]
      %v1987 = vld [vmem:[%s303 + $0x3a] sm:$0xff]
      %v1988 = vld [vmem:[%s303 + $0x4a] sm:$0xff]
      %v1989 = vld [vmem:[%s303 + $0x52] sm:$0xff]
      %v1990 = vld [vmem:[%s303 + $0x62] sm:$0xff]
      %v1991 = vld [vmem:[%s303 + $0x6a] sm:$0xff]
      %v1992 = vld [vmem:[%s303 + $0x7a] sm:$0xff]
      %v1993 = vld [vmem:[%s303 + $0x82] sm:$0xff]
      %v1994 = vld [vmem:[%s303 + $0x92] sm:$0xff]
      %v1995 = vld [vmem:[%s303 + $0x9a] sm:$0xff]
      %v1996 = vld [vmem:[%s303 + $0xaa] sm:$0xff]
      %v1997 = vld [vmem:[%s303 + $0xb2] sm:$0xff]
      %v1998 = vld [vmem:[%s303 + $0xc2] sm:$0xff]
      %v1999 = vld [vmem:[%s303 + $0xca] sm:$0xff]
      %v2000 = vld [vmem:[%s303 + $0xda] sm:$0xff]
      %v2001 = vld [vmem:[%s303 + $0xe2] sm:$0xff]
      %v2002 = vld [vmem:[%s303 + $0xf2] sm:$0xff]
      %v2003 = vld [vmem:[%s303 + $0xfa] sm:$0xff]
      %v2004 = vld [vmem:[%s303 + $0x10a] sm:$0xff]
      %v2005 = vld [vmem:[%s303 + $0x112] sm:$0xff]
      %v2006 = vld [vmem:[%s303 + $0x122] sm:$0xff]
      %v2007 = vld [vmem:[%s303 + $0x12a] sm:$0xff]
      %v2008 = vld [vmem:[%s303 + $0x13a] sm:$0xff]
      %v2009 = vld [vmem:[%s303 + $0x142] sm:$0xff]
      %v2010 = vld [vmem:[%s303 + $0x152] sm:$0xff]
      %v2011 = vld [vmem:[%s303 + $0x15a] sm:$0xff]
      %v2012 = vld [vmem:[%s303 + $0x16a] sm:$0xff]
      %v2013 = vld [vmem:[%s303 + $0x172] sm:$0xff]
      %s2014 = scalar_lea.vmem %s1, 20
      %v2015 = vld [vmem:[%s2014] sm:$0xf]
      %v2017 = vsel %vm262, %v1982, 0
      %v2020 = vsel %vm262, %v1983, 0
      %v2023 = vsel %vm262, %v1984, 0
      %v2026 = vsel %vm262, %v1985, 0
      %v2029 = vsel %vm262, %v1986, 0
      %v2032 = vsel %vm262, %v1987, 0
      %v2035 = vsel %vm262, %v1988, 0
      %v2038 = vsel %vm262, %v1989, 0
      %v2041 = vsel %vm262, %v1990, 0
      %v2044 = vsel %vm262, %v1991, 0
      %v2047 = vsel %vm262, %v1992, 0
      %v2050 = vsel %vm262, %v1993, 0
      %v2053 = vsel %vm262, %v1994, 0
      %v2056 = vsel %vm262, %v1995, 0
      %v2059 = vsel %vm262, %v1996, 0
      %v2062 = vsel %vm262, %v1997, 0
      %v2065 = vsel %vm262, %v1998, 0
      %v2068 = vsel %vm262, %v1999, 0
      %v2071 = vsel %vm262, %v2000, 0
      %v2074 = vsel %vm262, %v2001, 0
      %v2077 = vsel %vm262, %v2002, 0
      %v2080 = vsel %vm262, %v2003, 0
      %v2083 = vsel %vm262, %v2004, 0
      %v2086 = vsel %vm262, %v2005, 0
      %v2089 = vsel %vm262, %v2006, 0
      %v2092 = vsel %vm262, %v2007, 0
      %v2095 = vsel %vm262, %v2008, 0
      %v2098 = vsel %vm262, %v2009, 0
      %v2101 = vsel %vm262, %v2010, 0
      %v2104 = vsel %vm262, %v2011, 0
      %v2107 = vsel %vm262, %v2012, 0
      %v2110 = vsel %vm262, %v2013, 0
      %v2113 = vsel %vm465, %v2015, 0
      %2115 = vmatpush.msra.mxu0 0.0
      %2116 = vmatpush.msra.mxu0 0.0
      %2117 = vmatpush.msra.mxu0 0.0
      %2118 = vmatpush.msra.mxu0 0.0
      %2119 = vmatpush.msra.mxu0 0.0
      %2120 = vmatpush.msra.mxu0 0.0
      %2121 = vmatpush.msra.mxu0 0.0
      %2122 = vmatpush.msra.mxu0 0.0
      %2123 = vmatpush.msra.mxu0 0.0
      %2124 = vmatpush.msra.mxu0 0.0
      %2125 = vmatpush.msra.mxu0 0.0
      %2126 = vmatpush.msra.mxu0 0.0
      %2127 = vmatpush.msra.mxu0 0.0
      %2128 = vmatpush.msra.mxu0 0.0
      %2129 = vmatpush.msra.mxu0 0.0
      %2130 = vmatpush.msra.mxu0 %v2113
      %2131 = vmatmul.f32.gmra.mxu0 %v2017
      %v2132 = vpop.f32.mrf.mxu0
      %v2133 = vadd.f32 0.0, %v2132
      %2134 = vmatmul.f32.gmra.mxu0 %v2020
      %v2135 = vpop.f32.mrf.mxu0
      %v2136 = vadd.f32 0.0, %v2135
      %2137 = vmatmul.f32.gmra.mxu0 %v2023
      %v2138 = vpop.f32.mrf.mxu0
      %v2139 = vadd.f32 0.0, %v2138
      %2140 = vmatmul.f32.gmra.mxu0 %v2026
      %v2141 = vpop.f32.mrf.mxu0
      %v2142 = vadd.f32 0.0, %v2141
      %2143 = vmatmul.f32.gmra.mxu0 %v2029
      %v2144 = vpop.f32.mrf.mxu0
      %v2145 = vadd.f32 0.0, %v2144
      %2146 = vmatmul.f32.gmra.mxu0 %v2032
      %v2147 = vpop.f32.mrf.mxu0
      %v2148 = vadd.f32 0.0, %v2147
      %2149 = vmatmul.f32.gmra.mxu0 %v2035
      %v2150 = vpop.f32.mrf.mxu0
      %v2151 = vadd.f32 0.0, %v2150
      %2152 = vmatmul.f32.gmra.mxu0 %v2038
      %v2153 = vpop.f32.mrf.mxu0
      %v2154 = vadd.f32 0.0, %v2153
      %2155 = vmatmul.f32.gmra.mxu0 %v2041
      %v2156 = vpop.f32.mrf.mxu0
      %v2157 = vadd.f32 0.0, %v2156
      %2158 = vmatmul.f32.gmra.mxu0 %v2044
      %v2159 = vpop.f32.mrf.mxu0
      %v2160 = vadd.f32 0.0, %v2159
      %2161 = vmatmul.f32.gmra.mxu0 %v2047
      %v2162 = vpop.f32.mrf.mxu0
      %v2163 = vadd.f32 0.0, %v2162
      %2164 = vmatmul.f32.gmra.mxu0 %v2050
      %v2165 = vpop.f32.mrf.mxu0
      %v2166 = vadd.f32 0.0, %v2165
      %2167 = vmatmul.f32.gmra.mxu0 %v2053
      %v2168 = vpop.f32.mrf.mxu0
      %v2169 = vadd.f32 0.0, %v2168
      %2170 = vmatmul.f32.gmra.mxu0 %v2056
      %v2171 = vpop.f32.mrf.mxu0
      %v2172 = vadd.f32 0.0, %v2171
      %2173 = vmatmul.f32.gmra.mxu0 %v2059
      %v2174 = vpop.f32.mrf.mxu0
      %v2175 = vadd.f32 0.0, %v2174
      %2176 = vmatmul.f32.gmra.mxu0 %v2062
      %v2177 = vpop.f32.mrf.mxu0
      %v2178 = vadd.f32 0.0, %v2177
      %2179 = vmatmul.f32.gmra.mxu0 %v2065
      %v2180 = vpop.f32.mrf.mxu0
      %v2181 = vadd.f32 0.0, %v2180
      %2182 = vmatmul.f32.gmra.mxu0 %v2068
      %v2183 = vpop.f32.mrf.mxu0
      %v2184 = vadd.f32 0.0, %v2183
      %2185 = vmatmul.f32.gmra.mxu0 %v2071
      %v2186 = vpop.f32.mrf.mxu0
      %v2187 = vadd.f32 0.0, %v2186
      %2188 = vmatmul.f32.gmra.mxu0 %v2074
      %v2189 = vpop.f32.mrf.mxu0
      %v2190 = vadd.f32 0.0, %v2189
      %2191 = vmatmul.f32.gmra.mxu0 %v2077
      %v2192 = vpop.f32.mrf.mxu0
      %v2193 = vadd.f32 0.0, %v2192
      %2194 = vmatmul.f32.gmra.mxu0 %v2080
      %v2195 = vpop.f32.mrf.mxu0
      %v2196 = vadd.f32 0.0, %v2195
      %2197 = vmatmul.f32.gmra.mxu0 %v2083
      %v2198 = vpop.f32.mrf.mxu0
      %v2199 = vadd.f32 0.0, %v2198
      %2200 = vmatmul.f32.gmra.mxu0 %v2086
      %v2201 = vpop.f32.mrf.mxu0
      %v2202 = vadd.f32 0.0, %v2201
      %2203 = vmatmul.f32.gmra.mxu0 %v2089
      %v2204 = vpop.f32.mrf.mxu0
      %v2205 = vadd.f32 0.0, %v2204
      %2206 = vmatmul.f32.gmra.mxu0 %v2092
      %v2207 = vpop.f32.mrf.mxu0
      %v2208 = vadd.f32 0.0, %v2207
      %2209 = vmatmul.f32.gmra.mxu0 %v2095
      %v2210 = vpop.f32.mrf.mxu0
      %v2211 = vadd.f32 0.0, %v2210
      %2212 = vmatmul.f32.gmra.mxu0 %v2098
      %v2213 = vpop.f32.mrf.mxu0
      %v2214 = vadd.f32 0.0, %v2213
      %2215 = vmatmul.f32.gmra.mxu0 %v2101
      %v2216 = vpop.f32.mrf.mxu0
      %v2217 = vadd.f32 0.0, %v2216
      %2218 = vmatmul.f32.gmra.mxu0 %v2104
      %v2219 = vpop.f32.mrf.mxu0
      %v2220 = vadd.f32 0.0, %v2219
      %2221 = vmatmul.f32.gmra.mxu0 %v2107
      %v2222 = vpop.f32.mrf.mxu0
      %v2223 = vadd.f32 0.0, %v2222
      %2224 = vmatmul.f32.gmra.mxu0 %v2110
      %v2225 = vpop.f32.mrf.mxu0
      %v2226 = vadd.f32 0.0, %v2225
      %2227 = vdwg.mxu0
      %v2228 = vld [vmem:[#allocation3] sm:$0xff]
      %v2229 = vld [vmem:[#allocation3 + $0x8] sm:$0xff]
      %v2230 = vld [vmem:[#allocation3 + $0x10] sm:$0xff]
      %v2231 = vld [vmem:[#allocation3 + $0x18] sm:$0xff]
      %v2232 = vld [vmem:[#allocation3 + $0x20] sm:$0xff]
      %v2233 = vld [vmem:[#allocation3 + $0x28] sm:$0xff]
      %v2234 = vld [vmem:[#allocation3 + $0x30] sm:$0xff]
      %v2235 = vld [vmem:[#allocation3 + $0x38] sm:$0xff]
      %v2236 = vld [vmem:[#allocation3 + $0x40] sm:$0xff]
      %v2237 = vld [vmem:[#allocation3 + $0x48] sm:$0xff]
      %v2238 = vld [vmem:[#allocation3 + $0x50] sm:$0xff]
      %v2239 = vld [vmem:[#allocation3 + $0x58] sm:$0xff]
      %v2240 = vld [vmem:[#allocation3 + $0x60] sm:$0xff]
      %v2241 = vld [vmem:[#allocation3 + $0x68] sm:$0xff]
      %v2242 = vld [vmem:[#allocation3 + $0x70] sm:$0xff]
      %v2243 = vld [vmem:[#allocation3 + $0x78] sm:$0xff]
      %v2244 = vld [vmem:[#allocation3 + $0x80] sm:$0xff]
      %v2245 = vld [vmem:[#allocation3 + $0x88] sm:$0xff]
      %v2246 = vld [vmem:[#allocation3 + $0x90] sm:$0xff]
      %v2247 = vld [vmem:[#allocation3 + $0x98] sm:$0xff]
      %v2248 = vld [vmem:[#allocation3 + $0xa0] sm:$0xff]
      %v2249 = vld [vmem:[#allocation3 + $0xa8] sm:$0xff]
      %v2250 = vld [vmem:[#allocation3 + $0xb0] sm:$0xff]
      %v2251 = vld [vmem:[#allocation3 + $0xb8] sm:$0xff]
      %v2252 = vld [vmem:[#allocation3 + $0xc0] sm:$0xff]
      %v2253 = vld [vmem:[#allocation3 + $0xc8] sm:$0xff]
      %v2254 = vld [vmem:[#allocation3 + $0xd0] sm:$0xff]
      %v2255 = vld [vmem:[#allocation3 + $0xd8] sm:$0xff]
      %v2256 = vld [vmem:[#allocation3 + $0xe0] sm:$0xff]
      %v2257 = vld [vmem:[#allocation3 + $0xe8] sm:$0xff]
      %v2258 = vld [vmem:[#allocation3 + $0xf0] sm:$0xff]
      %v2259 = vld [vmem:[#allocation3 + $0xf8] sm:$0xff]
      %v2260 = vadd.f32 %v2228, %v2133
      %v2261 = vadd.f32 %v2229, %v2136
      %v2262 = vadd.f32 %v2230, %v2139
      %v2263 = vadd.f32 %v2231, %v2142
      %v2264 = vadd.f32 %v2232, %v2145
      %v2265 = vadd.f32 %v2233, %v2148
      %v2266 = vadd.f32 %v2234, %v2151
      %v2267 = vadd.f32 %v2235, %v2154
      %v2268 = vadd.f32 %v2236, %v2157
      %v2269 = vadd.f32 %v2237, %v2160
      %v2270 = vadd.f32 %v2238, %v2163
      %v2271 = vadd.f32 %v2239, %v2166
      %v2272 = vadd.f32 %v2240, %v2169
      %v2273 = vadd.f32 %v2241, %v2172
      %v2274 = vadd.f32 %v2242, %v2175
      %v2275 = vadd.f32 %v2243, %v2178
      %v2276 = vadd.f32 %v2244, %v2181
      %v2277 = vadd.f32 %v2245, %v2184
      %v2278 = vadd.f32 %v2246, %v2187
      %v2279 = vadd.f32 %v2247, %v2190
      %v2280 = vadd.f32 %v2248, %v2193
      %v2281 = vadd.f32 %v2249, %v2196
      %v2282 = vadd.f32 %v2250, %v2199
      %v2283 = vadd.f32 %v2251, %v2202
      %v2284 = vadd.f32 %v2252, %v2205
      %v2285 = vadd.f32 %v2253, %v2208
      %v2286 = vadd.f32 %v2254, %v2211
      %v2287 = vadd.f32 %v2255, %v2214
      %v2288 = vadd.f32 %v2256, %v2217
      %v2289 = vadd.f32 %v2257, %v2220
      %v2290 = vadd.f32 %v2258, %v2223
      %v2291 = vadd.f32 %v2259, %v2226
      %2292 = vst.msk [vmem:[#allocation3] sm:$0xff] %vm262, %v2260
      %2293 = vst.msk [vmem:[#allocation3 + $0x8] sm:$0xff] %vm262, %v2261
      %2294 = vst.msk [vmem:[#allocation3 + $0x10] sm:$0xff] %vm262, %v2262
      %2295 = vst.msk [vmem:[#allocation3 + $0x18] sm:$0xff] %vm262, %v2263
      %2296 = vst.msk [vmem:[#allocation3 + $0x20] sm:$0xff] %vm262, %v2264
      %2297 = vst.msk [vmem:[#allocation3 + $0x28] sm:$0xff] %vm262, %v2265
      %2298 = vst.msk [vmem:[#allocation3 + $0x30] sm:$0xff] %vm262, %v2266
      %2299 = vst.msk [vmem:[#allocation3 + $0x38] sm:$0xff] %vm262, %v2267
      %2300 = vst.msk [vmem:[#allocation3 + $0x40] sm:$0xff] %vm262, %v2268
      %2301 = vst.msk [vmem:[#allocation3 + $0x48] sm:$0xff] %vm262, %v2269
      %2302 = vst.msk [vmem:[#allocation3 + $0x50] sm:$0xff] %vm262, %v2270
      %2303 = vst.msk [vmem:[#allocation3 + $0x58] sm:$0xff] %vm262, %v2271
      %2304 = vst.msk [vmem:[#allocation3 + $0x60] sm:$0xff] %vm262, %v2272
      %2305 = vst.msk [vmem:[#allocation3 + $0x68] sm:$0xff] %vm262, %v2273
      %2306 = vst.msk [vmem:[#allocation3 + $0x70] sm:$0xff] %vm262, %v2274
      %2307 = vst.msk [vmem:[#allocation3 + $0x78] sm:$0xff] %vm262, %v2275
      %2308 = vst.msk [vmem:[#allocation3 + $0x80] sm:$0xff] %vm262, %v2276
      %2309 = vst.msk [vmem:[#allocation3 + $0x88] sm:$0xff] %vm262, %v2277
      %2310 = vst.msk [vmem:[#allocation3 + $0x90] sm:$0xff] %vm262, %v2278
      %2311 = vst.msk [vmem:[#allocation3 + $0x98] sm:$0xff] %vm262, %v2279
      %2312 = vst.msk [vmem:[#allocation3 + $0xa0] sm:$0xff] %vm262, %v2280
      %2313 = vst.msk [vmem:[#allocation3 + $0xa8] sm:$0xff] %vm262, %v2281
      %2314 = vst.msk [vmem:[#allocation3 + $0xb0] sm:$0xff] %vm262, %v2282
      %2315 = vst.msk [vmem:[#allocation3 + $0xb8] sm:$0xff] %vm262, %v2283
      %2316 = vst.msk [vmem:[#allocation3 + $0xc0] sm:$0xff] %vm262, %v2284
      %2317 = vst.msk [vmem:[#allocation3 + $0xc8] sm:$0xff] %vm262, %v2285
      %2318 = vst.msk [vmem:[#allocation3 + $0xd0] sm:$0xff] %vm262, %v2286
      %2319 = vst.msk [vmem:[#allocation3 + $0xd8] sm:$0xff] %vm262, %v2287
      %2320 = vst.msk [vmem:[#allocation3 + $0xe0] sm:$0xff] %vm262, %v2288
      %2321 = vst.msk [vmem:[#allocation3 + $0xe8] sm:$0xff] %vm262, %v2289
      %2322 = vst.msk [vmem:[#allocation3 + $0xf0] sm:$0xff] %vm262, %v2290
      %2323 = vst.msk [vmem:[#allocation3 + $0xf8] sm:$0xff] %vm262, %v2291
      %s2324 = scalar_lea.vmem [#allocation2], 48
      %v2325 = vld [vmem:[%s2324] sm:$0xff]
      %v2326 = vld [vmem:[%s2324 + $0x8] sm:$0xff]
      %v2327 = vld [vmem:[%s2324 + $0x18] sm:$0xff]
      %v2328 = vld [vmem:[%s2324 + $0x20] sm:$0xff]
      %v2329 = vld [vmem:[%s2324 + $0x30] sm:$0xff]
      %v2330 = vld [vmem:[%s2324 + $0x38] sm:$0xff]
      %v2331 = vld [vmem:[%s2324 + $0x48] sm:$0xff]
      %v2332 = vld [vmem:[%s2324 + $0x50] sm:$0xff]
      %v2333 = vld [vmem:[%s2324 + $0x60] sm:$0xff]
      %v2334 = vld [vmem:[%s2324 + $0x68] sm:$0xff]
      %v2335 = vld [vmem:[%s2324 + $0x78] sm:$0xff]
      %v2336 = vld [vmem:[%s2324 + $0x80] sm:$0xff]
      %v2337 = vld [vmem:[%s2324 + $0x90] sm:$0xff]
      %v2338 = vld [vmem:[%s2324 + $0x98] sm:$0xff]
      %v2339 = vld [vmem:[%s2324 + $0xa8] sm:$0xff]
      %v2340 = vld [vmem:[%s2324 + $0xb0] sm:$0xff]
      %v2341 = vld [vmem:[%s2324 + $0xc0] sm:$0xff]
      %v2342 = vld [vmem:[%s2324 + $0xc8] sm:$0xff]
      %v2343 = vld [vmem:[%s2324 + $0xd8] sm:$0xff]
      %v2344 = vld [vmem:[%s2324 + $0xe0] sm:$0xff]
      %v2345 = vld [vmem:[%s2324 + $0xf0] sm:$0xff]
      %v2346 = vld [vmem:[%s2324 + $0xf8] sm:$0xff]
      %v2347 = vld [vmem:[%s2324 + $0x108] sm:$0xff]
      %v2348 = vld [vmem:[%s2324 + $0x110] sm:$0xff]
      %v2349 = vld [vmem:[%s2324 + $0x120] sm:$0xff]
      %v2350 = vld [vmem:[%s2324 + $0x128] sm:$0xff]
      %v2351 = vld [vmem:[%s2324 + $0x138] sm:$0xff]
      %v2352 = vld [vmem:[%s2324 + $0x140] sm:$0xff]
      %v2353 = vld [vmem:[%s2324 + $0x150] sm:$0xff]
      %v2354 = vld [vmem:[%s2324 + $0x158] sm:$0xff]
      %v2355 = vld [vmem:[%s2324 + $0x168] sm:$0xff]
      %v2356 = vld [vmem:[%s2324 + $0x170] sm:$0xff]
      %s2357 = scalar_lea.vmem %s1, 24
      %v2358 = vld [vmem:[%s2357] sm:$0xf]
      %v2360 = vsel %vm262, %v2325, 0
      %v2363 = vsel %vm262, %v2326, 0
      %v2366 = vsel %vm262, %v2327, 0
      %v2369 = vsel %vm262, %v2328, 0
      %v2372 = vsel %vm262, %v2329, 0
      %v2375 = vsel %vm262, %v2330, 0
      %v2378 = vsel %vm262, %v2331, 0
      %v2381 = vsel %vm262, %v2332, 0
      %v2384 = vsel %vm262, %v2333, 0
      %v2387 = vsel %vm262, %v2334, 0
      %v2390 = vsel %vm262, %v2335, 0
      %v2393 = vsel %vm262, %v2336, 0
      %v2396 = vsel %vm262, %v2337, 0
      %v2399 = vsel %vm262, %v2338, 0
      %v2402 = vsel %vm262, %v2339, 0
      %v2405 = vsel %vm262, %v2340, 0
      %v2408 = vsel %vm262, %v2341, 0
      %v2411 = vsel %vm262, %v2342, 0
      %v2414 = vsel %vm262, %v2343, 0
      %v2417 = vsel %vm262, %v2344, 0
      %v2420 = vsel %vm262, %v2345, 0
      %v2423 = vsel %vm262, %v2346, 0
      %v2426 = vsel %vm262, %v2347, 0
      %v2429 = vsel %vm262, %v2348, 0
      %v2432 = vsel %vm262, %v2349, 0
      %v2435 = vsel %vm262, %v2350, 0
      %v2438 = vsel %vm262, %v2351, 0
      %v2441 = vsel %vm262, %v2352, 0
      %v2444 = vsel %vm262, %v2353, 0
      %v2447 = vsel %vm262, %v2354, 0
      %v2450 = vsel %vm262, %v2355, 0
      %v2453 = vsel %vm262, %v2356, 0
      %v2456 = vsel %vm465, %v2358, 0
      %2458 = vmatpush.msra.mxu0 0.0
      %2459 = vmatpush.msra.mxu0 0.0
      %2460 = vmatpush.msra.mxu0 0.0
      %2461 = vmatpush.msra.mxu0 0.0
      %2462 = vmatpush.msra.mxu0 0.0
      %2463 = vmatpush.msra.mxu0 0.0
      %2464 = vmatpush.msra.mxu0 0.0
      %2465 = vmatpush.msra.mxu0 0.0
      %2466 = vmatpush.msra.mxu0 0.0
      %2467 = vmatpush.msra.mxu0 0.0
      %2468 = vmatpush.msra.mxu0 0.0
      %2469 = vmatpush.msra.mxu0 0.0
      %2470 = vmatpush.msra.mxu0 0.0
      %2471 = vmatpush.msra.mxu0 0.0
      %2472 = vmatpush.msra.mxu0 0.0
      %2473 = vmatpush.msra.mxu0 %v2456
      %2474 = vmatmul.f32.gmra.mxu0 %v2360
      %v2475 = vpop.f32.mrf.mxu0
      %v2476 = vadd.f32 0.0, %v2475
      %2477 = vmatmul.f32.gmra.mxu0 %v2363
      %v2478 = vpop.f32.mrf.mxu0
      %v2479 = vadd.f32 0.0, %v2478
      %2480 = vmatmul.f32.gmra.mxu0 %v2366
      %v2481 = vpop.f32.mrf.mxu0
      %v2482 = vadd.f32 0.0, %v2481
      %2483 = vmatmul.f32.gmra.mxu0 %v2369
      %v2484 = vpop.f32.mrf.mxu0
      %v2485 = vadd.f32 0.0, %v2484
      %2486 = vmatmul.f32.gmra.mxu0 %v2372
      %v2487 = vpop.f32.mrf.mxu0
      %v2488 = vadd.f32 0.0, %v2487
      %2489 = vmatmul.f32.gmra.mxu0 %v2375
      %v2490 = vpop.f32.mrf.mxu0
      %v2491 = vadd.f32 0.0, %v2490
      %2492 = vmatmul.f32.gmra.mxu0 %v2378
      %v2493 = vpop.f32.mrf.mxu0
      %v2494 = vadd.f32 0.0, %v2493
      %2495 = vmatmul.f32.gmra.mxu0 %v2381
      %v2496 = vpop.f32.mrf.mxu0
      %v2497 = vadd.f32 0.0, %v2496
      %2498 = vmatmul.f32.gmra.mxu0 %v2384
      %v2499 = vpop.f32.mrf.mxu0
      %v2500 = vadd.f32 0.0, %v2499
      %2501 = vmatmul.f32.gmra.mxu0 %v2387
      %v2502 = vpop.f32.mrf.mxu0
      %v2503 = vadd.f32 0.0, %v2502
      %2504 = vmatmul.f32.gmra.mxu0 %v2390
      %v2505 = vpop.f32.mrf.mxu0
      %v2506 = vadd.f32 0.0, %v2505
      %2507 = vmatmul.f32.gmra.mxu0 %v2393
      %v2508 = vpop.f32.mrf.mxu0
      %v2509 = vadd.f32 0.0, %v2508
      %2510 = vmatmul.f32.gmra.mxu0 %v2396
      %v2511 = vpop.f32.mrf.mxu0
      %v2512 = vadd.f32 0.0, %v2511
      %2513 = vmatmul.f32.gmra.mxu0 %v2399
      %v2514 = vpop.f32.mrf.mxu0
      %v2515 = vadd.f32 0.0, %v2514
      %2516 = vmatmul.f32.gmra.mxu0 %v2402
      %v2517 = vpop.f32.mrf.mxu0
      %v2518 = vadd.f32 0.0, %v2517
      %2519 = vmatmul.f32.gmra.mxu0 %v2405
      %v2520 = vpop.f32.mrf.mxu0
      %v2521 = vadd.f32 0.0, %v2520
      %2522 = vmatmul.f32.gmra.mxu0 %v2408
      %v2523 = vpop.f32.mrf.mxu0
      %v2524 = vadd.f32 0.0, %v2523
      %2525 = vmatmul.f32.gmra.mxu0 %v2411
      %v2526 = vpop.f32.mrf.mxu0
      %v2527 = vadd.f32 0.0, %v2526
      %2528 = vmatmul.f32.gmra.mxu0 %v2414
      %v2529 = vpop.f32.mrf.mxu0
      %v2530 = vadd.f32 0.0, %v2529
      %2531 = vmatmul.f32.gmra.mxu0 %v2417
      %v2532 = vpop.f32.mrf.mxu0
      %v2533 = vadd.f32 0.0, %v2532
      %2534 = vmatmul.f32.gmra.mxu0 %v2420
      %v2535 = vpop.f32.mrf.mxu0
      %v2536 = vadd.f32 0.0, %v2535
      %2537 = vmatmul.f32.gmra.mxu0 %v2423
      %v2538 = vpop.f32.mrf.mxu0
      %v2539 = vadd.f32 0.0, %v2538
      %2540 = vmatmul.f32.gmra.mxu0 %v2426
      %v2541 = vpop.f32.mrf.mxu0
      %v2542 = vadd.f32 0.0, %v2541
      %2543 = vmatmul.f32.gmra.mxu0 %v2429
      %v2544 = vpop.f32.mrf.mxu0
      %v2545 = vadd.f32 0.0, %v2544
      %2546 = vmatmul.f32.gmra.mxu0 %v2432
      %v2547 = vpop.f32.mrf.mxu0
      %v2548 = vadd.f32 0.0, %v2547
      %2549 = vmatmul.f32.gmra.mxu0 %v2435
      %v2550 = vpop.f32.mrf.mxu0
      %v2551 = vadd.f32 0.0, %v2550
      %2552 = vmatmul.f32.gmra.mxu0 %v2438
      %v2553 = vpop.f32.mrf.mxu0
      %v2554 = vadd.f32 0.0, %v2553
      %2555 = vmatmul.f32.gmra.mxu0 %v2441
      %v2556 = vpop.f32.mrf.mxu0
      %v2557 = vadd.f32 0.0, %v2556
      %2558 = vmatmul.f32.gmra.mxu0 %v2444
      %v2559 = vpop.f32.mrf.mxu0
      %v2560 = vadd.f32 0.0, %v2559
      %2561 = vmatmul.f32.gmra.mxu0 %v2447
      %v2562 = vpop.f32.mrf.mxu0
      %v2563 = vadd.f32 0.0, %v2562
      %2564 = vmatmul.f32.gmra.mxu0 %v2450
      %v2565 = vpop.f32.mrf.mxu0
      %v2566 = vadd.f32 0.0, %v2565
      %2567 = vmatmul.f32.gmra.mxu0 %v2453
      %v2568 = vpop.f32.mrf.mxu0
      %v2569 = vadd.f32 0.0, %v2568
      %2570 = vdwg.mxu0
      %v2571 = vld [vmem:[#allocation3] sm:$0xff]
      %v2572 = vld [vmem:[#allocation3 + $0x8] sm:$0xff]
      %v2573 = vld [vmem:[#allocation3 + $0x10] sm:$0xff]
      %v2574 = vld [vmem:[#allocation3 + $0x18] sm:$0xff]
      %v2575 = vld [vmem:[#allocation3 + $0x20] sm:$0xff]
      %v2576 = vld [vmem:[#allocation3 + $0x28] sm:$0xff]
      %v2577 = vld [vmem:[#allocation3 + $0x30] sm:$0xff]
      %v2578 = vld [vmem:[#allocation3 + $0x38] sm:$0xff]
      %v2579 = vld [vmem:[#allocation3 + $0x40] sm:$0xff]
      %v2580 = vld [vmem:[#allocation3 + $0x48] sm:$0xff]
      %v2581 = vld [vmem:[#allocation3 + $0x50] sm:$0xff]
      %v2582 = vld [vmem:[#allocation3 + $0x58] sm:$0xff]
      %v2583 = vld [vmem:[#allocation3 + $0x60] sm:$0xff]
      %v2584 = vld [vmem:[#allocation3 + $0x68] sm:$0xff]
      %v2585 = vld [vmem:[#allocation3 + $0x70] sm:$0xff]
      %v2586 = vld [vmem:[#allocation3 + $0x78] sm:$0xff]
      %v2587 = vld [vmem:[#allocation3 + $0x80] sm:$0xff]
      %v2588 = vld [vmem:[#allocation3 + $0x88] sm:$0xff]
      %v2589 = vld [vmem:[#allocation3 + $0x90] sm:$0xff]
      %v2590 = vld [vmem:[#allocation3 + $0x98] sm:$0xff]
      %v2591 = vld [vmem:[#allocation3 + $0xa0] sm:$0xff]
      %v2592 = vld [vmem:[#allocation3 + $0xa8] sm:$0xff]
      %v2593 = vld [vmem:[#allocation3 + $0xb0] sm:$0xff]
      %v2594 = vld [vmem:[#allocation3 + $0xb8] sm:$0xff]
      %v2595 = vld [vmem:[#allocation3 + $0xc0] sm:$0xff]
      %v2596 = vld [vmem:[#allocation3 + $0xc8] sm:$0xff]
      %v2597 = vld [vmem:[#allocation3 + $0xd0] sm:$0xff]
      %v2598 = vld [vmem:[#allocation3 + $0xd8] sm:$0xff]
      %v2599 = vld [vmem:[#allocation3 + $0xe0] sm:$0xff]
      %v2600 = vld [vmem:[#allocation3 + $0xe8] sm:$0xff]
      %v2601 = vld [vmem:[#allocation3 + $0xf0] sm:$0xff]
      %v2602 = vld [vmem:[#allocation3 + $0xf8] sm:$0xff]
      %v2603 = vadd.f32 %v2571, %v2476
      %v2604 = vadd.f32 %v2572, %v2479
      %v2605 = vadd.f32 %v2573, %v2482
      %v2606 = vadd.f32 %v2574, %v2485
      %v2607 = vadd.f32 %v2575, %v2488
      %v2608 = vadd.f32 %v2576, %v2491
      %v2609 = vadd.f32 %v2577, %v2494
      %v2610 = vadd.f32 %v2578, %v2497
      %v2611 = vadd.f32 %v2579, %v2500
      %v2612 = vadd.f32 %v2580, %v2503
      %v2613 = vadd.f32 %v2581, %v2506
      %v2614 = vadd.f32 %v2582, %v2509
      %v2615 = vadd.f32 %v2583, %v2512
      %v2616 = vadd.f32 %v2584, %v2515
      %v2617 = vadd.f32 %v2585, %v2518
      %v2618 = vadd.f32 %v2586, %v2521
      %v2619 = vadd.f32 %v2587, %v2524
      %v2620 = vadd.f32 %v2588, %v2527
      %v2621 = vadd.f32 %v2589, %v2530
      %v2622 = vadd.f32 %v2590, %v2533
      %v2623 = vadd.f32 %v2591, %v2536
      %v2624 = vadd.f32 %v2592, %v2539
      %v2625 = vadd.f32 %v2593, %v2542
      %v2626 = vadd.f32 %v2594, %v2545
      %v2627 = vadd.f32 %v2595, %v2548
      %v2628 = vadd.f32 %v2596, %v2551
      %v2629 = vadd.f32 %v2597, %v2554
      %v2630 = vadd.f32 %v2598, %v2557
      %v2631 = vadd.f32 %v2599, %v2560
      %v2632 = vadd.f32 %v2600, %v2563
      %v2633 = vadd.f32 %v2601, %v2566
      %v2634 = vadd.f32 %v2602, %v2569
      %2635 = vst.msk [vmem:[#allocation3] sm:$0xff] %vm262, %v2603
      %2636 = vst.msk [vmem:[#allocation3 + $0x8] sm:$0xff] %vm262, %v2604
      %2637 = vst.msk [vmem:[#allocation3 + $0x10] sm:$0xff] %vm262, %v2605
      %2638 = vst.msk [vmem:[#allocation3 + $0x18] sm:$0xff] %vm262, %v2606
      %2639 = vst.msk [vmem:[#allocation3 + $0x20] sm:$0xff] %vm262, %v2607
      %2640 = vst.msk [vmem:[#allocation3 + $0x28] sm:$0xff] %vm262, %v2608
      %2641 = vst.msk [vmem:[#allocation3 + $0x30] sm:$0xff] %vm262, %v2609
      %2642 = vst.msk [vmem:[#allocation3 + $0x38] sm:$0xff] %vm262, %v2610
      %2643 = vst.msk [vmem:[#allocation3 + $0x40] sm:$0xff] %vm262, %v2611
      %2644 = vst.msk [vmem:[#allocation3 + $0x48] sm:$0xff] %vm262, %v2612
      %2645 = vst.msk [vmem:[#allocation3 + $0x50] sm:$0xff] %vm262, %v2613
      %2646 = vst.msk [vmem:[#allocation3 + $0x58] sm:$0xff] %vm262, %v2614
      %2647 = vst.msk [vmem:[#allocation3 + $0x60] sm:$0xff] %vm262, %v2615
      %2648 = vst.msk [vmem:[#allocation3 + $0x68] sm:$0xff] %vm262, %v2616
      %2649 = vst.msk [vmem:[#allocation3 + $0x70] sm:$0xff] %vm262, %v2617
      %2650 = vst.msk [vmem:[#allocation3 + $0x78] sm:$0xff] %vm262, %v2618
      %2651 = vst.msk [vmem:[#allocation3 + $0x80] sm:$0xff] %vm262, %v2619
      %2652 = vst.msk [vmem:[#allocation3 + $0x88] sm:$0xff] %vm262, %v2620
      %2653 = vst.msk [vmem:[#allocation3 + $0x90] sm:$0xff] %vm262, %v2621
      %2654 = vst.msk [vmem:[#allocation3 + $0x98] sm:$0xff] %vm262, %v2622
      %2655 = vst.msk [vmem:[#allocation3 + $0xa0] sm:$0xff] %vm262, %v2623
      %2656 = vst.msk [vmem:[#allocation3 + $0xa8] sm:$0xff] %vm262, %v2624
      %2657 = vst.msk [vmem:[#allocation3 + $0xb0] sm:$0xff] %vm262, %v2625
      %2658 = vst.msk [vmem:[#allocation3 + $0xb8] sm:$0xff] %vm262, %v2626
      %2659 = vst.msk [vmem:[#allocation3 + $0xc0] sm:$0xff] %vm262, %v2627
      %2660 = vst.msk [vmem:[#allocation3 + $0xc8] sm:$0xff] %vm262, %v2628
      %2661 = vst.msk [vmem:[#allocation3 + $0xd0] sm:$0xff] %vm262, %v2629
      %2662 = vst.msk [vmem:[#allocation3 + $0xd8] sm:$0xff] %vm262, %v2630
      %2663 = vst.msk [vmem:[#allocation3 + $0xe0] sm:$0xff] %vm262, %v2631
      %2664 = vst.msk [vmem:[#allocation3 + $0xe8] sm:$0xff] %vm262, %v2632
      %2665 = vst.msk [vmem:[#allocation3 + $0xf0] sm:$0xff] %vm262, %v2633
      %2666 = vst.msk [vmem:[#allocation3 + $0xf8] sm:$0xff] %vm262, %v2634
      %v2667 = vld [vmem:[%s2324 + $0x1] sm:$0xff]
      %v2668 = vld [vmem:[%s2324 + $0x9] sm:$0xff]
      %v2669 = vld [vmem:[%s2324 + $0x19] sm:$0xff]
      %v2670 = vld [vmem:[%s2324 + $0x21] sm:$0xff]
      %v2671 = vld [vmem:[%s2324 + $0x31] sm:$0xff]
      %v2672 = vld [vmem:[%s2324 + $0x39] sm:$0xff]
      %v2673 = vld [vmem:[%s2324 + $0x49] sm:$0xff]
      %v2674 = vld [vmem:[%s2324 + $0x51] sm:$0xff]
      %v2675 = vld [vmem:[%s2324 + $0x61] sm:$0xff]
      %v2676 = vld [vmem:[%s2324 + $0x69] sm:$0xff]
      %v2677 = vld [vmem:[%s2324 + $0x79] sm:$0xff]
      %v2678 = vld [vmem:[%s2324 + $0x81] sm:$0xff]
      %v2679 = vld [vmem:[%s2324 + $0x91] sm:$0xff]
      %v2680 = vld [vmem:[%s2324 + $0x99] sm:$0xff]
      %v2681 = vld [vmem:[%s2324 + $0xa9] sm:$0xff]
      %v2682 = vld [vmem:[%s2324 + $0xb1] sm:$0xff]
      %v2683 = vld [vmem:[%s2324 + $0xc1] sm:$0xff]
      %v2684 = vld [vmem:[%s2324 + $0xc9] sm:$0xff]
      %v2685 = vld [vmem:[%s2324 + $0xd9] sm:$0xff]
      %v2686 = vld [vmem:[%s2324 + $0xe1] sm:$0xff]
      %v2687 = vld [vmem:[%s2324 + $0xf1] sm:$0xff]
      %v2688 = vld [vmem:[%s2324 + $0xf9] sm:$0xff]
      %v2689 = vld [vmem:[%s2324 + $0x109] sm:$0xff]
      %v2690 = vld [vmem:[%s2324 + $0x111] sm:$0xff]
      %v2691 = vld [vmem:[%s2324 + $0x121] sm:$0xff]
      %v2692 = vld [vmem:[%s2324 + $0x129] sm:$0xff]
      %v2693 = vld [vmem:[%s2324 + $0x139] sm:$0xff]
      %v2694 = vld [vmem:[%s2324 + $0x141] sm:$0xff]
      %v2695 = vld [vmem:[%s2324 + $0x151] sm:$0xff]
      %v2696 = vld [vmem:[%s2324 + $0x159] sm:$0xff]
      %v2697 = vld [vmem:[%s2324 + $0x169] sm:$0xff]
      %v2698 = vld [vmem:[%s2324 + $0x171] sm:$0xff]
      %s2699 = scalar_lea.vmem %s1, 28
      %v2700 = vld [vmem:[%s2699] sm:$0xf]
      %v2702 = vsel %vm262, %v2667, 0
      %v2705 = vsel %vm262, %v2668, 0
      %v2708 = vsel %vm262, %v2669, 0
      %v2711 = vsel %vm262, %v2670, 0
      %v2714 = vsel %vm262, %v2671, 0
      %v2717 = vsel %vm262, %v2672, 0
      %v2720 = vsel %vm262, %v2673, 0
      %v2723 = vsel %vm262, %v2674, 0
      %v2726 = vsel %vm262, %v2675, 0
      %v2729 = vsel %vm262, %v2676, 0
      %v2732 = vsel %vm262, %v2677, 0
      %v2735 = vsel %vm262, %v2678, 0
      %v2738 = vsel %vm262, %v2679, 0
      %v2741 = vsel %vm262, %v2680, 0
      %v2744 = vsel %vm262, %v2681, 0
      %v2747 = vsel %vm262, %v2682, 0
      %v2750 = vsel %vm262, %v2683, 0
      %v2753 = vsel %vm262, %v2684, 0
      %v2756 = vsel %vm262, %v2685, 0
      %v2759 = vsel %vm262, %v2686, 0
      %v2762 = vsel %vm262, %v2687, 0
      %v2765 = vsel %vm262, %v2688, 0
      %v2768 = vsel %vm262, %v2689, 0
      %v2771 = vsel %vm262, %v2690, 0
      %v2774 = vsel %vm262, %v2691, 0
      %v2777 = vsel %vm262, %v2692, 0
      %v2780 = vsel %vm262, %v2693, 0
      %v2783 = vsel %vm262, %v2694, 0
      %v2786 = vsel %vm262, %v2695, 0
      %v2789 = vsel %vm262, %v2696, 0
      %v2792 = vsel %vm262, %v2697, 0
      %v2795 = vsel %vm262, %v2698, 0
      %v2798 = vsel %vm465, %v2700, 0
      %2800 = vmatpush.msra.mxu0 0.0
      %2801 = vmatpush.msra.mxu0 0.0
      %2802 = vmatpush.msra.mxu0 0.0
      %2803 = vmatpush.msra.mxu0 0.0
      %2804 = vmatpush.msra.mxu0 0.0
      %2805 = vmatpush.msra.mxu0 0.0
      %2806 = vmatpush.msra.mxu0 0.0
      %2807 = vmatpush.msra.mxu0 0.0
      %2808 = vmatpush.msra.mxu0 0.0
      %2809 = vmatpush.msra.mxu0 0.0
      %2810 = vmatpush.msra.mxu0 0.0
      %2811 = vmatpush.msra.mxu0 0.0
      %2812 = vmatpush.msra.mxu0 0.0
      %2813 = vmatpush.msra.mxu0 0.0
      %2814 = vmatpush.msra.mxu0 0.0
      %2815 = vmatpush.msra.mxu0 %v2798
      %2816 = vmatmul.f32.gmra.mxu0 %v2702
      %v2817 = vpop.f32.mrf.mxu0
      %v2818 = vadd.f32 0.0, %v2817
      %2819 = vmatmul.f32.gmra.mxu0 %v2705
      %v2820 = vpop.f32.mrf.mxu0
      %v2821 = vadd.f32 0.0, %v2820
      %2822 = vmatmul.f32.gmra.mxu0 %v2708
      %v2823 = vpop.f32.mrf.mxu0
      %v2824 = vadd.f32 0.0, %v2823
      %2825 = vmatmul.f32.gmra.mxu0 %v2711
      %v2826 = vpop.f32.mrf.mxu0
      %v2827 = vadd.f32 0.0, %v2826
      %2828 = vmatmul.f32.gmra.mxu0 %v2714
      %v2829 = vpop.f32.mrf.mxu0
      %v2830 = vadd.f32 0.0, %v2829
      %2831 = vmatmul.f32.gmra.mxu0 %v2717
      %v2832 = vpop.f32.mrf.mxu0
      %v2833 = vadd.f32 0.0, %v2832
      %2834 = vmatmul.f32.gmra.mxu0 %v2720
      %v2835 = vpop.f32.mrf.mxu0
      %v2836 = vadd.f32 0.0, %v2835
      %2837 = vmatmul.f32.gmra.mxu0 %v2723
      %v2838 = vpop.f32.mrf.mxu0
      %v2839 = vadd.f32 0.0, %v2838
      %2840 = vmatmul.f32.gmra.mxu0 %v2726
      %v2841 = vpop.f32.mrf.mxu0
      %v2842 = vadd.f32 0.0, %v2841
      %2843 = vmatmul.f32.gmra.mxu0 %v2729
      %v2844 = vpop.f32.mrf.mxu0
      %v2845 = vadd.f32 0.0, %v2844
      %2846 = vmatmul.f32.gmra.mxu0 %v2732
      %v2847 = vpop.f32.mrf.mxu0
      %v2848 = vadd.f32 0.0, %v2847
      %2849 = vmatmul.f32.gmra.mxu0 %v2735
      %v2850 = vpop.f32.mrf.mxu0
      %v2851 = vadd.f32 0.0, %v2850
      %2852 = vmatmul.f32.gmra.mxu0 %v2738
      %v2853 = vpop.f32.mrf.mxu0
      %v2854 = vadd.f32 0.0, %v2853
      %2855 = vmatmul.f32.gmra.mxu0 %v2741
      %v2856 = vpop.f32.mrf.mxu0
      %v2857 = vadd.f32 0.0, %v2856
      %2858 = vmatmul.f32.gmra.mxu0 %v2744
      %v2859 = vpop.f32.mrf.mxu0
      %v2860 = vadd.f32 0.0, %v2859
      %2861 = vmatmul.f32.gmra.mxu0 %v2747
      %v2862 = vpop.f32.mrf.mxu0
      %v2863 = vadd.f32 0.0, %v2862
      %2864 = vmatmul.f32.gmra.mxu0 %v2750
      %v2865 = vpop.f32.mrf.mxu0
      %v2866 = vadd.f32 0.0, %v2865
      %2867 = vmatmul.f32.gmra.mxu0 %v2753
      %v2868 = vpop.f32.mrf.mxu0
      %v2869 = vadd.f32 0.0, %v2868
      %2870 = vmatmul.f32.gmra.mxu0 %v2756
      %v2871 = vpop.f32.mrf.mxu0
      %v2872 = vadd.f32 0.0, %v2871
      %2873 = vmatmul.f32.gmra.mxu0 %v2759
      %v2874 = vpop.f32.mrf.mxu0
      %v2875 = vadd.f32 0.0, %v2874
      %2876 = vmatmul.f32.gmra.mxu0 %v2762
      %v2877 = vpop.f32.mrf.mxu0
      %v2878 = vadd.f32 0.0, %v2877
      %2879 = vmatmul.f32.gmra.mxu0 %v2765
      %v2880 = vpop.f32.mrf.mxu0
      %v2881 = vadd.f32 0.0, %v2880
      %2882 = vmatmul.f32.gmra.mxu0 %v2768
      %v2883 = vpop.f32.mrf.mxu0
      %v2884 = vadd.f32 0.0, %v2883
      %2885 = vmatmul.f32.gmra.mxu0 %v2771
      %v2886 = vpop.f32.mrf.mxu0
      %v2887 = vadd.f32 0.0, %v2886
      %2888 = vmatmul.f32.gmra.mxu0 %v2774
      %v2889 = vpop.f32.mrf.mxu0
      %v2890 = vadd.f32 0.0, %v2889
      %2891 = vmatmul.f32.gmra.mxu0 %v2777
      %v2892 = vpop.f32.mrf.mxu0
      %v2893 = vadd.f32 0.0, %v2892
      %2894 = vmatmul.f32.gmra.mxu0 %v2780
      %v2895 = vpop.f32.mrf.mxu0
      %v2896 = vadd.f32 0.0, %v2895
      %2897 = vmatmul.f32.gmra.mxu0 %v2783
      %v2898 = vpop.f32.mrf.mxu0
      %v2899 = vadd.f32 0.0, %v2898
      %2900 = vmatmul.f32.gmra.mxu0 %v2786
      %v2901 = vpop.f32.mrf.mxu0
      %v2902 = vadd.f32 0.0, %v2901
      %2903 = vmatmul.f32.gmra.mxu0 %v2789
      %v2904 = vpop.f32.mrf.mxu0
      %v2905 = vadd.f32 0.0, %v2904
      %2906 = vmatmul.f32.gmra.mxu0 %v2792
      %v2907 = vpop.f32.mrf.mxu0
      %v2908 = vadd.f32 0.0, %v2907
      %2909 = vmatmul.f32.gmra.mxu0 %v2795
      %v2910 = vpop.f32.mrf.mxu0
      %v2911 = vadd.f32 0.0, %v2910
      %2912 = vdwg.mxu0
      %v2913 = vld [vmem:[#allocation3] sm:$0xff]
      %v2914 = vld [vmem:[#allocation3 + $0x8] sm:$0xff]
      %v2915 = vld [vmem:[#allocation3 + $0x10] sm:$0xff]
      %v2916 = vld [vmem:[#allocation3 + $0x18] sm:$0xff]
      %v2917 = vld [vmem:[#allocation3 + $0x20] sm:$0xff]
      %v2918 = vld [vmem:[#allocation3 + $0x28] sm:$0xff]
      %v2919 = vld [vmem:[#allocation3 + $0x30] sm:$0xff]
      %v2920 = vld [vmem:[#allocation3 + $0x38] sm:$0xff]
      %v2921 = vld [vmem:[#allocation3 + $0x40] sm:$0xff]
      %v2922 = vld [vmem:[#allocation3 + $0x48] sm:$0xff]
      %v2923 = vld [vmem:[#allocation3 + $0x50] sm:$0xff]
      %v2924 = vld [vmem:[#allocation3 + $0x58] sm:$0xff]
      %v2925 = vld [vmem:[#allocation3 + $0x60] sm:$0xff]
      %v2926 = vld [vmem:[#allocation3 + $0x68] sm:$0xff]
      %v2927 = vld [vmem:[#allocation3 + $0x70] sm:$0xff]
      %v2928 = vld [vmem:[#allocation3 + $0x78] sm:$0xff]
      %v2929 = vld [vmem:[#allocation3 + $0x80] sm:$0xff]
      %v2930 = vld [vmem:[#allocation3 + $0x88] sm:$0xff]
      %v2931 = vld [vmem:[#allocation3 + $0x90] sm:$0xff]
      %v2932 = vld [vmem:[#allocation3 + $0x98] sm:$0xff]
      %v2933 = vld [vmem:[#allocation3 + $0xa0] sm:$0xff]
      %v2934 = vld [vmem:[#allocation3 + $0xa8] sm:$0xff]
      %v2935 = vld [vmem:[#allocation3 + $0xb0] sm:$0xff]
      %v2936 = vld [vmem:[#allocation3 + $0xb8] sm:$0xff]
      %v2937 = vld [vmem:[#allocation3 + $0xc0] sm:$0xff]
      %v2938 = vld [vmem:[#allocation3 + $0xc8] sm:$0xff]
      %v2939 = vld [vmem:[#allocation3 + $0xd0] sm:$0xff]
      %v2940 = vld [vmem:[#allocation3 + $0xd8] sm:$0xff]
      %v2941 = vld [vmem:[#allocation3 + $0xe0] sm:$0xff]
      %v2942 = vld [vmem:[#allocation3 + $0xe8] sm:$0xff]
      %v2943 = vld [vmem:[#allocation3 + $0xf0] sm:$0xff]
      %v2944 = vld [vmem:[#allocation3 + $0xf8] sm:$0xff]
      %v2945 = vadd.f32 %v2913, %v2818
      %v2946 = vadd.f32 %v2914, %v2821
      %v2947 = vadd.f32 %v2915, %v2824
      %v2948 = vadd.f32 %v2916, %v2827
      %v2949 = vadd.f32 %v2917, %v2830
      %v2950 = vadd.f32 %v2918, %v2833
      %v2951 = vadd.f32 %v2919, %v2836
      %v2952 = vadd.f32 %v2920, %v2839
      %v2953 = vadd.f32 %v2921, %v2842
      %v2954 = vadd.f32 %v2922, %v2845
      %v2955 = vadd.f32 %v2923, %v2848
      %v2956 = vadd.f32 %v2924, %v2851
      %v2957 = vadd.f32 %v2925, %v2854
      %v2958 = vadd.f32 %v2926, %v2857
      %v2959 = vadd.f32 %v2927, %v2860
      %v2960 = vadd.f32 %v2928, %v2863
      %v2961 = vadd.f32 %v2929, %v2866
      %v2962 = vadd.f32 %v2930, %v2869
      %v2963 = vadd.f32 %v2931, %v2872
      %v2964 = vadd.f32 %v2932, %v2875
      %v2965 = vadd.f32 %v2933, %v2878
      %v2966 = vadd.f32 %v2934, %v2881
      %v2967 = vadd.f32 %v2935, %v2884
      %v2968 = vadd.f32 %v2936, %v2887
      %v2969 = vadd.f32 %v2937, %v2890
      %v2970 = vadd.f32 %v2938, %v2893
      %v2971 = vadd.f32 %v2939, %v2896
      %v2972 = vadd.f32 %v2940, %v2899
      %v2973 = vadd.f32 %v2941, %v2902
      %v2974 = vadd.f32 %v2942, %v2905
      %v2975 = vadd.f32 %v2943, %v2908
      %v2976 = vadd.f32 %v2944, %v2911
      %2977 = vst.msk [vmem:[#allocation3] sm:$0xff] %vm262, %v2945
      %2978 = vst.msk [vmem:[#allocation3 + $0x8] sm:$0xff] %vm262, %v2946
      %2979 = vst.msk [vmem:[#allocation3 + $0x10] sm:$0xff] %vm262, %v2947
      %2980 = vst.msk [vmem:[#allocation3 + $0x18] sm:$0xff] %vm262, %v2948
      %2981 = vst.msk [vmem:[#allocation3 + $0x20] sm:$0xff] %vm262, %v2949
      %2982 = vst.msk [vmem:[#allocation3 + $0x28] sm:$0xff] %vm262, %v2950
      %2983 = vst.msk [vmem:[#allocation3 + $0x30] sm:$0xff] %vm262, %v2951
      %2984 = vst.msk [vmem:[#allocation3 + $0x38] sm:$0xff] %vm262, %v2952
      %2985 = vst.msk [vmem:[#allocation3 + $0x40] sm:$0xff] %vm262, %v2953
      %2986 = vst.msk [vmem:[#allocation3 + $0x48] sm:$0xff] %vm262, %v2954
      %2987 = vst.msk [vmem:[#allocation3 + $0x50] sm:$0xff] %vm262, %v2955
      %2988 = vst.msk [vmem:[#allocation3 + $0x58] sm:$0xff] %vm262, %v2956
      %2989 = vst.msk [vmem:[#allocation3 + $0x60] sm:$0xff] %vm262, %v2957
      %2990 = vst.msk [vmem:[#allocation3 + $0x68] sm:$0xff] %vm262, %v2958
      %2991 = vst.msk [vmem:[#allocation3 + $0x70] sm:$0xff] %vm262, %v2959
      %2992 = vst.msk [vmem:[#allocation3 + $0x78] sm:$0xff] %vm262, %v2960
      %2993 = vst.msk [vmem:[#allocation3 + $0x80] sm:$0xff] %vm262, %v2961
      %2994 = vst.msk [vmem:[#allocation3 + $0x88] sm:$0xff] %vm262, %v2962
      %2995 = vst.msk [vmem:[#allocation3 + $0x90] sm:$0xff] %vm262, %v2963
      %2996 = vst.msk [vmem:[#allocation3 + $0x98] sm:$0xff] %vm262, %v2964
      %2997 = vst.msk [vmem:[#allocation3 + $0xa0] sm:$0xff] %vm262, %v2965
      %2998 = vst.msk [vmem:[#allocation3 + $0xa8] sm:$0xff] %vm262, %v2966
      %2999 = vst.msk [vmem:[#allocation3 + $0xb0] sm:$0xff] %vm262, %v2967
      %3000 = vst.msk [vmem:[#allocation3 + $0xb8] sm:$0xff] %vm262, %v2968
      %3001 = vst.msk [vmem:[#allocation3 + $0xc0] sm:$0xff] %vm262, %v2969
      %3002 = vst.msk [vmem:[#allocation3 + $0xc8] sm:$0xff] %vm262, %v2970
      %3003 = vst.msk [vmem:[#allocation3 + $0xd0] sm:$0xff] %vm262, %v2971
      %3004 = vst.msk [vmem:[#allocation3 + $0xd8] sm:$0xff] %vm262, %v2972
      %3005 = vst.msk [vmem:[#allocation3 + $0xe0] sm:$0xff] %vm262, %v2973
      %3006 = vst.msk [vmem:[#allocation3 + $0xe8] sm:$0xff] %vm262, %v2974
      %3007 = vst.msk [vmem:[#allocation3 + $0xf0] sm:$0xff] %vm262, %v2975
      %3008 = vst.msk [vmem:[#allocation3 + $0xf8] sm:$0xff] %vm262, %v2976
      %v3009 = vld [vmem:[%s2324 + $0x2] sm:$0xff]
      %v3010 = vld [vmem:[%s2324 + $0xa] sm:$0xff]
      %v3011 = vld [vmem:[%s2324 + $0x1a] sm:$0xff]
      %v3012 = vld [vmem:[%s2324 + $0x22] sm:$0xff]
      %v3013 = vld [vmem:[%s2324 + $0x32] sm:$0xff]
      %v3014 = vld [vmem:[%s2324 + $0x3a] sm:$0xff]
      %v3015 = vld [vmem:[%s2324 + $0x4a] sm:$0xff]
      %v3016 = vld [vmem:[%s2324 + $0x52] sm:$0xff]
      %v3017 = vld [vmem:[%s2324 + $0x62] sm:$0xff]
      %v3018 = vld [vmem:[%s2324 + $0x6a] sm:$0xff]
      %v3019 = vld [vmem:[%s2324 + $0x7a] sm:$0xff]
      %v3020 = vld [vmem:[%s2324 + $0x82] sm:$0xff]
      %v3021 = vld [vmem:[%s2324 + $0x92] sm:$0xff]
      %v3022 = vld [vmem:[%s2324 + $0x9a] sm:$0xff]
      %v3023 = vld [vmem:[%s2324 + $0xaa] sm:$0xff]
      %v3024 = vld [vmem:[%s2324 + $0xb2] sm:$0xff]
      %v3025 = vld [vmem:[%s2324 + $0xc2] sm:$0xff]
      %v3026 = vld [vmem:[%s2324 + $0xca] sm:$0xff]
      %v3027 = vld [vmem:[%s2324 + $0xda] sm:$0xff]
      %v3028 = vld [vmem:[%s2324 + $0xe2] sm:$0xff]
      %v3029 = vld [vmem:[%s2324 + $0xf2] sm:$0xff]
      %v3030 = vld [vmem:[%s2324 + $0xfa] sm:$0xff]
      %v3031 = vld [vmem:[%s2324 + $0x10a] sm:$0xff]
      %v3032 = vld [vmem:[%s2324 + $0x112] sm:$0xff]
      %v3033 = vld [vmem:[%s2324 + $0x122] sm:$0xff]
      %v3034 = vld [vmem:[%s2324 + $0x12a] sm:$0xff]
      %v3035 = vld [vmem:[%s2324 + $0x13a] sm:$0xff]
      %v3036 = vld [vmem:[%s2324 + $0x142] sm:$0xff]
      %v3037 = vld [vmem:[%s2324 + $0x152] sm:$0xff]
      %v3038 = vld [vmem:[%s2324 + $0x15a] sm:$0xff]
      %v3039 = vld [vmem:[%s2324 + $0x16a] sm:$0xff]
      %v3040 = vld [vmem:[%s2324 + $0x172] sm:$0xff]
      %s3041 = scalar_lea.vmem %s1, 32
      %v3042 = vld [vmem:[%s3041] sm:$0xf]
      %v3044 = vsel %vm262, %v3009, 0
      %v3047 = vsel %vm262, %v3010, 0
      %v3050 = vsel %vm262, %v3011, 0
      %v3053 = vsel %vm262, %v3012, 0
      %v3056 = vsel %vm262, %v3013, 0
      %v3059 = vsel %vm262, %v3014, 0
      %v3062 = vsel %vm262, %v3015, 0
      %v3065 = vsel %vm262, %v3016, 0
      %v3068 = vsel %vm262, %v3017, 0
      %v3071 = vsel %vm262, %v3018, 0
      %v3074 = vsel %vm262, %v3019, 0
      %v3077 = vsel %vm262, %v3020, 0
      %v3080 = vsel %vm262, %v3021, 0
      %v3083 = vsel %vm262, %v3022, 0
      %v3086 = vsel %vm262, %v3023, 0
      %v3089 = vsel %vm262, %v3024, 0
      %v3092 = vsel %vm262, %v3025, 0
      %v3095 = vsel %vm262, %v3026, 0
      %v3098 = vsel %vm262, %v3027, 0
      %v3101 = vsel %vm262, %v3028, 0
      %v3104 = vsel %vm262, %v3029, 0
      %v3107 = vsel %vm262, %v3030, 0
      %v3110 = vsel %vm262, %v3031, 0
      %v3113 = vsel %vm262, %v3032, 0
      %v3116 = vsel %vm262, %v3033, 0
      %v3119 = vsel %vm262, %v3034, 0
      %v3122 = vsel %vm262, %v3035, 0
      %v3125 = vsel %vm262, %v3036, 0
      %v3128 = vsel %vm262, %v3037, 0
      %v3131 = vsel %vm262, %v3038, 0
      %v3134 = vsel %vm262, %v3039, 0
      %v3137 = vsel %vm262, %v3040, 0
      %v3140 = vsel %vm465, %v3042, 0
      %3142 = vmatpush.msra.mxu0 0.0
      %3143 = vmatpush.msra.mxu0 0.0
      %3144 = vmatpush.msra.mxu0 0.0
      %3145 = vmatpush.msra.mxu0 0.0
      %3146 = vmatpush.msra.mxu0 0.0
      %3147 = vmatpush.msra.mxu0 0.0
      %3148 = vmatpush.msra.mxu0 0.0
      %3149 = vmatpush.msra.mxu0 0.0
      %3150 = vmatpush.msra.mxu0 0.0
      %3151 = vmatpush.msra.mxu0 0.0
      %3152 = vmatpush.msra.mxu0 0.0
      %3153 = vmatpush.msra.mxu0 0.0
      %3154 = vmatpush.msra.mxu0 0.0
      %3155 = vmatpush.msra.mxu0 0.0
      %3156 = vmatpush.msra.mxu0 0.0
      %3157 = vmatpush.msra.mxu0 %v3140
      %3158 = vmatmul.f32.gmra.mxu0 %v3044
      %v3159 = vpop.f32.mrf.mxu0
      %v3160 = vadd.f32 0.0, %v3159
      %3161 = vmatmul.f32.gmra.mxu0 %v3047
      %v3162 = vpop.f32.mrf.mxu0
      %v3163 = vadd.f32 0.0, %v3162
      %3164 = vmatmul.f32.gmra.mxu0 %v3050
      %v3165 = vpop.f32.mrf.mxu0
      %v3166 = vadd.f32 0.0, %v3165
      %3167 = vmatmul.f32.gmra.mxu0 %v3053
      %v3168 = vpop.f32.mrf.mxu0
      %v3169 = vadd.f32 0.0, %v3168
      %3170 = vmatmul.f32.gmra.mxu0 %v3056
      %v3171 = vpop.f32.mrf.mxu0
      %v3172 = vadd.f32 0.0, %v3171
      %3173 = vmatmul.f32.gmra.mxu0 %v3059
      %v3174 = vpop.f32.mrf.mxu0
      %v3175 = vadd.f32 0.0, %v3174
      %3176 = vmatmul.f32.gmra.mxu0 %v3062
      %v3177 = vpop.f32.mrf.mxu0
      %v3178 = vadd.f32 0.0, %v3177
      %3179 = vmatmul.f32.gmra.mxu0 %v3065
      %v3180 = vpop.f32.mrf.mxu0
      %v3181 = vadd.f32 0.0, %v3180
      %3182 = vmatmul.f32.gmra.mxu0 %v3068
      %v3183 = vpop.f32.mrf.mxu0
      %v3184 = vadd.f32 0.0, %v3183
      %3185 = vmatmul.f32.gmra.mxu0 %v3071
      %v3186 = vpop.f32.mrf.mxu0
      %v3187 = vadd.f32 0.0, %v3186
      %3188 = vmatmul.f32.gmra.mxu0 %v3074
      %v3189 = vpop.f32.mrf.mxu0
      %v3190 = vadd.f32 0.0, %v3189
      %3191 = vmatmul.f32.gmra.mxu0 %v3077
      %v3192 = vpop.f32.mrf.mxu0
      %v3193 = vadd.f32 0.0, %v3192
      %3194 = vmatmul.f32.gmra.mxu0 %v3080
      %v3195 = vpop.f32.mrf.mxu0
      %v3196 = vadd.f32 0.0, %v3195
      %3197 = vmatmul.f32.gmra.mxu0 %v3083
      %v3198 = vpop.f32.mrf.mxu0
      %v3199 = vadd.f32 0.0, %v3198
      %3200 = vmatmul.f32.gmra.mxu0 %v3086
      %v3201 = vpop.f32.mrf.mxu0
      %v3202 = vadd.f32 0.0, %v3201
      %3203 = vmatmul.f32.gmra.mxu0 %v3089
      %v3204 = vpop.f32.mrf.mxu0
      %v3205 = vadd.f32 0.0, %v3204
      %3206 = vmatmul.f32.gmra.mxu0 %v3092
      %v3207 = vpop.f32.mrf.mxu0
      %v3208 = vadd.f32 0.0, %v3207
      %3209 = vmatmul.f32.gmra.mxu0 %v3095
      %v3210 = vpop.f32.mrf.mxu0
      %v3211 = vadd.f32 0.0, %v3210
      %3212 = vmatmul.f32.gmra.mxu0 %v3098
      %v3213 = vpop.f32.mrf.mxu0
      %v3214 = vadd.f32 0.0, %v3213
      %3215 = vmatmul.f32.gmra.mxu0 %v3101
      %v3216 = vpop.f32.mrf.mxu0
      %v3217 = vadd.f32 0.0, %v3216
      %3218 = vmatmul.f32.gmra.mxu0 %v3104
      %v3219 = vpop.f32.mrf.mxu0
      %v3220 = vadd.f32 0.0, %v3219
      %3221 = vmatmul.f32.gmra.mxu0 %v3107
      %v3222 = vpop.f32.mrf.mxu0
      %v3223 = vadd.f32 0.0, %v3222
      %3224 = vmatmul.f32.gmra.mxu0 %v3110
      %v3225 = vpop.f32.mrf.mxu0
      %v3226 = vadd.f32 0.0, %v3225
      %3227 = vmatmul.f32.gmra.mxu0 %v3113
      %v3228 = vpop.f32.mrf.mxu0
      %v3229 = vadd.f32 0.0, %v3228
      %3230 = vmatmul.f32.gmra.mxu0 %v3116
      %v3231 = vpop.f32.mrf.mxu0
      %v3232 = vadd.f32 0.0, %v3231
      %3233 = vmatmul.f32.gmra.mxu0 %v3119
      %v3234 = vpop.f32.mrf.mxu0
      %v3235 = vadd.f32 0.0, %v3234
      %3236 = vmatmul.f32.gmra.mxu0 %v3122
      %v3237 = vpop.f32.mrf.mxu0
      %v3238 = vadd.f32 0.0, %v3237
      %3239 = vmatmul.f32.gmra.mxu0 %v3125
      %v3240 = vpop.f32.mrf.mxu0
      %v3241 = vadd.f32 0.0, %v3240
      %3242 = vmatmul.f32.gmra.mxu0 %v3128
      %v3243 = vpop.f32.mrf.mxu0
      %v3244 = vadd.f32 0.0, %v3243
      %3245 = vmatmul.f32.gmra.mxu0 %v3131
      %v3246 = vpop.f32.mrf.mxu0
      %v3247 = vadd.f32 0.0, %v3246
      %3248 = vmatmul.f32.gmra.mxu0 %v3134
      %v3249 = vpop.f32.mrf.mxu0
      %v3250 = vadd.f32 0.0, %v3249
      %3251 = vmatmul.f32.gmra.mxu0 %v3137
      %v3252 = vpop.f32.mrf.mxu0
      %v3253 = vadd.f32 0.0, %v3252
      %3254 = vdwg.mxu0
      %v3255 = vld [vmem:[#allocation3] sm:$0xff]
      %v3256 = vld [vmem:[#allocation3 + $0x8] sm:$0xff]
      %v3257 = vld [vmem:[#allocation3 + $0x10] sm:$0xff]
      %v3258 = vld [vmem:[#allocation3 + $0x18] sm:$0xff]
      %v3259 = vld [vmem:[#allocation3 + $0x20] sm:$0xff]
      %v3260 = vld [vmem:[#allocation3 + $0x28] sm:$0xff]
      %v3261 = vld [vmem:[#allocation3 + $0x30] sm:$0xff]
      %v3262 = vld [vmem:[#allocation3 + $0x38] sm:$0xff]
      %v3263 = vld [vmem:[#allocation3 + $0x40] sm:$0xff]
      %v3264 = vld [vmem:[#allocation3 + $0x48] sm:$0xff]
      %v3265 = vld [vmem:[#allocation3 + $0x50] sm:$0xff]
      %v3266 = vld [vmem:[#allocation3 + $0x58] sm:$0xff]
      %v3267 = vld [vmem:[#allocation3 + $0x60] sm:$0xff]
      %v3268 = vld [vmem:[#allocation3 + $0x68] sm:$0xff]
      %v3269 = vld [vmem:[#allocation3 + $0x70] sm:$0xff]
      %v3270 = vld [vmem:[#allocation3 + $0x78] sm:$0xff]
      %v3271 = vld [vmem:[#allocation3 + $0x80] sm:$0xff]
      %v3272 = vld [vmem:[#allocation3 + $0x88] sm:$0xff]
      %v3273 = vld [vmem:[#allocation3 + $0x90] sm:$0xff]
      %v3274 = vld [vmem:[#allocation3 + $0x98] sm:$0xff]
      %v3275 = vld [vmem:[#allocation3 + $0xa0] sm:$0xff]
      %v3276 = vld [vmem:[#allocation3 + $0xa8] sm:$0xff]
      %v3277 = vld [vmem:[#allocation3 + $0xb0] sm:$0xff]
      %v3278 = vld [vmem:[#allocation3 + $0xb8] sm:$0xff]
      %v3279 = vld [vmem:[#allocation3 + $0xc0] sm:$0xff]
      %v3280 = vld [vmem:[#allocation3 + $0xc8] sm:$0xff]
      %v3281 = vld [vmem:[#allocation3 + $0xd0] sm:$0xff]
      %v3282 = vld [vmem:[#allocation3 + $0xd8] sm:$0xff]
      %v3283 = vld [vmem:[#allocation3 + $0xe0] sm:$0xff]
      %v3284 = vld [vmem:[#allocation3 + $0xe8] sm:$0xff]
      %v3285 = vld [vmem:[#allocation3 + $0xf0] sm:$0xff]
      %v3286 = vld [vmem:[#allocation3 + $0xf8] sm:$0xff]
      %v3287 = vadd.f32 %v3255, %v3160
      %v3288 = vadd.f32 %v3256, %v3163
      %v3289 = vadd.f32 %v3257, %v3166
      %v3290 = vadd.f32 %v3258, %v3169
      %v3291 = vadd.f32 %v3259, %v3172
      %v3292 = vadd.f32 %v3260, %v3175
      %v3293 = vadd.f32 %v3261, %v3178
      %v3294 = vadd.f32 %v3262, %v3181
      %v3295 = vadd.f32 %v3263, %v3184
      %v3296 = vadd.f32 %v3264, %v3187
      %v3297 = vadd.f32 %v3265, %v3190
      %v3298 = vadd.f32 %v3266, %v3193
      %v3299 = vadd.f32 %v3267, %v3196
      %v3300 = vadd.f32 %v3268, %v3199
      %v3301 = vadd.f32 %v3269, %v3202
      %v3302 = vadd.f32 %v3270, %v3205
      %v3303 = vadd.f32 %v3271, %v3208
      %v3304 = vadd.f32 %v3272, %v3211
      %v3305 = vadd.f32 %v3273, %v3214
      %v3306 = vadd.f32 %v3274, %v3217
      %v3307 = vadd.f32 %v3275, %v3220
      %v3308 = vadd.f32 %v3276, %v3223
      %v3309 = vadd.f32 %v3277, %v3226
      %v3310 = vadd.f32 %v3278, %v3229
      %v3311 = vadd.f32 %v3279, %v3232
      %v3312 = vadd.f32 %v3280, %v3235
      %v3313 = vadd.f32 %v3281, %v3238
      %v3314 = vadd.f32 %v3282, %v3241
      %v3315 = vadd.f32 %v3283, %v3244
      %v3316 = vadd.f32 %v3284, %v3247
      %v3317 = vadd.f32 %v3285, %v3250
      %v3318 = vadd.f32 %v3286, %v3253
      %3319 = vst.msk [vmem:[#allocation3] sm:$0xff] %vm262, %v3287
      %3320 = vst.msk [vmem:[#allocation3 + $0x8] sm:$0xff] %vm262, %v3288
      %3321 = vst.msk [vmem:[#allocation3 + $0x10] sm:$0xff] %vm262, %v3289
      %3322 = vst.msk [vmem:[#allocation3 + $0x18] sm:$0xff] %vm262, %v3290
      %3323 = vst.msk [vmem:[#allocation3 + $0x20] sm:$0xff] %vm262, %v3291
      %3324 = vst.msk [vmem:[#allocation3 + $0x28] sm:$0xff] %vm262, %v3292
      %3325 = vst.msk [vmem:[#allocation3 + $0x30] sm:$0xff] %vm262, %v3293
      %3326 = vst.msk [vmem:[#allocation3 + $0x38] sm:$0xff] %vm262, %v3294
      %3327 = vst.msk [vmem:[#allocation3 + $0x40] sm:$0xff] %vm262, %v3295
      %3328 = vst.msk [vmem:[#allocation3 + $0x48] sm:$0xff] %vm262, %v3296
      %3329 = vst.msk [vmem:[#allocation3 + $0x50] sm:$0xff] %vm262, %v3297
      %3330 = vst.msk [vmem:[#allocation3 + $0x58] sm:$0xff] %vm262, %v3298
      %3331 = vst.msk [vmem:[#allocation3 + $0x60] sm:$0xff] %vm262, %v3299
      %3332 = vst.msk [vmem:[#allocation3 + $0x68] sm:$0xff] %vm262, %v3300
      %3333 = vst.msk [vmem:[#allocation3 + $0x70] sm:$0xff] %vm262, %v3301
      %3334 = vst.msk [vmem:[#allocation3 + $0x78] sm:$0xff] %vm262, %v3302
      %3335 = vst.msk [vmem:[#allocation3 + $0x80] sm:$0xff] %vm262, %v3303
      %3336 = vst.msk [vmem:[#allocation3 + $0x88] sm:$0xff] %vm262, %v3304
      %3337 = vst.msk [vmem:[#allocation3 + $0x90] sm:$0xff] %vm262, %v3305
      %3338 = vst.msk [vmem:[#allocation3 + $0x98] sm:$0xff] %vm262, %v3306
      %3339 = vst.msk [vmem:[#allocation3 + $0xa0] sm:$0xff] %vm262, %v3307
      %3340 = vst.msk [vmem:[#allocation3 + $0xa8] sm:$0xff] %vm262, %v3308
      %3341 = vst.msk [vmem:[#allocation3 + $0xb0] sm:$0xff] %vm262, %v3309
      %3342 = vst.msk [vmem:[#allocation3 + $0xb8] sm:$0xff] %vm262, %v3310
      %3343 = vst.msk [vmem:[#allocation3 + $0xc0] sm:$0xff] %vm262, %v3311
      %3344 = vst.msk [vmem:[#allocation3 + $0xc8] sm:$0xff] %vm262, %v3312
      %3345 = vst.msk [vmem:[#allocation3 + $0xd0] sm:$0xff] %vm262, %v3313
      %3346 = vst.msk [vmem:[#allocation3 + $0xd8] sm:$0xff] %vm262, %v3314
      %3347 = vst.msk [vmem:[#allocation3 + $0xe0] sm:$0xff] %vm262, %v3315
      %3348 = vst.msk [vmem:[#allocation3 + $0xe8] sm:$0xff] %vm262, %v3316
      %3349 = vst.msk [vmem:[#allocation3 + $0xf0] sm:$0xff] %vm262, %v3317
      %3350 = vst.msk [vmem:[#allocation3 + $0xf8] sm:$0xff] %vm262, %v3318
      %v3351 = vld [vmem:[#allocation3] sm:$0xff]
      %v3352 = vld [vmem:[#allocation3 + $0x8] sm:$0xff]
      %v3353 = vld [vmem:[#allocation3 + $0x10] sm:$0xff]
      %v3354 = vld [vmem:[#allocation3 + $0x18] sm:$0xff]
      %v3355 = vld [vmem:[#allocation3 + $0x20] sm:$0xff]
      %v3356 = vld [vmem:[#allocation3 + $0x28] sm:$0xff]
      %v3357 = vld [vmem:[#allocation3 + $0x30] sm:$0xff]
      %v3358 = vld [vmem:[#allocation3 + $0x38] sm:$0xff]
      %v3359 = vld [vmem:[#allocation3 + $0x40] sm:$0xff]
      %v3360 = vld [vmem:[#allocation3 + $0x48] sm:$0xff]
      %v3361 = vld [vmem:[#allocation3 + $0x50] sm:$0xff]
      %v3362 = vld [vmem:[#allocation3 + $0x58] sm:$0xff]
      %v3363 = vld [vmem:[#allocation3 + $0x60] sm:$0xff]
      %v3364 = vld [vmem:[#allocation3 + $0x68] sm:$0xff]
      %v3365 = vld [vmem:[#allocation3 + $0x70] sm:$0xff]
      %v3366 = vld [vmem:[#allocation3 + $0x78] sm:$0xff]
      %v3367 = vld [vmem:[#allocation3 + $0x80] sm:$0xff]
      %v3368 = vld [vmem:[#allocation3 + $0x88] sm:$0xff]
      %v3369 = vld [vmem:[#allocation3 + $0x90] sm:$0xff]
      %v3370 = vld [vmem:[#allocation3 + $0x98] sm:$0xff]
      %v3371 = vld [vmem:[#allocation3 + $0xa0] sm:$0xff]
      %v3372 = vld [vmem:[#allocation3 + $0xa8] sm:$0xff]
      %v3373 = vld [vmem:[#allocation3 + $0xb0] sm:$0xff]
      %v3374 = vld [vmem:[#allocation3 + $0xb8] sm:$0xff]
      %v3375 = vld [vmem:[#allocation3 + $0xc0] sm:$0xff]
      %v3376 = vld [vmem:[#allocation3 + $0xc8] sm:$0xff]
      %v3377 = vld [vmem:[#allocation3 + $0xd0] sm:$0xff]
      %v3378 = vld [vmem:[#allocation3 + $0xd8] sm:$0xff]
      %v3379 = vld [vmem:[#allocation3 + $0xe0] sm:$0xff]
      %v3380 = vld [vmem:[#allocation3 + $0xe8] sm:$0xff]
      %v3381 = vld [vmem:[#allocation3 + $0xf0] sm:$0xff]
      %v3382 = vld [vmem:[#allocation3 + $0xf8] sm:$0xff]
      %v3383 = vld [vmem:[%s2] sm:$0x1]
      %v3385 = vperm.slane %v3383, 0
      %v3387 = vadd.f32 %v3351, %v3385
      %v3388 = vadd.f32 %v3352, %v3385
      %v3389 = vadd.f32 %v3353, %v3385
      %v3390 = vadd.f32 %v3354, %v3385
      %v3391 = vadd.f32 %v3355, %v3385
      %v3392 = vadd.f32 %v3356, %v3385
      %v3393 = vadd.f32 %v3357, %v3385
      %v3394 = vadd.f32 %v3358, %v3385
      %v3395 = vadd.f32 %v3359, %v3385
      %v3396 = vadd.f32 %v3360, %v3385
      %v3397 = vadd.f32 %v3361, %v3385
      %v3398 = vadd.f32 %v3362, %v3385
      %v3399 = vadd.f32 %v3363, %v3385
      %v3400 = vadd.f32 %v3364, %v3385
      %v3401 = vadd.f32 %v3365, %v3385
      %v3402 = vadd.f32 %v3366, %v3385
      %v3403 = vadd.f32 %v3367, %v3385
      %v3404 = vadd.f32 %v3368, %v3385
      %v3405 = vadd.f32 %v3369, %v3385
      %v3406 = vadd.f32 %v3370, %v3385
      %v3407 = vadd.f32 %v3371, %v3385
      %v3408 = vadd.f32 %v3372, %v3385
      %v3409 = vadd.f32 %v3373, %v3385
      %v3410 = vadd.f32 %v3374, %v3385
      %v3411 = vadd.f32 %v3375, %v3385
      %v3412 = vadd.f32 %v3376, %v3385
      %v3413 = vadd.f32 %v3377, %v3385
      %v3414 = vadd.f32 %v3378, %v3385
      %v3415 = vadd.f32 %v3379, %v3385
      %v3416 = vadd.f32 %v3380, %v3385
      %v3417 = vadd.f32 %v3381, %v3385
      %v3418 = vadd.f32 %v3382, %v3385
      %v3419 = vmax.f32 %v3387, 0.0
      %v3420 = vmax.f32 %v3388, 0.0
      %v3421 = vmax.f32 %v3389, 0.0
      %v3422 = vmax.f32 %v3390, 0.0
      %v3423 = vmax.f32 %v3391, 0.0
      %v3424 = vmax.f32 %v3392, 0.0
      %v3425 = vmax.f32 %v3393, 0.0
      %v3426 = vmax.f32 %v3394, 0.0
      %v3427 = vmax.f32 %v3395, 0.0
      %v3428 = vmax.f32 %v3396, 0.0
      %v3429 = vmax.f32 %v3397, 0.0
      %v3430 = vmax.f32 %v3398, 0.0
      %v3431 = vmax.f32 %v3399, 0.0
      %v3432 = vmax.f32 %v3400, 0.0
      %v3433 = vmax.f32 %v3401, 0.0
      %v3434 = vmax.f32 %v3402, 0.0
      %v3435 = vmax.f32 %v3403, 0.0
      %v3436 = vmax.f32 %v3404, 0.0
      %v3437 = vmax.f32 %v3405, 0.0
      %v3438 = vmax.f32 %v3406, 0.0
      %v3439 = vmax.f32 %v3407, 0.0
      %v3440 = vmax.f32 %v3408, 0.0
      %v3441 = vmax.f32 %v3409, 0.0
      %v3442 = vmax.f32 %v3410, 0.0
      %v3443 = vmax.f32 %v3411, 0.0
      %v3444 = vmax.f32 %v3412, 0.0
      %v3445 = vmax.f32 %v3413, 0.0
      %v3446 = vmax.f32 %v3414, 0.0
      %v3447 = vmax.f32 %v3415, 0.0
      %v3448 = vmax.f32 %v3416, 0.0
      %v3449 = vmax.f32 %v3417, 0.0
      %v3450 = vmax.f32 %v3418, 0.0
      %3451 = vst.msk [vmem:[%s303 + $0x1] sm:$0xff] %vm262, %v3419
      %3452 = vst.msk [vmem:[%s303 + $0x9] sm:$0xff] %vm262, %v3420
      %3453 = vst.msk [vmem:[%s303 + $0x19] sm:$0xff] %vm262, %v3421
      %3454 = vst.msk [vmem:[%s303 + $0x21] sm:$0xff] %vm262, %v3422
      %3455 = vst.msk [vmem:[%s303 + $0x31] sm:$0xff] %vm262, %v3423
      %3456 = vst.msk [vmem:[%s303 + $0x39] sm:$0xff] %vm262, %v3424
      %3457 = vst.msk [vmem:[%s303 + $0x49] sm:$0xff] %vm262, %v3425
      %3458 = vst.msk [vmem:[%s303 + $0x51] sm:$0xff] %vm262, %v3426
      %3459 = vst.msk [vmem:[%s303 + $0x61] sm:$0xff] %vm262, %v3427
      %3460 = vst.msk [vmem:[%s303 + $0x69] sm:$0xff] %vm262, %v3428
      %3461 = vst.msk [vmem:[%s303 + $0x79] sm:$0xff] %vm262, %v3429
      %3462 = vst.msk [vmem:[%s303 + $0x81] sm:$0xff] %vm262, %v3430
      %3463 = vst.msk [vmem:[%s303 + $0x91] sm:$0xff] %vm262, %v3431
      %3464 = vst.msk [vmem:[%s303 + $0x99] sm:$0xff] %vm262, %v3432
      %3465 = vst.msk [vmem:[%s303 + $0xa9] sm:$0xff] %vm262, %v3433
      %3466 = vst.msk [vmem:[%s303 + $0xb1] sm:$0xff] %vm262, %v3434
      %3467 = vst.msk [vmem:[%s303 + $0xc1] sm:$0xff] %vm262, %v3435
      %3468 = vst.msk [vmem:[%s303 + $0xc9] sm:$0xff] %vm262, %v3436
      %3469 = vst.msk [vmem:[%s303 + $0xd9] sm:$0xff] %vm262, %v3437
      %3470 = vst.msk [vmem:[%s303 + $0xe1] sm:$0xff] %vm262, %v3438
      %3471 = vst.msk [vmem:[%s303 + $0xf1] sm:$0xff] %vm262, %v3439
      %3472 = vst.msk [vmem:[%s303 + $0xf9] sm:$0xff] %vm262, %v3440
      %3473 = vst.msk [vmem:[%s303 + $0x109] sm:$0xff] %vm262, %v3441
      %3474 = vst.msk [vmem:[%s303 + $0x111] sm:$0xff] %vm262, %v3442
      %3475 = vst.msk [vmem:[%s303 + $0x121] sm:$0xff] %vm262, %v3443
      %3476 = vst.msk [vmem:[%s303 + $0x129] sm:$0xff] %vm262, %v3444
      %3477 = vst.msk [vmem:[%s303 + $0x139] sm:$0xff] %vm262, %v3445
      %3478 = vst.msk [vmem:[%s303 + $0x141] sm:$0xff] %vm262, %v3446
      %3479 = vst.msk [vmem:[%s303 + $0x151] sm:$0xff] %vm262, %v3447
      %3480 = vst.msk [vmem:[%s303 + $0x159] sm:$0xff] %vm262, %v3448
      %3481 = vst.msk [vmem:[%s303 + $0x169] sm:$0xff] %vm262, %v3449
      %3482 = vst.msk [vmem:[%s303 + $0x171] sm:$0xff] %vm262, %v3450
      %v3483 = vld [vmem:[#allocation2] sm:$0xff]
      %v3484 = vld [vmem:[#allocation2 + $0x8] sm:$0xff]
      %v3485 = vld [vmem:[#allocation2 + $0x18] sm:$0xff]
      %v3486 = vld [vmem:[#allocation2 + $0x20] sm:$0xff]
      %v3487 = vld [vmem:[#allocation2 + $0x30] sm:$0xff]
      %v3488 = vld [vmem:[#allocation2 + $0x38] sm:$0xff]
      %v3489 = vld [vmem:[#allocation2 + $0x48] sm:$0xff]
      %v3490 = vld [vmem:[#allocation2 + $0x50] sm:$0xff]
      %v3491 = vld [vmem:[#allocation2 + $0x60] sm:$0xff]
      %v3492 = vld [vmem:[#allocation2 + $0x68] sm:$0xff]
      %v3493 = vld [vmem:[#allocation2 + $0x78] sm:$0xff]
      %v3494 = vld [vmem:[#allocation2 + $0x80] sm:$0xff]
      %v3495 = vld [vmem:[#allocation2 + $0x90] sm:$0xff]
      %v3496 = vld [vmem:[#allocation2 + $0x98] sm:$0xff]
      %v3497 = vld [vmem:[#allocation2 + $0xa8] sm:$0xff]
      %v3498 = vld [vmem:[#allocation2 + $0xb0] sm:$0xff]
      %v3499 = vld [vmem:[#allocation2 + $0xc0] sm:$0xff]
      %v3500 = vld [vmem:[#allocation2 + $0xc8] sm:$0xff]
      %v3501 = vld [vmem:[#allocation2 + $0xd8] sm:$0xff]
      %v3502 = vld [vmem:[#allocation2 + $0xe0] sm:$0xff]
      %v3503 = vld [vmem:[#allocation2 + $0xf0] sm:$0xff]
      %v3504 = vld [vmem:[#allocation2 + $0xf8] sm:$0xff]
      %v3505 = vld [vmem:[#allocation2 + $0x108] sm:$0xff]
      %v3506 = vld [vmem:[#allocation2 + $0x110] sm:$0xff]
      %v3507 = vld [vmem:[#allocation2 + $0x120] sm:$0xff]
      %v3508 = vld [vmem:[#allocation2 + $0x128] sm:$0xff]
      %v3509 = vld [vmem:[#allocation2 + $0x138] sm:$0xff]
      %v3510 = vld [vmem:[#allocation2 + $0x140] sm:$0xff]
      %v3511 = vld [vmem:[#allocation2 + $0x150] sm:$0xff]
      %v3512 = vld [vmem:[#allocation2 + $0x158] sm:$0xff]
      %v3513 = vld [vmem:[#allocation2 + $0x168] sm:$0xff]
      %v3514 = vld [vmem:[#allocation2 + $0x170] sm:$0xff]
      %v3515 = vld [vmem:[%s3] sm:$0xf]
      %v3517 = vsel %vm262, %v3483, 0
      %v3520 = vsel %vm262, %v3484, 0
      %v3523 = vsel %vm262, %v3485, 0
      %v3526 = vsel %vm262, %v3486, 0
      %v3529 = vsel %vm262, %v3487, 0
      %v3532 = vsel %vm262, %v3488, 0
      %v3535 = vsel %vm262, %v3489, 0
      %v3538 = vsel %vm262, %v3490, 0
      %v3541 = vsel %vm262, %v3491, 0
      %v3544 = vsel %vm262, %v3492, 0
      %v3547 = vsel %vm262, %v3493, 0
      %v3550 = vsel %vm262, %v3494, 0
      %v3553 = vsel %vm262, %v3495, 0
      %v3556 = vsel %vm262, %v3496, 0
      %v3559 = vsel %vm262, %v3497, 0
      %v3562 = vsel %vm262, %v3498, 0
      %v3565 = vsel %vm262, %v3499, 0
      %v3568 = vsel %vm262, %v3500, 0
      %v3571 = vsel %vm262, %v3501, 0
      %v3574 = vsel %vm262, %v3502, 0
      %v3577 = vsel %vm262, %v3503, 0
      %v3580 = vsel %vm262, %v3504, 0
      %v3583 = vsel %vm262, %v3505, 0
      %v3586 = vsel %vm262, %v3506, 0
      %v3589 = vsel %vm262, %v3507, 0
      %v3592 = vsel %vm262, %v3508, 0
      %v3595 = vsel %vm262, %v3509, 0
      %v3598 = vsel %vm262, %v3510, 0
      %v3601 = vsel %vm262, %v3511, 0
      %v3604 = vsel %vm262, %v3512, 0
      %v3607 = vsel %vm262, %v3513, 0
      %v3610 = vsel %vm262, %v3514, 0
      %v3613 = vsel %vm465, %v3515, 0
      %3615 = vmatpush.msra.mxu0 0.0
      %3616 = vmatpush.msra.mxu0 0.0
      %3617 = vmatpush.msra.mxu0 0.0
      %3618 = vmatpush.msra.mxu0 0.0
      %3619 = vmatpush.msra.mxu0 0.0
      %3620 = vmatpush.msra.mxu0 0.0
      %3621 = vmatpush.msra.mxu0 0.0
      %3622 = vmatpush.msra.mxu0 0.0
      %3623 = vmatpush.msra.mxu0 0.0
      %3624 = vmatpush.msra.mxu0 0.0
      %3625 = vmatpush.msra.mxu0 0.0
      %3626 = vmatpush.msra.mxu0 0.0
      %3627 = vmatpush.msra.mxu0 0.0
      %3628 = vmatpush.msra.mxu0 0.0
      %3629 = vmatpush.msra.mxu0 0.0
      %3630 = vmatpush.msra.mxu0 %v3613
      %3631 = vmatmul.f32.gmra.mxu0 %v3517
      %v3632 = vpop.f32.mrf.mxu0
      %v3633 = vadd.f32 0.0, %v3632
      %3634 = vmatmul.f32.gmra.mxu0 %v3520
      %v3635 = vpop.f32.mrf.mxu0
      %v3636 = vadd.f32 0.0, %v3635
      %3637 = vmatmul.f32.gmra.mxu0 %v3523
      %v3638 = vpop.f32.mrf.mxu0
      %v3639 = vadd.f32 0.0, %v3638
      %3640 = vmatmul.f32.gmra.mxu0 %v3526
      %v3641 = vpop.f32.mrf.mxu0
      %v3642 = vadd.f32 0.0, %v3641
      %3643 = vmatmul.f32.gmra.mxu0 %v3529
      %v3644 = vpop.f32.mrf.mxu0
      %v3645 = vadd.f32 0.0, %v3644
      %3646 = vmatmul.f32.gmra.mxu0 %v3532
      %v3647 = vpop.f32.mrf.mxu0
      %v3648 = vadd.f32 0.0, %v3647
      %3649 = vmatmul.f32.gmra.mxu0 %v3535
      %v3650 = vpop.f32.mrf.mxu0
      %v3651 = vadd.f32 0.0, %v3650
      %3652 = vmatmul.f32.gmra.mxu0 %v3538
      %v3653 = vpop.f32.mrf.mxu0
      %v3654 = vadd.f32 0.0, %v3653
      %3655 = vmatmul.f32.gmra.mxu0 %v3541
      %v3656 = vpop.f32.mrf.mxu0
      %v3657 = vadd.f32 0.0, %v3656
      %3658 = vmatmul.f32.gmra.mxu0 %v3544
      %v3659 = vpop.f32.mrf.mxu0
      %v3660 = vadd.f32 0.0, %v3659
      %3661 = vmatmul.f32.gmra.mxu0 %v3547
      %v3662 = vpop.f32.mrf.mxu0
      %v3663 = vadd.f32 0.0, %v3662
      %3664 = vmatmul.f32.gmra.mxu0 %v3550
      %v3665 = vpop.f32.mrf.mxu0
      %v3666 = vadd.f32 0.0, %v3665
      %3667 = vmatmul.f32.gmra.mxu0 %v3553
      %v3668 = vpop.f32.mrf.mxu0
      %v3669 = vadd.f32 0.0, %v3668
      %3670 = vmatmul.f32.gmra.mxu0 %v3556
      %v3671 = vpop.f32.mrf.mxu0
      %v3672 = vadd.f32 0.0, %v3671
      %3673 = vmatmul.f32.gmra.mxu0 %v3559
      %v3674 = vpop.f32.mrf.mxu0
      %v3675 = vadd.f32 0.0, %v3674
      %3676 = vmatmul.f32.gmra.mxu0 %v3562
      %v3677 = vpop.f32.mrf.mxu0
      %v3678 = vadd.f32 0.0, %v3677
      %3679 = vmatmul.f32.gmra.mxu0 %v3565
      %v3680 = vpop.f32.mrf.mxu0
      %v3681 = vadd.f32 0.0, %v3680
      %3682 = vmatmul.f32.gmra.mxu0 %v3568
      %v3683 = vpop.f32.mrf.mxu0
      %v3684 = vadd.f32 0.0, %v3683
      %3685 = vmatmul.f32.gmra.mxu0 %v3571
      %v3686 = vpop.f32.mrf.mxu0
      %v3687 = vadd.f32 0.0, %v3686
      %3688 = vmatmul.f32.gmra.mxu0 %v3574
      %v3689 = vpop.f32.mrf.mxu0
      %v3690 = vadd.f32 0.0, %v3689
      %3691 = vmatmul.f32.gmra.mxu0 %v3577
      %v3692 = vpop.f32.mrf.mxu0
      %v3693 = vadd.f32 0.0, %v3692
      %3694 = vmatmul.f32.gmra.mxu0 %v3580
      %v3695 = vpop.f32.mrf.mxu0
      %v3696 = vadd.f32 0.0, %v3695
      %3697 = vmatmul.f32.gmra.mxu0 %v3583
      %v3698 = vpop.f32.mrf.mxu0
      %v3699 = vadd.f32 0.0, %v3698
      %3700 = vmatmul.f32.gmra.mxu0 %v3586
      %v3701 = vpop.f32.mrf.mxu0
      %v3702 = vadd.f32 0.0, %v3701
      %3703 = vmatmul.f32.gmra.mxu0 %v3589
      %v3704 = vpop.f32.mrf.mxu0
      %v3705 = vadd.f32 0.0, %v3704
      %3706 = vmatmul.f32.gmra.mxu0 %v3592
      %v3707 = vpop.f32.mrf.mxu0
      %v3708 = vadd.f32 0.0, %v3707
      %3709 = vmatmul.f32.gmra.mxu0 %v3595
      %v3710 = vpop.f32.mrf.mxu0
      %v3711 = vadd.f32 0.0, %v3710
      %3712 = vmatmul.f32.gmra.mxu0 %v3598
      %v3713 = vpop.f32.mrf.mxu0
      %v3714 = vadd.f32 0.0, %v3713
      %3715 = vmatmul.f32.gmra.mxu0 %v3601
      %v3716 = vpop.f32.mrf.mxu0
      %v3717 = vadd.f32 0.0, %v3716
      %3718 = vmatmul.f32.gmra.mxu0 %v3604
      %v3719 = vpop.f32.mrf.mxu0
      %v3720 = vadd.f32 0.0, %v3719
      %3721 = vmatmul.f32.gmra.mxu0 %v3607
      %v3722 = vpop.f32.mrf.mxu0
      %v3723 = vadd.f32 0.0, %v3722
      %3724 = vmatmul.f32.gmra.mxu0 %v3610
      %v3725 = vpop.f32.mrf.mxu0
      %v3726 = vadd.f32 0.0, %v3725
      %3727 = vdwg.mxu0
      %3728 = vst.msk [vmem:[#allocation3] sm:$0xff] %vm262, %v3633
      %3729 = vst.msk [vmem:[#allocation3 + $0x8] sm:$0xff] %vm262, %v3636
      %3730 = vst.msk [vmem:[#allocation3 + $0x10] sm:$0xff] %vm262, %v3639
      %3731 = vst.msk [vmem:[#allocation3 + $0x18] sm:$0xff] %vm262, %v3642
      %3732 = vst.msk [vmem:[#allocation3 + $0x20] sm:$0xff] %vm262, %v3645
      %3733 = vst.msk [vmem:[#allocation3 + $0x28] sm:$0xff] %vm262, %v3648
      %3734 = vst.msk [vmem:[#allocation3 + $0x30] sm:$0xff] %vm262, %v3651
      %3735 = vst.msk [vmem:[#allocation3 + $0x38] sm:$0xff] %vm262, %v3654
      %3736 = vst.msk [vmem:[#allocation3 + $0x40] sm:$0xff] %vm262, %v3657
      %3737 = vst.msk [vmem:[#allocation3 + $0x48] sm:$0xff] %vm262, %v3660
      %3738 = vst.msk [vmem:[#allocation3 + $0x50] sm:$0xff] %vm262, %v3663
      %3739 = vst.msk [vmem:[#allocation3 + $0x58] sm:$0xff] %vm262, %v3666
      %3740 = vst.msk [vmem:[#allocation3 + $0x60] sm:$0xff] %vm262, %v3669
      %3741 = vst.msk [vmem:[#allocation3 + $0x68] sm:$0xff] %vm262, %v3672
      %3742 = vst.msk [vmem:[#allocation3 + $0x70] sm:$0xff] %vm262, %v3675
      %3743 = vst.msk [vmem:[#allocation3 + $0x78] sm:$0xff] %vm262, %v3678
      %3744 = vst.msk [vmem:[#allocation3 + $0x80] sm:$0xff] %vm262, %v3681
      %3745 = vst.msk [vmem:[#allocation3 + $0x88] sm:$0xff] %vm262, %v3684
      %3746 = vst.msk [vmem:[#allocation3 + $0x90] sm:$0xff] %vm262, %v3687
      %3747 = vst.msk [vmem:[#allocation3 + $0x98] sm:$0xff] %vm262, %v3690
      %3748 = vst.msk [vmem:[#allocation3 + $0xa0] sm:$0xff] %vm262, %v3693
      %3749 = vst.msk [vmem:[#allocation3 + $0xa8] sm:$0xff] %vm262, %v3696
      %3750 = vst.msk [vmem:[#allocation3 + $0xb0] sm:$0xff] %vm262, %v3699
      %3751 = vst.msk [vmem:[#allocation3 + $0xb8] sm:$0xff] %vm262, %v3702
      %3752 = vst.msk [vmem:[#allocation3 + $0xc0] sm:$0xff] %vm262, %v3705
      %3753 = vst.msk [vmem:[#allocation3 + $0xc8] sm:$0xff] %vm262, %v3708
      %3754 = vst.msk [vmem:[#allocation3 + $0xd0] sm:$0xff] %vm262, %v3711
      %3755 = vst.msk [vmem:[#allocation3 + $0xd8] sm:$0xff] %vm262, %v3714
      %3756 = vst.msk [vmem:[#allocation3 + $0xe0] sm:$0xff] %vm262, %v3717
      %3757 = vst.msk [vmem:[#allocation3 + $0xe8] sm:$0xff] %vm262, %v3720
      %3758 = vst.msk [vmem:[#allocation3 + $0xf0] sm:$0xff] %vm262, %v3723
      %3759 = vst.msk [vmem:[#allocation3 + $0xf8] sm:$0xff] %vm262, %v3726
      %v3760 = vld [vmem:[#allocation2 + $0x1] sm:$0xff]
      %v3761 = vld [vmem:[#allocation2 + $0x9] sm:$0xff]
      %v3762 = vld [vmem:[#allocation2 + $0x19] sm:$0xff]
      %v3763 = vld [vmem:[#allocation2 + $0x21] sm:$0xff]
      %v3764 = vld [vmem:[#allocation2 + $0x31] sm:$0xff]
      %v3765 = vld [vmem:[#allocation2 + $0x39] sm:$0xff]
      %v3766 = vld [vmem:[#allocation2 + $0x49] sm:$0xff]
      %v3767 = vld [vmem:[#allocation2 + $0x51] sm:$0xff]
      %v3768 = vld [vmem:[#allocation2 + $0x61] sm:$0xff]
      %v3769 = vld [vmem:[#allocation2 + $0x69] sm:$0xff]
      %v3770 = vld [vmem:[#allocation2 + $0x79] sm:$0xff]
      %v3771 = vld [vmem:[#allocation2 + $0x81] sm:$0xff]
      %v3772 = vld [vmem:[#allocation2 + $0x91] sm:$0xff]
      %v3773 = vld [vmem:[#allocation2 + $0x99] sm:$0xff]
      %v3774 = vld [vmem:[#allocation2 + $0xa9] sm:$0xff]
      %v3775 = vld [vmem:[#allocation2 + $0xb1] sm:$0xff]
      %v3776 = vld [vmem:[#allocation2 + $0xc1] sm:$0xff]
      %v3777 = vld [vmem:[#allocation2 + $0xc9] sm:$0xff]
      %v3778 = vld [vmem:[#allocation2 + $0xd9] sm:$0xff]
      %v3779 = vld [vmem:[#allocation2 + $0xe1] sm:$0xff]
      %v3780 = vld [vmem:[#allocation2 + $0xf1] sm:$0xff]
      %v3781 = vld [vmem:[#allocation2 + $0xf9] sm:$0xff]
      %v3782 = vld [vmem:[#allocation2 + $0x109] sm:$0xff]
      %v3783 = vld [vmem:[#allocation2 + $0x111] sm:$0xff]
      %v3784 = vld [vmem:[#allocation2 + $0x121] sm:$0xff]
      %v3785 = vld [vmem:[#allocation2 + $0x129] sm:$0xff]
      %v3786 = vld [vmem:[#allocation2 + $0x139] sm:$0xff]
      %v3787 = vld [vmem:[#allocation2 + $0x141] sm:$0xff]
      %v3788 = vld [vmem:[#allocation2 + $0x151] sm:$0xff]
      %v3789 = vld [vmem:[#allocation2 + $0x159] sm:$0xff]
      %v3790 = vld [vmem:[#allocation2 + $0x169] sm:$0xff]
      %v3791 = vld [vmem:[#allocation2 + $0x171] sm:$0xff]
      %s3792 = scalar_lea.vmem %s3, 4
      %v3793 = vld [vmem:[%s3792] sm:$0xf]
      %v3795 = vsel %vm262, %v3760, 0
      %v3798 = vsel %vm262, %v3761, 0
      %v3801 = vsel %vm262, %v3762, 0
      %v3804 = vsel %vm262, %v3763, 0
      %v3807 = vsel %vm262, %v3764, 0
      %v3810 = vsel %vm262, %v3765, 0
      %v3813 = vsel %vm262, %v3766, 0
      %v3816 = vsel %vm262, %v3767, 0
      %v3819 = vsel %vm262, %v3768, 0
      %v3822 = vsel %vm262, %v3769, 0
      %v3825 = vsel %vm262, %v3770, 0
      %v3828 = vsel %vm262, %v3771, 0
      %v3831 = vsel %vm262, %v3772, 0
      %v3834 = vsel %vm262, %v3773, 0
      %v3837 = vsel %vm262, %v3774, 0
      %v3840 = vsel %vm262, %v3775, 0
      %v3843 = vsel %vm262, %v3776, 0
      %v3846 = vsel %vm262, %v3777, 0
      %v3849 = vsel %vm262, %v3778, 0
      %v3852 = vsel %vm262, %v3779, 0
      %v3855 = vsel %vm262, %v3780, 0
      %v3858 = vsel %vm262, %v3781, 0
      %v3861 = vsel %vm262, %v3782, 0
      %v3864 = vsel %vm262, %v3783, 0
      %v3867 = vsel %vm262, %v3784, 0
      %v3870 = vsel %vm262, %v3785, 0
      %v3873 = vsel %vm262, %v3786, 0
      %v3876 = vsel %vm262, %v3787, 0
      %v3879 = vsel %vm262, %v3788, 0
      %v3882 = vsel %vm262, %v3789, 0
      %v3885 = vsel %vm262, %v3790, 0
      %v3888 = vsel %vm262, %v3791, 0
      %v3891 = vsel %vm465, %v3793, 0
      %3893 = vmatpush.msra.mxu0 0.0
      %3894 = vmatpush.msra.mxu0 0.0
      %3895 = vmatpush.msra.mxu0 0.0
      %3896 = vmatpush.msra.mxu0 0.0
      %3897 = vmatpush.msra.mxu0 0.0
      %3898 = vmatpush.msra.mxu0 0.0
      %3899 = vmatpush.msra.mxu0 0.0
      %3900 = vmatpush.msra.mxu0 0.0
      %3901 = vmatpush.msra.mxu0 0.0
      %3902 = vmatpush.msra.mxu0 0.0
      %3903 = vmatpush.msra.mxu0 0.0
      %3904 = vmatpush.msra.mxu0 0.0
      %3905 = vmatpush.msra.mxu0 0.0
      %3906 = vmatpush.msra.mxu0 0.0
      %3907 = vmatpush.msra.mxu0 0.0
      %3908 = vmatpush.msra.mxu0 %v3891
      %3909 = vmatmul.f32.gmra.mxu0 %v3795
      %v3910 = vpop.f32.mrf.mxu0
      %v3911 = vadd.f32 0.0, %v3910
      %3912 = vmatmul.f32.gmra.mxu0 %v3798
      %v3913 = vpop.f32.mrf.mxu0
      %v3914 = vadd.f32 0.0, %v3913
      %3915 = vmatmul.f32.gmra.mxu0 %v3801
      %v3916 = vpop.f32.mrf.mxu0
      %v3917 = vadd.f32 0.0, %v3916
      %3918 = vmatmul.f32.gmra.mxu0 %v3804
      %v3919 = vpop.f32.mrf.mxu0
      %v3920 = vadd.f32 0.0, %v3919
      %3921 = vmatmul.f32.gmra.mxu0 %v3807
      %v3922 = vpop.f32.mrf.mxu0
      %v3923 = vadd.f32 0.0, %v3922
      %3924 = vmatmul.f32.gmra.mxu0 %v3810
      %v3925 = vpop.f32.mrf.mxu0
      %v3926 = vadd.f32 0.0, %v3925
      %3927 = vmatmul.f32.gmra.mxu0 %v3813
      %v3928 = vpop.f32.mrf.mxu0
      %v3929 = vadd.f32 0.0, %v3928
      %3930 = vmatmul.f32.gmra.mxu0 %v3816
      %v3931 = vpop.f32.mrf.mxu0
      %v3932 = vadd.f32 0.0, %v3931
      %3933 = vmatmul.f32.gmra.mxu0 %v3819
      %v3934 = vpop.f32.mrf.mxu0
      %v3935 = vadd.f32 0.0, %v3934
      %3936 = vmatmul.f32.gmra.mxu0 %v3822
      %v3937 = vpop.f32.mrf.mxu0
      %v3938 = vadd.f32 0.0, %v3937
      %3939 = vmatmul.f32.gmra.mxu0 %v3825
      %v3940 = vpop.f32.mrf.mxu0
      %v3941 = vadd.f32 0.0, %v3940
      %3942 = vmatmul.f32.gmra.mxu0 %v3828
      %v3943 = vpop.f32.mrf.mxu0
      %v3944 = vadd.f32 0.0, %v3943
      %3945 = vmatmul.f32.gmra.mxu0 %v3831
      %v3946 = vpop.f32.mrf.mxu0
      %v3947 = vadd.f32 0.0, %v3946
      %3948 = vmatmul.f32.gmra.mxu0 %v3834
      %v3949 = vpop.f32.mrf.mxu0
      %v3950 = vadd.f32 0.0, %v3949
      %3951 = vmatmul.f32.gmra.mxu0 %v3837
      %v3952 = vpop.f32.mrf.mxu0
      %v3953 = vadd.f32 0.0, %v3952
      %3954 = vmatmul.f32.gmra.mxu0 %v3840
      %v3955 = vpop.f32.mrf.mxu0
      %v3956 = vadd.f32 0.0, %v3955
      %3957 = vmatmul.f32.gmra.mxu0 %v3843
      %v3958 = vpop.f32.mrf.mxu0
      %v3959 = vadd.f32 0.0, %v3958
      %3960 = vmatmul.f32.gmra.mxu0 %v3846
      %v3961 = vpop.f32.mrf.mxu0
      %v3962 = vadd.f32 0.0, %v3961
      %3963 = vmatmul.f32.gmra.mxu0 %v3849
      %v3964 = vpop.f32.mrf.mxu0
      %v3965 = vadd.f32 0.0, %v3964
      %3966 = vmatmul.f32.gmra.mxu0 %v3852
      %v3967 = vpop.f32.mrf.mxu0
      %v3968 = vadd.f32 0.0, %v3967
      %3969 = vmatmul.f32.gmra.mxu0 %v3855
      %v3970 = vpop.f32.mrf.mxu0
      %v3971 = vadd.f32 0.0, %v3970
      %3972 = vmatmul.f32.gmra.mxu0 %v3858
      %v3973 = vpop.f32.mrf.mxu0
      %v3974 = vadd.f32 0.0, %v3973
      %3975 = vmatmul.f32.gmra.mxu0 %v3861
      %v3976 = vpop.f32.mrf.mxu0
      %v3977 = vadd.f32 0.0, %v3976
      %3978 = vmatmul.f32.gmra.mxu0 %v3864
      %v3979 = vpop.f32.mrf.mxu0
      %v3980 = vadd.f32 0.0, %v3979
      %3981 = vmatmul.f32.gmra.mxu0 %v3867
      %v3982 = vpop.f32.mrf.mxu0
      %v3983 = vadd.f32 0.0, %v3982
      %3984 = vmatmul.f32.gmra.mxu0 %v3870
      %v3985 = vpop.f32.mrf.mxu0
      %v3986 = vadd.f32 0.0, %v3985
      %3987 = vmatmul.f32.gmra.mxu0 %v3873
      %v3988 = vpop.f32.mrf.mxu0
      %v3989 = vadd.f32 0.0, %v3988
      %3990 = vmatmul.f32.gmra.mxu0 %v3876
      %v3991 = vpop.f32.mrf.mxu0
      %v3992 = vadd.f32 0.0, %v3991
      %3993 = vmatmul.f32.gmra.mxu0 %v3879
      %v3994 = vpop.f32.mrf.mxu0
      %v3995 = vadd.f32 0.0, %v3994
      %3996 = vmatmul.f32.gmra.mxu0 %v3882
      %v3997 = vpop.f32.mrf.mxu0
      %v3998 = vadd.f32 0.0, %v3997
      %3999 = vmatmul.f32.gmra.mxu0 %v3885
      %v4000 = vpop.f32.mrf.mxu0
      %v4001 = vadd.f32 0.0, %v4000
      %4002 = vmatmul.f32.gmra.mxu0 %v3888
      %v4003 = vpop.f32.mrf.mxu0
      %v4004 = vadd.f32 0.0, %v4003
      %4005 = vdwg.mxu0
      %v4006 = vld [vmem:[#allocation3] sm:$0xff]
      %v4007 = vld [vmem:[#allocation3 + $0x8] sm:$0xff]
      %v4008 = vld [vmem:[#allocation3 + $0x10] sm:$0xff]
      %v4009 = vld [vmem:[#allocation3 + $0x18] sm:$0xff]
      %v4010 = vld [vmem:[#allocation3 + $0x20] sm:$0xff]
      %v4011 = vld [vmem:[#allocation3 + $0x28] sm:$0xff]
      %v4012 = vld [vmem:[#allocation3 + $0x30] sm:$0xff]
      %v4013 = vld [vmem:[#allocation3 + $0x38] sm:$0xff]
      %v4014 = vld [vmem:[#allocation3 + $0x40] sm:$0xff]
      %v4015 = vld [vmem:[#allocation3 + $0x48] sm:$0xff]
      %v4016 = vld [vmem:[#allocation3 + $0x50] sm:$0xff]
      %v4017 = vld [vmem:[#allocation3 + $0x58] sm:$0xff]
      %v4018 = vld [vmem:[#allocation3 + $0x60] sm:$0xff]
      %v4019 = vld [vmem:[#allocation3 + $0x68] sm:$0xff]
      %v4020 = vld [vmem:[#allocation3 + $0x70] sm:$0xff]
      %v4021 = vld [vmem:[#allocation3 + $0x78] sm:$0xff]
      %v4022 = vld [vmem:[#allocation3 + $0x80] sm:$0xff]
      %v4023 = vld [vmem:[#allocation3 + $0x88] sm:$0xff]
      %v4024 = vld [vmem:[#allocation3 + $0x90] sm:$0xff]
      %v4025 = vld [vmem:[#allocation3 + $0x98] sm:$0xff]
      %v4026 = vld [vmem:[#allocation3 + $0xa0] sm:$0xff]
      %v4027 = vld [vmem:[#allocation3 + $0xa8] sm:$0xff]
      %v4028 = vld [vmem:[#allocation3 + $0xb0] sm:$0xff]
      %v4029 = vld [vmem:[#allocation3 + $0xb8] sm:$0xff]
      %v4030 = vld [vmem:[#allocation3 + $0xc0] sm:$0xff]
      %v4031 = vld [vmem:[#allocation3 + $0xc8] sm:$0xff]
      %v4032 = vld [vmem:[#allocation3 + $0xd0] sm:$0xff]
      %v4033 = vld [vmem:[#allocation3 + $0xd8] sm:$0xff]
      %v4034 = vld [vmem:[#allocation3 + $0xe0] sm:$0xff]
      %v4035 = vld [vmem:[#allocation3 + $0xe8] sm:$0xff]
      %v4036 = vld [vmem:[#allocation3 + $0xf0] sm:$0xff]
      %v4037 = vld [vmem:[#allocation3 + $0xf8] sm:$0xff]
      %v4038 = vadd.f32 %v4006, %v3911
      %v4039 = vadd.f32 %v4007, %v3914
      %v4040 = vadd.f32 %v4008, %v3917
      %v4041 = vadd.f32 %v4009, %v3920
      %v4042 = vadd.f32 %v4010, %v3923
      %v4043 = vadd.f32 %v4011, %v3926
      %v4044 = vadd.f32 %v4012, %v3929
      %v4045 = vadd.f32 %v4013, %v3932
      %v4046 = vadd.f32 %v4014, %v3935
      %v4047 = vadd.f32 %v4015, %v3938
      %v4048 = vadd.f32 %v4016, %v3941
      %v4049 = vadd.f32 %v4017, %v3944
      %v4050 = vadd.f32 %v4018, %v3947
      %v4051 = vadd.f32 %v4019, %v3950
      %v4052 = vadd.f32 %v4020, %v3953
      %v4053 = vadd.f32 %v4021, %v3956
      %v4054 = vadd.f32 %v4022, %v3959
      %v4055 = vadd.f32 %v4023, %v3962
      %v4056 = vadd.f32 %v4024, %v3965
      %v4057 = vadd.f32 %v4025, %v3968
      %v4058 = vadd.f32 %v4026, %v3971
      %v4059 = vadd.f32 %v4027, %v3974
      %v4060 = vadd.f32 %v4028, %v3977
      %v4061 = vadd.f32 %v4029, %v3980
      %v4062 = vadd.f32 %v4030, %v3983
      %v4063 = vadd.f32 %v4031, %v3986
      %v4064 = vadd.f32 %v4032, %v3989
      %v4065 = vadd.f32 %v4033, %v3992
      %v4066 = vadd.f32 %v4034, %v3995
      %v4067 = vadd.f32 %v4035, %v3998
      %v4068 = vadd.f32 %v4036, %v4001
      %v4069 = vadd.f32 %v4037, %v4004
      %4070 = vst.msk [vmem:[#allocation3] sm:$0xff] %vm262, %v4038
      %4071 = vst.msk [vmem:[#allocation3 + $0x8] sm:$0xff] %vm262, %v4039
      %4072 = vst.msk [vmem:[#allocation3 + $0x10] sm:$0xff] %vm262, %v4040
      %4073 = vst.msk [vmem:[#allocation3 + $0x18] sm:$0xff] %vm262, %v4041
      %4074 = vst.msk [vmem:[#allocation3 + $0x20] sm:$0xff] %vm262, %v4042
      %4075 = vst.msk [vmem:[#allocation3 + $0x28] sm:$0xff] %vm262, %v4043
      %4076 = vst.msk [vmem:[#allocation3 + $0x30] sm:$0xff] %vm262, %v4044
      %4077 = vst.msk [vmem:[#allocation3 + $0x38] sm:$0xff] %vm262, %v4045
      %4078 = vst.msk [vmem:[#allocation3 + $0x40] sm:$0xff] %vm262, %v4046
      %4079 = vst.msk [vmem:[#allocation3 + $0x48] sm:$0xff] %vm262, %v4047
      %4080 = vst.msk [vmem:[#allocation3 + $0x50] sm:$0xff] %vm262, %v4048
      %4081 = vst.msk [vmem:[#allocation3 + $0x58] sm:$0xff] %vm262, %v4049
      %4082 = vst.msk [vmem:[#allocation3 + $0x60] sm:$0xff] %vm262, %v4050
      %4083 = vst.msk [vmem:[#allocation3 + $0x68] sm:$0xff] %vm262, %v4051
      %4084 = vst.msk [vmem:[#allocation3 + $0x70] sm:$0xff] %vm262, %v4052
      %4085 = vst.msk [vmem:[#allocation3 + $0x78] sm:$0xff] %vm262, %v4053
      %4086 = vst.msk [vmem:[#allocation3 + $0x80] sm:$0xff] %vm262, %v4054
      %4087 = vst.msk [vmem:[#allocation3 + $0x88] sm:$0xff] %vm262, %v4055
      %4088 = vst.msk [vmem:[#allocation3 + $0x90] sm:$0xff] %vm262, %v4056
      %4089 = vst.msk [vmem:[#allocation3 + $0x98] sm:$0xff] %vm262, %v4057
      %4090 = vst.msk [vmem:[#allocation3 + $0xa0] sm:$0xff] %vm262, %v4058
      %4091 = vst.msk [vmem:[#allocation3 + $0xa8] sm:$0xff] %vm262, %v4059
      %4092 = vst.msk [vmem:[#allocation3 + $0xb0] sm:$0xff] %vm262, %v4060
      %4093 = vst.msk [vmem:[#allocation3 + $0xb8] sm:$0xff] %vm262, %v4061
      %4094 = vst.msk [vmem:[#allocation3 + $0xc0] sm:$0xff] %vm262, %v4062
      %4095 = vst.msk [vmem:[#allocation3 + $0xc8] sm:$0xff] %vm262, %v4063
      %4096 = vst.msk [vmem:[#allocation3 + $0xd0] sm:$0xff] %vm262, %v4064
      %4097 = vst.msk [vmem:[#allocation3 + $0xd8] sm:$0xff] %vm262, %v4065
      %4098 = vst.msk [vmem:[#allocation3 + $0xe0] sm:$0xff] %vm262, %v4066
      %4099 = vst.msk [vmem:[#allocation3 + $0xe8] sm:$0xff] %vm262, %v4067
      %4100 = vst.msk [vmem:[#allocation3 + $0xf0] sm:$0xff] %vm262, %v4068
      %4101 = vst.msk [vmem:[#allocation3 + $0xf8] sm:$0xff] %vm262, %v4069
      %v4102 = vld [vmem:[#allocation2 + $0x2] sm:$0xff]
      %v4103 = vld [vmem:[#allocation2 + $0xa] sm:$0xff]
      %v4104 = vld [vmem:[#allocation2 + $0x1a] sm:$0xff]
      %v4105 = vld [vmem:[#allocation2 + $0x22] sm:$0xff]
      %v4106 = vld [vmem:[#allocation2 + $0x32] sm:$0xff]
      %v4107 = vld [vmem:[#allocation2 + $0x3a] sm:$0xff]
      %v4108 = vld [vmem:[#allocation2 + $0x4a] sm:$0xff]
      %v4109 = vld [vmem:[#allocation2 + $0x52] sm:$0xff]
      %v4110 = vld [vmem:[#allocation2 + $0x62] sm:$0xff]
      %v4111 = vld [vmem:[#allocation2 + $0x6a] sm:$0xff]
      %v4112 = vld [vmem:[#allocation2 + $0x7a] sm:$0xff]
      %v4113 = vld [vmem:[#allocation2 + $0x82] sm:$0xff]
      %v4114 = vld [vmem:[#allocation2 + $0x92] sm:$0xff]
      %v4115 = vld [vmem:[#allocation2 + $0x9a] sm:$0xff]
      %v4116 = vld [vmem:[#allocation2 + $0xaa] sm:$0xff]
      %v4117 = vld [vmem:[#allocation2 + $0xb2] sm:$0xff]
      %v4118 = vld [vmem:[#allocation2 + $0xc2] sm:$0xff]
      %v4119 = vld [vmem:[#allocation2 + $0xca] sm:$0xff]
      %v4120 = vld [vmem:[#allocation2 + $0xda] sm:$0xff]
      %v4121 = vld [vmem:[#allocation2 + $0xe2] sm:$0xff]
      %v4122 = vld [vmem:[#allocation2 + $0xf2] sm:$0xff]
      %v4123 = vld [vmem:[#allocation2 + $0xfa] sm:$0xff]
      %v4124 = vld [vmem:[#allocation2 + $0x10a] sm:$0xff]
      %v4125 = vld [vmem:[#allocation2 + $0x112] sm:$0xff]
      %v4126 = vld [vmem:[#allocation2 + $0x122] sm:$0xff]
      %v4127 = vld [vmem:[#allocation2 + $0x12a] sm:$0xff]
      %v4128 = vld [vmem:[#allocation2 + $0x13a] sm:$0xff]
      %v4129 = vld [vmem:[#allocation2 + $0x142] sm:$0xff]
      %v4130 = vld [vmem:[#allocation2 + $0x152] sm:$0xff]
      %v4131 = vld [vmem:[#allocation2 + $0x15a] sm:$0xff]
      %v4132 = vld [vmem:[#allocation2 + $0x16a] sm:$0xff]
      %v4133 = vld [vmem:[#allocation2 + $0x172] sm:$0xff]
      %s4134 = scalar_lea.vmem %s3, 8
      %v4135 = vld [vmem:[%s4134] sm:$0xf]
      %v4137 = vsel %vm262, %v4102, 0
      %v4140 = vsel %vm262, %v4103, 0
      %v4143 = vsel %vm262, %v4104, 0
      %v4146 = vsel %vm262, %v4105, 0
      %v4149 = vsel %vm262, %v4106, 0
      %v4152 = vsel %vm262, %v4107, 0
      %v4155 = vsel %vm262, %v4108, 0
      %v4158 = vsel %vm262, %v4109, 0
      %v4161 = vsel %vm262, %v4110, 0
      %v4164 = vsel %vm262, %v4111, 0
      %v4167 = vsel %vm262, %v4112, 0
      %v4170 = vsel %vm262, %v4113, 0
      %v4173 = vsel %vm262, %v4114, 0
      %v4176 = vsel %vm262, %v4115, 0
      %v4179 = vsel %vm262, %v4116, 0
      %v4182 = vsel %vm262, %v4117, 0
      %v4185 = vsel %vm262, %v4118, 0
      %v4188 = vsel %vm262, %v4119, 0
      %v4191 = vsel %vm262, %v4120, 0
      %v4194 = vsel %vm262, %v4121, 0
      %v4197 = vsel %vm262, %v4122, 0
      %v4200 = vsel %vm262, %v4123, 0
      %v4203 = vsel %vm262, %v4124, 0
      %v4206 = vsel %vm262, %v4125, 0
      %v4209 = vsel %vm262, %v4126, 0
      %v4212 = vsel %vm262, %v4127, 0
      %v4215 = vsel %vm262, %v4128, 0
      %v4218 = vsel %vm262, %v4129, 0
      %v4221 = vsel %vm262, %v4130, 0
      %v4224 = vsel %vm262, %v4131, 0
      %v4227 = vsel %vm262, %v4132, 0
      %v4230 = vsel %vm262, %v4133, 0
      %v4233 = vsel %vm465, %v4135, 0
      %4235 = vmatpush.msra.mxu0 0.0
      %4236 = vmatpush.msra.mxu0 0.0
      %4237 = vmatpush.msra.mxu0 0.0
      %4238 = vmatpush.msra.mxu0 0.0
      %4239 = vmatpush.msra.mxu0 0.0
      %4240 = vmatpush.msra.mxu0 0.0
      %4241 = vmatpush.msra.mxu0 0.0
      %4242 = vmatpush.msra.mxu0 0.0
      %4243 = vmatpush.msra.mxu0 0.0
      %4244 = vmatpush.msra.mxu0 0.0
      %4245 = vmatpush.msra.mxu0 0.0
      %4246 = vmatpush.msra.mxu0 0.0
      %4247 = vmatpush.msra.mxu0 0.0
      %4248 = vmatpush.msra.mxu0 0.0
      %4249 = vmatpush.msra.mxu0 0.0
      %4250 = vmatpush.msra.mxu0 %v4233
      %4251 = vmatmul.f32.gmra.mxu0 %v4137
      %v4252 = vpop.f32.mrf.mxu0
      %v4253 = vadd.f32 0.0, %v4252
      %4254 = vmatmul.f32.gmra.mxu0 %v4140
      %v4255 = vpop.f32.mrf.mxu0
      %v4256 = vadd.f32 0.0, %v4255
      %4257 = vmatmul.f32.gmra.mxu0 %v4143
      %v4258 = vpop.f32.mrf.mxu0
      %v4259 = vadd.f32 0.0, %v4258
      %4260 = vmatmul.f32.gmra.mxu0 %v4146
      %v4261 = vpop.f32.mrf.mxu0
      %v4262 = vadd.f32 0.0, %v4261
      %4263 = vmatmul.f32.gmra.mxu0 %v4149
      %v4264 = vpop.f32.mrf.mxu0
      %v4265 = vadd.f32 0.0, %v4264
      %4266 = vmatmul.f32.gmra.mxu0 %v4152
      %v4267 = vpop.f32.mrf.mxu0
      %v4268 = vadd.f32 0.0, %v4267
      %4269 = vmatmul.f32.gmra.mxu0 %v4155
      %v4270 = vpop.f32.mrf.mxu0
      %v4271 = vadd.f32 0.0, %v4270
      %4272 = vmatmul.f32.gmra.mxu0 %v4158
      %v4273 = vpop.f32.mrf.mxu0
      %v4274 = vadd.f32 0.0, %v4273
      %4275 = vmatmul.f32.gmra.mxu0 %v4161
      %v4276 = vpop.f32.mrf.mxu0
      %v4277 = vadd.f32 0.0, %v4276
      %4278 = vmatmul.f32.gmra.mxu0 %v4164
      %v4279 = vpop.f32.mrf.mxu0
      %v4280 = vadd.f32 0.0, %v4279
      %4281 = vmatmul.f32.gmra.mxu0 %v4167
      %v4282 = vpop.f32.mrf.mxu0
      %v4283 = vadd.f32 0.0, %v4282
      %4284 = vmatmul.f32.gmra.mxu0 %v4170
      %v4285 = vpop.f32.mrf.mxu0
      %v4286 = vadd.f32 0.0, %v4285
      %4287 = vmatmul.f32.gmra.mxu0 %v4173
      %v4288 = vpop.f32.mrf.mxu0
      %v4289 = vadd.f32 0.0, %v4288
      %4290 = vmatmul.f32.gmra.mxu0 %v4176
      %v4291 = vpop.f32.mrf.mxu0
      %v4292 = vadd.f32 0.0, %v4291
      %4293 = vmatmul.f32.gmra.mxu0 %v4179
      %v4294 = vpop.f32.mrf.mxu0
      %v4295 = vadd.f32 0.0, %v4294
      %4296 = vmatmul.f32.gmra.mxu0 %v4182
      %v4297 = vpop.f32.mrf.mxu0
      %v4298 = vadd.f32 0.0, %v4297
      %4299 = vmatmul.f32.gmra.mxu0 %v4185
      %v4300 = vpop.f32.mrf.mxu0
      %v4301 = vadd.f32 0.0, %v4300
      %4302 = vmatmul.f32.gmra.mxu0 %v4188
      %v4303 = vpop.f32.mrf.mxu0
      %v4304 = vadd.f32 0.0, %v4303
      %4305 = vmatmul.f32.gmra.mxu0 %v4191
      %v4306 = vpop.f32.mrf.mxu0
      %v4307 = vadd.f32 0.0, %v4306
      %4308 = vmatmul.f32.gmra.mxu0 %v4194
      %v4309 = vpop.f32.mrf.mxu0
      %v4310 = vadd.f32 0.0, %v4309
      %4311 = vmatmul.f32.gmra.mxu0 %v4197
      %v4312 = vpop.f32.mrf.mxu0
      %v4313 = vadd.f32 0.0, %v4312
      %4314 = vmatmul.f32.gmra.mxu0 %v4200
      %v4315 = vpop.f32.mrf.mxu0
      %v4316 = vadd.f32 0.0, %v4315
      %4317 = vmatmul.f32.gmra.mxu0 %v4203
      %v4318 = vpop.f32.mrf.mxu0
      %v4319 = vadd.f32 0.0, %v4318
      %4320 = vmatmul.f32.gmra.mxu0 %v4206
      %v4321 = vpop.f32.mrf.mxu0
      %v4322 = vadd.f32 0.0, %v4321
      %4323 = vmatmul.f32.gmra.mxu0 %v4209
      %v4324 = vpop.f32.mrf.mxu0
      %v4325 = vadd.f32 0.0, %v4324
      %4326 = vmatmul.f32.gmra.mxu0 %v4212
      %v4327 = vpop.f32.mrf.mxu0
      %v4328 = vadd.f32 0.0, %v4327
      %4329 = vmatmul.f32.gmra.mxu0 %v4215
      %v4330 = vpop.f32.mrf.mxu0
      %v4331 = vadd.f32 0.0, %v4330
      %4332 = vmatmul.f32.gmra.mxu0 %v4218
      %v4333 = vpop.f32.mrf.mxu0
      %v4334 = vadd.f32 0.0, %v4333
      %4335 = vmatmul.f32.gmra.mxu0 %v4221
      %v4336 = vpop.f32.mrf.mxu0
      %v4337 = vadd.f32 0.0, %v4336
      %4338 = vmatmul.f32.gmra.mxu0 %v4224
      %v4339 = vpop.f32.mrf.mxu0
      %v4340 = vadd.f32 0.0, %v4339
      %4341 = vmatmul.f32.gmra.mxu0 %v4227
      %v4342 = vpop.f32.mrf.mxu0
      %v4343 = vadd.f32 0.0, %v4342
      %4344 = vmatmul.f32.gmra.mxu0 %v4230
      %v4345 = vpop.f32.mrf.mxu0
      %v4346 = vadd.f32 0.0, %v4345
      %4347 = vdwg.mxu0
      %v4348 = vld [vmem:[#allocation3] sm:$0xff]
      %v4349 = vld [vmem:[#allocation3 + $0x8] sm:$0xff]
      %v4350 = vld [vmem:[#allocation3 + $0x10] sm:$0xff]
      %v4351 = vld [vmem:[#allocation3 + $0x18] sm:$0xff]
      %v4352 = vld [vmem:[#allocation3 + $0x20] sm:$0xff]
      %v4353 = vld [vmem:[#allocation3 + $0x28] sm:$0xff]
      %v4354 = vld [vmem:[#allocation3 + $0x30] sm:$0xff]
      %v4355 = vld [vmem:[#allocation3 + $0x38] sm:$0xff]
      %v4356 = vld [vmem:[#allocation3 + $0x40] sm:$0xff]
      %v4357 = vld [vmem:[#allocation3 + $0x48] sm:$0xff]
      %v4358 = vld [vmem:[#allocation3 + $0x50] sm:$0xff]
      %v4359 = vld [vmem:[#allocation3 + $0x58] sm:$0xff]
      %v4360 = vld [vmem:[#allocation3 + $0x60] sm:$0xff]
      %v4361 = vld [vmem:[#allocation3 + $0x68] sm:$0xff]
      %v4362 = vld [vmem:[#allocation3 + $0x70] sm:$0xff]
      %v4363 = vld [vmem:[#allocation3 + $0x78] sm:$0xff]
      %v4364 = vld [vmem:[#allocation3 + $0x80] sm:$0xff]
      %v4365 = vld [vmem:[#allocation3 + $0x88] sm:$0xff]
      %v4366 = vld [vmem:[#allocation3 + $0x90] sm:$0xff]
      %v4367 = vld [vmem:[#allocation3 + $0x98] sm:$0xff]
      %v4368 = vld [vmem:[#allocation3 + $0xa0] sm:$0xff]
      %v4369 = vld [vmem:[#allocation3 + $0xa8] sm:$0xff]
      %v4370 = vld [vmem:[#allocation3 + $0xb0] sm:$0xff]
      %v4371 = vld [vmem:[#allocation3 + $0xb8] sm:$0xff]
      %v4372 = vld [vmem:[#allocation3 + $0xc0] sm:$0xff]
      %v4373 = vld [vmem:[#allocation3 + $0xc8] sm:$0xff]
      %v4374 = vld [vmem:[#allocation3 + $0xd0] sm:$0xff]
      %v4375 = vld [vmem:[#allocation3 + $0xd8] sm:$0xff]
      %v4376 = vld [vmem:[#allocation3 + $0xe0] sm:$0xff]
      %v4377 = vld [vmem:[#allocation3 + $0xe8] sm:$0xff]
      %v4378 = vld [vmem:[#allocation3 + $0xf0] sm:$0xff]
      %v4379 = vld [vmem:[#allocation3 + $0xf8] sm:$0xff]
      %v4380 = vadd.f32 %v4348, %v4253
      %v4381 = vadd.f32 %v4349, %v4256
      %v4382 = vadd.f32 %v4350, %v4259
      %v4383 = vadd.f32 %v4351, %v4262
      %v4384 = vadd.f32 %v4352, %v4265
      %v4385 = vadd.f32 %v4353, %v4268
      %v4386 = vadd.f32 %v4354, %v4271
      %v4387 = vadd.f32 %v4355, %v4274
      %v4388 = vadd.f32 %v4356, %v4277
      %v4389 = vadd.f32 %v4357, %v4280
      %v4390 = vadd.f32 %v4358, %v4283
      %v4391 = vadd.f32 %v4359, %v4286
      %v4392 = vadd.f32 %v4360, %v4289
      %v4393 = vadd.f32 %v4361, %v4292
      %v4394 = vadd.f32 %v4362, %v4295
      %v4395 = vadd.f32 %v4363, %v4298
      %v4396 = vadd.f32 %v4364, %v4301
      %v4397 = vadd.f32 %v4365, %v4304
      %v4398 = vadd.f32 %v4366, %v4307
      %v4399 = vadd.f32 %v4367, %v4310
      %v4400 = vadd.f32 %v4368, %v4313
      %v4401 = vadd.f32 %v4369, %v4316
      %v4402 = vadd.f32 %v4370, %v4319
      %v4403 = vadd.f32 %v4371, %v4322
      %v4404 = vadd.f32 %v4372, %v4325
      %v4405 = vadd.f32 %v4373, %v4328
      %v4406 = vadd.f32 %v4374, %v4331
      %v4407 = vadd.f32 %v4375, %v4334
      %v4408 = vadd.f32 %v4376, %v4337
      %v4409 = vadd.f32 %v4377, %v4340
      %v4410 = vadd.f32 %v4378, %v4343
      %v4411 = vadd.f32 %v4379, %v4346
      %4412 = vst.msk [vmem:[#allocation3] sm:$0xff] %vm262, %v4380
      %4413 = vst.msk [vmem:[#allocation3 + $0x8] sm:$0xff] %vm262, %v4381
      %4414 = vst.msk [vmem:[#allocation3 + $0x10] sm:$0xff] %vm262, %v4382
      %4415 = vst.msk [vmem:[#allocation3 + $0x18] sm:$0xff] %vm262, %v4383
      %4416 = vst.msk [vmem:[#allocation3 + $0x20] sm:$0xff] %vm262, %v4384
      %4417 = vst.msk [vmem:[#allocation3 + $0x28] sm:$0xff] %vm262, %v4385
      %4418 = vst.msk [vmem:[#allocation3 + $0x30] sm:$0xff] %vm262, %v4386
      %4419 = vst.msk [vmem:[#allocation3 + $0x38] sm:$0xff] %vm262, %v4387
      %4420 = vst.msk [vmem:[#allocation3 + $0x40] sm:$0xff] %vm262, %v4388
      %4421 = vst.msk [vmem:[#allocation3 + $0x48] sm:$0xff] %vm262, %v4389
      %4422 = vst.msk [vmem:[#allocation3 + $0x50] sm:$0xff] %vm262, %v4390
      %4423 = vst.msk [vmem:[#allocation3 + $0x58] sm:$0xff] %vm262, %v4391
      %4424 = vst.msk [vmem:[#allocation3 + $0x60] sm:$0xff] %vm262, %v4392
      %4425 = vst.msk [vmem:[#allocation3 + $0x68] sm:$0xff] %vm262, %v4393
      %4426 = vst.msk [vmem:[#allocation3 + $0x70] sm:$0xff] %vm262, %v4394
      %4427 = vst.msk [vmem:[#allocation3 + $0x78] sm:$0xff] %vm262, %v4395
      %4428 = vst.msk [vmem:[#allocation3 + $0x80] sm:$0xff] %vm262, %v4396
      %4429 = vst.msk [vmem:[#allocation3 + $0x88] sm:$0xff] %vm262, %v4397
      %4430 = vst.msk [vmem:[#allocation3 + $0x90] sm:$0xff] %vm262, %v4398
      %4431 = vst.msk [vmem:[#allocation3 + $0x98] sm:$0xff] %vm262, %v4399
      %4432 = vst.msk [vmem:[#allocation3 + $0xa0] sm:$0xff] %vm262, %v4400
      %4433 = vst.msk [vmem:[#allocation3 + $0xa8] sm:$0xff] %vm262, %v4401
      %4434 = vst.msk [vmem:[#allocation3 + $0xb0] sm:$0xff] %vm262, %v4402
      %4435 = vst.msk [vmem:[#allocation3 + $0xb8] sm:$0xff] %vm262, %v4403
      %4436 = vst.msk [vmem:[#allocation3 + $0xc0] sm:$0xff] %vm262, %v4404
      %4437 = vst.msk [vmem:[#allocation3 + $0xc8] sm:$0xff] %vm262, %v4405
      %4438 = vst.msk [vmem:[#allocation3 + $0xd0] sm:$0xff] %vm262, %v4406
      %4439 = vst.msk [vmem:[#allocation3 + $0xd8] sm:$0xff] %vm262, %v4407
      %4440 = vst.msk [vmem:[#allocation3 + $0xe0] sm:$0xff] %vm262, %v4408
      %4441 = vst.msk [vmem:[#allocation3 + $0xe8] sm:$0xff] %vm262, %v4409
      %4442 = vst.msk [vmem:[#allocation3 + $0xf0] sm:$0xff] %vm262, %v4410
      %4443 = vst.msk [vmem:[#allocation3 + $0xf8] sm:$0xff] %vm262, %v4411
      %v4444 = vld [vmem:[%s303] sm:$0xff]
      %v4445 = vld [vmem:[%s303 + $0x8] sm:$0xff]
      %v4446 = vld [vmem:[%s303 + $0x18] sm:$0xff]
      %v4447 = vld [vmem:[%s303 + $0x20] sm:$0xff]
      %v4448 = vld [vmem:[%s303 + $0x30] sm:$0xff]
      %v4449 = vld [vmem:[%s303 + $0x38] sm:$0xff]
      %v4450 = vld [vmem:[%s303 + $0x48] sm:$0xff]
      %v4451 = vld [vmem:[%s303 + $0x50] sm:$0xff]
      %v4452 = vld [vmem:[%s303 + $0x60] sm:$0xff]
      %v4453 = vld [vmem:[%s303 + $0x68] sm:$0xff]
      %v4454 = vld [vmem:[%s303 + $0x78] sm:$0xff]
      %v4455 = vld [vmem:[%s303 + $0x80] sm:$0xff]
      %v4456 = vld [vmem:[%s303 + $0x90] sm:$0xff]
      %v4457 = vld [vmem:[%s303 + $0x98] sm:$0xff]
      %v4458 = vld [vmem:[%s303 + $0xa8] sm:$0xff]
      %v4459 = vld [vmem:[%s303 + $0xb0] sm:$0xff]
      %v4460 = vld [vmem:[%s303 + $0xc0] sm:$0xff]
      %v4461 = vld [vmem:[%s303 + $0xc8] sm:$0xff]
      %v4462 = vld [vmem:[%s303 + $0xd8] sm:$0xff]
      %v4463 = vld [vmem:[%s303 + $0xe0] sm:$0xff]
      %v4464 = vld [vmem:[%s303 + $0xf0] sm:$0xff]
      %v4465 = vld [vmem:[%s303 + $0xf8] sm:$0xff]
      %v4466 = vld [vmem:[%s303 + $0x108] sm:$0xff]
      %v4467 = vld [vmem:[%s303 + $0x110] sm:$0xff]
      %v4468 = vld [vmem:[%s303 + $0x120] sm:$0xff]
      %v4469 = vld [vmem:[%s303 + $0x128] sm:$0xff]
      %v4470 = vld [vmem:[%s303 + $0x138] sm:$0xff]
      %v4471 = vld [vmem:[%s303 + $0x140] sm:$0xff]
      %v4472 = vld [vmem:[%s303 + $0x150] sm:$0xff]
      %v4473 = vld [vmem:[%s303 + $0x158] sm:$0xff]
      %v4474 = vld [vmem:[%s303 + $0x168] sm:$0xff]
      %v4475 = vld [vmem:[%s303 + $0x170] sm:$0xff]
      %s4476 = scalar_lea.vmem %s3, 12
      %v4477 = vld [vmem:[%s4476] sm:$0xf]
      %v4479 = vsel %vm262, %v4444, 0
      %v4482 = vsel %vm262, %v4445, 0
      %v4485 = vsel %vm262, %v4446, 0
      %v4488 = vsel %vm262, %v4447, 0
      %v4491 = vsel %vm262, %v4448, 0
      %v4494 = vsel %vm262, %v4449, 0
      %v4497 = vsel %vm262, %v4450, 0
      %v4500 = vsel %vm262, %v4451, 0
      %v4503 = vsel %vm262, %v4452, 0
      %v4506 = vsel %vm262, %v4453, 0
      %v4509 = vsel %vm262, %v4454, 0
      %v4512 = vsel %vm262, %v4455, 0
      %v4515 = vsel %vm262, %v4456, 0
      %v4518 = vsel %vm262, %v4457, 0
      %v4521 = vsel %vm262, %v4458, 0
      %v4524 = vsel %vm262, %v4459, 0
      %v4527 = vsel %vm262, %v4460, 0
      %v4530 = vsel %vm262, %v4461, 0
      %v4533 = vsel %vm262, %v4462, 0
      %v4536 = vsel %vm262, %v4463, 0
      %v4539 = vsel %vm262, %v4464, 0
      %v4542 = vsel %vm262, %v4465, 0
      %v4545 = vsel %vm262, %v4466, 0
      %v4548 = vsel %vm262, %v4467, 0
      %v4551 = vsel %vm262, %v4468, 0
      %v4554 = vsel %vm262, %v4469, 0
      %v4557 = vsel %vm262, %v4470, 0
      %v4560 = vsel %vm262, %v4471, 0
      %v4563 = vsel %vm262, %v4472, 0
      %v4566 = vsel %vm262, %v4473, 0
      %v4569 = vsel %vm262, %v4474, 0
      %v4572 = vsel %vm262, %v4475, 0
      %v4575 = vsel %vm465, %v4477, 0
      %4577 = vmatpush.msra.mxu0 0.0
      %4578 = vmatpush.msra.mxu0 0.0
      %4579 = vmatpush.msra.mxu0 0.0
      %4580 = vmatpush.msra.mxu0 0.0
      %4581 = vmatpush.msra.mxu0 0.0
      %4582 = vmatpush.msra.mxu0 0.0
      %4583 = vmatpush.msra.mxu0 0.0
      %4584 = vmatpush.msra.mxu0 0.0
      %4585 = vmatpush.msra.mxu0 0.0
      %4586 = vmatpush.msra.mxu0 0.0
      %4587 = vmatpush.msra.mxu0 0.0
      %4588 = vmatpush.msra.mxu0 0.0
      %4589 = vmatpush.msra.mxu0 0.0
      %4590 = vmatpush.msra.mxu0 0.0
      %4591 = vmatpush.msra.mxu0 0.0
      %4592 = vmatpush.msra.mxu0 %v4575
      %4593 = vmatmul.f32.gmra.mxu0 %v4479
      %v4594 = vpop.f32.mrf.mxu0
      %v4595 = vadd.f32 0.0, %v4594
      %4596 = vmatmul.f32.gmra.mxu0 %v4482
      %v4597 = vpop.f32.mrf.mxu0
      %v4598 = vadd.f32 0.0, %v4597
      %4599 = vmatmul.f32.gmra.mxu0 %v4485
      %v4600 = vpop.f32.mrf.mxu0
      %v4601 = vadd.f32 0.0, %v4600
      %4602 = vmatmul.f32.gmra.mxu0 %v4488
      %v4603 = vpop.f32.mrf.mxu0
      %v4604 = vadd.f32 0.0, %v4603
      %4605 = vmatmul.f32.gmra.mxu0 %v4491
      %v4606 = vpop.f32.mrf.mxu0
      %v4607 = vadd.f32 0.0, %v4606
      %4608 = vmatmul.f32.gmra.mxu0 %v4494
      %v4609 = vpop.f32.mrf.mxu0
      %v4610 = vadd.f32 0.0, %v4609
      %4611 = vmatmul.f32.gmra.mxu0 %v4497
      %v4612 = vpop.f32.mrf.mxu0
      %v4613 = vadd.f32 0.0, %v4612
      %4614 = vmatmul.f32.gmra.mxu0 %v4500
      %v4615 = vpop.f32.mrf.mxu0
      %v4616 = vadd.f32 0.0, %v4615
      %4617 = vmatmul.f32.gmra.mxu0 %v4503
      %v4618 = vpop.f32.mrf.mxu0
      %v4619 = vadd.f32 0.0, %v4618
      %4620 = vmatmul.f32.gmra.mxu0 %v4506
      %v4621 = vpop.f32.mrf.mxu0
      %v4622 = vadd.f32 0.0, %v4621
      %4623 = vmatmul.f32.gmra.mxu0 %v4509
      %v4624 = vpop.f32.mrf.mxu0
      %v4625 = vadd.f32 0.0, %v4624
      %4626 = vmatmul.f32.gmra.mxu0 %v4512
      %v4627 = vpop.f32.mrf.mxu0
      %v4628 = vadd.f32 0.0, %v4627
      %4629 = vmatmul.f32.gmra.mxu0 %v4515
      %v4630 = vpop.f32.mrf.mxu0
      %v4631 = vadd.f32 0.0, %v4630
      %4632 = vmatmul.f32.gmra.mxu0 %v4518
      %v4633 = vpop.f32.mrf.mxu0
      %v4634 = vadd.f32 0.0, %v4633
      %4635 = vmatmul.f32.gmra.mxu0 %v4521
      %v4636 = vpop.f32.mrf.mxu0
      %v4637 = vadd.f32 0.0, %v4636
      %4638 = vmatmul.f32.gmra.mxu0 %v4524
      %v4639 = vpop.f32.mrf.mxu0
      %v4640 = vadd.f32 0.0, %v4639
      %4641 = vmatmul.f32.gmra.mxu0 %v4527
      %v4642 = vpop.f32.mrf.mxu0
      %v4643 = vadd.f32 0.0, %v4642
      %4644 = vmatmul.f32.gmra.mxu0 %v4530
      %v4645 = vpop.f32.mrf.mxu0
      %v4646 = vadd.f32 0.0, %v4645
      %4647 = vmatmul.f32.gmra.mxu0 %v4533
      %v4648 = vpop.f32.mrf.mxu0
      %v4649 = vadd.f32 0.0, %v4648
      %4650 = vmatmul.f32.gmra.mxu0 %v4536
      %v4651 = vpop.f32.mrf.mxu0
      %v4652 = vadd.f32 0.0, %v4651
      %4653 = vmatmul.f32.gmra.mxu0 %v4539
      %v4654 = vpop.f32.mrf.mxu0
      %v4655 = vadd.f32 0.0, %v4654
      %4656 = vmatmul.f32.gmra.mxu0 %v4542
      %v4657 = vpop.f32.mrf.mxu0
      %v4658 = vadd.f32 0.0, %v4657
      %4659 = vmatmul.f32.gmra.mxu0 %v4545
      %v4660 = vpop.f32.mrf.mxu0
      %v4661 = vadd.f32 0.0, %v4660
      %4662 = vmatmul.f32.gmra.mxu0 %v4548
      %v4663 = vpop.f32.mrf.mxu0
      %v4664 = vadd.f32 0.0, %v4663
      %4665 = vmatmul.f32.gmra.mxu0 %v4551
      %v4666 = vpop.f32.mrf.mxu0
      %v4667 = vadd.f32 0.0, %v4666
      %4668 = vmatmul.f32.gmra.mxu0 %v4554
      %v4669 = vpop.f32.mrf.mxu0
      %v4670 = vadd.f32 0.0, %v4669
      %4671 = vmatmul.f32.gmra.mxu0 %v4557
      %v4672 = vpop.f32.mrf.mxu0
      %v4673 = vadd.f32 0.0, %v4672
      %4674 = vmatmul.f32.gmra.mxu0 %v4560
      %v4675 = vpop.f32.mrf.mxu0
      %v4676 = vadd.f32 0.0, %v4675
      %4677 = vmatmul.f32.gmra.mxu0 %v4563
      %v4678 = vpop.f32.mrf.mxu0
      %v4679 = vadd.f32 0.0, %v4678
      %4680 = vmatmul.f32.gmra.mxu0 %v4566
      %v4681 = vpop.f32.mrf.mxu0
      %v4682 = vadd.f32 0.0, %v4681
      %4683 = vmatmul.f32.gmra.mxu0 %v4569
      %v4684 = vpop.f32.mrf.mxu0
      %v4685 = vadd.f32 0.0, %v4684
      %4686 = vmatmul.f32.gmra.mxu0 %v4572
      %v4687 = vpop.f32.mrf.mxu0
      %v4688 = vadd.f32 0.0, %v4687
      %4689 = vdwg.mxu0
      %v4690 = vld [vmem:[#allocation3] sm:$0xff]
      %v4691 = vld [vmem:[#allocation3 + $0x8] sm:$0xff]
      %v4692 = vld [vmem:[#allocation3 + $0x10] sm:$0xff]
      %v4693 = vld [vmem:[#allocation3 + $0x18] sm:$0xff]
      %v4694 = vld [vmem:[#allocation3 + $0x20] sm:$0xff]
      %v4695 = vld [vmem:[#allocation3 + $0x28] sm:$0xff]
      %v4696 = vld [vmem:[#allocation3 + $0x30] sm:$0xff]
      %v4697 = vld [vmem:[#allocation3 + $0x38] sm:$0xff]
      %v4698 = vld [vmem:[#allocation3 + $0x40] sm:$0xff]
      %v4699 = vld [vmem:[#allocation3 + $0x48] sm:$0xff]
      %v4700 = vld [vmem:[#allocation3 + $0x50] sm:$0xff]
      %v4701 = vld [vmem:[#allocation3 + $0x58] sm:$0xff]
      %v4702 = vld [vmem:[#allocation3 + $0x60] sm:$0xff]
      %v4703 = vld [vmem:[#allocation3 + $0x68] sm:$0xff]
      %v4704 = vld [vmem:[#allocation3 + $0x70] sm:$0xff]
      %v4705 = vld [vmem:[#allocation3 + $0x78] sm:$0xff]
      %v4706 = vld [vmem:[#allocation3 + $0x80] sm:$0xff]
      %v4707 = vld [vmem:[#allocation3 + $0x88] sm:$0xff]
      %v4708 = vld [vmem:[#allocation3 + $0x90] sm:$0xff]
      %v4709 = vld [vmem:[#allocation3 + $0x98] sm:$0xff]
      %v4710 = vld [vmem:[#allocation3 + $0xa0] sm:$0xff]
      %v4711 = vld [vmem:[#allocation3 + $0xa8] sm:$0xff]
      %v4712 = vld [vmem:[#allocation3 + $0xb0] sm:$0xff]
      %v4713 = vld [vmem:[#allocation3 + $0xb8] sm:$0xff]
      %v4714 = vld [vmem:[#allocation3 + $0xc0] sm:$0xff]
      %v4715 = vld [vmem:[#allocation3 + $0xc8] sm:$0xff]
      %v4716 = vld [vmem:[#allocation3 + $0xd0] sm:$0xff]
      %v4717 = vld [vmem:[#allocation3 + $0xd8] sm:$0xff]
      %v4718 = vld [vmem:[#allocation3 + $0xe0] sm:$0xff]
      %v4719 = vld [vmem:[#allocation3 + $0xe8] sm:$0xff]
      %v4720 = vld [vmem:[#allocation3 + $0xf0] sm:$0xff]
      %v4721 = vld [vmem:[#allocation3 + $0xf8] sm:$0xff]
      %v4722 = vadd.f32 %v4690, %v4595
      %v4723 = vadd.f32 %v4691, %v4598
      %v4724 = vadd.f32 %v4692, %v4601
      %v4725 = vadd.f32 %v4693, %v4604
      %v4726 = vadd.f32 %v4694, %v4607
      %v4727 = vadd.f32 %v4695, %v4610
      %v4728 = vadd.f32 %v4696, %v4613
      %v4729 = vadd.f32 %v4697, %v4616
      %v4730 = vadd.f32 %v4698, %v4619
      %v4731 = vadd.f32 %v4699, %v4622
      %v4732 = vadd.f32 %v4700, %v4625
      %v4733 = vadd.f32 %v4701, %v4628
      %v4734 = vadd.f32 %v4702, %v4631
      %v4735 = vadd.f32 %v4703, %v4634
      %v4736 = vadd.f32 %v4704, %v4637
      %v4737 = vadd.f32 %v4705, %v4640
      %v4738 = vadd.f32 %v4706, %v4643
      %v4739 = vadd.f32 %v4707, %v4646
      %v4740 = vadd.f32 %v4708, %v4649
      %v4741 = vadd.f32 %v4709, %v4652
      %v4742 = vadd.f32 %v4710, %v4655
      %v4743 = vadd.f32 %v4711, %v4658
      %v4744 = vadd.f32 %v4712, %v4661
      %v4745 = vadd.f32 %v4713, %v4664
      %v4746 = vadd.f32 %v4714, %v4667
      %v4747 = vadd.f32 %v4715, %v4670
      %v4748 = vadd.f32 %v4716, %v4673
      %v4749 = vadd.f32 %v4717, %v4676
      %v4750 = vadd.f32 %v4718, %v4679
      %v4751 = vadd.f32 %v4719, %v4682
      %v4752 = vadd.f32 %v4720, %v4685
      %v4753 = vadd.f32 %v4721, %v4688
      %4754 = vst.msk [vmem:[#allocation3] sm:$0xff] %vm262, %v4722
      %4755 = vst.msk [vmem:[#allocation3 + $0x8] sm:$0xff] %vm262, %v4723
      %4756 = vst.msk [vmem:[#allocation3 + $0x10] sm:$0xff] %vm262, %v4724
      %4757 = vst.msk [vmem:[#allocation3 + $0x18] sm:$0xff] %vm262, %v4725
      %4758 = vst.msk [vmem:[#allocation3 + $0x20] sm:$0xff] %vm262, %v4726
      %4759 = vst.msk [vmem:[#allocation3 + $0x28] sm:$0xff] %vm262, %v4727
      %4760 = vst.msk [vmem:[#allocation3 + $0x30] sm:$0xff] %vm262, %v4728
      %4761 = vst.msk [vmem:[#allocation3 + $0x38] sm:$0xff] %vm262, %v4729
      %4762 = vst.msk [vmem:[#allocation3 + $0x40] sm:$0xff] %vm262, %v4730
      %4763 = vst.msk [vmem:[#allocation3 + $0x48] sm:$0xff] %vm262, %v4731
      %4764 = vst.msk [vmem:[#allocation3 + $0x50] sm:$0xff] %vm262, %v4732
      %4765 = vst.msk [vmem:[#allocation3 + $0x58] sm:$0xff] %vm262, %v4733
      %4766 = vst.msk [vmem:[#allocation3 + $0x60] sm:$0xff] %vm262, %v4734
      %4767 = vst.msk [vmem:[#allocation3 + $0x68] sm:$0xff] %vm262, %v4735
      %4768 = vst.msk [vmem:[#allocation3 + $0x70] sm:$0xff] %vm262, %v4736
      %4769 = vst.msk [vmem:[#allocation3 + $0x78] sm:$0xff] %vm262, %v4737
      %4770 = vst.msk [vmem:[#allocation3 + $0x80] sm:$0xff] %vm262, %v4738
      %4771 = vst.msk [vmem:[#allocation3 + $0x88] sm:$0xff] %vm262, %v4739
      %4772 = vst.msk [vmem:[#allocation3 + $0x90] sm:$0xff] %vm262, %v4740
      %4773 = vst.msk [vmem:[#allocation3 + $0x98] sm:$0xff] %vm262, %v4741
      %4774 = vst.msk [vmem:[#allocation3 + $0xa0] sm:$0xff] %vm262, %v4742
      %4775 = vst.msk [vmem:[#allocation3 + $0xa8] sm:$0xff] %vm262, %v4743
      %4776 = vst.msk [vmem:[#allocation3 + $0xb0] sm:$0xff] %vm262, %v4744
      %4777 = vst.msk [vmem:[#allocation3 + $0xb8] sm:$0xff] %vm262, %v4745
      %4778 = vst.msk [vmem:[#allocation3 + $0xc0] sm:$0xff] %vm262, %v4746
      %4779 = vst.msk [vmem:[#allocation3 + $0xc8] sm:$0xff] %vm262, %v4747
      %4780 = vst.msk [vmem:[#allocation3 + $0xd0] sm:$0xff] %vm262, %v4748
      %4781 = vst.msk [vmem:[#allocation3 + $0xd8] sm:$0xff] %vm262, %v4749
      %4782 = vst.msk [vmem:[#allocation3 + $0xe0] sm:$0xff] %vm262, %v4750
      %4783 = vst.msk [vmem:[#allocation3 + $0xe8] sm:$0xff] %vm262, %v4751
      %4784 = vst.msk [vmem:[#allocation3 + $0xf0] sm:$0xff] %vm262, %v4752
      %4785 = vst.msk [vmem:[#allocation3 + $0xf8] sm:$0xff] %vm262, %v4753
      %v4786 = vld [vmem:[%s303 + $0x1] sm:$0xff]
      %v4787 = vld [vmem:[%s303 + $0x9] sm:$0xff]
      %v4788 = vld [vmem:[%s303 + $0x19] sm:$0xff]
      %v4789 = vld [vmem:[%s303 + $0x21] sm:$0xff]
      %v4790 = vld [vmem:[%s303 + $0x31] sm:$0xff]
      %v4791 = vld [vmem:[%s303 + $0x39] sm:$0xff]
      %v4792 = vld [vmem:[%s303 + $0x49] sm:$0xff]
      %v4793 = vld [vmem:[%s303 + $0x51] sm:$0xff]
      %v4794 = vld [vmem:[%s303 + $0x61] sm:$0xff]
      %v4795 = vld [vmem:[%s303 + $0x69] sm:$0xff]
      %v4796 = vld [vmem:[%s303 + $0x79] sm:$0xff]
      %v4797 = vld [vmem:[%s303 + $0x81] sm:$0xff]
      %v4798 = vld [vmem:[%s303 + $0x91] sm:$0xff]
      %v4799 = vld [vmem:[%s303 + $0x99] sm:$0xff]
      %v4800 = vld [vmem:[%s303 + $0xa9] sm:$0xff]
      %v4801 = vld [vmem:[%s303 + $0xb1] sm:$0xff]
      %v4802 = vld [vmem:[%s303 + $0xc1] sm:$0xff]
      %v4803 = vld [vmem:[%s303 + $0xc9] sm:$0xff]
      %v4804 = vld [vmem:[%s303 + $0xd9] sm:$0xff]
      %v4805 = vld [vmem:[%s303 + $0xe1] sm:$0xff]
      %v4806 = vld [vmem:[%s303 + $0xf1] sm:$0xff]
      %v4807 = vld [vmem:[%s303 + $0xf9] sm:$0xff]
      %v4808 = vld [vmem:[%s303 + $0x109] sm:$0xff]
      %v4809 = vld [vmem:[%s303 + $0x111] sm:$0xff]
      %v4810 = vld [vmem:[%s303 + $0x121] sm:$0xff]
      %v4811 = vld [vmem:[%s303 + $0x129] sm:$0xff]
      %v4812 = vld [vmem:[%s303 + $0x139] sm:$0xff]
      %v4813 = vld [vmem:[%s303 + $0x141] sm:$0xff]
      %v4814 = vld [vmem:[%s303 + $0x151] sm:$0xff]
      %v4815 = vld [vmem:[%s303 + $0x159] sm:$0xff]
      %v4816 = vld [vmem:[%s303 + $0x169] sm:$0xff]
      %v4817 = vld [vmem:[%s303 + $0x171] sm:$0xff]
      %s4818 = scalar_lea.vmem %s3, 16
      %v4819 = vld [vmem:[%s4818] sm:$0xf]
      %v4821 = vsel %vm262, %v4786, 0
      %v4824 = vsel %vm262, %v4787, 0
      %v4827 = vsel %vm262, %v4788, 0
      %v4830 = vsel %vm262, %v4789, 0
      %v4833 = vsel %vm262, %v4790, 0
      %v4836 = vsel %vm262, %v4791, 0
      %v4839 = vsel %vm262, %v4792, 0
      %v4842 = vsel %vm262, %v4793, 0
      %v4845 = vsel %vm262, %v4794, 0
      %v4848 = vsel %vm262, %v4795, 0
      %v4851 = vsel %vm262, %v4796, 0
      %v4854 = vsel %vm262, %v4797, 0
      %v4857 = vsel %vm262, %v4798, 0
      %v4860 = vsel %vm262, %v4799, 0
      %v4863 = vsel %vm262, %v4800, 0
      %v4866 = vsel %vm262, %v4801, 0
      %v4869 = vsel %vm262, %v4802, 0
      %v4872 = vsel %vm262, %v4803, 0
      %v4875 = vsel %vm262, %v4804, 0
      %v4878 = vsel %vm262, %v4805, 0
      %v4881 = vsel %vm262, %v4806, 0
      %v4884 = vsel %vm262, %v4807, 0
      %v4887 = vsel %vm262, %v4808, 0
      %v4890 = vsel %vm262, %v4809, 0
      %v4893 = vsel %vm262, %v4810, 0
      %v4896 = vsel %vm262, %v4811, 0
      %v4899 = vsel %vm262, %v4812, 0
      %v4902 = vsel %vm262, %v4813, 0
      %v4905 = vsel %vm262, %v4814, 0
      %v4908 = vsel %vm262, %v4815, 0
      %v4911 = vsel %vm262, %v4816, 0
      %v4914 = vsel %vm262, %v4817, 0
      %v4917 = vsel %vm465, %v4819, 0
      %4919 = vmatpush.msra.mxu0 0.0
      %4920 = vmatpush.msra.mxu0 0.0
      %4921 = vmatpush.msra.mxu0 0.0
      %4922 = vmatpush.msra.mxu0 0.0
      %4923 = vmatpush.msra.mxu0 0.0
      %4924 = vmatpush.msra.mxu0 0.0
      %4925 = vmatpush.msra.mxu0 0.0
      %4926 = vmatpush.msra.mxu0 0.0
      %4927 = vmatpush.msra.mxu0 0.0
      %4928 = vmatpush.msra.mxu0 0.0
      %4929 = vmatpush.msra.mxu0 0.0
      %4930 = vmatpush.msra.mxu0 0.0
      %4931 = vmatpush.msra.mxu0 0.0
      %4932 = vmatpush.msra.mxu0 0.0
      %4933 = vmatpush.msra.mxu0 0.0
      %4934 = vmatpush.msra.mxu0 %v4917
      %4935 = vmatmul.f32.gmra.mxu0 %v4821
      %v4936 = vpop.f32.mrf.mxu0
      %v4937 = vadd.f32 0.0, %v4936
      %4938 = vmatmul.f32.gmra.mxu0 %v4824
      %v4939 = vpop.f32.mrf.mxu0
      %v4940 = vadd.f32 0.0, %v4939
      %4941 = vmatmul.f32.gmra.mxu0 %v4827
      %v4942 = vpop.f32.mrf.mxu0
      %v4943 = vadd.f32 0.0, %v4942
      %4944 = vmatmul.f32.gmra.mxu0 %v4830
      %v4945 = vpop.f32.mrf.mxu0
      %v4946 = vadd.f32 0.0, %v4945
      %4947 = vmatmul.f32.gmra.mxu0 %v4833
      %v4948 = vpop.f32.mrf.mxu0
      %v4949 = vadd.f32 0.0, %v4948
      %4950 = vmatmul.f32.gmra.mxu0 %v4836
      %v4951 = vpop.f32.mrf.mxu0
      %v4952 = vadd.f32 0.0, %v4951
      %4953 = vmatmul.f32.gmra.mxu0 %v4839
      %v4954 = vpop.f32.mrf.mxu0
      %v4955 = vadd.f32 0.0, %v4954
      %4956 = vmatmul.f32.gmra.mxu0 %v4842
      %v4957 = vpop.f32.mrf.mxu0
      %v4958 = vadd.f32 0.0, %v4957
      %4959 = vmatmul.f32.gmra.mxu0 %v4845
      %v4960 = vpop.f32.mrf.mxu0
      %v4961 = vadd.f32 0.0, %v4960
      %4962 = vmatmul.f32.gmra.mxu0 %v4848
      %v4963 = vpop.f32.mrf.mxu0
      %v4964 = vadd.f32 0.0, %v4963
      %4965 = vmatmul.f32.gmra.mxu0 %v4851
      %v4966 = vpop.f32.mrf.mxu0
      %v4967 = vadd.f32 0.0, %v4966
      %4968 = vmatmul.f32.gmra.mxu0 %v4854
      %v4969 = vpop.f32.mrf.mxu0
      %v4970 = vadd.f32 0.0, %v4969
      %4971 = vmatmul.f32.gmra.mxu0 %v4857
      %v4972 = vpop.f32.mrf.mxu0
      %v4973 = vadd.f32 0.0, %v4972
      %4974 = vmatmul.f32.gmra.mxu0 %v4860
      %v4975 = vpop.f32.mrf.mxu0
      %v4976 = vadd.f32 0.0, %v4975
      %4977 = vmatmul.f32.gmra.mxu0 %v4863
      %v4978 = vpop.f32.mrf.mxu0
      %v4979 = vadd.f32 0.0, %v4978
      %4980 = vmatmul.f32.gmra.mxu0 %v4866
      %v4981 = vpop.f32.mrf.mxu0
      %v4982 = vadd.f32 0.0, %v4981
      %4983 = vmatmul.f32.gmra.mxu0 %v4869
      %v4984 = vpop.f32.mrf.mxu0
      %v4985 = vadd.f32 0.0, %v4984
      %4986 = vmatmul.f32.gmra.mxu0 %v4872
      %v4987 = vpop.f32.mrf.mxu0
      %v4988 = vadd.f32 0.0, %v4987
      %4989 = vmatmul.f32.gmra.mxu0 %v4875
      %v4990 = vpop.f32.mrf.mxu0
      %v4991 = vadd.f32 0.0, %v4990
      %4992 = vmatmul.f32.gmra.mxu0 %v4878
      %v4993 = vpop.f32.mrf.mxu0
      %v4994 = vadd.f32 0.0, %v4993
      %4995 = vmatmul.f32.gmra.mxu0 %v4881
      %v4996 = vpop.f32.mrf.mxu0
      %v4997 = vadd.f32 0.0, %v4996
      %4998 = vmatmul.f32.gmra.mxu0 %v4884
      %v4999 = vpop.f32.mrf.mxu0
      %v5000 = vadd.f32 0.0, %v4999
      %5001 = vmatmul.f32.gmra.mxu0 %v4887
      %v5002 = vpop.f32.mrf.mxu0
      %v5003 = vadd.f32 0.0, %v5002
      %5004 = vmatmul.f32.gmra.mxu0 %v4890
      %v5005 = vpop.f32.mrf.mxu0
      %v5006 = vadd.f32 0.0, %v5005
      %5007 = vmatmul.f32.gmra.mxu0 %v4893
      %v5008 = vpop.f32.mrf.mxu0
      %v5009 = vadd.f32 0.0, %v5008
      %5010 = vmatmul.f32.gmra.mxu0 %v4896
      %v5011 = vpop.f32.mrf.mxu0
      %v5012 = vadd.f32 0.0, %v5011
      %5013 = vmatmul.f32.gmra.mxu0 %v4899
      %v5014 = vpop.f32.mrf.mxu0
      %v5015 = vadd.f32 0.0, %v5014
      %5016 = vmatmul.f32.gmra.mxu0 %v4902
      %v5017 = vpop.f32.mrf.mxu0
      %v5018 = vadd.f32 0.0, %v5017
      %5019 = vmatmul.f32.gmra.mxu0 %v4905
      %v5020 = vpop.f32.mrf.mxu0
      %v5021 = vadd.f32 0.0, %v5020
      %5022 = vmatmul.f32.gmra.mxu0 %v4908
      %v5023 = vpop.f32.mrf.mxu0
      %v5024 = vadd.f32 0.0, %v5023
      %5025 = vmatmul.f32.gmra.mxu0 %v4911
      %v5026 = vpop.f32.mrf.mxu0
      %v5027 = vadd.f32 0.0, %v5026
      %5028 = vmatmul.f32.gmra.mxu0 %v4914
      %v5029 = vpop.f32.mrf.mxu0
      %v5030 = vadd.f32 0.0, %v5029
      %5031 = vdwg.mxu0
      %v5032 = vld [vmem:[#allocation3] sm:$0xff]
      %v5033 = vld [vmem:[#allocation3 + $0x8] sm:$0xff]
      %v5034 = vld [vmem:[#allocation3 + $0x10] sm:$0xff]
      %v5035 = vld [vmem:[#allocation3 + $0x18] sm:$0xff]
      %v5036 = vld [vmem:[#allocation3 + $0x20] sm:$0xff]
      %v5037 = vld [vmem:[#allocation3 + $0x28] sm:$0xff]
      %v5038 = vld [vmem:[#allocation3 + $0x30] sm:$0xff]
      %v5039 = vld [vmem:[#allocation3 + $0x38] sm:$0xff]
      %v5040 = vld [vmem:[#allocation3 + $0x40] sm:$0xff]
      %v5041 = vld [vmem:[#allocation3 + $0x48] sm:$0xff]
      %v5042 = vld [vmem:[#allocation3 + $0x50] sm:$0xff]
      %v5043 = vld [vmem:[#allocation3 + $0x58] sm:$0xff]
      %v5044 = vld [vmem:[#allocation3 + $0x60] sm:$0xff]
      %v5045 = vld [vmem:[#allocation3 + $0x68] sm:$0xff]
      %v5046 = vld [vmem:[#allocation3 + $0x70] sm:$0xff]
      %v5047 = vld [vmem:[#allocation3 + $0x78] sm:$0xff]
      %v5048 = vld [vmem:[#allocation3 + $0x80] sm:$0xff]
      %v5049 = vld [vmem:[#allocation3 + $0x88] sm:$0xff]
      %v5050 = vld [vmem:[#allocation3 + $0x90] sm:$0xff]
      %v5051 = vld [vmem:[#allocation3 + $0x98] sm:$0xff]
      %v5052 = vld [vmem:[#allocation3 + $0xa0] sm:$0xff]
      %v5053 = vld [vmem:[#allocation3 + $0xa8] sm:$0xff]
      %v5054 = vld [vmem:[#allocation3 + $0xb0] sm:$0xff]
      %v5055 = vld [vmem:[#allocation3 + $0xb8] sm:$0xff]
      %v5056 = vld [vmem:[#allocation3 + $0xc0] sm:$0xff]
      %v5057 = vld [vmem:[#allocation3 + $0xc8] sm:$0xff]
      %v5058 = vld [vmem:[#allocation3 + $0xd0] sm:$0xff]
      %v5059 = vld [vmem:[#allocation3 + $0xd8] sm:$0xff]
      %v5060 = vld [vmem:[#allocation3 + $0xe0] sm:$0xff]
      %v5061 = vld [vmem:[#allocation3 + $0xe8] sm:$0xff]
      %v5062 = vld [vmem:[#allocation3 + $0xf0] sm:$0xff]
      %v5063 = vld [vmem:[#allocation3 + $0xf8] sm:$0xff]
      %v5064 = vadd.f32 %v5032, %v4937
      %v5065 = vadd.f32 %v5033, %v4940
      %v5066 = vadd.f32 %v5034, %v4943
      %v5067 = vadd.f32 %v5035, %v4946
      %v5068 = vadd.f32 %v5036, %v4949
      %v5069 = vadd.f32 %v5037, %v4952
      %v5070 = vadd.f32 %v5038, %v4955
      %v5071 = vadd.f32 %v5039, %v4958
      %v5072 = vadd.f32 %v5040, %v4961
      %v5073 = vadd.f32 %v5041, %v4964
      %v5074 = vadd.f32 %v5042, %v4967
      %v5075 = vadd.f32 %v5043, %v4970
      %v5076 = vadd.f32 %v5044, %v4973
      %v5077 = vadd.f32 %v5045, %v4976
      %v5078 = vadd.f32 %v5046, %v4979
      %v5079 = vadd.f32 %v5047, %v4982
      %v5080 = vadd.f32 %v5048, %v4985
      %v5081 = vadd.f32 %v5049, %v4988
      %v5082 = vadd.f32 %v5050, %v4991
      %v5083 = vadd.f32 %v5051, %v4994
      %v5084 = vadd.f32 %v5052, %v4997
      %v5085 = vadd.f32 %v5053, %v5000
      %v5086 = vadd.f32 %v5054, %v5003
      %v5087 = vadd.f32 %v5055, %v5006
      %v5088 = vadd.f32 %v5056, %v5009
      %v5089 = vadd.f32 %v5057, %v5012
      %v5090 = vadd.f32 %v5058, %v5015
      %v5091 = vadd.f32 %v5059, %v5018
      %v5092 = vadd.f32 %v5060, %v5021
      %v5093 = vadd.f32 %v5061, %v5024
      %v5094 = vadd.f32 %v5062, %v5027
      %v5095 = vadd.f32 %v5063, %v5030
      %5096 = vst.msk [vmem:[#allocation3] sm:$0xff] %vm262, %v5064
      %5097 = vst.msk [vmem:[#allocation3 + $0x8] sm:$0xff] %vm262, %v5065
      %5098 = vst.msk [vmem:[#allocation3 + $0x10] sm:$0xff] %vm262, %v5066
      %5099 = vst.msk [vmem:[#allocation3 + $0x18] sm:$0xff] %vm262, %v5067
      %5100 = vst.msk [vmem:[#allocation3 + $0x20] sm:$0xff] %vm262, %v5068
      %5101 = vst.msk [vmem:[#allocation3 + $0x28] sm:$0xff] %vm262, %v5069
      %5102 = vst.msk [vmem:[#allocation3 + $0x30] sm:$0xff] %vm262, %v5070
      %5103 = vst.msk [vmem:[#allocation3 + $0x38] sm:$0xff] %vm262, %v5071
      %5104 = vst.msk [vmem:[#allocation3 + $0x40] sm:$0xff] %vm262, %v5072
      %5105 = vst.msk [vmem:[#allocation3 + $0x48] sm:$0xff] %vm262, %v5073
      %5106 = vst.msk [vmem:[#allocation3 + $0x50] sm:$0xff] %vm262, %v5074
      %5107 = vst.msk [vmem:[#allocation3 + $0x58] sm:$0xff] %vm262, %v5075
      %5108 = vst.msk [vmem:[#allocation3 + $0x60] sm:$0xff] %vm262, %v5076
      %5109 = vst.msk [vmem:[#allocation3 + $0x68] sm:$0xff] %vm262, %v5077
      %5110 = vst.msk [vmem:[#allocation3 + $0x70] sm:$0xff] %vm262, %v5078
      %5111 = vst.msk [vmem:[#allocation3 + $0x78] sm:$0xff] %vm262, %v5079
      %5112 = vst.msk [vmem:[#allocation3 + $0x80] sm:$0xff] %vm262, %v5080
      %5113 = vst.msk [vmem:[#allocation3 + $0x88] sm:$0xff] %vm262, %v5081
      %5114 = vst.msk [vmem:[#allocation3 + $0x90] sm:$0xff] %vm262, %v5082
      %5115 = vst.msk [vmem:[#allocation3 + $0x98] sm:$0xff] %vm262, %v5083
      %5116 = vst.msk [vmem:[#allocation3 + $0xa0] sm:$0xff] %vm262, %v5084
      %5117 = vst.msk [vmem:[#allocation3 + $0xa8] sm:$0xff] %vm262, %v5085
      %5118 = vst.msk [vmem:[#allocation3 + $0xb0] sm:$0xff] %vm262, %v5086
      %5119 = vst.msk [vmem:[#allocation3 + $0xb8] sm:$0xff] %vm262, %v5087
      %5120 = vst.msk [vmem:[#allocation3 + $0xc0] sm:$0xff] %vm262, %v5088
      %5121 = vst.msk [vmem:[#allocation3 + $0xc8] sm:$0xff] %vm262, %v5089
      %5122 = vst.msk [vmem:[#allocation3 + $0xd0] sm:$0xff] %vm262, %v5090
      %5123 = vst.msk [vmem:[#allocation3 + $0xd8] sm:$0xff] %vm262, %v5091
      %5124 = vst.msk [vmem:[#allocation3 + $0xe0] sm:$0xff] %vm262, %v5092
      %5125 = vst.msk [vmem:[#allocation3 + $0xe8] sm:$0xff] %vm262, %v5093
      %5126 = vst.msk [vmem:[#allocation3 + $0xf0] sm:$0xff] %vm262, %v5094
      %5127 = vst.msk [vmem:[#allocation3 + $0xf8] sm:$0xff] %vm262, %v5095
      %v5128 = vld [vmem:[%s303 + $0x2] sm:$0xff]
      %v5129 = vld [vmem:[%s303 + $0xa] sm:$0xff]
      %v5130 = vld [vmem:[%s303 + $0x1a] sm:$0xff]
      %v5131 = vld [vmem:[%s303 + $0x22] sm:$0xff]
      %v5132 = vld [vmem:[%s303 + $0x32] sm:$0xff]
      %v5133 = vld [vmem:[%s303 + $0x3a] sm:$0xff]
      %v5134 = vld [vmem:[%s303 + $0x4a] sm:$0xff]
      %v5135 = vld [vmem:[%s303 + $0x52] sm:$0xff]
      %v5136 = vld [vmem:[%s303 + $0x62] sm:$0xff]
      %v5137 = vld [vmem:[%s303 + $0x6a] sm:$0xff]
      %v5138 = vld [vmem:[%s303 + $0x7a] sm:$0xff]
      %v5139 = vld [vmem:[%s303 + $0x82] sm:$0xff]
      %v5140 = vld [vmem:[%s303 + $0x92] sm:$0xff]
      %v5141 = vld [vmem:[%s303 + $0x9a] sm:$0xff]
      %v5142 = vld [vmem:[%s303 + $0xaa] sm:$0xff]
      %v5143 = vld [vmem:[%s303 + $0xb2] sm:$0xff]
      %v5144 = vld [vmem:[%s303 + $0xc2] sm:$0xff]
      %v5145 = vld [vmem:[%s303 + $0xca] sm:$0xff]
      %v5146 = vld [vmem:[%s303 + $0xda] sm:$0xff]
      %v5147 = vld [vmem:[%s303 + $0xe2] sm:$0xff]
      %v5148 = vld [vmem:[%s303 + $0xf2] sm:$0xff]
      %v5149 = vld [vmem:[%s303 + $0xfa] sm:$0xff]
      %v5150 = vld [vmem:[%s303 + $0x10a] sm:$0xff]
      %v5151 = vld [vmem:[%s303 + $0x112] sm:$0xff]
      %v5152 = vld [vmem:[%s303 + $0x122] sm:$0xff]
      %v5153 = vld [vmem:[%s303 + $0x12a] sm:$0xff]
      %v5154 = vld [vmem:[%s303 + $0x13a] sm:$0xff]
      %v5155 = vld [vmem:[%s303 + $0x142] sm:$0xff]
      %v5156 = vld [vmem:[%s303 + $0x152] sm:$0xff]
      %v5157 = vld [vmem:[%s303 + $0x15a] sm:$0xff]
      %v5158 = vld [vmem:[%s303 + $0x16a] sm:$0xff]
      %v5159 = vld [vmem:[%s303 + $0x172] sm:$0xff]
      %s5160 = scalar_lea.vmem %s3, 20
      %v5161 = vld [vmem:[%s5160] sm:$0xf]
      %v5163 = vsel %vm262, %v5128, 0
      %v5166 = vsel %vm262, %v5129, 0
      %v5169 = vsel %vm262, %v5130, 0
      %v5172 = vsel %vm262, %v5131, 0
      %v5175 = vsel %vm262, %v5132, 0
      %v5178 = vsel %vm262, %v5133, 0
      %v5181 = vsel %vm262, %v5134, 0
      %v5184 = vsel %vm262, %v5135, 0
      %v5187 = vsel %vm262, %v5136, 0
      %v5190 = vsel %vm262, %v5137, 0
      %v5193 = vsel %vm262, %v5138, 0
      %v5196 = vsel %vm262, %v5139, 0
      %v5199 = vsel %vm262, %v5140, 0
      %v5202 = vsel %vm262, %v5141, 0
      %v5205 = vsel %vm262, %v5142, 0
      %v5208 = vsel %vm262, %v5143, 0
      %v5211 = vsel %vm262, %v5144, 0
      %v5214 = vsel %vm262, %v5145, 0
      %v5217 = vsel %vm262, %v5146, 0
      %v5220 = vsel %vm262, %v5147, 0
      %v5223 = vsel %vm262, %v5148, 0
      %v5226 = vsel %vm262, %v5149, 0
      %v5229 = vsel %vm262, %v5150, 0
      %v5232 = vsel %vm262, %v5151, 0
      %v5235 = vsel %vm262, %v5152, 0
      %v5238 = vsel %vm262, %v5153, 0
      %v5241 = vsel %vm262, %v5154, 0
      %v5244 = vsel %vm262, %v5155, 0
      %v5247 = vsel %vm262, %v5156, 0
      %v5250 = vsel %vm262, %v5157, 0
      %v5253 = vsel %vm262, %v5158, 0
      %v5256 = vsel %vm262, %v5159, 0
      %v5259 = vsel %vm465, %v5161, 0
      %5261 = vmatpush.msra.mxu0 0.0
      %5262 = vmatpush.msra.mxu0 0.0
      %5263 = vmatpush.msra.mxu0 0.0
      %5264 = vmatpush.msra.mxu0 0.0
      %5265 = vmatpush.msra.mxu0 0.0
      %5266 = vmatpush.msra.mxu0 0.0
      %5267 = vmatpush.msra.mxu0 0.0
      %5268 = vmatpush.msra.mxu0 0.0
      %5269 = vmatpush.msra.mxu0 0.0
      %5270 = vmatpush.msra.mxu0 0.0
      %5271 = vmatpush.msra.mxu0 0.0
      %5272 = vmatpush.msra.mxu0 0.0
      %5273 = vmatpush.msra.mxu0 0.0
      %5274 = vmatpush.msra.mxu0 0.0
      %5275 = vmatpush.msra.mxu0 0.0
      %5276 = vmatpush.msra.mxu0 %v5259
      %5277 = vmatmul.f32.gmra.mxu0 %v5163
      %v5278 = vpop.f32.mrf.mxu0
      %v5279 = vadd.f32 0.0, %v5278
      %5280 = vmatmul.f32.gmra.mxu0 %v5166
      %v5281 = vpop.f32.mrf.mxu0
      %v5282 = vadd.f32 0.0, %v5281
      %5283 = vmatmul.f32.gmra.mxu0 %v5169
      %v5284 = vpop.f32.mrf.mxu0
      %v5285 = vadd.f32 0.0, %v5284
      %5286 = vmatmul.f32.gmra.mxu0 %v5172
      %v5287 = vpop.f32.mrf.mxu0
      %v5288 = vadd.f32 0.0, %v5287
      %5289 = vmatmul.f32.gmra.mxu0 %v5175
      %v5290 = vpop.f32.mrf.mxu0
      %v5291 = vadd.f32 0.0, %v5290
      %5292 = vmatmul.f32.gmra.mxu0 %v5178
      %v5293 = vpop.f32.mrf.mxu0
      %v5294 = vadd.f32 0.0, %v5293
      %5295 = vmatmul.f32.gmra.mxu0 %v5181
      %v5296 = vpop.f32.mrf.mxu0
      %v5297 = vadd.f32 0.0, %v5296
      %5298 = vmatmul.f32.gmra.mxu0 %v5184
      %v5299 = vpop.f32.mrf.mxu0
      %v5300 = vadd.f32 0.0, %v5299
      %5301 = vmatmul.f32.gmra.mxu0 %v5187
      %v5302 = vpop.f32.mrf.mxu0
      %v5303 = vadd.f32 0.0, %v5302
      %5304 = vmatmul.f32.gmra.mxu0 %v5190
      %v5305 = vpop.f32.mrf.mxu0
      %v5306 = vadd.f32 0.0, %v5305
      %5307 = vmatmul.f32.gmra.mxu0 %v5193
      %v5308 = vpop.f32.mrf.mxu0
      %v5309 = vadd.f32 0.0, %v5308
      %5310 = vmatmul.f32.gmra.mxu0 %v5196
      %v5311 = vpop.f32.mrf.mxu0
      %v5312 = vadd.f32 0.0, %v5311
      %5313 = vmatmul.f32.gmra.mxu0 %v5199
      %v5314 = vpop.f32.mrf.mxu0
      %v5315 = vadd.f32 0.0, %v5314
      %5316 = vmatmul.f32.gmra.mxu0 %v5202
      %v5317 = vpop.f32.mrf.mxu0
      %v5318 = vadd.f32 0.0, %v5317
      %5319 = vmatmul.f32.gmra.mxu0 %v5205
      %v5320 = vpop.f32.mrf.mxu0
      %v5321 = vadd.f32 0.0, %v5320
      %5322 = vmatmul.f32.gmra.mxu0 %v5208
      %v5323 = vpop.f32.mrf.mxu0
      %v5324 = vadd.f32 0.0, %v5323
      %5325 = vmatmul.f32.gmra.mxu0 %v5211
      %v5326 = vpop.f32.mrf.mxu0
      %v5327 = vadd.f32 0.0, %v5326
      %5328 = vmatmul.f32.gmra.mxu0 %v5214
      %v5329 = vpop.f32.mrf.mxu0
      %v5330 = vadd.f32 0.0, %v5329
      %5331 = vmatmul.f32.gmra.mxu0 %v5217
      %v5332 = vpop.f32.mrf.mxu0
      %v5333 = vadd.f32 0.0, %v5332
      %5334 = vmatmul.f32.gmra.mxu0 %v5220
      %v5335 = vpop.f32.mrf.mxu0
      %v5336 = vadd.f32 0.0, %v5335
      %5337 = vmatmul.f32.gmra.mxu0 %v5223
      %v5338 = vpop.f32.mrf.mxu0
      %v5339 = vadd.f32 0.0, %v5338
      %5340 = vmatmul.f32.gmra.mxu0 %v5226
      %v5341 = vpop.f32.mrf.mxu0
      %v5342 = vadd.f32 0.0, %v5341
      %5343 = vmatmul.f32.gmra.mxu0 %v5229
      %v5344 = vpop.f32.mrf.mxu0
      %v5345 = vadd.f32 0.0, %v5344
      %5346 = vmatmul.f32.gmra.mxu0 %v5232
      %v5347 = vpop.f32.mrf.mxu0
      %v5348 = vadd.f32 0.0, %v5347
      %5349 = vmatmul.f32.gmra.mxu0 %v5235
      %v5350 = vpop.f32.mrf.mxu0
      %v5351 = vadd.f32 0.0, %v5350
      %5352 = vmatmul.f32.gmra.mxu0 %v5238
      %v5353 = vpop.f32.mrf.mxu0
      %v5354 = vadd.f32 0.0, %v5353
      %5355 = vmatmul.f32.gmra.mxu0 %v5241
      %v5356 = vpop.f32.mrf.mxu0
      %v5357 = vadd.f32 0.0, %v5356
      %5358 = vmatmul.f32.gmra.mxu0 %v5244
      %v5359 = vpop.f32.mrf.mxu0
      %v5360 = vadd.f32 0.0, %v5359
      %5361 = vmatmul.f32.gmra.mxu0 %v5247
      %v5362 = vpop.f32.mrf.mxu0
      %v5363 = vadd.f32 0.0, %v5362
      %5364 = vmatmul.f32.gmra.mxu0 %v5250
      %v5365 = vpop.f32.mrf.mxu0
      %v5366 = vadd.f32 0.0, %v5365
      %5367 = vmatmul.f32.gmra.mxu0 %v5253
      %v5368 = vpop.f32.mrf.mxu0
      %v5369 = vadd.f32 0.0, %v5368
      %5370 = vmatmul.f32.gmra.mxu0 %v5256
      %v5371 = vpop.f32.mrf.mxu0
      %v5372 = vadd.f32 0.0, %v5371
      %5373 = vdwg.mxu0
      %v5374 = vld [vmem:[#allocation3] sm:$0xff]
      %v5375 = vld [vmem:[#allocation3 + $0x8] sm:$0xff]
      %v5376 = vld [vmem:[#allocation3 + $0x10] sm:$0xff]
      %v5377 = vld [vmem:[#allocation3 + $0x18] sm:$0xff]
      %v5378 = vld [vmem:[#allocation3 + $0x20] sm:$0xff]
      %v5379 = vld [vmem:[#allocation3 + $0x28] sm:$0xff]
      %v5380 = vld [vmem:[#allocation3 + $0x30] sm:$0xff]
      %v5381 = vld [vmem:[#allocation3 + $0x38] sm:$0xff]
      %v5382 = vld [vmem:[#allocation3 + $0x40] sm:$0xff]
      %v5383 = vld [vmem:[#allocation3 + $0x48] sm:$0xff]
      %v5384 = vld [vmem:[#allocation3 + $0x50] sm:$0xff]
      %v5385 = vld [vmem:[#allocation3 + $0x58] sm:$0xff]
      %v5386 = vld [vmem:[#allocation3 + $0x60] sm:$0xff]
      %v5387 = vld [vmem:[#allocation3 + $0x68] sm:$0xff]
      %v5388 = vld [vmem:[#allocation3 + $0x70] sm:$0xff]
      %v5389 = vld [vmem:[#allocation3 + $0x78] sm:$0xff]
      %v5390 = vld [vmem:[#allocation3 + $0x80] sm:$0xff]
      %v5391 = vld [vmem:[#allocation3 + $0x88] sm:$0xff]
      %v5392 = vld [vmem:[#allocation3 + $0x90] sm:$0xff]
      %v5393 = vld [vmem:[#allocation3 + $0x98] sm:$0xff]
      %v5394 = vld [vmem:[#allocation3 + $0xa0] sm:$0xff]
      %v5395 = vld [vmem:[#allocation3 + $0xa8] sm:$0xff]
      %v5396 = vld [vmem:[#allocation3 + $0xb0] sm:$0xff]
      %v5397 = vld [vmem:[#allocation3 + $0xb8] sm:$0xff]
      %v5398 = vld [vmem:[#allocation3 + $0xc0] sm:$0xff]
      %v5399 = vld [vmem:[#allocation3 + $0xc8] sm:$0xff]
      %v5400 = vld [vmem:[#allocation3 + $0xd0] sm:$0xff]
      %v5401 = vld [vmem:[#allocation3 + $0xd8] sm:$0xff]
      %v5402 = vld [vmem:[#allocation3 + $0xe0] sm:$0xff]
      %v5403 = vld [vmem:[#allocation3 + $0xe8] sm:$0xff]
      %v5404 = vld [vmem:[#allocation3 + $0xf0] sm:$0xff]
      %v5405 = vld [vmem:[#allocation3 + $0xf8] sm:$0xff]
      %v5406 = vadd.f32 %v5374, %v5279
      %v5407 = vadd.f32 %v5375, %v5282
      %v5408 = vadd.f32 %v5376, %v5285
      %v5409 = vadd.f32 %v5377, %v5288
      %v5410 = vadd.f32 %v5378, %v5291
      %v5411 = vadd.f32 %v5379, %v5294
      %v5412 = vadd.f32 %v5380, %v5297
      %v5413 = vadd.f32 %v5381, %v5300
      %v5414 = vadd.f32 %v5382, %v5303
      %v5415 = vadd.f32 %v5383, %v5306
      %v5416 = vadd.f32 %v5384, %v5309
      %v5417 = vadd.f32 %v5385, %v5312
      %v5418 = vadd.f32 %v5386, %v5315
      %v5419 = vadd.f32 %v5387, %v5318
      %v5420 = vadd.f32 %v5388, %v5321
      %v5421 = vadd.f32 %v5389, %v5324
      %v5422 = vadd.f32 %v5390, %v5327
      %v5423 = vadd.f32 %v5391, %v5330
      %v5424 = vadd.f32 %v5392, %v5333
      %v5425 = vadd.f32 %v5393, %v5336
      %v5426 = vadd.f32 %v5394, %v5339
      %v5427 = vadd.f32 %v5395, %v5342
      %v5428 = vadd.f32 %v5396, %v5345
      %v5429 = vadd.f32 %v5397, %v5348
      %v5430 = vadd.f32 %v5398, %v5351
      %v5431 = vadd.f32 %v5399, %v5354
      %v5432 = vadd.f32 %v5400, %v5357
      %v5433 = vadd.f32 %v5401, %v5360
      %v5434 = vadd.f32 %v5402, %v5363
      %v5435 = vadd.f32 %v5403, %v5366
      %v5436 = vadd.f32 %v5404, %v5369
      %v5437 = vadd.f32 %v5405, %v5372
      %5438 = vst.msk [vmem:[#allocation3] sm:$0xff] %vm262, %v5406
      %5439 = vst.msk [vmem:[#allocation3 + $0x8] sm:$0xff] %vm262, %v5407
      %5440 = vst.msk [vmem:[#allocation3 + $0x10] sm:$0xff] %vm262, %v5408
      %5441 = vst.msk [vmem:[#allocation3 + $0x18] sm:$0xff] %vm262, %v5409
      %5442 = vst.msk [vmem:[#allocation3 + $0x20] sm:$0xff] %vm262, %v5410
      %5443 = vst.msk [vmem:[#allocation3 + $0x28] sm:$0xff] %vm262, %v5411
      %5444 = vst.msk [vmem:[#allocation3 + $0x30] sm:$0xff] %vm262, %v5412
      %5445 = vst.msk [vmem:[#allocation3 + $0x38] sm:$0xff] %vm262, %v5413
      %5446 = vst.msk [vmem:[#allocation3 + $0x40] sm:$0xff] %vm262, %v5414
      %5447 = vst.msk [vmem:[#allocation3 + $0x48] sm:$0xff] %vm262, %v5415
      %5448 = vst.msk [vmem:[#allocation3 + $0x50] sm:$0xff] %vm262, %v5416
      %5449 = vst.msk [vmem:[#allocation3 + $0x58] sm:$0xff] %vm262, %v5417
      %5450 = vst.msk [vmem:[#allocation3 + $0x60] sm:$0xff] %vm262, %v5418
      %5451 = vst.msk [vmem:[#allocation3 + $0x68] sm:$0xff] %vm262, %v5419
      %5452 = vst.msk [vmem:[#allocation3 + $0x70] sm:$0xff] %vm262, %v5420
      %5453 = vst.msk [vmem:[#allocation3 + $0x78] sm:$0xff] %vm262, %v5421
      %5454 = vst.msk [vmem:[#allocation3 + $0x80] sm:$0xff] %vm262, %v5422
      %5455 = vst.msk [vmem:[#allocation3 + $0x88] sm:$0xff] %vm262, %v5423
      %5456 = vst.msk [vmem:[#allocation3 + $0x90] sm:$0xff] %vm262, %v5424
      %5457 = vst.msk [vmem:[#allocation3 + $0x98] sm:$0xff] %vm262, %v5425
      %5458 = vst.msk [vmem:[#allocation3 + $0xa0] sm:$0xff] %vm262, %v5426
      %5459 = vst.msk [vmem:[#allocation3 + $0xa8] sm:$0xff] %vm262, %v5427
      %5460 = vst.msk [vmem:[#allocation3 + $0xb0] sm:$0xff] %vm262, %v5428
      %5461 = vst.msk [vmem:[#allocation3 + $0xb8] sm:$0xff] %vm262, %v5429
      %5462 = vst.msk [vmem:[#allocation3 + $0xc0] sm:$0xff] %vm262, %v5430
      %5463 = vst.msk [vmem:[#allocation3 + $0xc8] sm:$0xff] %vm262, %v5431
      %5464 = vst.msk [vmem:[#allocation3 + $0xd0] sm:$0xff] %vm262, %v5432
      %5465 = vst.msk [vmem:[#allocation3 + $0xd8] sm:$0xff] %vm262, %v5433
      %5466 = vst.msk [vmem:[#allocation3 + $0xe0] sm:$0xff] %vm262, %v5434
      %5467 = vst.msk [vmem:[#allocation3 + $0xe8] sm:$0xff] %vm262, %v5435
      %5468 = vst.msk [vmem:[#allocation3 + $0xf0] sm:$0xff] %vm262, %v5436
      %5469 = vst.msk [vmem:[#allocation3 + $0xf8] sm:$0xff] %vm262, %v5437
      %v5470 = vld [vmem:[%s2324] sm:$0xff]
      %v5471 = vld [vmem:[%s2324 + $0x8] sm:$0xff]
      %v5472 = vld [vmem:[%s2324 + $0x18] sm:$0xff]
      %v5473 = vld [vmem:[%s2324 + $0x20] sm:$0xff]
      %v5474 = vld [vmem:[%s2324 + $0x30] sm:$0xff]
      %v5475 = vld [vmem:[%s2324 + $0x38] sm:$0xff]
      %v5476 = vld [vmem:[%s2324 + $0x48] sm:$0xff]
      %v5477 = vld [vmem:[%s2324 + $0x50] sm:$0xff]
      %v5478 = vld [vmem:[%s2324 + $0x60] sm:$0xff]
      %v5479 = vld [vmem:[%s2324 + $0x68] sm:$0xff]
      %v5480 = vld [vmem:[%s2324 + $0x78] sm:$0xff]
      %v5481 = vld [vmem:[%s2324 + $0x80] sm:$0xff]
      %v5482 = vld [vmem:[%s2324 + $0x90] sm:$0xff]
      %v5483 = vld [vmem:[%s2324 + $0x98] sm:$0xff]
      %v5484 = vld [vmem:[%s2324 + $0xa8] sm:$0xff]
      %v5485 = vld [vmem:[%s2324 + $0xb0] sm:$0xff]
      %v5486 = vld [vmem:[%s2324 + $0xc0] sm:$0xff]
      %v5487 = vld [vmem:[%s2324 + $0xc8] sm:$0xff]
      %v5488 = vld [vmem:[%s2324 + $0xd8] sm:$0xff]
      %v5489 = vld [vmem:[%s2324 + $0xe0] sm:$0xff]
      %v5490 = vld [vmem:[%s2324 + $0xf0] sm:$0xff]
      %v5491 = vld [vmem:[%s2324 + $0xf8] sm:$0xff]
      %v5492 = vld [vmem:[%s2324 + $0x108] sm:$0xff]
      %v5493 = vld [vmem:[%s2324 + $0x110] sm:$0xff]
      %v5494 = vld [vmem:[%s2324 + $0x120] sm:$0xff]
      %v5495 = vld [vmem:[%s2324 + $0x128] sm:$0xff]
      %v5496 = vld [vmem:[%s2324 + $0x138] sm:$0xff]
      %v5497 = vld [vmem:[%s2324 + $0x140] sm:$0xff]
      %v5498 = vld [vmem:[%s2324 + $0x150] sm:$0xff]
      %v5499 = vld [vmem:[%s2324 + $0x158] sm:$0xff]
      %v5500 = vld [vmem:[%s2324 + $0x168] sm:$0xff]
      %v5501 = vld [vmem:[%s2324 + $0x170] sm:$0xff]
      %s5502 = scalar_lea.vmem %s3, 24
      %v5503 = vld [vmem:[%s5502] sm:$0xf]
      %v5505 = vsel %vm262, %v5470, 0
      %v5508 = vsel %vm262, %v5471, 0
      %v5511 = vsel %vm262, %v5472, 0
      %v5514 = vsel %vm262, %v5473, 0
      %v5517 = vsel %vm262, %v5474, 0
      %v5520 = vsel %vm262, %v5475, 0
      %v5523 = vsel %vm262, %v5476, 0
      %v5526 = vsel %vm262, %v5477, 0
      %v5529 = vsel %vm262, %v5478, 0
      %v5532 = vsel %vm262, %v5479, 0
      %v5535 = vsel %vm262, %v5480, 0
      %v5538 = vsel %vm262, %v5481, 0
      %v5541 = vsel %vm262, %v5482, 0
      %v5544 = vsel %vm262, %v5483, 0
      %v5547 = vsel %vm262, %v5484, 0
      %v5550 = vsel %vm262, %v5485, 0
      %v5553 = vsel %vm262, %v5486, 0
      %v5556 = vsel %vm262, %v5487, 0
      %v5559 = vsel %vm262, %v5488, 0
      %v5562 = vsel %vm262, %v5489, 0
      %v5565 = vsel %vm262, %v5490, 0
      %v5568 = vsel %vm262, %v5491, 0
      %v5571 = vsel %vm262, %v5492, 0
      %v5574 = vsel %vm262, %v5493, 0
      %v5577 = vsel %vm262, %v5494, 0
      %v5580 = vsel %vm262, %v5495, 0
      %v5583 = vsel %vm262, %v5496, 0
      %v5586 = vsel %vm262, %v5497, 0
      %v5589 = vsel %vm262, %v5498, 0
      %v5592 = vsel %vm262, %v5499, 0
      %v5595 = vsel %vm262, %v5500, 0
      %v5598 = vsel %vm262, %v5501, 0
      %v5601 = vsel %vm465, %v5503, 0
      %5603 = vmatpush.msra.mxu0 0.0
      %5604 = vmatpush.msra.mxu0 0.0
      %5605 = vmatpush.msra.mxu0 0.0
      %5606 = vmatpush.msra.mxu0 0.0
      %5607 = vmatpush.msra.mxu0 0.0
      %5608 = vmatpush.msra.mxu0 0.0
      %5609 = vmatpush.msra.mxu0 0.0
      %5610 = vmatpush.msra.mxu0 0.0
      %5611 = vmatpush.msra.mxu0 0.0
      %5612 = vmatpush.msra.mxu0 0.0
      %5613 = vmatpush.msra.mxu0 0.0
      %5614 = vmatpush.msra.mxu0 0.0
      %5615 = vmatpush.msra.mxu0 0.0
      %5616 = vmatpush.msra.mxu0 0.0
      %5617 = vmatpush.msra.mxu0 0.0
      %5618 = vmatpush.msra.mxu0 %v5601
      %5619 = vmatmul.f32.gmra.mxu0 %v5505
      %v5620 = vpop.f32.mrf.mxu0
      %v5621 = vadd.f32 0.0, %v5620
      %5622 = vmatmul.f32.gmra.mxu0 %v5508
      %v5623 = vpop.f32.mrf.mxu0
      %v5624 = vadd.f32 0.0, %v5623
      %5625 = vmatmul.f32.gmra.mxu0 %v5511
      %v5626 = vpop.f32.mrf.mxu0
      %v5627 = vadd.f32 0.0, %v5626
      %5628 = vmatmul.f32.gmra.mxu0 %v5514
      %v5629 = vpop.f32.mrf.mxu0
      %v5630 = vadd.f32 0.0, %v5629
      %5631 = vmatmul.f32.gmra.mxu0 %v5517
      %v5632 = vpop.f32.mrf.mxu0
      %v5633 = vadd.f32 0.0, %v5632
      %5634 = vmatmul.f32.gmra.mxu0 %v5520
      %v5635 = vpop.f32.mrf.mxu0
      %v5636 = vadd.f32 0.0, %v5635
      %5637 = vmatmul.f32.gmra.mxu0 %v5523
      %v5638 = vpop.f32.mrf.mxu0
      %v5639 = vadd.f32 0.0, %v5638
      %5640 = vmatmul.f32.gmra.mxu0 %v5526
      %v5641 = vpop.f32.mrf.mxu0
      %v5642 = vadd.f32 0.0, %v5641
      %5643 = vmatmul.f32.gmra.mxu0 %v5529
      %v5644 = vpop.f32.mrf.mxu0
      %v5645 = vadd.f32 0.0, %v5644
      %5646 = vmatmul.f32.gmra.mxu0 %v5532
      %v5647 = vpop.f32.mrf.mxu0
      %v5648 = vadd.f32 0.0, %v5647
      %5649 = vmatmul.f32.gmra.mxu0 %v5535
      %v5650 = vpop.f32.mrf.mxu0
      %v5651 = vadd.f32 0.0, %v5650
      %5652 = vmatmul.f32.gmra.mxu0 %v5538
      %v5653 = vpop.f32.mrf.mxu0
      %v5654 = vadd.f32 0.0, %v5653
      %5655 = vmatmul.f32.gmra.mxu0 %v5541
      %v5656 = vpop.f32.mrf.mxu0
      %v5657 = vadd.f32 0.0, %v5656
      %5658 = vmatmul.f32.gmra.mxu0 %v5544
      %v5659 = vpop.f32.mrf.mxu0
      %v5660 = vadd.f32 0.0, %v5659
      %5661 = vmatmul.f32.gmra.mxu0 %v5547
      %v5662 = vpop.f32.mrf.mxu0
      %v5663 = vadd.f32 0.0, %v5662
      %5664 = vmatmul.f32.gmra.mxu0 %v5550
      %v5665 = vpop.f32.mrf.mxu0
      %v5666 = vadd.f32 0.0, %v5665
      %5667 = vmatmul.f32.gmra.mxu0 %v5553
      %v5668 = vpop.f32.mrf.mxu0
      %v5669 = vadd.f32 0.0, %v5668
      %5670 = vmatmul.f32.gmra.mxu0 %v5556
      %v5671 = vpop.f32.mrf.mxu0
      %v5672 = vadd.f32 0.0, %v5671
      %5673 = vmatmul.f32.gmra.mxu0 %v5559
      %v5674 = vpop.f32.mrf.mxu0
      %v5675 = vadd.f32 0.0, %v5674
      %5676 = vmatmul.f32.gmra.mxu0 %v5562
      %v5677 = vpop.f32.mrf.mxu0
      %v5678 = vadd.f32 0.0, %v5677
      %5679 = vmatmul.f32.gmra.mxu0 %v5565
      %v5680 = vpop.f32.mrf.mxu0
      %v5681 = vadd.f32 0.0, %v5680
      %5682 = vmatmul.f32.gmra.mxu0 %v5568
      %v5683 = vpop.f32.mrf.mxu0
      %v5684 = vadd.f32 0.0, %v5683
      %5685 = vmatmul.f32.gmra.mxu0 %v5571
      %v5686 = vpop.f32.mrf.mxu0
      %v5687 = vadd.f32 0.0, %v5686
      %5688 = vmatmul.f32.gmra.mxu0 %v5574
      %v5689 = vpop.f32.mrf.mxu0
      %v5690 = vadd.f32 0.0, %v5689
      %5691 = vmatmul.f32.gmra.mxu0 %v5577
      %v5692 = vpop.f32.mrf.mxu0
      %v5693 = vadd.f32 0.0, %v5692
      %5694 = vmatmul.f32.gmra.mxu0 %v5580
      %v5695 = vpop.f32.mrf.mxu0
      %v5696 = vadd.f32 0.0, %v5695
      %5697 = vmatmul.f32.gmra.mxu0 %v5583
      %v5698 = vpop.f32.mrf.mxu0
      %v5699 = vadd.f32 0.0, %v5698
      %5700 = vmatmul.f32.gmra.mxu0 %v5586
      %v5701 = vpop.f32.mrf.mxu0
      %v5702 = vadd.f32 0.0, %v5701
      %5703 = vmatmul.f32.gmra.mxu0 %v5589
      %v5704 = vpop.f32.mrf.mxu0
      %v5705 = vadd.f32 0.0, %v5704
      %5706 = vmatmul.f32.gmra.mxu0 %v5592
      %v5707 = vpop.f32.mrf.mxu0
      %v5708 = vadd.f32 0.0, %v5707
      %5709 = vmatmul.f32.gmra.mxu0 %v5595
      %v5710 = vpop.f32.mrf.mxu0
      %v5711 = vadd.f32 0.0, %v5710
      %5712 = vmatmul.f32.gmra.mxu0 %v5598
      %v5713 = vpop.f32.mrf.mxu0
      %v5714 = vadd.f32 0.0, %v5713
      %5715 = vdwg.mxu0
      %v5716 = vld [vmem:[#allocation3] sm:$0xff]
      %v5717 = vld [vmem:[#allocation3 + $0x8] sm:$0xff]
      %v5718 = vld [vmem:[#allocation3 + $0x10] sm:$0xff]
      %v5719 = vld [vmem:[#allocation3 + $0x18] sm:$0xff]
      %v5720 = vld [vmem:[#allocation3 + $0x20] sm:$0xff]
      %v5721 = vld [vmem:[#allocation3 + $0x28] sm:$0xff]
      %v5722 = vld [vmem:[#allocation3 + $0x30] sm:$0xff]
      %v5723 = vld [vmem:[#allocation3 + $0x38] sm:$0xff]
      %v5724 = vld [vmem:[#allocation3 + $0x40] sm:$0xff]
      %v5725 = vld [vmem:[#allocation3 + $0x48] sm:$0xff]
      %v5726 = vld [vmem:[#allocation3 + $0x50] sm:$0xff]
      %v5727 = vld [vmem:[#allocation3 + $0x58] sm:$0xff]
      %v5728 = vld [vmem:[#allocation3 + $0x60] sm:$0xff]
      %v5729 = vld [vmem:[#allocation3 + $0x68] sm:$0xff]
      %v5730 = vld [vmem:[#allocation3 + $0x70] sm:$0xff]
      %v5731 = vld [vmem:[#allocation3 + $0x78] sm:$0xff]
      %v5732 = vld [vmem:[#allocation3 + $0x80] sm:$0xff]
      %v5733 = vld [vmem:[#allocation3 + $0x88] sm:$0xff]
      %v5734 = vld [vmem:[#allocation3 + $0x90] sm:$0xff]
      %v5735 = vld [vmem:[#allocation3 + $0x98] sm:$0xff]
      %v5736 = vld [vmem:[#allocation3 + $0xa0] sm:$0xff]
      %v5737 = vld [vmem:[#allocation3 + $0xa8] sm:$0xff]
      %v5738 = vld [vmem:[#allocation3 + $0xb0] sm:$0xff]
      %v5739 = vld [vmem:[#allocation3 + $0xb8] sm:$0xff]
      %v5740 = vld [vmem:[#allocation3 + $0xc0] sm:$0xff]
      %v5741 = vld [vmem:[#allocation3 + $0xc8] sm:$0xff]
      %v5742 = vld [vmem:[#allocation3 + $0xd0] sm:$0xff]
      %v5743 = vld [vmem:[#allocation3 + $0xd8] sm:$0xff]
      %v5744 = vld [vmem:[#allocation3 + $0xe0] sm:$0xff]
      %v5745 = vld [vmem:[#allocation3 + $0xe8] sm:$0xff]
      %v5746 = vld [vmem:[#allocation3 + $0xf0] sm:$0xff]
      %v5747 = vld [vmem:[#allocation3 + $0xf8] sm:$0xff]
      %v5748 = vadd.f32 %v5716, %v5621
      %v5749 = vadd.f32 %v5717, %v5624
      %v5750 = vadd.f32 %v5718, %v5627
      %v5751 = vadd.f32 %v5719, %v5630
      %v5752 = vadd.f32 %v5720, %v5633
      %v5753 = vadd.f32 %v5721, %v5636
      %v5754 = vadd.f32 %v5722, %v5639
      %v5755 = vadd.f32 %v5723, %v5642
      %v5756 = vadd.f32 %v5724, %v5645
      %v5757 = vadd.f32 %v5725, %v5648
      %v5758 = vadd.f32 %v5726, %v5651
      %v5759 = vadd.f32 %v5727, %v5654
      %v5760 = vadd.f32 %v5728, %v5657
      %v5761 = vadd.f32 %v5729, %v5660
      %v5762 = vadd.f32 %v5730, %v5663
      %v5763 = vadd.f32 %v5731, %v5666
      %v5764 = vadd.f32 %v5732, %v5669
      %v5765 = vadd.f32 %v5733, %v5672
      %v5766 = vadd.f32 %v5734, %v5675
      %v5767 = vadd.f32 %v5735, %v5678
      %v5768 = vadd.f32 %v5736, %v5681
      %v5769 = vadd.f32 %v5737, %v5684
      %v5770 = vadd.f32 %v5738, %v5687
      %v5771 = vadd.f32 %v5739, %v5690
      %v5772 = vadd.f32 %v5740, %v5693
      %v5773 = vadd.f32 %v5741, %v5696
      %v5774 = vadd.f32 %v5742, %v5699
      %v5775 = vadd.f32 %v5743, %v5702
      %v5776 = vadd.f32 %v5744, %v5705
      %v5777 = vadd.f32 %v5745, %v5708
      %v5778 = vadd.f32 %v5746, %v5711
      %v5779 = vadd.f32 %v5747, %v5714
      %5780 = vst.msk [vmem:[#allocation3] sm:$0xff] %vm262, %v5748
      %5781 = vst.msk [vmem:[#allocation3 + $0x8] sm:$0xff] %vm262, %v5749
      %5782 = vst.msk [vmem:[#allocation3 + $0x10] sm:$0xff] %vm262, %v5750
      %5783 = vst.msk [vmem:[#allocation3 + $0x18] sm:$0xff] %vm262, %v5751
      %5784 = vst.msk [vmem:[#allocation3 + $0x20] sm:$0xff] %vm262, %v5752
      %5785 = vst.msk [vmem:[#allocation3 + $0x28] sm:$0xff] %vm262, %v5753
      %5786 = vst.msk [vmem:[#allocation3 + $0x30] sm:$0xff] %vm262, %v5754
      %5787 = vst.msk [vmem:[#allocation3 + $0x38] sm:$0xff] %vm262, %v5755
      %5788 = vst.msk [vmem:[#allocation3 + $0x40] sm:$0xff] %vm262, %v5756
      %5789 = vst.msk [vmem:[#allocation3 + $0x48] sm:$0xff] %vm262, %v5757
      %5790 = vst.msk [vmem:[#allocation3 + $0x50] sm:$0xff] %vm262, %v5758
      %5791 = vst.msk [vmem:[#allocation3 + $0x58] sm:$0xff] %vm262, %v5759
      %5792 = vst.msk [vmem:[#allocation3 + $0x60] sm:$0xff] %vm262, %v5760
      %5793 = vst.msk [vmem:[#allocation3 + $0x68] sm:$0xff] %vm262, %v5761
      %5794 = vst.msk [vmem:[#allocation3 + $0x70] sm:$0xff] %vm262, %v5762
      %5795 = vst.msk [vmem:[#allocation3 + $0x78] sm:$0xff] %vm262, %v5763
      %5796 = vst.msk [vmem:[#allocation3 + $0x80] sm:$0xff] %vm262, %v5764
      %5797 = vst.msk [vmem:[#allocation3 + $0x88] sm:$0xff] %vm262, %v5765
      %5798 = vst.msk [vmem:[#allocation3 + $0x90] sm:$0xff] %vm262, %v5766
      %5799 = vst.msk [vmem:[#allocation3 + $0x98] sm:$0xff] %vm262, %v5767
      %5800 = vst.msk [vmem:[#allocation3 + $0xa0] sm:$0xff] %vm262, %v5768
      %5801 = vst.msk [vmem:[#allocation3 + $0xa8] sm:$0xff] %vm262, %v5769
      %5802 = vst.msk [vmem:[#allocation3 + $0xb0] sm:$0xff] %vm262, %v5770
      %5803 = vst.msk [vmem:[#allocation3 + $0xb8] sm:$0xff] %vm262, %v5771
      %5804 = vst.msk [vmem:[#allocation3 + $0xc0] sm:$0xff] %vm262, %v5772
      %5805 = vst.msk [vmem:[#allocation3 + $0xc8] sm:$0xff] %vm262, %v5773
      %5806 = vst.msk [vmem:[#allocation3 + $0xd0] sm:$0xff] %vm262, %v5774
      %5807 = vst.msk [vmem:[#allocation3 + $0xd8] sm:$0xff] %vm262, %v5775
      %5808 = vst.msk [vmem:[#allocation3 + $0xe0] sm:$0xff] %vm262, %v5776
      %5809 = vst.msk [vmem:[#allocation3 + $0xe8] sm:$0xff] %vm262, %v5777
      %5810 = vst.msk [vmem:[#allocation3 + $0xf0] sm:$0xff] %vm262, %v5778
      %5811 = vst.msk [vmem:[#allocation3 + $0xf8] sm:$0xff] %vm262, %v5779
      %v5812 = vld [vmem:[%s2324 + $0x1] sm:$0xff]
      %v5813 = vld [vmem:[%s2324 + $0x9] sm:$0xff]
      %v5814 = vld [vmem:[%s2324 + $0x19] sm:$0xff]
      %v5815 = vld [vmem:[%s2324 + $0x21] sm:$0xff]
      %v5816 = vld [vmem:[%s2324 + $0x31] sm:$0xff]
      %v5817 = vld [vmem:[%s2324 + $0x39] sm:$0xff]
      %v5818 = vld [vmem:[%s2324 + $0x49] sm:$0xff]
      %v5819 = vld [vmem:[%s2324 + $0x51] sm:$0xff]
      %v5820 = vld [vmem:[%s2324 + $0x61] sm:$0xff]
      %v5821 = vld [vmem:[%s2324 + $0x69] sm:$0xff]
      %v5822 = vld [vmem:[%s2324 + $0x79] sm:$0xff]
      %v5823 = vld [vmem:[%s2324 + $0x81] sm:$0xff]
      %v5824 = vld [vmem:[%s2324 + $0x91] sm:$0xff]
      %v5825 = vld [vmem:[%s2324 + $0x99] sm:$0xff]
      %v5826 = vld [vmem:[%s2324 + $0xa9] sm:$0xff]
      %v5827 = vld [vmem:[%s2324 + $0xb1] sm:$0xff]
      %v5828 = vld [vmem:[%s2324 + $0xc1] sm:$0xff]
      %v5829 = vld [vmem:[%s2324 + $0xc9] sm:$0xff]
      %v5830 = vld [vmem:[%s2324 + $0xd9] sm:$0xff]
      %v5831 = vld [vmem:[%s2324 + $0xe1] sm:$0xff]
      %v5832 = vld [vmem:[%s2324 + $0xf1] sm:$0xff]
      %v5833 = vld [vmem:[%s2324 + $0xf9] sm:$0xff]
      %v5834 = vld [vmem:[%s2324 + $0x109] sm:$0xff]
      %v5835 = vld [vmem:[%s2324 + $0x111] sm:$0xff]
      %v5836 = vld [vmem:[%s2324 + $0x121] sm:$0xff]
      %v5837 = vld [vmem:[%s2324 + $0x129] sm:$0xff]
      %v5838 = vld [vmem:[%s2324 + $0x139] sm:$0xff]
      %v5839 = vld [vmem:[%s2324 + $0x141] sm:$0xff]
      %v5840 = vld [vmem:[%s2324 + $0x151] sm:$0xff]
      %v5841 = vld [vmem:[%s2324 + $0x159] sm:$0xff]
      %v5842 = vld [vmem:[%s2324 + $0x169] sm:$0xff]
      %v5843 = vld [vmem:[%s2324 + $0x171] sm:$0xff]
      %s5844 = scalar_lea.vmem %s3, 28
      %v5845 = vld [vmem:[%s5844] sm:$0xf]
      %v5847 = vsel %vm262, %v5812, 0
      %v5850 = vsel %vm262, %v5813, 0
      %v5853 = vsel %vm262, %v5814, 0
      %v5856 = vsel %vm262, %v5815, 0
      %v5859 = vsel %vm262, %v5816, 0
      %v5862 = vsel %vm262, %v5817, 0
      %v5865 = vsel %vm262, %v5818, 0
      %v5868 = vsel %vm262, %v5819, 0
      %v5871 = vsel %vm262, %v5820, 0
      %v5874 = vsel %vm262, %v5821, 0
      %v5877 = vsel %vm262, %v5822, 0
      %v5880 = vsel %vm262, %v5823, 0
      %v5883 = vsel %vm262, %v5824, 0
      %v5886 = vsel %vm262, %v5825, 0
      %v5889 = vsel %vm262, %v5826, 0
      %v5892 = vsel %vm262, %v5827, 0
      %v5895 = vsel %vm262, %v5828, 0
      %v5898 = vsel %vm262, %v5829, 0
      %v5901 = vsel %vm262, %v5830, 0
      %v5904 = vsel %vm262, %v5831, 0
      %v5907 = vsel %vm262, %v5832, 0
      %v5910 = vsel %vm262, %v5833, 0
      %v5913 = vsel %vm262, %v5834, 0
      %v5916 = vsel %vm262, %v5835, 0
      %v5919 = vsel %vm262, %v5836, 0
      %v5922 = vsel %vm262, %v5837, 0
      %v5925 = vsel %vm262, %v5838, 0
      %v5928 = vsel %vm262, %v5839, 0
      %v5931 = vsel %vm262, %v5840, 0
      %v5934 = vsel %vm262, %v5841, 0
      %v5937 = vsel %vm262, %v5842, 0
      %v5940 = vsel %vm262, %v5843, 0
      %v5943 = vsel %vm465, %v5845, 0
      %5945 = vmatpush.msra.mxu0 0.0
      %5946 = vmatpush.msra.mxu0 0.0
      %5947 = vmatpush.msra.mxu0 0.0
      %5948 = vmatpush.msra.mxu0 0.0
      %5949 = vmatpush.msra.mxu0 0.0
      %5950 = vmatpush.msra.mxu0 0.0
      %5951 = vmatpush.msra.mxu0 0.0
      %5952 = vmatpush.msra.mxu0 0.0
      %5953 = vmatpush.msra.mxu0 0.0
      %5954 = vmatpush.msra.mxu0 0.0
      %5955 = vmatpush.msra.mxu0 0.0
      %5956 = vmatpush.msra.mxu0 0.0
      %5957 = vmatpush.msra.mxu0 0.0
      %5958 = vmatpush.msra.mxu0 0.0
      %5959 = vmatpush.msra.mxu0 0.0
      %5960 = vmatpush.msra.mxu0 %v5943
      %5961 = vmatmul.f32.gmra.mxu0 %v5847
      %v5962 = vpop.f32.mrf.mxu0
      %v5963 = vadd.f32 0.0, %v5962
      %5964 = vmatmul.f32.gmra.mxu0 %v5850
      %v5965 = vpop.f32.mrf.mxu0
      %v5966 = vadd.f32 0.0, %v5965
      %5967 = vmatmul.f32.gmra.mxu0 %v5853
      %v5968 = vpop.f32.mrf.mxu0
      %v5969 = vadd.f32 0.0, %v5968
      %5970 = vmatmul.f32.gmra.mxu0 %v5856
      %v5971 = vpop.f32.mrf.mxu0
      %v5972 = vadd.f32 0.0, %v5971
      %5973 = vmatmul.f32.gmra.mxu0 %v5859
      %v5974 = vpop.f32.mrf.mxu0
      %v5975 = vadd.f32 0.0, %v5974
      %5976 = vmatmul.f32.gmra.mxu0 %v5862
      %v5977 = vpop.f32.mrf.mxu0
      %v5978 = vadd.f32 0.0, %v5977
      %5979 = vmatmul.f32.gmra.mxu0 %v5865
      %v5980 = vpop.f32.mrf.mxu0
      %v5981 = vadd.f32 0.0, %v5980
      %5982 = vmatmul.f32.gmra.mxu0 %v5868
      %v5983 = vpop.f32.mrf.mxu0
      %v5984 = vadd.f32 0.0, %v5983
      %5985 = vmatmul.f32.gmra.mxu0 %v5871
      %v5986 = vpop.f32.mrf.mxu0
      %v5987 = vadd.f32 0.0, %v5986
      %5988 = vmatmul.f32.gmra.mxu0 %v5874
      %v5989 = vpop.f32.mrf.mxu0
      %v5990 = vadd.f32 0.0, %v5989
      %5991 = vmatmul.f32.gmra.mxu0 %v5877
      %v5992 = vpop.f32.mrf.mxu0
      %v5993 = vadd.f32 0.0, %v5992
      %5994 = vmatmul.f32.gmra.mxu0 %v5880
      %v5995 = vpop.f32.mrf.mxu0
      %v5996 = vadd.f32 0.0, %v5995
      %5997 = vmatmul.f32.gmra.mxu0 %v5883
      %v5998 = vpop.f32.mrf.mxu0
      %v5999 = vadd.f32 0.0, %v5998
      %6000 = vmatmul.f32.gmra.mxu0 %v5886
      %v6001 = vpop.f32.mrf.mxu0
      %v6002 = vadd.f32 0.0, %v6001
      %6003 = vmatmul.f32.gmra.mxu0 %v5889
      %v6004 = vpop.f32.mrf.mxu0
      %v6005 = vadd.f32 0.0, %v6004
      %6006 = vmatmul.f32.gmra.mxu0 %v5892
      %v6007 = vpop.f32.mrf.mxu0
      %v6008 = vadd.f32 0.0, %v6007
      %6009 = vmatmul.f32.gmra.mxu0 %v5895
      %v6010 = vpop.f32.mrf.mxu0
      %v6011 = vadd.f32 0.0, %v6010
      %6012 = vmatmul.f32.gmra.mxu0 %v5898
      %v6013 = vpop.f32.mrf.mxu0
      %v6014 = vadd.f32 0.0, %v6013
      %6015 = vmatmul.f32.gmra.mxu0 %v5901
      %v6016 = vpop.f32.mrf.mxu0
      %v6017 = vadd.f32 0.0, %v6016
      %6018 = vmatmul.f32.gmra.mxu0 %v5904
      %v6019 = vpop.f32.mrf.mxu0
      %v6020 = vadd.f32 0.0, %v6019
      %6021 = vmatmul.f32.gmra.mxu0 %v5907
      %v6022 = vpop.f32.mrf.mxu0
      %v6023 = vadd.f32 0.0, %v6022
      %6024 = vmatmul.f32.gmra.mxu0 %v5910
      %v6025 = vpop.f32.mrf.mxu0
      %v6026 = vadd.f32 0.0, %v6025
      %6027 = vmatmul.f32.gmra.mxu0 %v5913
      %v6028 = vpop.f32.mrf.mxu0
      %v6029 = vadd.f32 0.0, %v6028
      %6030 = vmatmul.f32.gmra.mxu0 %v5916
      %v6031 = vpop.f32.mrf.mxu0
      %v6032 = vadd.f32 0.0, %v6031
      %6033 = vmatmul.f32.gmra.mxu0 %v5919
      %v6034 = vpop.f32.mrf.mxu0
      %v6035 = vadd.f32 0.0, %v6034
      %6036 = vmatmul.f32.gmra.mxu0 %v5922
      %v6037 = vpop.f32.mrf.mxu0
      %v6038 = vadd.f32 0.0, %v6037
      %6039 = vmatmul.f32.gmra.mxu0 %v5925
      %v6040 = vpop.f32.mrf.mxu0
      %v6041 = vadd.f32 0.0, %v6040
      %6042 = vmatmul.f32.gmra.mxu0 %v5928
      %v6043 = vpop.f32.mrf.mxu0
      %v6044 = vadd.f32 0.0, %v6043
      %6045 = vmatmul.f32.gmra.mxu0 %v5931
      %v6046 = vpop.f32.mrf.mxu0
      %v6047 = vadd.f32 0.0, %v6046
      %6048 = vmatmul.f32.gmra.mxu0 %v5934
      %v6049 = vpop.f32.mrf.mxu0
      %v6050 = vadd.f32 0.0, %v6049
      %6051 = vmatmul.f32.gmra.mxu0 %v5937
      %v6052 = vpop.f32.mrf.mxu0
      %v6053 = vadd.f32 0.0, %v6052
      %6054 = vmatmul.f32.gmra.mxu0 %v5940
      %v6055 = vpop.f32.mrf.mxu0
      %v6056 = vadd.f32 0.0, %v6055
      %6057 = vdwg.mxu0
      %v6058 = vld [vmem:[#allocation3] sm:$0xff]
      %v6059 = vld [vmem:[#allocation3 + $0x8] sm:$0xff]
      %v6060 = vld [vmem:[#allocation3 + $0x10] sm:$0xff]
      %v6061 = vld [vmem:[#allocation3 + $0x18] sm:$0xff]
      %v6062 = vld [vmem:[#allocation3 + $0x20] sm:$0xff]
      %v6063 = vld [vmem:[#allocation3 + $0x28] sm:$0xff]
      %v6064 = vld [vmem:[#allocation3 + $0x30] sm:$0xff]
      %v6065 = vld [vmem:[#allocation3 + $0x38] sm:$0xff]
      %v6066 = vld [vmem:[#allocation3 + $0x40] sm:$0xff]
      %v6067 = vld [vmem:[#allocation3 + $0x48] sm:$0xff]
      %v6068 = vld [vmem:[#allocation3 + $0x50] sm:$0xff]
      %v6069 = vld [vmem:[#allocation3 + $0x58] sm:$0xff]
      %v6070 = vld [vmem:[#allocation3 + $0x60] sm:$0xff]
      %v6071 = vld [vmem:[#allocation3 + $0x68] sm:$0xff]
      %v6072 = vld [vmem:[#allocation3 + $0x70] sm:$0xff]
      %v6073 = vld [vmem:[#allocation3 + $0x78] sm:$0xff]
      %v6074 = vld [vmem:[#allocation3 + $0x80] sm:$0xff]
      %v6075 = vld [vmem:[#allocation3 + $0x88] sm:$0xff]
      %v6076 = vld [vmem:[#allocation3 + $0x90] sm:$0xff]
      %v6077 = vld [vmem:[#allocation3 + $0x98] sm:$0xff]
      %v6078 = vld [vmem:[#allocation3 + $0xa0] sm:$0xff]
      %v6079 = vld [vmem:[#allocation3 + $0xa8] sm:$0xff]
      %v6080 = vld [vmem:[#allocation3 + $0xb0] sm:$0xff]
      %v6081 = vld [vmem:[#allocation3 + $0xb8] sm:$0xff]
      %v6082 = vld [vmem:[#allocation3 + $0xc0] sm:$0xff]
      %v6083 = vld [vmem:[#allocation3 + $0xc8] sm:$0xff]
      %v6084 = vld [vmem:[#allocation3 + $0xd0] sm:$0xff]
      %v6085 = vld [vmem:[#allocation3 + $0xd8] sm:$0xff]
      %v6086 = vld [vmem:[#allocation3 + $0xe0] sm:$0xff]
      %v6087 = vld [vmem:[#allocation3 + $0xe8] sm:$0xff]
      %v6088 = vld [vmem:[#allocation3 + $0xf0] sm:$0xff]
      %v6089 = vld [vmem:[#allocation3 + $0xf8] sm:$0xff]
      %v6090 = vadd.f32 %v6058, %v5963
      %v6091 = vadd.f32 %v6059, %v5966
      %v6092 = vadd.f32 %v6060, %v5969
      %v6093 = vadd.f32 %v6061, %v5972
      %v6094 = vadd.f32 %v6062, %v5975
      %v6095 = vadd.f32 %v6063, %v5978
      %v6096 = vadd.f32 %v6064, %v5981
      %v6097 = vadd.f32 %v6065, %v5984
      %v6098 = vadd.f32 %v6066, %v5987
      %v6099 = vadd.f32 %v6067, %v5990
      %v6100 = vadd.f32 %v6068, %v5993
      %v6101 = vadd.f32 %v6069, %v5996
      %v6102 = vadd.f32 %v6070, %v5999
      %v6103 = vadd.f32 %v6071, %v6002
      %v6104 = vadd.f32 %v6072, %v6005
      %v6105 = vadd.f32 %v6073, %v6008
      %v6106 = vadd.f32 %v6074, %v6011
      %v6107 = vadd.f32 %v6075, %v6014
      %v6108 = vadd.f32 %v6076, %v6017
      %v6109 = vadd.f32 %v6077, %v6020
      %v6110 = vadd.f32 %v6078, %v6023
      %v6111 = vadd.f32 %v6079, %v6026
      %v6112 = vadd.f32 %v6080, %v6029
      %v6113 = vadd.f32 %v6081, %v6032
      %v6114 = vadd.f32 %v6082, %v6035
      %v6115 = vadd.f32 %v6083, %v6038
      %v6116 = vadd.f32 %v6084, %v6041
      %v6117 = vadd.f32 %v6085, %v6044
      %v6118 = vadd.f32 %v6086, %v6047
      %v6119 = vadd.f32 %v6087, %v6050
      %v6120 = vadd.f32 %v6088, %v6053
      %v6121 = vadd.f32 %v6089, %v6056
      %6122 = vst.msk [vmem:[#allocation3] sm:$0xff] %vm262, %v6090
      %6123 = vst.msk [vmem:[#allocation3 + $0x8] sm:$0xff] %vm262, %v6091
      %6124 = vst.msk [vmem:[#allocation3 + $0x10] sm:$0xff] %vm262, %v6092
      %6125 = vst.msk [vmem:[#allocation3 + $0x18] sm:$0xff] %vm262, %v6093
      %6126 = vst.msk [vmem:[#allocation3 + $0x20] sm:$0xff] %vm262, %v6094
      %6127 = vst.msk [vmem:[#allocation3 + $0x28] sm:$0xff] %vm262, %v6095
      %6128 = vst.msk [vmem:[#allocation3 + $0x30] sm:$0xff] %vm262, %v6096
      %6129 = vst.msk [vmem:[#allocation3 + $0x38] sm:$0xff] %vm262, %v6097
      %6130 = vst.msk [vmem:[#allocation3 + $0x40] sm:$0xff] %vm262, %v6098
      %6131 = vst.msk [vmem:[#allocation3 + $0x48] sm:$0xff] %vm262, %v6099
      %6132 = vst.msk [vmem:[#allocation3 + $0x50] sm:$0xff] %vm262, %v6100
      %6133 = vst.msk [vmem:[#allocation3 + $0x58] sm:$0xff] %vm262, %v6101
      %6134 = vst.msk [vmem:[#allocation3 + $0x60] sm:$0xff] %vm262, %v6102
      %6135 = vst.msk [vmem:[#allocation3 + $0x68] sm:$0xff] %vm262, %v6103
      %6136 = vst.msk [vmem:[#allocation3 + $0x70] sm:$0xff] %vm262, %v6104
      %6137 = vst.msk [vmem:[#allocation3 + $0x78] sm:$0xff] %vm262, %v6105
      %6138 = vst.msk [vmem:[#allocation3 + $0x80] sm:$0xff] %vm262, %v6106
      %6139 = vst.msk [vmem:[#allocation3 + $0x88] sm:$0xff] %vm262, %v6107
      %6140 = vst.msk [vmem:[#allocation3 + $0x90] sm:$0xff] %vm262, %v6108
      %6141 = vst.msk [vmem:[#allocation3 + $0x98] sm:$0xff] %vm262, %v6109
      %6142 = vst.msk [vmem:[#allocation3 + $0xa0] sm:$0xff] %vm262, %v6110
      %6143 = vst.msk [vmem:[#allocation3 + $0xa8] sm:$0xff] %vm262, %v6111
      %6144 = vst.msk [vmem:[#allocation3 + $0xb0] sm:$0xff] %vm262, %v6112
      %6145 = vst.msk [vmem:[#allocation3 + $0xb8] sm:$0xff] %vm262, %v6113
      %6146 = vst.msk [vmem:[#allocation3 + $0xc0] sm:$0xff] %vm262, %v6114
      %6147 = vst.msk [vmem:[#allocation3 + $0xc8] sm:$0xff] %vm262, %v6115
      %6148 = vst.msk [vmem:[#allocation3 + $0xd0] sm:$0xff] %vm262, %v6116
      %6149 = vst.msk [vmem:[#allocation3 + $0xd8] sm:$0xff] %vm262, %v6117
      %6150 = vst.msk [vmem:[#allocation3 + $0xe0] sm:$0xff] %vm262, %v6118
      %6151 = vst.msk [vmem:[#allocation3 + $0xe8] sm:$0xff] %vm262, %v6119
      %6152 = vst.msk [vmem:[#allocation3 + $0xf0] sm:$0xff] %vm262, %v6120
      %6153 = vst.msk [vmem:[#allocation3 + $0xf8] sm:$0xff] %vm262, %v6121
      %v6154 = vld [vmem:[%s2324 + $0x2] sm:$0xff]
      %v6155 = vld [vmem:[%s2324 + $0xa] sm:$0xff]
      %v6156 = vld [vmem:[%s2324 + $0x1a] sm:$0xff]
      %v6157 = vld [vmem:[%s2324 + $0x22] sm:$0xff]
      %v6158 = vld [vmem:[%s2324 + $0x32] sm:$0xff]
      %v6159 = vld [vmem:[%s2324 + $0x3a] sm:$0xff]
      %v6160 = vld [vmem:[%s2324 + $0x4a] sm:$0xff]
      %v6161 = vld [vmem:[%s2324 + $0x52] sm:$0xff]
      %v6162 = vld [vmem:[%s2324 + $0x62] sm:$0xff]
      %v6163 = vld [vmem:[%s2324 + $0x6a] sm:$0xff]
      %v6164 = vld [vmem:[%s2324 + $0x7a] sm:$0xff]
      %v6165 = vld [vmem:[%s2324 + $0x82] sm:$0xff]
      %v6166 = vld [vmem:[%s2324 + $0x92] sm:$0xff]
      %v6167 = vld [vmem:[%s2324 + $0x9a] sm:$0xff]
      %v6168 = vld [vmem:[%s2324 + $0xaa] sm:$0xff]
      %v6169 = vld [vmem:[%s2324 + $0xb2] sm:$0xff]
      %v6170 = vld [vmem:[%s2324 + $0xc2] sm:$0xff]
      %v6171 = vld [vmem:[%s2324 + $0xca] sm:$0xff]
      %v6172 = vld [vmem:[%s2324 + $0xda] sm:$0xff]
      %v6173 = vld [vmem:[%s2324 + $0xe2] sm:$0xff]
      %v6174 = vld [vmem:[%s2324 + $0xf2] sm:$0xff]
      %v6175 = vld [vmem:[%s2324 + $0xfa] sm:$0xff]
      %v6176 = vld [vmem:[%s2324 + $0x10a] sm:$0xff]
      %v6177 = vld [vmem:[%s2324 + $0x112] sm:$0xff]
      %v6178 = vld [vmem:[%s2324 + $0x122] sm:$0xff]
      %v6179 = vld [vmem:[%s2324 + $0x12a] sm:$0xff]
      %v6180 = vld [vmem:[%s2324 + $0x13a] sm:$0xff]
      %v6181 = vld [vmem:[%s2324 + $0x142] sm:$0xff]
      %v6182 = vld [vmem:[%s2324 + $0x152] sm:$0xff]
      %v6183 = vld [vmem:[%s2324 + $0x15a] sm:$0xff]
      %v6184 = vld [vmem:[%s2324 + $0x16a] sm:$0xff]
      %v6185 = vld [vmem:[%s2324 + $0x172] sm:$0xff]
      %s6186 = scalar_lea.vmem %s3, 32
      %v6187 = vld [vmem:[%s6186] sm:$0xf]
      %v6189 = vsel %vm262, %v6154, 0
      %v6192 = vsel %vm262, %v6155, 0
      %v6195 = vsel %vm262, %v6156, 0
      %v6198 = vsel %vm262, %v6157, 0
      %v6201 = vsel %vm262, %v6158, 0
      %v6204 = vsel %vm262, %v6159, 0
      %v6207 = vsel %vm262, %v6160, 0
      %v6210 = vsel %vm262, %v6161, 0
      %v6213 = vsel %vm262, %v6162, 0
      %v6216 = vsel %vm262, %v6163, 0
      %v6219 = vsel %vm262, %v6164, 0
      %v6222 = vsel %vm262, %v6165, 0
      %v6225 = vsel %vm262, %v6166, 0
      %v6228 = vsel %vm262, %v6167, 0
      %v6231 = vsel %vm262, %v6168, 0
      %v6234 = vsel %vm262, %v6169, 0
      %v6237 = vsel %vm262, %v6170, 0
      %v6240 = vsel %vm262, %v6171, 0
      %v6243 = vsel %vm262, %v6172, 0
      %v6246 = vsel %vm262, %v6173, 0
      %v6249 = vsel %vm262, %v6174, 0
      %v6252 = vsel %vm262, %v6175, 0
      %v6255 = vsel %vm262, %v6176, 0
      %v6258 = vsel %vm262, %v6177, 0
      %v6261 = vsel %vm262, %v6178, 0
      %v6264 = vsel %vm262, %v6179, 0
      %v6267 = vsel %vm262, %v6180, 0
      %v6270 = vsel %vm262, %v6181, 0
      %v6273 = vsel %vm262, %v6182, 0
      %v6276 = vsel %vm262, %v6183, 0
      %v6279 = vsel %vm262, %v6184, 0
      %v6282 = vsel %vm262, %v6185, 0
      %v6285 = vsel %vm465, %v6187, 0
      %6287 = vmatpush.msra.mxu0 0.0
      %6288 = vmatpush.msra.mxu0 0.0
      %6289 = vmatpush.msra.mxu0 0.0
      %6290 = vmatpush.msra.mxu0 0.0
      %6291 = vmatpush.msra.mxu0 0.0
      %6292 = vmatpush.msra.mxu0 0.0
      %6293 = vmatpush.msra.mxu0 0.0
      %6294 = vmatpush.msra.mxu0 0.0
      %6295 = vmatpush.msra.mxu0 0.0
      %6296 = vmatpush.msra.mxu0 0.0
      %6297 = vmatpush.msra.mxu0 0.0
      %6298 = vmatpush.msra.mxu0 0.0
      %6299 = vmatpush.msra.mxu0 0.0
      %6300 = vmatpush.msra.mxu0 0.0
      %6301 = vmatpush.msra.mxu0 0.0
      %6302 = vmatpush.msra.mxu0 %v6285
      %6303 = vmatmul.f32.gmra.mxu0 %v6189
      %v6304 = vpop.f32.mrf.mxu0
      %v6305 = vadd.f32 0.0, %v6304
      %6306 = vmatmul.f32.gmra.mxu0 %v6192
      %v6307 = vpop.f32.mrf.mxu0
      %v6308 = vadd.f32 0.0, %v6307
      %6309 = vmatmul.f32.gmra.mxu0 %v6195
      %v6310 = vpop.f32.mrf.mxu0
      %v6311 = vadd.f32 0.0, %v6310
      %6312 = vmatmul.f32.gmra.mxu0 %v6198
      %v6313 = vpop.f32.mrf.mxu0
      %v6314 = vadd.f32 0.0, %v6313
      %6315 = vmatmul.f32.gmra.mxu0 %v6201
      %v6316 = vpop.f32.mrf.mxu0
      %v6317 = vadd.f32 0.0, %v6316
      %6318 = vmatmul.f32.gmra.mxu0 %v6204
      %v6319 = vpop.f32.mrf.mxu0
      %v6320 = vadd.f32 0.0, %v6319
      %6321 = vmatmul.f32.gmra.mxu0 %v6207
      %v6322 = vpop.f32.mrf.mxu0
      %v6323 = vadd.f32 0.0, %v6322
      %6324 = vmatmul.f32.gmra.mxu0 %v6210
      %v6325 = vpop.f32.mrf.mxu0
      %v6326 = vadd.f32 0.0, %v6325
      %6327 = vmatmul.f32.gmra.mxu0 %v6213
      %v6328 = vpop.f32.mrf.mxu0
      %v6329 = vadd.f32 0.0, %v6328
      %6330 = vmatmul.f32.gmra.mxu0 %v6216
      %v6331 = vpop.f32.mrf.mxu0
      %v6332 = vadd.f32 0.0, %v6331
      %6333 = vmatmul.f32.gmra.mxu0 %v6219
      %v6334 = vpop.f32.mrf.mxu0
      %v6335 = vadd.f32 0.0, %v6334
      %6336 = vmatmul.f32.gmra.mxu0 %v6222
      %v6337 = vpop.f32.mrf.mxu0
      %v6338 = vadd.f32 0.0, %v6337
      %6339 = vmatmul.f32.gmra.mxu0 %v6225
      %v6340 = vpop.f32.mrf.mxu0
      %v6341 = vadd.f32 0.0, %v6340
      %6342 = vmatmul.f32.gmra.mxu0 %v6228
      %v6343 = vpop.f32.mrf.mxu0
      %v6344 = vadd.f32 0.0, %v6343
      %6345 = vmatmul.f32.gmra.mxu0 %v6231
      %v6346 = vpop.f32.mrf.mxu0
      %v6347 = vadd.f32 0.0, %v6346
      %6348 = vmatmul.f32.gmra.mxu0 %v6234
      %v6349 = vpop.f32.mrf.mxu0
      %v6350 = vadd.f32 0.0, %v6349
      %6351 = vmatmul.f32.gmra.mxu0 %v6237
      %v6352 = vpop.f32.mrf.mxu0
      %v6353 = vadd.f32 0.0, %v6352
      %6354 = vmatmul.f32.gmra.mxu0 %v6240
      %v6355 = vpop.f32.mrf.mxu0
      %v6356 = vadd.f32 0.0, %v6355
      %6357 = vmatmul.f32.gmra.mxu0 %v6243
      %v6358 = vpop.f32.mrf.mxu0
      %v6359 = vadd.f32 0.0, %v6358
      %6360 = vmatmul.f32.gmra.mxu0 %v6246
      %v6361 = vpop.f32.mrf.mxu0
      %v6362 = vadd.f32 0.0, %v6361
      %6363 = vmatmul.f32.gmra.mxu0 %v6249
      %v6364 = vpop.f32.mrf.mxu0
      %v6365 = vadd.f32 0.0, %v6364
      %6366 = vmatmul.f32.gmra.mxu0 %v6252
      %v6367 = vpop.f32.mrf.mxu0
      %v6368 = vadd.f32 0.0, %v6367
      %6369 = vmatmul.f32.gmra.mxu0 %v6255
      %v6370 = vpop.f32.mrf.mxu0
      %v6371 = vadd.f32 0.0, %v6370
      %6372 = vmatmul.f32.gmra.mxu0 %v6258
      %v6373 = vpop.f32.mrf.mxu0
      %v6374 = vadd.f32 0.0, %v6373
      %6375 = vmatmul.f32.gmra.mxu0 %v6261
      %v6376 = vpop.f32.mrf.mxu0
      %v6377 = vadd.f32 0.0, %v6376
      %6378 = vmatmul.f32.gmra.mxu0 %v6264
      %v6379 = vpop.f32.mrf.mxu0
      %v6380 = vadd.f32 0.0, %v6379
      %6381 = vmatmul.f32.gmra.mxu0 %v6267
      %v6382 = vpop.f32.mrf.mxu0
      %v6383 = vadd.f32 0.0, %v6382
      %6384 = vmatmul.f32.gmra.mxu0 %v6270
      %v6385 = vpop.f32.mrf.mxu0
      %v6386 = vadd.f32 0.0, %v6385
      %6387 = vmatmul.f32.gmra.mxu0 %v6273
      %v6388 = vpop.f32.mrf.mxu0
      %v6389 = vadd.f32 0.0, %v6388
      %6390 = vmatmul.f32.gmra.mxu0 %v6276
      %v6391 = vpop.f32.mrf.mxu0
      %v6392 = vadd.f32 0.0, %v6391
      %6393 = vmatmul.f32.gmra.mxu0 %v6279
      %v6394 = vpop.f32.mrf.mxu0
      %v6395 = vadd.f32 0.0, %v6394
      %6396 = vmatmul.f32.gmra.mxu0 %v6282
      %v6397 = vpop.f32.mrf.mxu0
      %v6398 = vadd.f32 0.0, %v6397
      %6399 = vdwg.mxu0
      %v6400 = vld [vmem:[#allocation3] sm:$0xff]
      %v6401 = vld [vmem:[#allocation3 + $0x8] sm:$0xff]
      %v6402 = vld [vmem:[#allocation3 + $0x10] sm:$0xff]
      %v6403 = vld [vmem:[#allocation3 + $0x18] sm:$0xff]
      %v6404 = vld [vmem:[#allocation3 + $0x20] sm:$0xff]
      %v6405 = vld [vmem:[#allocation3 + $0x28] sm:$0xff]
      %v6406 = vld [vmem:[#allocation3 + $0x30] sm:$0xff]
      %v6407 = vld [vmem:[#allocation3 + $0x38] sm:$0xff]
      %v6408 = vld [vmem:[#allocation3 + $0x40] sm:$0xff]
      %v6409 = vld [vmem:[#allocation3 + $0x48] sm:$0xff]
      %v6410 = vld [vmem:[#allocation3 + $0x50] sm:$0xff]
      %v6411 = vld [vmem:[#allocation3 + $0x58] sm:$0xff]
      %v6412 = vld [vmem:[#allocation3 + $0x60] sm:$0xff]
      %v6413 = vld [vmem:[#allocation3 + $0x68] sm:$0xff]
      %v6414 = vld [vmem:[#allocation3 + $0x70] sm:$0xff]
      %v6415 = vld [vmem:[#allocation3 + $0x78] sm:$0xff]
      %v6416 = vld [vmem:[#allocation3 + $0x80] sm:$0xff]
      %v6417 = vld [vmem:[#allocation3 + $0x88] sm:$0xff]
      %v6418 = vld [vmem:[#allocation3 + $0x90] sm:$0xff]
      %v6419 = vld [vmem:[#allocation3 + $0x98] sm:$0xff]
      %v6420 = vld [vmem:[#allocation3 + $0xa0] sm:$0xff]
      %v6421 = vld [vmem:[#allocation3 + $0xa8] sm:$0xff]
      %v6422 = vld [vmem:[#allocation3 + $0xb0] sm:$0xff]
      %v6423 = vld [vmem:[#allocation3 + $0xb8] sm:$0xff]
      %v6424 = vld [vmem:[#allocation3 + $0xc0] sm:$0xff]
      %v6425 = vld [vmem:[#allocation3 + $0xc8] sm:$0xff]
      %v6426 = vld [vmem:[#allocation3 + $0xd0] sm:$0xff]
      %v6427 = vld [vmem:[#allocation3 + $0xd8] sm:$0xff]
      %v6428 = vld [vmem:[#allocation3 + $0xe0] sm:$0xff]
      %v6429 = vld [vmem:[#allocation3 + $0xe8] sm:$0xff]
      %v6430 = vld [vmem:[#allocation3 + $0xf0] sm:$0xff]
      %v6431 = vld [vmem:[#allocation3 + $0xf8] sm:$0xff]
      %v6432 = vadd.f32 %v6400, %v6305
      %v6433 = vadd.f32 %v6401, %v6308
      %v6434 = vadd.f32 %v6402, %v6311
      %v6435 = vadd.f32 %v6403, %v6314
      %v6436 = vadd.f32 %v6404, %v6317
      %v6437 = vadd.f32 %v6405, %v6320
      %v6438 = vadd.f32 %v6406, %v6323
      %v6439 = vadd.f32 %v6407, %v6326
      %v6440 = vadd.f32 %v6408, %v6329
      %v6441 = vadd.f32 %v6409, %v6332
      %v6442 = vadd.f32 %v6410, %v6335
      %v6443 = vadd.f32 %v6411, %v6338
      %v6444 = vadd.f32 %v6412, %v6341
      %v6445 = vadd.f32 %v6413, %v6344
      %v6446 = vadd.f32 %v6414, %v6347
      %v6447 = vadd.f32 %v6415, %v6350
      %v6448 = vadd.f32 %v6416, %v6353
      %v6449 = vadd.f32 %v6417, %v6356
      %v6450 = vadd.f32 %v6418, %v6359
      %v6451 = vadd.f32 %v6419, %v6362
      %v6452 = vadd.f32 %v6420, %v6365
      %v6453 = vadd.f32 %v6421, %v6368
      %v6454 = vadd.f32 %v6422, %v6371
      %v6455 = vadd.f32 %v6423, %v6374
      %v6456 = vadd.f32 %v6424, %v6377
      %v6457 = vadd.f32 %v6425, %v6380
      %v6458 = vadd.f32 %v6426, %v6383
      %v6459 = vadd.f32 %v6427, %v6386
      %v6460 = vadd.f32 %v6428, %v6389
      %v6461 = vadd.f32 %v6429, %v6392
      %v6462 = vadd.f32 %v6430, %v6395
      %v6463 = vadd.f32 %v6431, %v6398
      %6464 = vst.msk [vmem:[#allocation3] sm:$0xff] %vm262, %v6432
      %6465 = vst.msk [vmem:[#allocation3 + $0x8] sm:$0xff] %vm262, %v6433
      %6466 = vst.msk [vmem:[#allocation3 + $0x10] sm:$0xff] %vm262, %v6434
      %6467 = vst.msk [vmem:[#allocation3 + $0x18] sm:$0xff] %vm262, %v6435
      %6468 = vst.msk [vmem:[#allocation3 + $0x20] sm:$0xff] %vm262, %v6436
      %6469 = vst.msk [vmem:[#allocation3 + $0x28] sm:$0xff] %vm262, %v6437
      %6470 = vst.msk [vmem:[#allocation3 + $0x30] sm:$0xff] %vm262, %v6438
      %6471 = vst.msk [vmem:[#allocation3 + $0x38] sm:$0xff] %vm262, %v6439
      %6472 = vst.msk [vmem:[#allocation3 + $0x40] sm:$0xff] %vm262, %v6440
      %6473 = vst.msk [vmem:[#allocation3 + $0x48] sm:$0xff] %vm262, %v6441
      %6474 = vst.msk [vmem:[#allocation3 + $0x50] sm:$0xff] %vm262, %v6442
      %6475 = vst.msk [vmem:[#allocation3 + $0x58] sm:$0xff] %vm262, %v6443
      %6476 = vst.msk [vmem:[#allocation3 + $0x60] sm:$0xff] %vm262, %v6444
      %6477 = vst.msk [vmem:[#allocation3 + $0x68] sm:$0xff] %vm262, %v6445
      %6478 = vst.msk [vmem:[#allocation3 + $0x70] sm:$0xff] %vm262, %v6446
      %6479 = vst.msk [vmem:[#allocation3 + $0x78] sm:$0xff] %vm262, %v6447
      %6480 = vst.msk [vmem:[#allocation3 + $0x80] sm:$0xff] %vm262, %v6448
      %6481 = vst.msk [vmem:[#allocation3 + $0x88] sm:$0xff] %vm262, %v6449
      %6482 = vst.msk [vmem:[#allocation3 + $0x90] sm:$0xff] %vm262, %v6450
      %6483 = vst.msk [vmem:[#allocation3 + $0x98] sm:$0xff] %vm262, %v6451
      %6484 = vst.msk [vmem:[#allocation3 + $0xa0] sm:$0xff] %vm262, %v6452
      %6485 = vst.msk [vmem:[#allocation3 + $0xa8] sm:$0xff] %vm262, %v6453
      %6486 = vst.msk [vmem:[#allocation3 + $0xb0] sm:$0xff] %vm262, %v6454
      %6487 = vst.msk [vmem:[#allocation3 + $0xb8] sm:$0xff] %vm262, %v6455
      %6488 = vst.msk [vmem:[#allocation3 + $0xc0] sm:$0xff] %vm262, %v6456
      %6489 = vst.msk [vmem:[#allocation3 + $0xc8] sm:$0xff] %vm262, %v6457
      %6490 = vst.msk [vmem:[#allocation3 + $0xd0] sm:$0xff] %vm262, %v6458
      %6491 = vst.msk [vmem:[#allocation3 + $0xd8] sm:$0xff] %vm262, %v6459
      %6492 = vst.msk [vmem:[#allocation3 + $0xe0] sm:$0xff] %vm262, %v6460
      %6493 = vst.msk [vmem:[#allocation3 + $0xe8] sm:$0xff] %vm262, %v6461
      %6494 = vst.msk [vmem:[#allocation3 + $0xf0] sm:$0xff] %vm262, %v6462
      %6495 = vst.msk [vmem:[#allocation3 + $0xf8] sm:$0xff] %vm262, %v6463
      %v6496 = vld [vmem:[#allocation3] sm:$0xff]
      %v6497 = vld [vmem:[#allocation3 + $0x8] sm:$0xff]
      %v6498 = vld [vmem:[#allocation3 + $0x10] sm:$0xff]
      %v6499 = vld [vmem:[#allocation3 + $0x18] sm:$0xff]
      %v6500 = vld [vmem:[#allocation3 + $0x20] sm:$0xff]
      %v6501 = vld [vmem:[#allocation3 + $0x28] sm:$0xff]
      %v6502 = vld [vmem:[#allocation3 + $0x30] sm:$0xff]
      %v6503 = vld [vmem:[#allocation3 + $0x38] sm:$0xff]
      %v6504 = vld [vmem:[#allocation3 + $0x40] sm:$0xff]
      %v6505 = vld [vmem:[#allocation3 + $0x48] sm:$0xff]
      %v6506 = vld [vmem:[#allocation3 + $0x50] sm:$0xff]
      %v6507 = vld [vmem:[#allocation3 + $0x58] sm:$0xff]
      %v6508 = vld [vmem:[#allocation3 + $0x60] sm:$0xff]
      %v6509 = vld [vmem:[#allocation3 + $0x68] sm:$0xff]
      %v6510 = vld [vmem:[#allocation3 + $0x70] sm:$0xff]
      %v6511 = vld [vmem:[#allocation3 + $0x78] sm:$0xff]
      %v6512 = vld [vmem:[#allocation3 + $0x80] sm:$0xff]
      %v6513 = vld [vmem:[#allocation3 + $0x88] sm:$0xff]
      %v6514 = vld [vmem:[#allocation3 + $0x90] sm:$0xff]
      %v6515 = vld [vmem:[#allocation3 + $0x98] sm:$0xff]
      %v6516 = vld [vmem:[#allocation3 + $0xa0] sm:$0xff]
      %v6517 = vld [vmem:[#allocation3 + $0xa8] sm:$0xff]
      %v6518 = vld [vmem:[#allocation3 + $0xb0] sm:$0xff]
      %v6519 = vld [vmem:[#allocation3 + $0xb8] sm:$0xff]
      %v6520 = vld [vmem:[#allocation3 + $0xc0] sm:$0xff]
      %v6521 = vld [vmem:[#allocation3 + $0xc8] sm:$0xff]
      %v6522 = vld [vmem:[#allocation3 + $0xd0] sm:$0xff]
      %v6523 = vld [vmem:[#allocation3 + $0xd8] sm:$0xff]
      %v6524 = vld [vmem:[#allocation3 + $0xe0] sm:$0xff]
      %v6525 = vld [vmem:[#allocation3 + $0xe8] sm:$0xff]
      %v6526 = vld [vmem:[#allocation3 + $0xf0] sm:$0xff]
      %v6527 = vld [vmem:[#allocation3 + $0xf8] sm:$0xff]
      %v6528 = vld [vmem:[%s4] sm:$0x1]
      %v6530 = vperm.slane %v6528, 0
      %v6532 = vadd.f32 %v6496, %v6530
      %v6533 = vadd.f32 %v6497, %v6530
      %v6534 = vadd.f32 %v6498, %v6530
      %v6535 = vadd.f32 %v6499, %v6530
      %v6536 = vadd.f32 %v6500, %v6530
      %v6537 = vadd.f32 %v6501, %v6530
      %v6538 = vadd.f32 %v6502, %v6530
      %v6539 = vadd.f32 %v6503, %v6530
      %v6540 = vadd.f32 %v6504, %v6530
      %v6541 = vadd.f32 %v6505, %v6530
      %v6542 = vadd.f32 %v6506, %v6530
      %v6543 = vadd.f32 %v6507, %v6530
      %v6544 = vadd.f32 %v6508, %v6530
      %v6545 = vadd.f32 %v6509, %v6530
      %v6546 = vadd.f32 %v6510, %v6530
      %v6547 = vadd.f32 %v6511, %v6530
      %v6548 = vadd.f32 %v6512, %v6530
      %v6549 = vadd.f32 %v6513, %v6530
      %v6550 = vadd.f32 %v6514, %v6530
      %v6551 = vadd.f32 %v6515, %v6530
      %v6552 = vadd.f32 %v6516, %v6530
      %v6553 = vadd.f32 %v6517, %v6530
      %v6554 = vadd.f32 %v6518, %v6530
      %v6555 = vadd.f32 %v6519, %v6530
      %v6556 = vadd.f32 %v6520, %v6530
      %v6557 = vadd.f32 %v6521, %v6530
      %v6558 = vadd.f32 %v6522, %v6530
      %v6559 = vadd.f32 %v6523, %v6530
      %v6560 = vadd.f32 %v6524, %v6530
      %v6561 = vadd.f32 %v6525, %v6530
      %v6562 = vadd.f32 %v6526, %v6530
      %v6563 = vadd.f32 %v6527, %v6530
      %v6564 = vld [vmem:[%s219] sm:$0xff]
      %v6565 = vld [vmem:[%s219 + $0x8] sm:$0xff]
      %v6566 = vld [vmem:[%s219 + $0x10] sm:$0xff]
      %v6567 = vld [vmem:[%s219 + $0x18] sm:$0xff]
      %v6568 = vld [vmem:[%s219 + $0x20] sm:$0xff]
      %v6569 = vld [vmem:[%s219 + $0x28] sm:$0xff]
      %v6570 = vld [vmem:[%s219 + $0x30] sm:$0xff]
      %v6571 = vld [vmem:[%s219 + $0x38] sm:$0xff]
      %v6572 = vld [vmem:[%s219 + $0x40] sm:$0xff]
      %v6573 = vld [vmem:[%s219 + $0x48] sm:$0xff]
      %v6574 = vld [vmem:[%s219 + $0x50] sm:$0xff]
      %v6575 = vld [vmem:[%s219 + $0x58] sm:$0xff]
      %v6576 = vld [vmem:[%s219 + $0x60] sm:$0xff]
      %v6577 = vld [vmem:[%s219 + $0x68] sm:$0xff]
      %v6578 = vld [vmem:[%s219 + $0x70] sm:$0xff]
      %v6579 = vld [vmem:[%s219 + $0x78] sm:$0xff]
      %v6580 = vld [vmem:[%s219 + $0x80] sm:$0xff]
      %v6581 = vld [vmem:[%s219 + $0x88] sm:$0xff]
      %v6582 = vld [vmem:[%s219 + $0x90] sm:$0xff]
      %v6583 = vld [vmem:[%s219 + $0x98] sm:$0xff]
      %v6584 = vld [vmem:[%s219 + $0xa0] sm:$0xff]
      %v6585 = vld [vmem:[%s219 + $0xa8] sm:$0xff]
      %v6586 = vld [vmem:[%s219 + $0xb0] sm:$0xff]
      %v6587 = vld [vmem:[%s219 + $0xb8] sm:$0xff]
      %v6588 = vld [vmem:[%s219 + $0xc0] sm:$0xff]
      %v6589 = vld [vmem:[%s219 + $0xc8] sm:$0xff]
      %v6590 = vld [vmem:[%s219 + $0xd0] sm:$0xff]
      %v6591 = vld [vmem:[%s219 + $0xd8] sm:$0xff]
      %v6592 = vld [vmem:[%s219 + $0xe0] sm:$0xff]
      %v6593 = vld [vmem:[%s219 + $0xe8] sm:$0xff]
      %v6594 = vld [vmem:[%s219 + $0xf0] sm:$0xff]
      %v6595 = vld [vmem:[%s219 + $0xf8] sm:$0xff]
      %v6596 = vadd.f32 %v6532, %v6564
      %v6597 = vadd.f32 %v6533, %v6565
      %v6598 = vadd.f32 %v6534, %v6566
      %v6599 = vadd.f32 %v6535, %v6567
      %v6600 = vadd.f32 %v6536, %v6568
      %v6601 = vadd.f32 %v6537, %v6569
      %v6602 = vadd.f32 %v6538, %v6570
      %v6603 = vadd.f32 %v6539, %v6571
      %v6604 = vadd.f32 %v6540, %v6572
      %v6605 = vadd.f32 %v6541, %v6573
      %v6606 = vadd.f32 %v6542, %v6574
      %v6607 = vadd.f32 %v6543, %v6575
      %v6608 = vadd.f32 %v6544, %v6576
      %v6609 = vadd.f32 %v6545, %v6577
      %v6610 = vadd.f32 %v6546, %v6578
      %v6611 = vadd.f32 %v6547, %v6579
      %v6612 = vadd.f32 %v6548, %v6580
      %v6613 = vadd.f32 %v6549, %v6581
      %v6614 = vadd.f32 %v6550, %v6582
      %v6615 = vadd.f32 %v6551, %v6583
      %v6616 = vadd.f32 %v6552, %v6584
      %v6617 = vadd.f32 %v6553, %v6585
      %v6618 = vadd.f32 %v6554, %v6586
      %v6619 = vadd.f32 %v6555, %v6587
      %v6620 = vadd.f32 %v6556, %v6588
      %v6621 = vadd.f32 %v6557, %v6589
      %v6622 = vadd.f32 %v6558, %v6590
      %v6623 = vadd.f32 %v6559, %v6591
      %v6624 = vadd.f32 %v6560, %v6592
      %v6625 = vadd.f32 %v6561, %v6593
      %v6626 = vadd.f32 %v6562, %v6594
      %v6627 = vadd.f32 %v6563, %v6595
      %6628 = vst.msk [vmem:[%s224] sm:$0xff] %vm262, %v6596
      %6629 = vst.msk [vmem:[%s224 + $0x8] sm:$0xff] %vm262, %v6597
      %6630 = vst.msk [vmem:[%s224 + $0x10] sm:$0xff] %vm262, %v6598
      %6631 = vst.msk [vmem:[%s224 + $0x18] sm:$0xff] %vm262, %v6599
      %6632 = vst.msk [vmem:[%s224 + $0x20] sm:$0xff] %vm262, %v6600
      %6633 = vst.msk [vmem:[%s224 + $0x28] sm:$0xff] %vm262, %v6601
      %6634 = vst.msk [vmem:[%s224 + $0x30] sm:$0xff] %vm262, %v6602
      %6635 = vst.msk [vmem:[%s224 + $0x38] sm:$0xff] %vm262, %v6603
      %6636 = vst.msk [vmem:[%s224 + $0x40] sm:$0xff] %vm262, %v6604
      %6637 = vst.msk [vmem:[%s224 + $0x48] sm:$0xff] %vm262, %v6605
      %6638 = vst.msk [vmem:[%s224 + $0x50] sm:$0xff] %vm262, %v6606
      %6639 = vst.msk [vmem:[%s224 + $0x58] sm:$0xff] %vm262, %v6607
      %6640 = vst.msk [vmem:[%s224 + $0x60] sm:$0xff] %vm262, %v6608
      %6641 = vst.msk [vmem:[%s224 + $0x68] sm:$0xff] %vm262, %v6609
      %6642 = vst.msk [vmem:[%s224 + $0x70] sm:$0xff] %vm262, %v6610
      %6643 = vst.msk [vmem:[%s224 + $0x78] sm:$0xff] %vm262, %v6611
      %6644 = vst.msk [vmem:[%s224 + $0x80] sm:$0xff] %vm262, %v6612
      %6645 = vst.msk [vmem:[%s224 + $0x88] sm:$0xff] %vm262, %v6613
      %6646 = vst.msk [vmem:[%s224 + $0x90] sm:$0xff] %vm262, %v6614
      %6647 = vst.msk [vmem:[%s224 + $0x98] sm:$0xff] %vm262, %v6615
      %6648 = vst.msk [vmem:[%s224 + $0xa0] sm:$0xff] %vm262, %v6616
      %6649 = vst.msk [vmem:[%s224 + $0xa8] sm:$0xff] %vm262, %v6617
      %6650 = vst.msk [vmem:[%s224 + $0xb0] sm:$0xff] %vm262, %v6618
      %6651 = vst.msk [vmem:[%s224 + $0xb8] sm:$0xff] %vm262, %v6619
      %6652 = vst.msk [vmem:[%s224 + $0xc0] sm:$0xff] %vm262, %v6620
      %6653 = vst.msk [vmem:[%s224 + $0xc8] sm:$0xff] %vm262, %v6621
      %6654 = vst.msk [vmem:[%s224 + $0xd0] sm:$0xff] %vm262, %v6622
      %6655 = vst.msk [vmem:[%s224 + $0xd8] sm:$0xff] %vm262, %v6623
      %6656 = vst.msk [vmem:[%s224 + $0xe0] sm:$0xff] %vm262, %v6624
      %6657 = vst.msk [vmem:[%s224 + $0xe8] sm:$0xff] %vm262, %v6625
      %6658 = vst.msk [vmem:[%s224 + $0xf0] sm:$0xff] %vm262, %v6626
      %6659 = vst.msk [vmem:[%s224 + $0xf8] sm:$0xff] %vm262, %v6627
      %p6660 = scmp.lt.s32.totalorder %s16, 1
      %s6661 = scalar_select %p6660, %s16, 1
      %s6662 = smul.addr %s6661, 32
      %s6663 = smul.addr %s6662, 8
      %s6664 = scalar_lea.vmem %s5, %s6663
      // Predicated region
      $region41: #{tpu_custom_call.1} parent=39 // pred_check
        %p6665 = pneg %p144
      $region42: #{tpu_custom_call.1} parent=39 // pred_check_branch
        %6667 = sbr.rel (%p6665) target = $region44
      $region43: #{tpu_custom_call.1} parent=39 // pred_region
        _
      $region44: #{tpu_custom_call.1} parent=39 // pred_fallthru
        _
    $region40: #{tpu_custom_call.1} parent=5 // pred_fallthru
      _
    %p6668 = scmp.le.s32.totalorder 2, %s11
    // Predicated region
    $region45: #{tpu_custom_call.1} parent=5 // pred_check
      %p6669 = pneg %p6668
    $region46: #{tpu_custom_call.1} parent=5 // pred_check_branch
      %6671 = sbr.rel (%p6669) target = $region48
    $region47: #{tpu_custom_call.1} parent=5 // pred_region
      %s6672 = ssub.s32 %s11, 2
      // Predicated region
      $region49: #{tpu_custom_call.1} parent=47 // pred_check
        %p6673 = pneg %p150
      $region50: #{tpu_custom_call.1} parent=47 // pred_check_branch
        %6675 = sbr.rel (%p6673) target = $region52
      $region51: #{tpu_custom_call.1} parent=47 // pred_region
        %p6676 = scmp.lt.s32.totalorder %s17, 1
        %s6677 = scalar_select %p6676, %s17, 1
        %s6678 = smul.addr %s6677, 32
        %s6679 = smul.addr %s6678, 8
        %s6680 = scalar_lea.vmem %s5, %s6679
      $region52: #{tpu_custom_call.1} parent=47 // pred_fallthru
        _
    $region48: #{tpu_custom_call.1} parent=5 // pred_fallthru
      _
  $region6: #{tpu_custom_call.1} parent=0 // loop_footer
    %s15 = sadd.s32 1, %s11
  $region7: #{tpu_custom_call.1} parent=0 // loop_footer_branch
    %10 = sbr.rel target = $region3
  $region8: #{tpu_custom_call.1} parent=0 // loop_exit
    _

</llo_original>
